<compile_context>
chip_gen: v7x
topology: tpu7x:2x2x1
jax: 0.10.0
libtpu: 0.0.40
codegen_flags: <defaults>
</compile_context>

<pallas_src>
import functools
import math

import jax
import jax.numpy as jnp
from jax.experimental import pallas as pl
from jax.experimental.pallas import tpu as pltpu


# ------------------------------ fused kernel ------------------------------

def _transformer_kernel(src_row_ref, src_col_ref, tgt_col_ref,
                        enc_emb_ref, dec_emb_ref, pe_ref,
                        e_wqkv, e_wo, e_w1, e_w2, e_vec,
                        d_swqkv, d_swo, d_cwq, d_cwkv, d_cwo,
                        d_w1, d_w2, d_vec,
                        fc_w_ref, fc_b_ref,
                        out_ref,
                        *, num_heads, num_layers, bc, eps):
    f32 = jnp.float32
    bf16 = jnp.bfloat16

    D = enc_emb_ref.shape[1]
    S = src_row_ref.shape[2]
    T = out_ref.shape[1]
    d_ff = e_w1.shape[2]
    H = num_heads
    dk = D // H
    scale = 1.0 / math.sqrt(dk)
    NEG = -1e9

    # ----------------------------- helpers -----------------------------
    def mm(x, w):                       # bf16 MXU matmul, f32 accumulation
        return jnp.dot(x.astype(w.dtype), w, preferred_element_type=f32)

    def ln(x, g, b):                    # f32 LayerNorm (VPU)
        mean = jnp.mean(x, axis=-1, keepdims=True)
        var = jnp.mean(jnp.square(x - mean), axis=-1, keepdims=True)
        return (x - mean) * jax.lax.rsqrt(var + eps) * g + b

    def softmax(s):                     # f32, exact division (matches torch)
        s = s - jnp.max(s, axis=-1, keepdims=True)
        p = jnp.exp(s)
        return p / jnp.sum(p, axis=-1, keepdims=True)

    def heads(mat, col0):               # (rows, *) -> (H, rows, dk), bf16
        return jnp.stack(
            [mat[:, col0 + h * dk: col0 + (h + 1) * dk] for h in range(H)],
            axis=0).astype(bf16)

    def merge(ctx):                     # (H, rows, dk) -> (rows, D)
        return jnp.concatenate([ctx[h] for h in range(H)], axis=1)

    def embed(ids_col, emb_ref):        # (M, 1) int ids -> (M, D) f32
        m, v = ids_col.shape[0], emb_ref.shape[0]
        onehot = (jax.lax.broadcasted_iota(jnp.int32, (m, v), 1) == ids_col)
        return jnp.dot(onehot.astype(emb_ref.dtype), emb_ref[...],
                       preferred_element_type=f32)

    def sdpa(q, k, v, bias):            # per batch element, all heads batched
        sc = jnp.einsum('hqd,hkd->hqk', q, k,
                        preferred_element_type=f32) * scale
        p = softmax(sc + bias)
        ctx = jnp.einsum('hqk,hkd->hqd', p.astype(bf16), v,
                         preferred_element_type=f32)
        return merge(ctx)

    # --------------- additive mask biases, built exactly once ---------------
    src_ids = src_row_ref[0]                                    # (bc, S)
    src_bias = [jnp.where(src_ids[b:b + 1, :] != 0, 0.0, NEG)[None]
                for b in range(bc)]                             # (1, 1, S) each
    r = jax.lax.broadcasted_iota(jnp.int32, (T, T), 0)
    c = jax.lax.broadcasted_iota(jnp.int32, (T, T), 1)
    causal_bias = jnp.where(r >= c, 0.0, NEG)                   # (T, T)
    tgt_ids_col = tgt_col_ref[0]                                # (bc*T, 1)
    # Reference module: tgt padding mask is on QUERY rows, AND causal.
    tgt_bias = [(causal_bias +
                 jnp.where(tgt_ids_col[b * T:(b + 1) * T, :] != 0, 0.0, NEG)
                 )[None] for b in range(bc)]                    # (1, T, T) each

    # --------------- token embedding + positional encoding ---------------
    pe = pe_ref[...]
    pe_s = jnp.concatenate([pe[:S]] * bc, axis=0)               # (bc*S, D)
    pe_t = jnp.concatenate([pe[:T]] * bc, axis=0)               # (bc*T, D)
    x = embed(src_col_ref[0], enc_emb_ref) + pe_s               # (bc*S, D)
    y = embed(tgt_col_ref[0], dec_emb_ref) + pe_t               # (bc*T, D)

    # ------------------------------ encoder ------------------------------
    for l in range(num_layers):
        vec = e_vec[l]                                          # (8, 128)
        bqkv, bo = vec[0:1, :3 * D], vec[1:2, :D]
        g1, bt1 = vec[2:3, :D], vec[3:4, :D]
        bf1, bf2 = vec[4:5, :d_ff], vec[5:6, :D]
        g2, bt2 = vec[6:7, :D], vec[7:8, :D]

        qkv = mm(x, e_wqkv[l]) + bqkv                           # (bc*S, 3D)
        ctx = []
        for b in range(bc):
            rows = qkv[b * S:(b + 1) * S]
            ctx.append(sdpa(heads(rows, 0), heads(rows, D), heads(rows, 2 * D),
                            src_bias[b]))
        attn = mm(jnp.concatenate(ctx, axis=0), e_wo[l]) + bo
        x = ln(x + attn, g1, bt1)

        ff = mm(jnp.maximum(mm(x, e_w1[l]) + bf1, 0.0), e_w2[l]) + bf2
        x = ln(x + ff, g2, bt2)

    # ------------------------------ decoder ------------------------------
    for l in range(num_layers):
        vec = d_vec[l]                                          # (13, 128)
        sbqkv, sbo = vec[0:1, :3 * D], vec[1:2, :D]
        g1, bt1 = vec[2:3, :D], vec[3:4, :D]
        cbq, cbkv, cbo = vec[4:5, :D], vec[5:6, :2 * D], vec[6:7, :D]
        g2, bt2 = vec[7:8, :D], vec[8:9, :D]
        bf1, bf2 = vec[9:10, :d_ff], vec[10:11, :D]
        g3, bt3 = vec[11:12, :D], vec[12:13, :D]

        # masked self-attention
        qkv = mm(y, d_swqkv[l]) + sbqkv                         # (bc*T, 3D)
        ctx = []
        for b in range(bc):
            rows = qkv[b * T:(b + 1) * T]
            ctx.append(sdpa(heads(rows, 0), heads(rows, D), heads(rows, 2 * D),
                            tgt_bias[b]))
        attn = mm(jnp.concatenate(ctx, axis=0), d_swo[l]) + sbo
        y = ln(y + attn, g1, bt1)

        # cross-attention over encoder memory (x)
        qp = mm(y, d_cwq[l]) + cbq                              # (bc*T, D)
        kv = mm(x, d_cwkv[l]) + cbkv                            # (bc*S, 2D)
        ctx = []
        for b in range(bc):
            qr = qp[b * T:(b + 1) * T]
            kr = kv[b * S:(b + 1) * S]
            ctx.append(sdpa(heads(qr, 0), heads(kr, 0), heads(kr, D),
                            src_bias[b]))
        attn = mm(jnp.concatenate(ctx, axis=0), d_cwo[l]) + cbo
        y = ln(y + attn, g2, bt2)

        # feed-forward
        ff = mm(jnp.maximum(mm(y, d_w1[l]) + bf1, 0.0), d_w2[l]) + bf2
        y = ln(y + ff, g3, bt3)

    # ------------- final projection (lane-dense, vocab -> 128) -------------
    logits = mm(y, fc_w_ref[...]) + fc_b_ref[...]               # (bc*T, Vpad)
    out_ref[...] = logits.reshape(bc, T, out_ref.shape[2])


# ------------------------------ BlockSpecs ------------------------------

def _shared_spec(arr):
    zeros = (0,) * arr.ndim
    return pl.BlockSpec(tuple(arr.shape), lambda c: zeros)


def _chunk_spec(arr):
    tail = (0,) * (arr.ndim - 1)
    return pl.BlockSpec((1,) + tuple(arr.shape[1:]), lambda c: (c,) + tail)


# ------------------------------- wrapper -------------------------------

def transformer_forward(params, src, tgt, *, num_heads, num_layers, tgt_vocab):
    B, S = src.shape
    T = tgt.shape[1]
    v_pad = params["fc_w"].shape[1]

    nc = 2 if B % 2 == 0 else 1     # >=2 chunks so both v7x TensorCores work
    bc = B // nc

    src_i = src.astype(jnp.int32)
    tgt_i = tgt.astype(jnp.int32)
    src_row = src_i.reshape(nc, bc, S)          # key-mask layout (lanes = S)
    src_col = src_i.reshape(nc, bc * S, 1)      # one-hot / column layout
    tgt_col = tgt_i.reshape(nc, bc * T, 1)
    pe = params["pe"][:max(S, T)]

    batch_inputs = [src_row, src_col, tgt_col]
    shared_inputs = [
        params["enc_emb"], params["dec_emb"], pe,
        params["e_wqkv"], params["e_wo"], params["e_w1"], params["e_w2"],
        params["e_vec"],
        params["d_swqkv"], params["d_swo"], params["d_cwq"], params["d_cwkv"],
        params["d_cwo"], params["d_w1"], params["d_w2"], params["d_vec"],
        params["fc_w"], params["fc_b"],
    ]

    logits = pl.pallas_call(
        functools.partial(_transformer_kernel, num_heads=num_heads,
                          num_layers=num_layers, bc=bc, eps=1e-5),
        out_shape=jax.ShapeDtypeStruct((B, T, v_pad), jnp.float32),
        grid=(nc,),
        in_specs=([_chunk_spec(a) for a in batch_inputs] +
                  [_shared_spec(a) for a in shared_inputs]),
        out_specs=pl.BlockSpec((bc, T, v_pad), lambda c: (c, 0, 0)),
        compiler_params=pltpu.CompilerParams(
            dimension_semantics=("parallel",),
            vmem_limit_bytes=32 * 1024 * 1024),
    )(*batch_inputs, *shared_inputs)

    # Kept in the wrapper so the kernel's stores stay lane-dense (128 wide).
    return logits[:, :, :tgt_vocab]


# ------------------------- deterministic param init -------------------------

def init_params(key, src_vocab, tgt_vocab, d_model, num_layers, d_ff, max_len):
    D, F, L = d_model, d_ff, num_layers
    kit = iter(jax.random.split(key, 512))

    def xav(shape):
        fan_in, fan_out = shape
        lim = math.sqrt(6.0 / (fan_in + fan_out))
        return jax.random.uniform(next(kit), shape, jnp.float32, -lim, lim)

    def wstack(shape):                      # layer-stacked bf16 weight slab
        return jnp.stack([xav(shape) for _ in range(L)]).astype(jnp.bfloat16)

    def catstack(n):                        # n (D,D) blocks fused along cols
        return jnp.stack(
            [jnp.concatenate([xav((D, D)) for _ in range(n)], axis=1)
             for _ in range(L)]).astype(jnp.bfloat16)

    def vec_slab(n_rows, gamma_rows):       # biases=0, LN gammas=1, lane-padded
        s = jnp.zeros((L, n_rows, 128), jnp.float32)
        for r in gamma_rows:
            s = s.at[:, r, :D].set(1.0)
        return s

    # sinusoidal positional encoding
    pos = jnp.arange(max_len, dtype=jnp.float32)[:, None]
    div = jnp.exp(jnp.arange(0, D, 2, dtype=jnp.float32)
                  * (-math.log(10000.0) / D))
    pe = jnp.zeros((max_len, D), jnp.float32)
    pe = pe.at[:, 0::2].set(jnp.sin(pos * div))
    pe = pe.at[:, 1::2].set(jnp.cos(pos * div))

    v_pad = ((tgt_vocab + 127) // 128) * 128
    fc_w = jnp.pad(xav((D, tgt_vocab)),
                   ((0, 0), (0, v_pad - tgt_vocab))).astype(jnp.bfloat16)

    return {
        "enc_emb": xav((src_vocab, D)).astype(jnp.bfloat16),
        "dec_emb": xav((tgt_vocab, D)).astype(jnp.bfloat16),
        "pe": pe,
        # encoder: wqkv | wo | w1 | w2 ; vec rows:
        #   0 bqkv | 1 bo | 2 ln1_g | 3 ln1_b | 4 b1 | 5 b2 | 6 ln2_g | 7 ln2_b
        "e_wqkv": catstack(3), "e_wo": wstack((D, D)),
        "e_w1": wstack((D, F)), "e_w2": wstack((F, D)),
        "e_vec": vec_slab(8, (2, 6)),
        # decoder vec rows:
        #   0 self_bqkv | 1 self_bo | 2 ln1_g | 3 ln1_b | 4 cross_bq |
        #   5 cross_bkv | 6 cross_bo | 7 ln2_g | 8 ln2_b | 9 b1 | 10 b2 |
        #   11 ln3_g | 12 ln3_b
        "d_swqkv": catstack(3), "d_swo": wstack((D, D)),
        "d_cwq": wstack((D, D)), "d_cwkv": catstack(2), "d_cwo": wstack((D, D)),
        "d_w1": wstack((D, F)), "d_w2": wstack((F, D)),
        "d_vec": vec_slab(13, (2, 7, 11)),
        "fc_w": fc_w,
        "fc_b": jnp.zeros((1, v_pad), jnp.float32),
    }


# --------------------------------- main ---------------------------------

if __name__ == "__main__":
    SRC_VOCAB, TGT_VOCAB = 32, 32
    D_MODEL, NUM_HEADS, NUM_LAYERS, D_FF = 32, 4, 2, 64
    MAX_LEN = 64
    B, S, T = 4, 8, 8

    key = jax.random.PRNGKey(0)
    pkey, skey, tkey = jax.random.split(key, 3)
    params = init_params(pkey, SRC_VOCAB, TGT_VOCAB, D_MODEL, NUM_LAYERS,
                         D_FF, MAX_LEN)

    # Token id 0 is the PAD id (as in the reference module's create_masks):
    # draw real tokens from [1, vocab) and right-pad half the batch with 0.
    src = jax.random.randint(skey, (B, S), 1, SRC_VOCAB, dtype=jnp.int32)
    tgt = jax.random.randint(tkey, (B, T), 1, TGT_VOCAB, dtype=jnp.int32)
    src = src.at[B // 2:, S - 2:].set(0)
    tgt = tgt.at[B // 2:, T - 2:].set(0)

    fwd = jax.jit(functools.partial(transformer_forward,
                                    num_heads=NUM_HEADS,
                                    num_layers=NUM_LAYERS,
                                    tgt_vocab=TGT_VOCAB))
    out = jax.block_until_ready(fwd(params, src, tgt))

    assert out.shape == (B, T, TGT_VOCAB), out.shape
    assert bool(jnp.all(jnp.isfinite(out)))
    print("KERNEL_OK")
</pallas_src>

<mosaic_0001>
module attributes {stable_mosaic.version = 11 : i64} {
  func.func @_transformer_kernel(%arg0: i32, %arg1: memref<1x2x8xi32, #tpu.memory_space<vmem>>, %arg2: memref<1x16x1xi32, #tpu.memory_space<vmem>>, %arg3: memref<1x16x1xi32, #tpu.memory_space<vmem>>, %arg4: memref<32x32xbf16, #tpu.memory_space<vmem>>, %arg5: memref<32x32xbf16, #tpu.memory_space<vmem>>, %arg6: memref<8x32xf32, #tpu.memory_space<vmem>>, %arg7: memref<2x32x96xbf16, #tpu.memory_space<vmem>>, %arg8: memref<2x32x32xbf16, #tpu.memory_space<vmem>>, %arg9: memref<2x32x64xbf16, #tpu.memory_space<vmem>>, %arg10: memref<2x64x32xbf16, #tpu.memory_space<vmem>>, %arg11: memref<2x8x128xf32, #tpu.memory_space<vmem>>, %arg12: memref<2x32x96xbf16, #tpu.memory_space<vmem>>, %arg13: memref<2x32x32xbf16, #tpu.memory_space<vmem>>, %arg14: memref<2x32x32xbf16, #tpu.memory_space<vmem>>, %arg15: memref<2x32x64xbf16, #tpu.memory_space<vmem>>, %arg16: memref<2x32x32xbf16, #tpu.memory_space<vmem>>, %arg17: memref<2x32x64xbf16, #tpu.memory_space<vmem>>, %arg18: memref<2x64x32xbf16, #tpu.memory_space<vmem>>, %arg19: memref<2x13x128xf32, #tpu.memory_space<vmem>>, %arg20: memref<32x128xbf16, #tpu.memory_space<vmem>>, %arg21: memref<1x128xf32, #tpu.memory_space<vmem>>, %arg22: memref<2x8x128xf32, #tpu.memory_space<vmem>>) attributes {dimension_semantics = [#tpu.dimension_semantics<parallel>], iteration_bounds = array<i64: 2>, scalar_prefetch = 0 : i64, scratch_operands = 0 : i64, tpu.core_type = #tpu.core_type<tc>, window_params = [{transform_indices = @transform_0, window_bounds = array<i64: 1, 2, 8>}, {transform_indices = @transform_1, window_bounds = array<i64: 1, 16, 1>}, {transform_indices = @transform_2, window_bounds = array<i64: 1, 16, 1>}, {pipeline_mode = #tpu.pipeline_mode<synchronous>, transform_indices = @transform_3, window_bounds = array<i64: 32, 32>}, {pipeline_mode = #tpu.pipeline_mode<synchronous>, transform_indices = @transform_4, window_bounds = array<i64: 32, 32>}, {pipeline_mode = #tpu.pipeline_mode<synchronous>, transform_indices = @transform_5, window_bounds = array<i64: 8, 32>}, {pipeline_mode = #tpu.pipeline_mode<synchronous>, transform_indices = @transform_6, window_bounds = array<i64: 2, 32, 96>}, {pipeline_mode = #tpu.pipeline_mode<synchronous>, transform_indices = @transform_7, window_bounds = array<i64: 2, 32, 32>}, {pipeline_mode = #tpu.pipeline_mode<synchronous>, transform_indices = @transform_8, window_bounds = array<i64: 2, 32, 64>}, {pipeline_mode = #tpu.pipeline_mode<synchronous>, transform_indices = @transform_9, window_bounds = array<i64: 2, 64, 32>}, {pipeline_mode = #tpu.pipeline_mode<synchronous>, transform_indices = @transform_10, window_bounds = array<i64: 2, 8, 128>}, {pipeline_mode = #tpu.pipeline_mode<synchronous>, transform_indices = @transform_11, window_bounds = array<i64: 2, 32, 96>}, {pipeline_mode = #tpu.pipeline_mode<synchronous>, transform_indices = @transform_12, window_bounds = array<i64: 2, 32, 32>}, {pipeline_mode = #tpu.pipeline_mode<synchronous>, transform_indices = @transform_13, window_bounds = array<i64: 2, 32, 32>}, {pipeline_mode = #tpu.pipeline_mode<synchronous>, transform_indices = @transform_14, window_bounds = array<i64: 2, 32, 64>}, {pipeline_mode = #tpu.pipeline_mode<synchronous>, transform_indices = @transform_15, window_bounds = array<i64: 2, 32, 32>}, {pipeline_mode = #tpu.pipeline_mode<synchronous>, transform_indices = @transform_16, window_bounds = array<i64: 2, 32, 64>}, {pipeline_mode = #tpu.pipeline_mode<synchronous>, transform_indices = @transform_17, window_bounds = array<i64: 2, 64, 32>}, {pipeline_mode = #tpu.pipeline_mode<synchronous>, transform_indices = @transform_18, window_bounds = array<i64: 2, 13, 128>}, {pipeline_mode = #tpu.pipeline_mode<synchronous>, transform_indices = @transform_19, window_bounds = array<i64: 32, 128>}, {pipeline_mode = #tpu.pipeline_mode<synchronous>, transform_indices = @transform_20, window_bounds = array<i64: 1, 128>}, {transform_indices = @transform_21, window_bounds = array<i64: 2, 8, 128>}]} {
    %c0 = arith.constant 0 : index
    %c0_0 = arith.constant 0 : index
    %c0_1 = arith.constant 0 : index
    %0 = vector.load %arg1[%c0, %c0_0, %c0_1] : memref<1x2x8xi32, #tpu.memory_space<vmem>>, vector<1x2x8xi32>
    %1 = vector.shape_cast %0 : vector<1x2x8xi32> to vector<2x8xi32>
    %2 = vector.extract_strided_slice %1 {offsets = [0, 0], sizes = [1, 8], strides = [1, 1]} : vector<2x8xi32> to vector<1x8xi32>
    %c0_i32 = arith.constant 0 : i32
    %3 = vector.broadcast %c0_i32 : i32 to vector<1x8xi32>
    %4 = arith.cmpi ne, %2, %3 : vector<1x8xi32>
    %cst = arith.constant 0.000000e+00 : f32
    %cst_2 = arith.constant -1.000000e+09 : f32
    %5 = vector.broadcast %cst : f32 to vector<1x8xf32>
    %6 = vector.broadcast %cst_2 : f32 to vector<1x8xf32>
    %7 = arith.select %4, %5, %6 : vector<1x8xi1>, vector<1x8xf32>
    %8 = vector.shape_cast %7 : vector<1x8xf32> to vector<1x1x8xf32>
    %9 = vector.extract_strided_slice %1 {offsets = [1, 0], sizes = [1, 8], strides = [1, 1]} : vector<2x8xi32> to vector<1x8xi32>
    %c0_i32_3 = arith.constant 0 : i32
    %10 = vector.broadcast %c0_i32_3 : i32 to vector<1x8xi32>
    %11 = arith.cmpi ne, %9, %10 : vector<1x8xi32>
    %cst_4 = arith.constant 0.000000e+00 : f32
    %cst_5 = arith.constant -1.000000e+09 : f32
    %12 = vector.broadcast %cst_4 : f32 to vector<1x8xf32>
    %13 = vector.broadcast %cst_5 : f32 to vector<1x8xf32>
    %14 = arith.select %11, %12, %13 : vector<1x8xi1>, vector<1x8xf32>
    %15 = vector.shape_cast %14 : vector<1x8xf32> to vector<1x1x8xf32>
    %16 = tpu.iota {dimensions = array<i32: 0>} : vector<8x8xi32>
    %17 = tpu.iota {dimensions = array<i32: 1>} : vector<8x8xi32>
    %18 = arith.cmpi sge, %16, %17 : vector<8x8xi32>
    %cst_6 = arith.constant 0.000000e+00 : f32
    %cst_7 = arith.constant -1.000000e+09 : f32
    %19 = vector.broadcast %cst_6 : f32 to vector<8x8xf32>
    %20 = vector.broadcast %cst_7 : f32 to vector<8x8xf32>
    %21 = arith.select %18, %19, %20 : vector<8x8xi1>, vector<8x8xf32>
    %c0_8 = arith.constant 0 : index
    %c0_9 = arith.constant 0 : index
    %c0_10 = arith.constant 0 : index
    %22 = vector.load %arg3[%c0_8, %c0_9, %c0_10] : memref<1x16x1xi32, #tpu.memory_space<vmem>>, vector<1x16x1xi32>
    %23 = vector.shape_cast %22 : vector<1x16x1xi32> to vector<16x1xi32>
    %24 = vector.extract_strided_slice %23 {offsets = [0, 0], sizes = [8, 1], strides = [1, 1]} : vector<16x1xi32> to vector<8x1xi32>
    %c0_i32_11 = arith.constant 0 : i32
    %25 = vector.broadcast %c0_i32_11 : i32 to vector<8x1xi32>
    %26 = arith.cmpi ne, %24, %25 : vector<8x1xi32>
    %cst_12 = arith.constant 0.000000e+00 : f32
    %cst_13 = arith.constant -1.000000e+09 : f32
    %27 = vector.broadcast %cst_12 : f32 to vector<8x1xf32>
    %28 = vector.broadcast %cst_13 : f32 to vector<8x1xf32>
    %29 = arith.select %26, %27, %28 : vector<8x1xi1>, vector<8x1xf32>
    %30 = vector.broadcast %29 : vector<8x1xf32> to vector<8x8xf32>
    %31 = arith.addf %21, %30 : vector<8x8xf32>
    %32 = vector.shape_cast %31 : vector<8x8xf32> to vector<1x8x8xf32>
    %33 = vector.extract_strided_slice %23 {offsets = [8, 0], sizes = [8, 1], strides = [1, 1]} : vector<16x1xi32> to vector<8x1xi32>
    %c0_i32_14 = arith.constant 0 : i32
    %34 = vector.broadcast %c0_i32_14 : i32 to vector<8x1xi32>
    %35 = arith.cmpi ne, %33, %34 : vector<8x1xi32>
    %cst_15 = arith.constant 0.000000e+00 : f32
    %cst_16 = arith.constant -1.000000e+09 : f32
    %36 = vector.broadcast %cst_15 : f32 to vector<8x1xf32>
    %37 = vector.broadcast %cst_16 : f32 to vector<8x1xf32>
    %38 = arith.select %35, %36, %37 : vector<8x1xi1>, vector<8x1xf32>
    %39 = vector.broadcast %38 : vector<8x1xf32> to vector<8x8xf32>
    %40 = arith.addf %21, %39 : vector<8x8xf32>
    %41 = vector.shape_cast %40 : vector<8x8xf32> to vector<1x8x8xf32>
    %c0_17 = arith.constant 0 : index
    %c0_18 = arith.constant 0 : index
    %42 = vector.load %arg6[%c0_17, %c0_18] : memref<8x32xf32, #tpu.memory_space<vmem>>, vector<8x32xf32>
    %43 = tpu.concatenate %42, %42 in 0 : vector<8x32xf32>, vector<8x32xf32> -> vector<16x32xf32>
    %44 = tpu.concatenate %42, %42 in 0 : vector<8x32xf32>, vector<8x32xf32> -> vector<16x32xf32>
    %c0_19 = arith.constant 0 : index
    %c0_20 = arith.constant 0 : index
    %c0_21 = arith.constant 0 : index
    %45 = vector.load %arg2[%c0_19, %c0_20, %c0_21] : memref<1x16x1xi32, #tpu.memory_space<vmem>>, vector<1x16x1xi32>
    %46 = vector.shape_cast %45 : vector<1x16x1xi32> to vector<16x1xi32>
    %47 = tpu.iota {dimensions = array<i32: 1>} : vector<16x32xi32>
    %48 = vector.broadcast %46 : vector<16x1xi32> to vector<16x32xi32>
    %49 = arith.cmpi eq, %47, %48 : vector<16x32xi32>
    %50 = arith.extui %49 : vector<16x32xi1> to vector<16x32xi32>
    %51 = arith.sitofp %50 : vector<16x32xi32> to vector<16x32xf32>
    %52 = arith.truncf %51 : vector<16x32xf32> to vector<16x32xbf16>
    %c0_22 = arith.constant 0 : index
    %c0_23 = arith.constant 0 : index
    %53 = vector.load %arg4[%c0_22, %c0_23] : memref<32x32xbf16, #tpu.memory_space<vmem>>, vector<32x32xbf16>
    %cst_24 = arith.constant dense<0.000000e+00> : vector<16x32xf32>
    %54 = tpu.matmul %52, %53, %cst_24 {dimension_numbers = #tpu.dot_dimension_numbers<[1], [0], [0], [1], [0, 0, 1, 1], [], []>} : vector<16x32xbf16>, vector<32x32xbf16>, vector<16x32xf32> -> vector<16x32xf32>
    %55 = arith.addf %54, %43 : vector<16x32xf32>
    %c0_25 = arith.constant 0 : index
    %c0_26 = arith.constant 0 : index
    %c0_27 = arith.constant 0 : index
    %56 = vector.load %arg3[%c0_25, %c0_26, %c0_27] : memref<1x16x1xi32, #tpu.memory_space<vmem>>, vector<1x16x1xi32>
    %57 = vector.shape_cast %56 : vector<1x16x1xi32> to vector<16x1xi32>
    %58 = tpu.iota {dimensions = array<i32: 1>} : vector<16x32xi32>
    %59 = vector.broadcast %57 : vector<16x1xi32> to vector<16x32xi32>
    %60 = arith.cmpi eq, %58, %59 : vector<16x32xi32>
    %61 = arith.extui %60 : vector<16x32xi1> to vector<16x32xi32>
    %62 = arith.sitofp %61 : vector<16x32xi32> to vector<16x32xf32>
    %63 = arith.truncf %62 : vector<16x32xf32> to vector<16x32xbf16>
    %c0_28 = arith.constant 0 : index
    %c0_29 = arith.constant 0 : index
    %64 = vector.load %arg5[%c0_28, %c0_29] : memref<32x32xbf16, #tpu.memory_space<vmem>>, vector<32x32xbf16>
    %cst_30 = arith.constant dense<0.000000e+00> : vector<16x32xf32>
    %65 = tpu.matmul %63, %64, %cst_30 {dimension_numbers = #tpu.dot_dimension_numbers<[1], [0], [0], [1], [0, 0, 1, 1], [], []>} : vector<16x32xbf16>, vector<32x32xbf16>, vector<16x32xf32> -> vector<16x32xf32>
    %66 = arith.addf %65, %44 : vector<16x32xf32>
    %c0_31 = arith.constant 0 : index
    %c0_32 = arith.constant 0 : index
    %c0_33 = arith.constant 0 : index
    %67 = vector.load %arg11[%c0_31, %c0_32, %c0_33] : memref<2x8x128xf32, #tpu.memory_space<vmem>>, vector<1x8x128xf32>
    %68 = vector.shape_cast %67 : vector<1x8x128xf32> to vector<8x128xf32>
    %69 = vector.extract_strided_slice %68 {offsets = [0, 0], sizes = [1, 96], strides = [1, 1]} : vector<8x128xf32> to vector<1x96xf32>
    %70 = vector.extract_strided_slice %68 {offsets = [1, 0], sizes = [1, 32], strides = [1, 1]} : vector<8x128xf32> to vector<1x32xf32>
    %71 = vector.extract_strided_slice %68 {offsets = [2, 0], sizes = [1, 32], strides = [1, 1]} : vector<8x128xf32> to vector<1x32xf32>
    %72 = vector.extract_strided_slice %68 {offsets = [3, 0], sizes = [1, 32], strides = [1, 1]} : vector<8x128xf32> to vector<1x32xf32>
    %73 = vector.extract_strided_slice %68 {offsets = [4, 0], sizes = [1, 64], strides = [1, 1]} : vector<8x128xf32> to vector<1x64xf32>
    %74 = vector.extract_strided_slice %68 {offsets = [5, 0], sizes = [1, 32], strides = [1, 1]} : vector<8x128xf32> to vector<1x32xf32>
    %75 = vector.extract_strided_slice %68 {offsets = [6, 0], sizes = [1, 32], strides = [1, 1]} : vector<8x128xf32> to vector<1x32xf32>
    %76 = vector.extract_strided_slice %68 {offsets = [7, 0], sizes = [1, 32], strides = [1, 1]} : vector<8x128xf32> to vector<1x32xf32>
    %c0_34 = arith.constant 0 : index
    %c0_35 = arith.constant 0 : index
    %c0_36 = arith.constant 0 : index
    %77 = vector.load %arg7[%c0_34, %c0_35, %c0_36] : memref<2x32x96xbf16, #tpu.memory_space<vmem>>, vector<1x32x96xbf16>
    %78 = vector.shape_cast %77 : vector<1x32x96xbf16> to vector<32x96xbf16>
    %79 = arith.truncf %55 : vector<16x32xf32> to vector<16x32xbf16>
    %cst_37 = arith.constant dense<0.000000e+00> : vector<16x96xf32>
    %80 = tpu.matmul %79, %78, %cst_37 {dimension_numbers = #tpu.dot_dimension_numbers<[1], [0], [0], [1], [0, 0, 1, 1], [], []>} : vector<16x32xbf16>, vector<32x96xbf16>, vector<16x96xf32> -> vector<16x96xf32>
    %81 = vector.broadcast %69 : vector<1x96xf32> to vector<16x96xf32>
    %82 = arith.addf %80, %81 : vector<16x96xf32>
    %83 = vector.extract_strided_slice %82 {offsets = [0, 0], sizes = [8, 96], strides = [1, 1]} : vector<16x96xf32> to vector<8x96xf32>
    %84 = vector.extract_strided_slice %83 {offsets = [0, 0], sizes = [8, 8], strides = [1, 1]} : vector<8x96xf32> to vector<8x8xf32>
    %85 = vector.extract_strided_slice %83 {offsets = [0, 8], sizes = [8, 8], strides = [1, 1]} : vector<8x96xf32> to vector<8x8xf32>
    %86 = vector.extract_strided_slice %83 {offsets = [0, 16], sizes = [8, 8], strides = [1, 1]} : vector<8x96xf32> to vector<8x8xf32>
    %87 = vector.extract_strided_slice %83 {offsets = [0, 24], sizes = [8, 8], strides = [1, 1]} : vector<8x96xf32> to vector<8x8xf32>
    %88 = vector.shape_cast %84 : vector<8x8xf32> to vector<1x8x8xf32>
    %89 = vector.shape_cast %85 : vector<8x8xf32> to vector<1x8x8xf32>
    %90 = vector.shape_cast %86 : vector<8x8xf32> to vector<1x8x8xf32>
    %91 = vector.shape_cast %87 : vector<8x8xf32> to vector<1x8x8xf32>
    %92 = tpu.concatenate %88, %89, %90, %91 in 0 : vector<1x8x8xf32>, vector<1x8x8xf32>, vector<1x8x8xf32>, vector<1x8x8xf32> -> vector<4x8x8xf32>
    %93 = arith.truncf %92 : vector<4x8x8xf32> to vector<4x8x8xbf16>
    %94 = vector.extract_strided_slice %83 {offsets = [0, 32], sizes = [8, 8], strides = [1, 1]} : vector<8x96xf32> to vector<8x8xf32>
    %95 = vector.extract_strided_slice %83 {offsets = [0, 40], sizes = [8, 8], strides = [1, 1]} : vector<8x96xf32> to vector<8x8xf32>
    %96 = vector.extract_strided_slice %83 {offsets = [0, 48], sizes = [8, 8], strides = [1, 1]} : vector<8x96xf32> to vector<8x8xf32>
    %97 = vector.extract_strided_slice %83 {offsets = [0, 56], sizes = [8, 8], strides = [1, 1]} : vector<8x96xf32> to vector<8x8xf32>
    %98 = vector.shape_cast %94 : vector<8x8xf32> to vector<1x8x8xf32>
    %99 = vector.shape_cast %95 : vector<8x8xf32> to vector<1x8x8xf32>
    %100 = vector.shape_cast %96 : vector<8x8xf32> to vector<1x8x8xf32>
    %101 = vector.shape_cast %97 : vector<8x8xf32> to vector<1x8x8xf32>
    %102 = tpu.concatenate %98, %99, %100, %101 in 0 : vector<1x8x8xf32>, vector<1x8x8xf32>, vector<1x8x8xf32>, vector<1x8x8xf32> -> vector<4x8x8xf32>
    %103 = arith.truncf %102 : vector<4x8x8xf32> to vector<4x8x8xbf16>
    %104 = vector.extract_strided_slice %83 {offsets = [0, 64], sizes = [8, 8], strides = [1, 1]} : vector<8x96xf32> to vector<8x8xf32>
    %105 = vector.extract_strided_slice %83 {offsets = [0, 72], sizes = [8, 8], strides = [1, 1]} : vector<8x96xf32> to vector<8x8xf32>
    %106 = vector.extract_strided_slice %83 {offsets = [0, 80], sizes = [8, 8], strides = [1, 1]} : vector<8x96xf32> to vector<8x8xf32>
    %107 = vector.extract_strided_slice %83 {offsets = [0, 88], sizes = [8, 8], strides = [1, 1]} : vector<8x96xf32> to vector<8x8xf32>
    %108 = vector.shape_cast %104 : vector<8x8xf32> to vector<1x8x8xf32>
    %109 = vector.shape_cast %105 : vector<8x8xf32> to vector<1x8x8xf32>
    %110 = vector.shape_cast %106 : vector<8x8xf32> to vector<1x8x8xf32>
    %111 = vector.shape_cast %107 : vector<8x8xf32> to vector<1x8x8xf32>
    %112 = tpu.concatenate %108, %109, %110, %111 in 0 : vector<1x8x8xf32>, vector<1x8x8xf32>, vector<1x8x8xf32>, vector<1x8x8xf32> -> vector<4x8x8xf32>
    %113 = arith.truncf %112 : vector<4x8x8xf32> to vector<4x8x8xbf16>
    "tpu.trace_start"() <{level = 10 : i32, message = "hqd,hkd->hqk"}> : () -> ()
    %cst_38 = arith.constant dense<0.000000e+00> : vector<4x8x8xf32>
    %114 = tpu.matmul %93, %103, %cst_38 {dimension_numbers = #tpu.dot_dimension_numbers<[2], [2], [1], [1], [0, 0, 0, 1, 1, 1], [0], [0]>} : vector<4x8x8xbf16>, vector<4x8x8xbf16>, vector<4x8x8xf32> -> vector<4x8x8xf32>
    "tpu.trace_stop"() : () -> ()
    %cst_39 = arith.constant 0.353553385 : f32
    %115 = vector.broadcast %cst_39 : f32 to vector<4x8x8xf32>
    %116 = arith.mulf %114, %115 : vector<4x8x8xf32>
    %117 = vector.broadcast %8 : vector<1x1x8xf32> to vector<4x8x8xf32>
    %118 = arith.addf %116, %117 : vector<4x8x8xf32>
    %cst_40 = arith.constant dense<0xFF800000> : vector<4x8xf32>
    %119 = vector.multi_reduction <maximumf>, %118, %cst_40 [2] : vector<4x8x8xf32> to vector<4x8xf32>
    %120 = vector.shape_cast %119 : vector<4x8xf32> to vector<4x8x1xf32>
    %121 = vector.broadcast %120 : vector<4x8x1xf32> to vector<4x8x8xf32>
    %122 = arith.subf %118, %121 : vector<4x8x8xf32>
    %123 = math.exp %122 : vector<4x8x8xf32>
    %cst_41 = arith.constant dense<0.000000e+00> : vector<4x8xf32>
    %124 = vector.multi_reduction <add>, %123, %cst_41 [2] : vector<4x8x8xf32> to vector<4x8xf32>
    %125 = vector.shape_cast %124 : vector<4x8xf32> to vector<4x8x1xf32>
    %126 = vector.broadcast %125 : vector<4x8x1xf32> to vector<4x8x8xf32>
    %127 = arith.divf %123, %126 : vector<4x8x8xf32>
    %128 = arith.truncf %127 : vector<4x8x8xf32> to vector<4x8x8xbf16>
    "tpu.trace_start"() <{level = 10 : i32, message = "hqk,hkd->hqd"}> : () -> ()
    %cst_42 = arith.constant dense<0.000000e+00> : vector<4x8x8xf32>
    %129 = tpu.matmul %128, %113, %cst_42 {dimension_numbers = #tpu.dot_dimension_numbers<[2], [1], [1], [2], [0, 0, 0, 1, 1, 2], [0], [0]>} : vector<4x8x8xbf16>, vector<4x8x8xbf16>, vector<4x8x8xf32> -> vector<4x8x8xf32>
    "tpu.trace_stop"() : () -> ()
    %130 = vector.extract_strided_slice %129 {offsets = [0, 0, 0], sizes = [1, 8, 8], strides = [1, 1, 1]} : vector<4x8x8xf32> to vector<1x8x8xf32>
    %131 = vector.shape_cast %130 : vector<1x8x8xf32> to vector<8x8xf32>
    %132 = vector.extract_strided_slice %129 {offsets = [1, 0, 0], sizes = [1, 8, 8], strides = [1, 1, 1]} : vector<4x8x8xf32> to vector<1x8x8xf32>
    %133 = vector.shape_cast %132 : vector<1x8x8xf32> to vector<8x8xf32>
    %134 = vector.extract_strided_slice %129 {offsets = [2, 0, 0], sizes = [1, 8, 8], strides = [1, 1, 1]} : vector<4x8x8xf32> to vector<1x8x8xf32>
    %135 = vector.shape_cast %134 : vector<1x8x8xf32> to vector<8x8xf32>
    %136 = vector.extract_strided_slice %129 {offsets = [3, 0, 0], sizes = [1, 8, 8], strides = [1, 1, 1]} : vector<4x8x8xf32> to vector<1x8x8xf32>
    %137 = vector.shape_cast %136 : vector<1x8x8xf32> to vector<8x8xf32>
    %138 = tpu.concatenate %131, %133, %135, %137 in 1 : vector<8x8xf32>, vector<8x8xf32>, vector<8x8xf32>, vector<8x8xf32> -> vector<8x32xf32>
    %139 = vector.extract_strided_slice %82 {offsets = [8, 0], sizes = [8, 96], strides = [1, 1]} : vector<16x96xf32> to vector<8x96xf32>
    %140 = vector.extract_strided_slice %139 {offsets = [0, 0], sizes = [8, 8], strides = [1, 1]} : vector<8x96xf32> to vector<8x8xf32>
    %141 = vector.extract_strided_slice %139 {offsets = [0, 8], sizes = [8, 8], strides = [1, 1]} : vector<8x96xf32> to vector<8x8xf32>
    %142 = vector.extract_strided_slice %139 {offsets = [0, 16], sizes = [8, 8], strides = [1, 1]} : vector<8x96xf32> to vector<8x8xf32>
    %143 = vector.extract_strided_slice %139 {offsets = [0, 24], sizes = [8, 8], strides = [1, 1]} : vector<8x96xf32> to vector<8x8xf32>
    %144 = vector.shape_cast %140 : vector<8x8xf32> to vector<1x8x8xf32>
    %145 = vector.shape_cast %141 : vector<8x8xf32> to vector<1x8x8xf32>
    %146 = vector.shape_cast %142 : vector<8x8xf32> to vector<1x8x8xf32>
    %147 = vector.shape_cast %143 : vector<8x8xf32> to vector<1x8x8xf32>
    %148 = tpu.concatenate %144, %145, %146, %147 in 0 : vector<1x8x8xf32>, vector<1x8x8xf32>, vector<1x8x8xf32>, vector<1x8x8xf32> -> vector<4x8x8xf32>
    %149 = arith.truncf %148 : vector<4x8x8xf32> to vector<4x8x8xbf16>
    %150 = vector.extract_strided_slice %139 {offsets = [0, 32], sizes = [8, 8], strides = [1, 1]} : vector<8x96xf32> to vector<8x8xf32>
    %151 = vector.extract_strided_slice %139 {offsets = [0, 40], sizes = [8, 8], strides = [1, 1]} : vector<8x96xf32> to vector<8x8xf32>
    %152 = vector.extract_strided_slice %139 {offsets = [0, 48], sizes = [8, 8], strides = [1, 1]} : vector<8x96xf32> to vector<8x8xf32>
    %153 = vector.extract_strided_slice %139 {offsets = [0, 56], sizes = [8, 8], strides = [1, 1]} : vector<8x96xf32> to vector<8x8xf32>
    %154 = vector.shape_cast %150 : vector<8x8xf32> to vector<1x8x8xf32>
    %155 = vector.shape_cast %151 : vector<8x8xf32> to vector<1x8x8xf32>
    %156 = vector.shape_cast %152 : vector<8x8xf32> to vector<1x8x8xf32>
    %157 = vector.shape_cast %153 : vector<8x8xf32> to vector<1x8x8xf32>
    %158 = tpu.concatenate %154, %155, %156, %157 in 0 : vector<1x8x8xf32>, vector<1x8x8xf32>, vector<1x8x8xf32>, vector<1x8x8xf32> -> vector<4x8x8xf32>
    %159 = arith.truncf %158 : vector<4x8x8xf32> to vector<4x8x8xbf16>
    %160 = vector.extract_strided_slice %139 {offsets = [0, 64], sizes = [8, 8], strides = [1, 1]} : vector<8x96xf32> to vector<8x8xf32>
    %161 = vector.extract_strided_slice %139 {offsets = [0, 72], sizes = [8, 8], strides = [1, 1]} : vector<8x96xf32> to vector<8x8xf32>
    %162 = vector.extract_strided_slice %139 {offsets = [0, 80], sizes = [8, 8], strides = [1, 1]} : vector<8x96xf32> to vector<8x8xf32>
    %163 = vector.extract_strided_slice %139 {offsets = [0, 88], sizes = [8, 8], strides = [1, 1]} : vector<8x96xf32> to vector<8x8xf32>
    %164 = vector.shape_cast %160 : vector<8x8xf32> to vector<1x8x8xf32>
    %165 = vector.shape_cast %161 : vector<8x8xf32> to vector<1x8x8xf32>
    %166 = vector.shape_cast %162 : vector<8x8xf32> to vector<1x8x8xf32>
    %167 = vector.shape_cast %163 : vector<8x8xf32> to vector<1x8x8xf32>
    %168 = tpu.concatenate %164, %165, %166, %167 in 0 : vector<1x8x8xf32>, vector<1x8x8xf32>, vector<1x8x8xf32>, vector<1x8x8xf32> -> vector<4x8x8xf32>
    %169 = arith.truncf %168 : vector<4x8x8xf32> to vector<4x8x8xbf16>
    "tpu.trace_start"() <{level = 10 : i32, message = "hqd,hkd->hqk"}> : () -> ()
    %cst_43 = arith.constant dense<0.000000e+00> : vector<4x8x8xf32>
    %170 = tpu.matmul %149, %159, %cst_43 {dimension_numbers = #tpu.dot_dimension_numbers<[2], [2], [1], [1], [0, 0, 0, 1, 1, 1], [0], [0]>} : vector<4x8x8xbf16>, vector<4x8x8xbf16>, vector<4x8x8xf32> -> vector<4x8x8xf32>
    "tpu.trace_stop"() : () -> ()
    %cst_44 = arith.constant 0.353553385 : f32
    %171 = vector.broadcast %cst_44 : f32 to vector<4x8x8xf32>
    %172 = arith.mulf %170, %171 : vector<4x8x8xf32>
    %173 = vector.broadcast %15 : vector<1x1x8xf32> to vector<4x8x8xf32>
    %174 = arith.addf %172, %173 : vector<4x8x8xf32>
    %cst_45 = arith.constant dense<0xFF800000> : vector<4x8xf32>
    %175 = vector.multi_reduction <maximumf>, %174, %cst_45 [2] : vector<4x8x8xf32> to vector<4x8xf32>
    %176 = vector.shape_cast %175 : vector<4x8xf32> to vector<4x8x1xf32>
    %177 = vector.broadcast %176 : vector<4x8x1xf32> to vector<4x8x8xf32>
    %178 = arith.subf %174, %177 : vector<4x8x8xf32>
    %179 = math.exp %178 : vector<4x8x8xf32>
    %cst_46 = arith.constant dense<0.000000e+00> : vector<4x8xf32>
    %180 = vector.multi_reduction <add>, %179, %cst_46 [2] : vector<4x8x8xf32> to vector<4x8xf32>
    %181 = vector.shape_cast %180 : vector<4x8xf32> to vector<4x8x1xf32>
    %182 = vector.broadcast %181 : vector<4x8x1xf32> to vector<4x8x8xf32>
    %183 = arith.divf %179, %182 : vector<4x8x8xf32>
    %184 = arith.truncf %183 : vector<4x8x8xf32> to vector<4x8x8xbf16>
    "tpu.trace_start"() <{level = 10 : i32, message = "hqk,hkd->hqd"}> : () -> ()
    %cst_47 = arith.constant dense<0.000000e+00> : vector<4x8x8xf32>
    %185 = tpu.matmul %184, %169, %cst_47 {dimension_numbers = #tpu.dot_dimension_numbers<[2], [1], [1], [2], [0, 0, 0, 1, 1, 2], [0], [0]>} : vector<4x8x8xbf16>, vector<4x8x8xbf16>, vector<4x8x8xf32> -> vector<4x8x8xf32>
    "tpu.trace_stop"() : () -> ()
    %186 = vector.extract_strided_slice %185 {offsets = [0, 0, 0], sizes = [1, 8, 8], strides = [1, 1, 1]} : vector<4x8x8xf32> to vector<1x8x8xf32>
    %187 = vector.shape_cast %186 : vector<1x8x8xf32> to vector<8x8xf32>
    %188 = vector.extract_strided_slice %185 {offsets = [1, 0, 0], sizes = [1, 8, 8], strides = [1, 1, 1]} : vector<4x8x8xf32> to vector<1x8x8xf32>
    %189 = vector.shape_cast %188 : vector<1x8x8xf32> to vector<8x8xf32>
    %190 = vector.extract_strided_slice %185 {offsets = [2, 0, 0], sizes = [1, 8, 8], strides = [1, 1, 1]} : vector<4x8x8xf32> to vector<1x8x8xf32>
    %191 = vector.shape_cast %190 : vector<1x8x8xf32> to vector<8x8xf32>
    %192 = vector.extract_strided_slice %185 {offsets = [3, 0, 0], sizes = [1, 8, 8], strides = [1, 1, 1]} : vector<4x8x8xf32> to vector<1x8x8xf32>
    %193 = vector.shape_cast %192 : vector<1x8x8xf32> to vector<8x8xf32>
    %194 = tpu.concatenate %187, %189, %191, %193 in 1 : vector<8x8xf32>, vector<8x8xf32>, vector<8x8xf32>, vector<8x8xf32> -> vector<8x32xf32>
    %195 = tpu.concatenate %138, %194 in 0 : vector<8x32xf32>, vector<8x32xf32> -> vector<16x32xf32>
    %c0_48 = arith.constant 0 : index
    %c0_49 = arith.constant 0 : index
    %c0_50 = arith.constant 0 : index
    %196 = vector.load %arg8[%c0_48, %c0_49, %c0_50] : memref<2x32x32xbf16, #tpu.memory_space<vmem>>, vector<1x32x32xbf16>
    %197 = vector.shape_cast %196 : vector<1x32x32xbf16> to vector<32x32xbf16>
    %198 = arith.truncf %195 : vector<16x32xf32> to vector<16x32xbf16>
    %cst_51 = arith.constant dense<0.000000e+00> : vector<16x32xf32>
    %199 = tpu.matmul %198, %197, %cst_51 {dimension_numbers = #tpu.dot_dimension_numbers<[1], [0], [0], [1], [0, 0, 1, 1], [], []>} : vector<16x32xbf16>, vector<32x32xbf16>, vector<16x32xf32> -> vector<16x32xf32>
    %200 = vector.broadcast %70 : vector<1x32xf32> to vector<16x32xf32>
    %201 = arith.addf %199, %200 : vector<16x32xf32>
    %202 = arith.addf %55, %201 : vector<16x32xf32>
    %cst_52 = arith.constant dense<0.000000e+00> : vector<16xf32>
    %203 = vector.multi_reduction <add>, %202, %cst_52 [1] : vector<16x32xf32> to vector<16xf32>
    %204 = vector.shape_cast %203 : vector<16xf32> to vector<16x1xf32>
    %cst_53 = arith.constant 3.200000e+01 : f32
    %205 = vector.broadcast %cst_53 : f32 to vector<16x1xf32>
    %206 = arith.divf %204, %205 : vector<16x1xf32>
    %207 = vector.broadcast %206 : vector<16x1xf32> to vector<16x32xf32>
    %208 = arith.subf %202, %207 : vector<16x32xf32>
    %209 = arith.mulf %208, %208 : vector<16x32xf32>
    %cst_54 = arith.constant dense<0.000000e+00> : vector<16xf32>
    %210 = vector.multi_reduction <add>, %209, %cst_54 [1] : vector<16x32xf32> to vector<16xf32>
    %211 = vector.shape_cast %210 : vector<16xf32> to vector<16x1xf32>
    %cst_55 = arith.constant 3.200000e+01 : f32
    %212 = vector.broadcast %cst_55 : f32 to vector<16x1xf32>
    %213 = arith.divf %211, %212 : vector<16x1xf32>
    %214 = vector.broadcast %206 : vector<16x1xf32> to vector<16x32xf32>
    %215 = arith.subf %202, %214 : vector<16x32xf32>
    %cst_56 = arith.constant 9.99999974E-6 : f32
    %216 = vector.broadcast %cst_56 : f32 to vector<16x1xf32>
    %217 = arith.addf %213, %216 : vector<16x1xf32>
    %218 = math.rsqrt %217 : vector<16x1xf32>
    %219 = vector.broadcast %218 : vector<16x1xf32> to vector<16x32xf32>
    %220 = arith.mulf %215, %219 : vector<16x32xf32>
    %221 = vector.broadcast %71 : vector<1x32xf32> to vector<16x32xf32>
    %222 = arith.mulf %220, %221 : vector<16x32xf32>
    %223 = vector.broadcast %72 : vector<1x32xf32> to vector<16x32xf32>
    %224 = arith.addf %222, %223 : vector<16x32xf32>
    %c0_57 = arith.constant 0 : index
    %c0_58 = arith.constant 0 : index
    %c0_59 = arith.constant 0 : index
    %225 = vector.load %arg9[%c0_57, %c0_58, %c0_59] : memref<2x32x64xbf16, #tpu.memory_space<vmem>>, vector<1x32x64xbf16>
    %226 = vector.shape_cast %225 : vector<1x32x64xbf16> to vector<32x64xbf16>
    %227 = arith.truncf %224 : vector<16x32xf32> to vector<16x32xbf16>
    %cst_60 = arith.constant dense<0.000000e+00> : vector<16x64xf32>
    %228 = tpu.matmul %227, %226, %cst_60 {dimension_numbers = #tpu.dot_dimension_numbers<[1], [0], [0], [1], [0, 0, 1, 1], [], []>} : vector<16x32xbf16>, vector<32x64xbf16>, vector<16x64xf32> -> vector<16x64xf32>
    %229 = vector.broadcast %73 : vector<1x64xf32> to vector<16x64xf32>
    %230 = arith.addf %228, %229 : vector<16x64xf32>
    %cst_61 = arith.constant 0.000000e+00 : f32
    %231 = vector.broadcast %cst_61 : f32 to vector<16x64xf32>
    %232 = arith.maximumf %230, %231 : vector<16x64xf32>
    %c0_62 = arith.constant 0 : index
    %c0_63 = arith.constant 0 : index
    %c0_64 = arith.constant 0 : index
    %233 = vector.load %arg10[%c0_62, %c0_63, %c0_64] : memref<2x64x32xbf16, #tpu.memory_space<vmem>>, vector<1x64x32xbf16>
    %234 = vector.shape_cast %233 : vector<1x64x32xbf16> to vector<64x32xbf16>
    %235 = arith.truncf %232 : vector<16x64xf32> to vector<16x64xbf16>
    %cst_65 = arith.constant dense<0.000000e+00> : vector<16x32xf32>
    %236 = tpu.matmul %235, %234, %cst_65 {dimension_numbers = #tpu.dot_dimension_numbers<[1], [0], [0], [1], [0, 0, 1, 1], [], []>} : vector<16x64xbf16>, vector<64x32xbf16>, vector<16x32xf32> -> vector<16x32xf32>
    %237 = vector.broadcast %74 : vector<1x32xf32> to vector<16x32xf32>
    %238 = arith.addf %236, %237 : vector<16x32xf32>
    %239 = arith.addf %224, %238 : vector<16x32xf32>
    %cst_66 = arith.constant dense<0.000000e+00> : vector<16xf32>
    %240 = vector.multi_reduction <add>, %239, %cst_66 [1] : vector<16x32xf32> to vector<16xf32>
    %241 = vector.shape_cast %240 : vector<16xf32> to vector<16x1xf32>
    %cst_67 = arith.constant 3.200000e+01 : f32
    %242 = vector.broadcast %cst_67 : f32 to vector<16x1xf32>
    %243 = arith.divf %241, %242 : vector<16x1xf32>
    %244 = vector.broadcast %243 : vector<16x1xf32> to vector<16x32xf32>
    %245 = arith.subf %239, %244 : vector<16x32xf32>
    %246 = arith.mulf %245, %245 : vector<16x32xf32>
    %cst_68 = arith.constant dense<0.000000e+00> : vector<16xf32>
    %247 = vector.multi_reduction <add>, %246, %cst_68 [1] : vector<16x32xf32> to vector<16xf32>
    %248 = vector.shape_cast %247 : vector<16xf32> to vector<16x1xf32>
    %cst_69 = arith.constant 3.200000e+01 : f32
    %249 = vector.broadcast %cst_69 : f32 to vector<16x1xf32>
    %250 = arith.divf %248, %249 : vector<16x1xf32>
    %251 = vector.broadcast %243 : vector<16x1xf32> to vector<16x32xf32>
    %252 = arith.subf %239, %251 : vector<16x32xf32>
    %cst_70 = arith.constant 9.99999974E-6 : f32
    %253 = vector.broadcast %cst_70 : f32 to vector<16x1xf32>
    %254 = arith.addf %250, %253 : vector<16x1xf32>
    %255 = math.rsqrt %254 : vector<16x1xf32>
    %256 = vector.broadcast %255 : vector<16x1xf32> to vector<16x32xf32>
    %257 = arith.mulf %252, %256 : vector<16x32xf32>
    %258 = vector.broadcast %75 : vector<1x32xf32> to vector<16x32xf32>
    %259 = arith.mulf %257, %258 : vector<16x32xf32>
    %260 = vector.broadcast %76 : vector<1x32xf32> to vector<16x32xf32>
    %261 = arith.addf %259, %260 : vector<16x32xf32>
    %c1 = arith.constant 1 : index
    %c0_71 = arith.constant 0 : index
    %c0_72 = arith.constant 0 : index
    %262 = vector.load %arg11[%c1, %c0_71, %c0_72] : memref<2x8x128xf32, #tpu.memory_space<vmem>>, vector<1x8x128xf32>
    %263 = vector.shape_cast %262 : vector<1x8x128xf32> to vector<8x128xf32>
    %264 = vector.extract_strided_slice %263 {offsets = [0, 0], sizes = [1, 96], strides = [1, 1]} : vector<8x128xf32> to vector<1x96xf32>
    %265 = vector.extract_strided_slice %263 {offsets = [1, 0], sizes = [1, 32], strides = [1, 1]} : vector<8x128xf32> to vector<1x32xf32>
    %266 = vector.extract_strided_slice %263 {offsets = [2, 0], sizes = [1, 32], strides = [1, 1]} : vector<8x128xf32> to vector<1x32xf32>
    %267 = vector.extract_strided_slice %263 {offsets = [3, 0], sizes = [1, 32], strides = [1, 1]} : vector<8x128xf32> to vector<1x32xf32>
    %268 = vector.extract_strided_slice %263 {offsets = [4, 0], sizes = [1, 64], strides = [1, 1]} : vector<8x128xf32> to vector<1x64xf32>
    %269 = vector.extract_strided_slice %263 {offsets = [5, 0], sizes = [1, 32], strides = [1, 1]} : vector<8x128xf32> to vector<1x32xf32>
    %270 = vector.extract_strided_slice %263 {offsets = [6, 0], sizes = [1, 32], strides = [1, 1]} : vector<8x128xf32> to vector<1x32xf32>
    %271 = vector.extract_strided_slice %263 {offsets = [7, 0], sizes = [1, 32], strides = [1, 1]} : vector<8x128xf32> to vector<1x32xf32>
    %c1_73 = arith.constant 1 : index
    %c0_74 = arith.constant 0 : index
    %c0_75 = arith.constant 0 : index
    %272 = vector.load %arg7[%c1_73, %c0_74, %c0_75] : memref<2x32x96xbf16, #tpu.memory_space<vmem>>, vector<1x32x96xbf16>
    %273 = vector.shape_cast %272 : vector<1x32x96xbf16> to vector<32x96xbf16>
    %274 = arith.truncf %261 : vector<16x32xf32> to vector<16x32xbf16>
    %cst_76 = arith.constant dense<0.000000e+00> : vector<16x96xf32>
    %275 = tpu.matmul %274, %273, %cst_76 {dimension_numbers = #tpu.dot_dimension_numbers<[1], [0], [0], [1], [0, 0, 1, 1], [], []>} : vector<16x32xbf16>, vector<32x96xbf16>, vector<16x96xf32> -> vector<16x96xf32>
    %276 = vector.broadcast %264 : vector<1x96xf32> to vector<16x96xf32>
    %277 = arith.addf %275, %276 : vector<16x96xf32>
    %278 = vector.extract_strided_slice %277 {offsets = [0, 0], sizes = [8, 96], strides = [1, 1]} : vector<16x96xf32> to vector<8x96xf32>
    %279 = vector.extract_strided_slice %278 {offsets = [0, 0], sizes = [8, 8], strides = [1, 1]} : vector<8x96xf32> to vector<8x8xf32>
    %280 = vector.extract_strided_slice %278 {offsets = [0, 8], sizes = [8, 8], strides = [1, 1]} : vector<8x96xf32> to vector<8x8xf32>
    %281 = vector.extract_strided_slice %278 {offsets = [0, 16], sizes = [8, 8], strides = [1, 1]} : vector<8x96xf32> to vector<8x8xf32>
    %282 = vector.extract_strided_slice %278 {offsets = [0, 24], sizes = [8, 8], strides = [1, 1]} : vector<8x96xf32> to vector<8x8xf32>
    %283 = vector.shape_cast %279 : vector<8x8xf32> to vector<1x8x8xf32>
    %284 = vector.shape_cast %280 : vector<8x8xf32> to vector<1x8x8xf32>
    %285 = vector.shape_cast %281 : vector<8x8xf32> to vector<1x8x8xf32>
    %286 = vector.shape_cast %282 : vector<8x8xf32> to vector<1x8x8xf32>
    %287 = tpu.concatenate %283, %284, %285, %286 in 0 : vector<1x8x8xf32>, vector<1x8x8xf32>, vector<1x8x8xf32>, vector<1x8x8xf32> -> vector<4x8x8xf32>
    %288 = arith.truncf %287 : vector<4x8x8xf32> to vector<4x8x8xbf16>
    %289 = vector.extract_strided_slice %278 {offsets = [0, 32], sizes = [8, 8], strides = [1, 1]} : vector<8x96xf32> to vector<8x8xf32>
    %290 = vector.extract_strided_slice %278 {offsets = [0, 40], sizes = [8, 8], strides = [1, 1]} : vector<8x96xf32> to vector<8x8xf32>
    %291 = vector.extract_strided_slice %278 {offsets = [0, 48], sizes = [8, 8], strides = [1, 1]} : vector<8x96xf32> to vector<8x8xf32>
    %292 = vector.extract_strided_slice %278 {offsets = [0, 56], sizes = [8, 8], strides = [1, 1]} : vector<8x96xf32> to vector<8x8xf32>
    %293 = vector.shape_cast %289 : vector<8x8xf32> to vector<1x8x8xf32>
    %294 = vector.shape_cast %290 : vector<8x8xf32> to vector<1x8x8xf32>
    %295 = vector.shape_cast %291 : vector<8x8xf32> to vector<1x8x8xf32>
    %296 = vector.shape_cast %292 : vector<8x8xf32> to vector<1x8x8xf32>
    %297 = tpu.concatenate %293, %294, %295, %296 in 0 : vector<1x8x8xf32>, vector<1x8x8xf32>, vector<1x8x8xf32>, vector<1x8x8xf32> -> vector<4x8x8xf32>
    %298 = arith.truncf %297 : vector<4x8x8xf32> to vector<4x8x8xbf16>
    %299 = vector.extract_strided_slice %278 {offsets = [0, 64], sizes = [8, 8], strides = [1, 1]} : vector<8x96xf32> to vector<8x8xf32>
    %300 = vector.extract_strided_slice %278 {offsets = [0, 72], sizes = [8, 8], strides = [1, 1]} : vector<8x96xf32> to vector<8x8xf32>
    %301 = vector.extract_strided_slice %278 {offsets = [0, 80], sizes = [8, 8], strides = [1, 1]} : vector<8x96xf32> to vector<8x8xf32>
    %302 = vector.extract_strided_slice %278 {offsets = [0, 88], sizes = [8, 8], strides = [1, 1]} : vector<8x96xf32> to vector<8x8xf32>
    %303 = vector.shape_cast %299 : vector<8x8xf32> to vector<1x8x8xf32>
    %304 = vector.shape_cast %300 : vector<8x8xf32> to vector<1x8x8xf32>
    %305 = vector.shape_cast %301 : vector<8x8xf32> to vector<1x8x8xf32>
    %306 = vector.shape_cast %302 : vector<8x8xf32> to vector<1x8x8xf32>
    %307 = tpu.concatenate %303, %304, %305, %306 in 0 : vector<1x8x8xf32>, vector<1x8x8xf32>, vector<1x8x8xf32>, vector<1x8x8xf32> -> vector<4x8x8xf32>
    %308 = arith.truncf %307 : vector<4x8x8xf32> to vector<4x8x8xbf16>
    "tpu.trace_start"() <{level = 10 : i32, message = "hqd,hkd->hqk"}> : () -> ()
    %cst_77 = arith.constant dense<0.000000e+00> : vector<4x8x8xf32>
    %309 = tpu.matmul %288, %298, %cst_77 {dimension_numbers = #tpu.dot_dimension_numbers<[2], [2], [1], [1], [0, 0, 0, 1, 1, 1], [0], [0]>} : vector<4x8x8xbf16>, vector<4x8x8xbf16>, vector<4x8x8xf32> -> vector<4x8x8xf32>
    "tpu.trace_stop"() : () -> ()
    %cst_78 = arith.constant 0.353553385 : f32
    %310 = vector.broadcast %cst_78 : f32 to vector<4x8x8xf32>
    %311 = arith.mulf %309, %310 : vector<4x8x8xf32>
    %312 = vector.broadcast %8 : vector<1x1x8xf32> to vector<4x8x8xf32>
    %313 = arith.addf %311, %312 : vector<4x8x8xf32>
    %cst_79 = arith.constant dense<0xFF800000> : vector<4x8xf32>
    %314 = vector.multi_reduction <maximumf>, %313, %cst_79 [2] : vector<4x8x8xf32> to vector<4x8xf32>
    %315 = vector.shape_cast %314 : vector<4x8xf32> to vector<4x8x1xf32>
    %316 = vector.broadcast %315 : vector<4x8x1xf32> to vector<4x8x8xf32>
    %317 = arith.subf %313, %316 : vector<4x8x8xf32>
    %318 = math.exp %317 : vector<4x8x8xf32>
    %cst_80 = arith.constant dense<0.000000e+00> : vector<4x8xf32>
    %319 = vector.multi_reduction <add>, %318, %cst_80 [2] : vector<4x8x8xf32> to vector<4x8xf32>
    %320 = vector.shape_cast %319 : vector<4x8xf32> to vector<4x8x1xf32>
    %321 = vector.broadcast %320 : vector<4x8x1xf32> to vector<4x8x8xf32>
    %322 = arith.divf %318, %321 : vector<4x8x8xf32>
    %323 = arith.truncf %322 : vector<4x8x8xf32> to vector<4x8x8xbf16>
    "tpu.trace_start"() <{level = 10 : i32, message = "hqk,hkd->hqd"}> : () -> ()
    %cst_81 = arith.constant dense<0.000000e+00> : vector<4x8x8xf32>
    %324 = tpu.matmul %323, %308, %cst_81 {dimension_numbers = #tpu.dot_dimension_numbers<[2], [1], [1], [2], [0, 0, 0, 1, 1, 2], [0], [0]>} : vector<4x8x8xbf16>, vector<4x8x8xbf16>, vector<4x8x8xf32> -> vector<4x8x8xf32>
    "tpu.trace_stop"() : () -> ()
    %325 = vector.extract_strided_slice %324 {offsets = [0, 0, 0], sizes = [1, 8, 8], strides = [1, 1, 1]} : vector<4x8x8xf32> to vector<1x8x8xf32>
    %326 = vector.shape_cast %325 : vector<1x8x8xf32> to vector<8x8xf32>
    %327 = vector.extract_strided_slice %324 {offsets = [1, 0, 0], sizes = [1, 8, 8], strides = [1, 1, 1]} : vector<4x8x8xf32> to vector<1x8x8xf32>
    %328 = vector.shape_cast %327 : vector<1x8x8xf32> to vector<8x8xf32>
    %329 = vector.extract_strided_slice %324 {offsets = [2, 0, 0], sizes = [1, 8, 8], strides = [1, 1, 1]} : vector<4x8x8xf32> to vector<1x8x8xf32>
    %330 = vector.shape_cast %329 : vector<1x8x8xf32> to vector<8x8xf32>
    %331 = vector.extract_strided_slice %324 {offsets = [3, 0, 0], sizes = [1, 8, 8], strides = [1, 1, 1]} : vector<4x8x8xf32> to vector<1x8x8xf32>
    %332 = vector.shape_cast %331 : vector<1x8x8xf32> to vector<8x8xf32>
    %333 = tpu.concatenate %326, %328, %330, %332 in 1 : vector<8x8xf32>, vector<8x8xf32>, vector<8x8xf32>, vector<8x8xf32> -> vector<8x32xf32>
    %334 = vector.extract_strided_slice %277 {offsets = [8, 0], sizes = [8, 96], strides = [1, 1]} : vector<16x96xf32> to vector<8x96xf32>
    %335 = vector.extract_strided_slice %334 {offsets = [0, 0], sizes = [8, 8], strides = [1, 1]} : vector<8x96xf32> to vector<8x8xf32>
    %336 = vector.extract_strided_slice %334 {offsets = [0, 8], sizes = [8, 8], strides = [1, 1]} : vector<8x96xf32> to vector<8x8xf32>
    %337 = vector.extract_strided_slice %334 {offsets = [0, 16], sizes = [8, 8], strides = [1, 1]} : vector<8x96xf32> to vector<8x8xf32>
    %338 = vector.extract_strided_slice %334 {offsets = [0, 24], sizes = [8, 8], strides = [1, 1]} : vector<8x96xf32> to vector<8x8xf32>
    %339 = vector.shape_cast %335 : vector<8x8xf32> to vector<1x8x8xf32>
    %340 = vector.shape_cast %336 : vector<8x8xf32> to vector<1x8x8xf32>
    %341 = vector.shape_cast %337 : vector<8x8xf32> to vector<1x8x8xf32>
    %342 = vector.shape_cast %338 : vector<8x8xf32> to vector<1x8x8xf32>
    %343 = tpu.concatenate %339, %340, %341, %342 in 0 : vector<1x8x8xf32>, vector<1x8x8xf32>, vector<1x8x8xf32>, vector<1x8x8xf32> -> vector<4x8x8xf32>
    %344 = arith.truncf %343 : vector<4x8x8xf32> to vector<4x8x8xbf16>
    %345 = vector.extract_strided_slice %334 {offsets = [0, 32], sizes = [8, 8], strides = [1, 1]} : vector<8x96xf32> to vector<8x8xf32>
    %346 = vector.extract_strided_slice %334 {offsets = [0, 40], sizes = [8, 8], strides = [1, 1]} : vector<8x96xf32> to vector<8x8xf32>
    %347 = vector.extract_strided_slice %334 {offsets = [0, 48], sizes = [8, 8], strides = [1, 1]} : vector<8x96xf32> to vector<8x8xf32>
    %348 = vector.extract_strided_slice %334 {offsets = [0, 56], sizes = [8, 8], strides = [1, 1]} : vector<8x96xf32> to vector<8x8xf32>
    %349 = vector.shape_cast %345 : vector<8x8xf32> to vector<1x8x8xf32>
    %350 = vector.shape_cast %346 : vector<8x8xf32> to vector<1x8x8xf32>
    %351 = vector.shape_cast %347 : vector<8x8xf32> to vector<1x8x8xf32>
    %352 = vector.shape_cast %348 : vector<8x8xf32> to vector<1x8x8xf32>
    %353 = tpu.concatenate %349, %350, %351, %352 in 0 : vector<1x8x8xf32>, vector<1x8x8xf32>, vector<1x8x8xf32>, vector<1x8x8xf32> -> vector<4x8x8xf32>
    %354 = arith.truncf %353 : vector<4x8x8xf32> to vector<4x8x8xbf16>
    %355 = vector.extract_strided_slice %334 {offsets = [0, 64], sizes = [8, 8], strides = [1, 1]} : vector<8x96xf32> to vector<8x8xf32>
    %356 = vector.extract_strided_slice %334 {offsets = [0, 72], sizes = [8, 8], strides = [1, 1]} : vector<8x96xf32> to vector<8x8xf32>
    %357 = vector.extract_strided_slice %334 {offsets = [0, 80], sizes = [8, 8], strides = [1, 1]} : vector<8x96xf32> to vector<8x8xf32>
    %358 = vector.extract_strided_slice %334 {offsets = [0, 88], sizes = [8, 8], strides = [1, 1]} : vector<8x96xf32> to vector<8x8xf32>
    %359 = vector.shape_cast %355 : vector<8x8xf32> to vector<1x8x8xf32>
    %360 = vector.shape_cast %356 : vector<8x8xf32> to vector<1x8x8xf32>
    %361 = vector.shape_cast %357 : vector<8x8xf32> to vector<1x8x8xf32>
    %362 = vector.shape_cast %358 : vector<8x8xf32> to vector<1x8x8xf32>
    %363 = tpu.concatenate %359, %360, %361, %362 in 0 : vector<1x8x8xf32>, vector<1x8x8xf32>, vector<1x8x8xf32>, vector<1x8x8xf32> -> vector<4x8x8xf32>
    %364 = arith.truncf %363 : vector<4x8x8xf32> to vector<4x8x8xbf16>
    "tpu.trace_start"() <{level = 10 : i32, message = "hqd,hkd->hqk"}> : () -> ()
    %cst_82 = arith.constant dense<0.000000e+00> : vector<4x8x8xf32>
    %365 = tpu.matmul %344, %354, %cst_82 {dimension_numbers = #tpu.dot_dimension_numbers<[2], [2], [1], [1], [0, 0, 0, 1, 1, 1], [0], [0]>} : vector<4x8x8xbf16>, vector<4x8x8xbf16>, vector<4x8x8xf32> -> vector<4x8x8xf32>
    "tpu.trace_stop"() : () -> ()
    %cst_83 = arith.constant 0.353553385 : f32
    %366 = vector.broadcast %cst_83 : f32 to vector<4x8x8xf32>
    %367 = arith.mulf %365, %366 : vector<4x8x8xf32>
    %368 = vector.broadcast %15 : vector<1x1x8xf32> to vector<4x8x8xf32>
    %369 = arith.addf %367, %368 : vector<4x8x8xf32>
    %cst_84 = arith.constant dense<0xFF800000> : vector<4x8xf32>
    %370 = vector.multi_reduction <maximumf>, %369, %cst_84 [2] : vector<4x8x8xf32> to vector<4x8xf32>
    %371 = vector.shape_cast %370 : vector<4x8xf32> to vector<4x8x1xf32>
    %372 = vector.broadcast %371 : vector<4x8x1xf32> to vector<4x8x8xf32>
    %373 = arith.subf %369, %372 : vector<4x8x8xf32>
    %374 = math.exp %373 : vector<4x8x8xf32>
    %cst_85 = arith.constant dense<0.000000e+00> : vector<4x8xf32>
    %375 = vector.multi_reduction <add>, %374, %cst_85 [2] : vector<4x8x8xf32> to vector<4x8xf32>
    %376 = vector.shape_cast %375 : vector<4x8xf32> to vector<4x8x1xf32>
    %377 = vector.broadcast %376 : vector<4x8x1xf32> to vector<4x8x8xf32>
    %378 = arith.divf %374, %377 : vector<4x8x8xf32>
    %379 = arith.truncf %378 : vector<4x8x8xf32> to vector<4x8x8xbf16>
    "tpu.trace_start"() <{level = 10 : i32, message = "hqk,hkd->hqd"}> : () -> ()
    %cst_86 = arith.constant dense<0.000000e+00> : vector<4x8x8xf32>
    %380 = tpu.matmul %379, %364, %cst_86 {dimension_numbers = #tpu.dot_dimension_numbers<[2], [1], [1], [2], [0, 0, 0, 1, 1, 2], [0], [0]>} : vector<4x8x8xbf16>, vector<4x8x8xbf16>, vector<4x8x8xf32> -> vector<4x8x8xf32>
    "tpu.trace_stop"() : () -> ()
    %381 = vector.extract_strided_slice %380 {offsets = [0, 0, 0], sizes = [1, 8, 8], strides = [1, 1, 1]} : vector<4x8x8xf32> to vector<1x8x8xf32>
    %382 = vector.shape_cast %381 : vector<1x8x8xf32> to vector<8x8xf32>
    %383 = vector.extract_strided_slice %380 {offsets = [1, 0, 0], sizes = [1, 8, 8], strides = [1, 1, 1]} : vector<4x8x8xf32> to vector<1x8x8xf32>
    %384 = vector.shape_cast %383 : vector<1x8x8xf32> to vector<8x8xf32>
    %385 = vector.extract_strided_slice %380 {offsets = [2, 0, 0], sizes = [1, 8, 8], strides = [1, 1, 1]} : vector<4x8x8xf32> to vector<1x8x8xf32>
    %386 = vector.shape_cast %385 : vector<1x8x8xf32> to vector<8x8xf32>
    %387 = vector.extract_strided_slice %380 {offsets = [3, 0, 0], sizes = [1, 8, 8], strides = [1, 1, 1]} : vector<4x8x8xf32> to vector<1x8x8xf32>
    %388 = vector.shape_cast %387 : vector<1x8x8xf32> to vector<8x8xf32>
    %389 = tpu.concatenate %382, %384, %386, %388 in 1 : vector<8x8xf32>, vector<8x8xf32>, vector<8x8xf32>, vector<8x8xf32> -> vector<8x32xf32>
    %390 = tpu.concatenate %333, %389 in 0 : vector<8x32xf32>, vector<8x32xf32> -> vector<16x32xf32>
    %c1_87 = arith.constant 1 : index
    %c0_88 = arith.constant 0 : index
    %c0_89 = arith.constant 0 : index
    %391 = vector.load %arg8[%c1_87, %c0_88, %c0_89] : memref<2x32x32xbf16, #tpu.memory_space<vmem>>, vector<1x32x32xbf16>
    %392 = vector.shape_cast %391 : vector<1x32x32xbf16> to vector<32x32xbf16>
    %393 = arith.truncf %390 : vector<16x32xf32> to vector<16x32xbf16>
    %cst_90 = arith.constant dense<0.000000e+00> : vector<16x32xf32>
    %394 = tpu.matmul %393, %392, %cst_90 {dimension_numbers = #tpu.dot_dimension_numbers<[1], [0], [0], [1], [0, 0, 1, 1], [], []>} : vector<16x32xbf16>, vector<32x32xbf16>, vector<16x32xf32> -> vector<16x32xf32>
    %395 = vector.broadcast %265 : vector<1x32xf32> to vector<16x32xf32>
    %396 = arith.addf %394, %395 : vector<16x32xf32>
    %397 = arith.addf %261, %396 : vector<16x32xf32>
    %cst_91 = arith.constant dense<0.000000e+00> : vector<16xf32>
    %398 = vector.multi_reduction <add>, %397, %cst_91 [1] : vector<16x32xf32> to vector<16xf32>
    %399 = vector.shape_cast %398 : vector<16xf32> to vector<16x1xf32>
    %cst_92 = arith.constant 3.200000e+01 : f32
    %400 = vector.broadcast %cst_92 : f32 to vector<16x1xf32>
    %401 = arith.divf %399, %400 : vector<16x1xf32>
    %402 = vector.broadcast %401 : vector<16x1xf32> to vector<16x32xf32>
    %403 = arith.subf %397, %402 : vector<16x32xf32>
    %404 = arith.mulf %403, %403 : vector<16x32xf32>
    %cst_93 = arith.constant dense<0.000000e+00> : vector<16xf32>
    %405 = vector.multi_reduction <add>, %404, %cst_93 [1] : vector<16x32xf32> to vector<16xf32>
    %406 = vector.shape_cast %405 : vector<16xf32> to vector<16x1xf32>
    %cst_94 = arith.constant 3.200000e+01 : f32
    %407 = vector.broadcast %cst_94 : f32 to vector<16x1xf32>
    %408 = arith.divf %406, %407 : vector<16x1xf32>
    %409 = vector.broadcast %401 : vector<16x1xf32> to vector<16x32xf32>
    %410 = arith.subf %397, %409 : vector<16x32xf32>
    %cst_95 = arith.constant 9.99999974E-6 : f32
    %411 = vector.broadcast %cst_95 : f32 to vector<16x1xf32>
    %412 = arith.addf %408, %411 : vector<16x1xf32>
    %413 = math.rsqrt %412 : vector<16x1xf32>
    %414 = vector.broadcast %413 : vector<16x1xf32> to vector<16x32xf32>
    %415 = arith.mulf %410, %414 : vector<16x32xf32>
    %416 = vector.broadcast %266 : vector<1x32xf32> to vector<16x32xf32>
    %417 = arith.mulf %415, %416 : vector<16x32xf32>
    %418 = vector.broadcast %267 : vector<1x32xf32> to vector<16x32xf32>
    %419 = arith.addf %417, %418 : vector<16x32xf32>
    %c1_96 = arith.constant 1 : index
    %c0_97 = arith.constant 0 : index
    %c0_98 = arith.constant 0 : index
    %420 = vector.load %arg9[%c1_96, %c0_97, %c0_98] : memref<2x32x64xbf16, #tpu.memory_space<vmem>>, vector<1x32x64xbf16>
    %421 = vector.shape_cast %420 : vector<1x32x64xbf16> to vector<32x64xbf16>
    %422 = arith.truncf %419 : vector<16x32xf32> to vector<16x32xbf16>
    %cst_99 = arith.constant dense<0.000000e+00> : vector<16x64xf32>
    %423 = tpu.matmul %422, %421, %cst_99 {dimension_numbers = #tpu.dot_dimension_numbers<[1], [0], [0], [1], [0, 0, 1, 1], [], []>} : vector<16x32xbf16>, vector<32x64xbf16>, vector<16x64xf32> -> vector<16x64xf32>
    %424 = vector.broadcast %268 : vector<1x64xf32> to vector<16x64xf32>
    %425 = arith.addf %423, %424 : vector<16x64xf32>
    %cst_100 = arith.constant 0.000000e+00 : f32
    %426 = vector.broadcast %cst_100 : f32 to vector<16x64xf32>
    %427 = arith.maximumf %425, %426 : vector<16x64xf32>
    %c1_101 = arith.constant 1 : index
    %c0_102 = arith.constant 0 : index
    %c0_103 = arith.constant 0 : index
    %428 = vector.load %arg10[%c1_101, %c0_102, %c0_103] : memref<2x64x32xbf16, #tpu.memory_space<vmem>>, vector<1x64x32xbf16>
    %429 = vector.shape_cast %428 : vector<1x64x32xbf16> to vector<64x32xbf16>
    %430 = arith.truncf %427 : vector<16x64xf32> to vector<16x64xbf16>
    %cst_104 = arith.constant dense<0.000000e+00> : vector<16x32xf32>
    %431 = tpu.matmul %430, %429, %cst_104 {dimension_numbers = #tpu.dot_dimension_numbers<[1], [0], [0], [1], [0, 0, 1, 1], [], []>} : vector<16x64xbf16>, vector<64x32xbf16>, vector<16x32xf32> -> vector<16x32xf32>
    %432 = vector.broadcast %269 : vector<1x32xf32> to vector<16x32xf32>
    %433 = arith.addf %431, %432 : vector<16x32xf32>
    %434 = arith.addf %419, %433 : vector<16x32xf32>
    %cst_105 = arith.constant dense<0.000000e+00> : vector<16xf32>
    %435 = vector.multi_reduction <add>, %434, %cst_105 [1] : vector<16x32xf32> to vector<16xf32>
    %436 = vector.shape_cast %435 : vector<16xf32> to vector<16x1xf32>
    %cst_106 = arith.constant 3.200000e+01 : f32
    %437 = vector.broadcast %cst_106 : f32 to vector<16x1xf32>
    %438 = arith.divf %436, %437 : vector<16x1xf32>
    %439 = vector.broadcast %438 : vector<16x1xf32> to vector<16x32xf32>
    %440 = arith.subf %434, %439 : vector<16x32xf32>
    %441 = arith.mulf %440, %440 : vector<16x32xf32>
    %cst_107 = arith.constant dense<0.000000e+00> : vector<16xf32>
    %442 = vector.multi_reduction <add>, %441, %cst_107 [1] : vector<16x32xf32> to vector<16xf32>
    %443 = vector.shape_cast %442 : vector<16xf32> to vector<16x1xf32>
    %cst_108 = arith.constant 3.200000e+01 : f32
    %444 = vector.broadcast %cst_108 : f32 to vector<16x1xf32>
    %445 = arith.divf %443, %444 : vector<16x1xf32>
    %446 = vector.broadcast %438 : vector<16x1xf32> to vector<16x32xf32>
    %447 = arith.subf %434, %446 : vector<16x32xf32>
    %cst_109 = arith.constant 9.99999974E-6 : f32
    %448 = vector.broadcast %cst_109 : f32 to vector<16x1xf32>
    %449 = arith.addf %445, %448 : vector<16x1xf32>
    %450 = math.rsqrt %449 : vector<16x1xf32>
    %451 = vector.broadcast %450 : vector<16x1xf32> to vector<16x32xf32>
    %452 = arith.mulf %447, %451 : vector<16x32xf32>
    %453 = vector.broadcast %270 : vector<1x32xf32> to vector<16x32xf32>
    %454 = arith.mulf %452, %453 : vector<16x32xf32>
    %455 = vector.broadcast %271 : vector<1x32xf32> to vector<16x32xf32>
    %456 = arith.addf %454, %455 : vector<16x32xf32>
    %c0_110 = arith.constant 0 : index
    %c0_111 = arith.constant 0 : index
    %c0_112 = arith.constant 0 : index
    %457 = vector.load %arg19[%c0_110, %c0_111, %c0_112] : memref<2x13x128xf32, #tpu.memory_space<vmem>>, vector<1x13x128xf32>
    %458 = vector.shape_cast %457 : vector<1x13x128xf32> to vector<13x128xf32>
    %459 = vector.extract_strided_slice %458 {offsets = [0, 0], sizes = [1, 96], strides = [1, 1]} : vector<13x128xf32> to vector<1x96xf32>
    %460 = vector.extract_strided_slice %458 {offsets = [1, 0], sizes = [1, 32], strides = [1, 1]} : vector<13x128xf32> to vector<1x32xf32>
    %461 = vector.extract_strided_slice %458 {offsets = [2, 0], sizes = [1, 32], strides = [1, 1]} : vector<13x128xf32> to vector<1x32xf32>
    %462 = vector.extract_strided_slice %458 {offsets = [3, 0], sizes = [1, 32], strides = [1, 1]} : vector<13x128xf32> to vector<1x32xf32>
    %463 = vector.extract_strided_slice %458 {offsets = [4, 0], sizes = [1, 32], strides = [1, 1]} : vector<13x128xf32> to vector<1x32xf32>
    %464 = vector.extract_strided_slice %458 {offsets = [5, 0], sizes = [1, 64], strides = [1, 1]} : vector<13x128xf32> to vector<1x64xf32>
    %465 = vector.extract_strided_slice %458 {offsets = [6, 0], sizes = [1, 32], strides = [1, 1]} : vector<13x128xf32> to vector<1x32xf32>
    %466 = vector.extract_strided_slice %458 {offsets = [7, 0], sizes = [1, 32], strides = [1, 1]} : vector<13x128xf32> to vector<1x32xf32>
    %467 = vector.extract_strided_slice %458 {offsets = [8, 0], sizes = [1, 32], strides = [1, 1]} : vector<13x128xf32> to vector<1x32xf32>
    %468 = vector.extract_strided_slice %458 {offsets = [9, 0], sizes = [1, 64], strides = [1, 1]} : vector<13x128xf32> to vector<1x64xf32>
    %469 = vector.extract_strided_slice %458 {offsets = [10, 0], sizes = [1, 32], strides = [1, 1]} : vector<13x128xf32> to vector<1x32xf32>
    %470 = vector.extract_strided_slice %458 {offsets = [11, 0], sizes = [1, 32], strides = [1, 1]} : vector<13x128xf32> to vector<1x32xf32>
    %471 = vector.extract_strided_slice %458 {offsets = [12, 0], sizes = [1, 32], strides = [1, 1]} : vector<13x128xf32> to vector<1x32xf32>
    %c0_113 = arith.constant 0 : index
    %c0_114 = arith.constant 0 : index
    %c0_115 = arith.constant 0 : index
    %472 = vector.load %arg12[%c0_113, %c0_114, %c0_115] : memref<2x32x96xbf16, #tpu.memory_space<vmem>>, vector<1x32x96xbf16>
    %473 = vector.shape_cast %472 : vector<1x32x96xbf16> to vector<32x96xbf16>
    %474 = arith.truncf %66 : vector<16x32xf32> to vector<16x32xbf16>
    %cst_116 = arith.constant dense<0.000000e+00> : vector<16x96xf32>
    %475 = tpu.matmul %474, %473, %cst_116 {dimension_numbers = #tpu.dot_dimension_numbers<[1], [0], [0], [1], [0, 0, 1, 1], [], []>} : vector<16x32xbf16>, vector<32x96xbf16>, vector<16x96xf32> -> vector<16x96xf32>
    %476 = vector.broadcast %459 : vector<1x96xf32> to vector<16x96xf32>
    %477 = arith.addf %475, %476 : vector<16x96xf32>
    %478 = vector.extract_strided_slice %477 {offsets = [0, 0], sizes = [8, 96], strides = [1, 1]} : vector<16x96xf32> to vector<8x96xf32>
    %479 = vector.extract_strided_slice %478 {offsets = [0, 0], sizes = [8, 8], strides = [1, 1]} : vector<8x96xf32> to vector<8x8xf32>
    %480 = vector.extract_strided_slice %478 {offsets = [0, 8], sizes = [8, 8], strides = [1, 1]} : vector<8x96xf32> to vector<8x8xf32>
    %481 = vector.extract_strided_slice %478 {offsets = [0, 16], sizes = [8, 8], strides = [1, 1]} : vector<8x96xf32> to vector<8x8xf32>
    %482 = vector.extract_strided_slice %478 {offsets = [0, 24], sizes = [8, 8], strides = [1, 1]} : vector<8x96xf32> to vector<8x8xf32>
    %483 = vector.shape_cast %479 : vector<8x8xf32> to vector<1x8x8xf32>
    %484 = vector.shape_cast %480 : vector<8x8xf32> to vector<1x8x8xf32>
    %485 = vector.shape_cast %481 : vector<8x8xf32> to vector<1x8x8xf32>
    %486 = vector.shape_cast %482 : vector<8x8xf32> to vector<1x8x8xf32>
    %487 = tpu.concatenate %483, %484, %485, %486 in 0 : vector<1x8x8xf32>, vector<1x8x8xf32>, vector<1x8x8xf32>, vector<1x8x8xf32> -> vector<4x8x8xf32>
    %488 = arith.truncf %487 : vector<4x8x8xf32> to vector<4x8x8xbf16>
    %489 = vector.extract_strided_slice %478 {offsets = [0, 32], sizes = [8, 8], strides = [1, 1]} : vector<8x96xf32> to vector<8x8xf32>
    %490 = vector.extract_strided_slice %478 {offsets = [0, 40], sizes = [8, 8], strides = [1, 1]} : vector<8x96xf32> to vector<8x8xf32>
    %491 = vector.extract_strided_slice %478 {offsets = [0, 48], sizes = [8, 8], strides = [1, 1]} : vector<8x96xf32> to vector<8x8xf32>
    %492 = vector.extract_strided_slice %478 {offsets = [0, 56], sizes = [8, 8], strides = [1, 1]} : vector<8x96xf32> to vector<8x8xf32>
    %493 = vector.shape_cast %489 : vector<8x8xf32> to vector<1x8x8xf32>
    %494 = vector.shape_cast %490 : vector<8x8xf32> to vector<1x8x8xf32>
    %495 = vector.shape_cast %491 : vector<8x8xf32> to vector<1x8x8xf32>
    %496 = vector.shape_cast %492 : vector<8x8xf32> to vector<1x8x8xf32>
    %497 = tpu.concatenate %493, %494, %495, %496 in 0 : vector<1x8x8xf32>, vector<1x8x8xf32>, vector<1x8x8xf32>, vector<1x8x8xf32> -> vector<4x8x8xf32>
    %498 = arith.truncf %497 : vector<4x8x8xf32> to vector<4x8x8xbf16>
    %499 = vector.extract_strided_slice %478 {offsets = [0, 64], sizes = [8, 8], strides = [1, 1]} : vector<8x96xf32> to vector<8x8xf32>
    %500 = vector.extract_strided_slice %478 {offsets = [0, 72], sizes = [8, 8], strides = [1, 1]} : vector<8x96xf32> to vector<8x8xf32>
    %501 = vector.extract_strided_slice %478 {offsets = [0, 80], sizes = [8, 8], strides = [1, 1]} : vector<8x96xf32> to vector<8x8xf32>
    %502 = vector.extract_strided_slice %478 {offsets = [0, 88], sizes = [8, 8], strides = [1, 1]} : vector<8x96xf32> to vector<8x8xf32>
    %503 = vector.shape_cast %499 : vector<8x8xf32> to vector<1x8x8xf32>
    %504 = vector.shape_cast %500 : vector<8x8xf32> to vector<1x8x8xf32>
    %505 = vector.shape_cast %501 : vector<8x8xf32> to vector<1x8x8xf32>
    %506 = vector.shape_cast %502 : vector<8x8xf32> to vector<1x8x8xf32>
    %507 = tpu.concatenate %503, %504, %505, %506 in 0 : vector<1x8x8xf32>, vector<1x8x8xf32>, vector<1x8x8xf32>, vector<1x8x8xf32> -> vector<4x8x8xf32>
    %508 = arith.truncf %507 : vector<4x8x8xf32> to vector<4x8x8xbf16>
    "tpu.trace_start"() <{level = 10 : i32, message = "hqd,hkd->hqk"}> : () -> ()
    %cst_117 = arith.constant dense<0.000000e+00> : vector<4x8x8xf32>
    %509 = tpu.matmul %488, %498, %cst_117 {dimension_numbers = #tpu.dot_dimension_numbers<[2], [2], [1], [1], [0, 0, 0, 1, 1, 1], [0], [0]>} : vector<4x8x8xbf16>, vector<4x8x8xbf16>, vector<4x8x8xf32> -> vector<4x8x8xf32>
    "tpu.trace_stop"() : () -> ()
    %cst_118 = arith.constant 0.353553385 : f32
    %510 = vector.broadcast %cst_118 : f32 to vector<4x8x8xf32>
    %511 = arith.mulf %509, %510 : vector<4x8x8xf32>
    %512 = vector.broadcast %32 : vector<1x8x8xf32> to vector<4x8x8xf32>
    %513 = arith.addf %511, %512 : vector<4x8x8xf32>
    %cst_119 = arith.constant dense<0xFF800000> : vector<4x8xf32>
    %514 = vector.multi_reduction <maximumf>, %513, %cst_119 [2] : vector<4x8x8xf32> to vector<4x8xf32>
    %515 = vector.shape_cast %514 : vector<4x8xf32> to vector<4x8x1xf32>
    %516 = vector.broadcast %515 : vector<4x8x1xf32> to vector<4x8x8xf32>
    %517 = arith.subf %513, %516 : vector<4x8x8xf32>
    %518 = math.exp %517 : vector<4x8x8xf32>
    %cst_120 = arith.constant dense<0.000000e+00> : vector<4x8xf32>
    %519 = vector.multi_reduction <add>, %518, %cst_120 [2] : vector<4x8x8xf32> to vector<4x8xf32>
    %520 = vector.shape_cast %519 : vector<4x8xf32> to vector<4x8x1xf32>
    %521 = vector.broadcast %520 : vector<4x8x1xf32> to vector<4x8x8xf32>
    %522 = arith.divf %518, %521 : vector<4x8x8xf32>
    %523 = arith.truncf %522 : vector<4x8x8xf32> to vector<4x8x8xbf16>
    "tpu.trace_start"() <{level = 10 : i32, message = "hqk,hkd->hqd"}> : () -> ()
    %cst_121 = arith.constant dense<0.000000e+00> : vector<4x8x8xf32>
    %524 = tpu.matmul %523, %508, %cst_121 {dimension_numbers = #tpu.dot_dimension_numbers<[2], [1], [1], [2], [0, 0, 0, 1, 1, 2], [0], [0]>} : vector<4x8x8xbf16>, vector<4x8x8xbf16>, vector<4x8x8xf32> -> vector<4x8x8xf32>
    "tpu.trace_stop"() : () -> ()
    %525 = vector.extract_strided_slice %524 {offsets = [0, 0, 0], sizes = [1, 8, 8], strides = [1, 1, 1]} : vector<4x8x8xf32> to vector<1x8x8xf32>
    %526 = vector.shape_cast %525 : vector<1x8x8xf32> to vector<8x8xf32>
    %527 = vector.extract_strided_slice %524 {offsets = [1, 0, 0], sizes = [1, 8, 8], strides = [1, 1, 1]} : vector<4x8x8xf32> to vector<1x8x8xf32>
    %528 = vector.shape_cast %527 : vector<1x8x8xf32> to vector<8x8xf32>
    %529 = vector.extract_strided_slice %524 {offsets = [2, 0, 0], sizes = [1, 8, 8], strides = [1, 1, 1]} : vector<4x8x8xf32> to vector<1x8x8xf32>
    %530 = vector.shape_cast %529 : vector<1x8x8xf32> to vector<8x8xf32>
    %531 = vector.extract_strided_slice %524 {offsets = [3, 0, 0], sizes = [1, 8, 8], strides = [1, 1, 1]} : vector<4x8x8xf32> to vector<1x8x8xf32>
    %532 = vector.shape_cast %531 : vector<1x8x8xf32> to vector<8x8xf32>
    %533 = tpu.concatenate %526, %528, %530, %532 in 1 : vector<8x8xf32>, vector<8x8xf32>, vector<8x8xf32>, vector<8x8xf32> -> vector<8x32xf32>
    %534 = vector.extract_strided_slice %477 {offsets = [8, 0], sizes = [8, 96], strides = [1, 1]} : vector<16x96xf32> to vector<8x96xf32>
    %535 = vector.extract_strided_slice %534 {offsets = [0, 0], sizes = [8, 8], strides = [1, 1]} : vector<8x96xf32> to vector<8x8xf32>
    %536 = vector.extract_strided_slice %534 {offsets = [0, 8], sizes = [8, 8], strides = [1, 1]} : vector<8x96xf32> to vector<8x8xf32>
    %537 = vector.extract_strided_slice %534 {offsets = [0, 16], sizes = [8, 8], strides = [1, 1]} : vector<8x96xf32> to vector<8x8xf32>
    %538 = vector.extract_strided_slice %534 {offsets = [0, 24], sizes = [8, 8], strides = [1, 1]} : vector<8x96xf32> to vector<8x8xf32>
    %539 = vector.shape_cast %535 : vector<8x8xf32> to vector<1x8x8xf32>
    %540 = vector.shape_cast %536 : vector<8x8xf32> to vector<1x8x8xf32>
    %541 = vector.shape_cast %537 : vector<8x8xf32> to vector<1x8x8xf32>
    %542 = vector.shape_cast %538 : vector<8x8xf32> to vector<1x8x8xf32>
    %543 = tpu.concatenate %539, %540, %541, %542 in 0 : vector<1x8x8xf32>, vector<1x8x8xf32>, vector<1x8x8xf32>, vector<1x8x8xf32> -> vector<4x8x8xf32>
    %544 = arith.truncf %543 : vector<4x8x8xf32> to vector<4x8x8xbf16>
    %545 = vector.extract_strided_slice %534 {offsets = [0, 32], sizes = [8, 8], strides = [1, 1]} : vector<8x96xf32> to vector<8x8xf32>
    %546 = vector.extract_strided_slice %534 {offsets = [0, 40], sizes = [8, 8], strides = [1, 1]} : vector<8x96xf32> to vector<8x8xf32>
    %547 = vector.extract_strided_slice %534 {offsets = [0, 48], sizes = [8, 8], strides = [1, 1]} : vector<8x96xf32> to vector<8x8xf32>
    %548 = vector.extract_strided_slice %534 {offsets = [0, 56], sizes = [8, 8], strides = [1, 1]} : vector<8x96xf32> to vector<8x8xf32>
    %549 = vector.shape_cast %545 : vector<8x8xf32> to vector<1x8x8xf32>
    %550 = vector.shape_cast %546 : vector<8x8xf32> to vector<1x8x8xf32>
    %551 = vector.shape_cast %547 : vector<8x8xf32> to vector<1x8x8xf32>
    %552 = vector.shape_cast %548 : vector<8x8xf32> to vector<1x8x8xf32>
    %553 = tpu.concatenate %549, %550, %551, %552 in 0 : vector<1x8x8xf32>, vector<1x8x8xf32>, vector<1x8x8xf32>, vector<1x8x8xf32> -> vector<4x8x8xf32>
    %554 = arith.truncf %553 : vector<4x8x8xf32> to vector<4x8x8xbf16>
    %555 = vector.extract_strided_slice %534 {offsets = [0, 64], sizes = [8, 8], strides = [1, 1]} : vector<8x96xf32> to vector<8x8xf32>
    %556 = vector.extract_strided_slice %534 {offsets = [0, 72], sizes = [8, 8], strides = [1, 1]} : vector<8x96xf32> to vector<8x8xf32>
    %557 = vector.extract_strided_slice %534 {offsets = [0, 80], sizes = [8, 8], strides = [1, 1]} : vector<8x96xf32> to vector<8x8xf32>
    %558 = vector.extract_strided_slice %534 {offsets = [0, 88], sizes = [8, 8], strides = [1, 1]} : vector<8x96xf32> to vector<8x8xf32>
    %559 = vector.shape_cast %555 : vector<8x8xf32> to vector<1x8x8xf32>
    %560 = vector.shape_cast %556 : vector<8x8xf32> to vector<1x8x8xf32>
    %561 = vector.shape_cast %557 : vector<8x8xf32> to vector<1x8x8xf32>
    %562 = vector.shape_cast %558 : vector<8x8xf32> to vector<1x8x8xf32>
    %563 = tpu.concatenate %559, %560, %561, %562 in 0 : vector<1x8x8xf32>, vector<1x8x8xf32>, vector<1x8x8xf32>, vector<1x8x8xf32> -> vector<4x8x8xf32>
    %564 = arith.truncf %563 : vector<4x8x8xf32> to vector<4x8x8xbf16>
    "tpu.trace_start"() <{level = 10 : i32, message = "hqd,hkd->hqk"}> : () -> ()
    %cst_122 = arith.constant dense<0.000000e+00> : vector<4x8x8xf32>
    %565 = tpu.matmul %544, %554, %cst_122 {dimension_numbers = #tpu.dot_dimension_numbers<[2], [2], [1], [1], [0, 0, 0, 1, 1, 1], [0], [0]>} : vector<4x8x8xbf16>, vector<4x8x8xbf16>, vector<4x8x8xf32> -> vector<4x8x8xf32>
    "tpu.trace_stop"() : () -> ()
    %cst_123 = arith.constant 0.353553385 : f32
    %566 = vector.broadcast %cst_123 : f32 to vector<4x8x8xf32>
    %567 = arith.mulf %565, %566 : vector<4x8x8xf32>
    %568 = vector.broadcast %41 : vector<1x8x8xf32> to vector<4x8x8xf32>
    %569 = arith.addf %567, %568 : vector<4x8x8xf32>
    %cst_124 = arith.constant dense<0xFF800000> : vector<4x8xf32>
    %570 = vector.multi_reduction <maximumf>, %569, %cst_124 [2] : vector<4x8x8xf32> to vector<4x8xf32>
    %571 = vector.shape_cast %570 : vector<4x8xf32> to vector<4x8x1xf32>
    %572 = vector.broadcast %571 : vector<4x8x1xf32> to vector<4x8x8xf32>
    %573 = arith.subf %569, %572 : vector<4x8x8xf32>
    %574 = math.exp %573 : vector<4x8x8xf32>
    %cst_125 = arith.constant dense<0.000000e+00> : vector<4x8xf32>
    %575 = vector.multi_reduction <add>, %574, %cst_125 [2] : vector<4x8x8xf32> to vector<4x8xf32>
    %576 = vector.shape_cast %575 : vector<4x8xf32> to vector<4x8x1xf32>
    %577 = vector.broadcast %576 : vector<4x8x1xf32> to vector<4x8x8xf32>
    %578 = arith.divf %574, %577 : vector<4x8x8xf32>
    %579 = arith.truncf %578 : vector<4x8x8xf32> to vector<4x8x8xbf16>
    "tpu.trace_start"() <{level = 10 : i32, message = "hqk,hkd->hqd"}> : () -> ()
    %cst_126 = arith.constant dense<0.000000e+00> : vector<4x8x8xf32>
    %580 = tpu.matmul %579, %564, %cst_126 {dimension_numbers = #tpu.dot_dimension_numbers<[2], [1], [1], [2], [0, 0, 0, 1, 1, 2], [0], [0]>} : vector<4x8x8xbf16>, vector<4x8x8xbf16>, vector<4x8x8xf32> -> vector<4x8x8xf32>
    "tpu.trace_stop"() : () -> ()
    %581 = vector.extract_strided_slice %580 {offsets = [0, 0, 0], sizes = [1, 8, 8], strides = [1, 1, 1]} : vector<4x8x8xf32> to vector<1x8x8xf32>
    %582 = vector.shape_cast %581 : vector<1x8x8xf32> to vector<8x8xf32>
    %583 = vector.extract_strided_slice %580 {offsets = [1, 0, 0], sizes = [1, 8, 8], strides = [1, 1, 1]} : vector<4x8x8xf32> to vector<1x8x8xf32>
    %584 = vector.shape_cast %583 : vector<1x8x8xf32> to vector<8x8xf32>
    %585 = vector.extract_strided_slice %580 {offsets = [2, 0, 0], sizes = [1, 8, 8], strides = [1, 1, 1]} : vector<4x8x8xf32> to vector<1x8x8xf32>
    %586 = vector.shape_cast %585 : vector<1x8x8xf32> to vector<8x8xf32>
    %587 = vector.extract_strided_slice %580 {offsets = [3, 0, 0], sizes = [1, 8, 8], strides = [1, 1, 1]} : vector<4x8x8xf32> to vector<1x8x8xf32>
    %588 = vector.shape_cast %587 : vector<1x8x8xf32> to vector<8x8xf32>
    %589 = tpu.concatenate %582, %584, %586, %588 in 1 : vector<8x8xf32>, vector<8x8xf32>, vector<8x8xf32>, vector<8x8xf32> -> vector<8x32xf32>
    %590 = tpu.concatenate %533, %589 in 0 : vector<8x32xf32>, vector<8x32xf32> -> vector<16x32xf32>
    %c0_127 = arith.constant 0 : index
    %c0_128 = arith.constant 0 : index
    %c0_129 = arith.constant 0 : index
    %591 = vector.load %arg13[%c0_127, %c0_128, %c0_129] : memref<2x32x32xbf16, #tpu.memory_space<vmem>>, vector<1x32x32xbf16>
    %592 = vector.shape_cast %591 : vector<1x32x32xbf16> to vector<32x32xbf16>
    %593 = arith.truncf %590 : vector<16x32xf32> to vector<16x32xbf16>
    %cst_130 = arith.constant dense<0.000000e+00> : vector<16x32xf32>
    %594 = tpu.matmul %593, %592, %cst_130 {dimension_numbers = #tpu.dot_dimension_numbers<[1], [0], [0], [1], [0, 0, 1, 1], [], []>} : vector<16x32xbf16>, vector<32x32xbf16>, vector<16x32xf32> -> vector<16x32xf32>
    %595 = vector.broadcast %460 : vector<1x32xf32> to vector<16x32xf32>
    %596 = arith.addf %594, %595 : vector<16x32xf32>
    %597 = arith.addf %66, %596 : vector<16x32xf32>
    %cst_131 = arith.constant dense<0.000000e+00> : vector<16xf32>
    %598 = vector.multi_reduction <add>, %597, %cst_131 [1] : vector<16x32xf32> to vector<16xf32>
    %599 = vector.shape_cast %598 : vector<16xf32> to vector<16x1xf32>
    %cst_132 = arith.constant 3.200000e+01 : f32
    %600 = vector.broadcast %cst_132 : f32 to vector<16x1xf32>
    %601 = arith.divf %599, %600 : vector<16x1xf32>
    %602 = vector.broadcast %601 : vector<16x1xf32> to vector<16x32xf32>
    %603 = arith.subf %597, %602 : vector<16x32xf32>
    %604 = arith.mulf %603, %603 : vector<16x32xf32>
    %cst_133 = arith.constant dense<0.000000e+00> : vector<16xf32>
    %605 = vector.multi_reduction <add>, %604, %cst_133 [1] : vector<16x32xf32> to vector<16xf32>
    %606 = vector.shape_cast %605 : vector<16xf32> to vector<16x1xf32>
    %cst_134 = arith.constant 3.200000e+01 : f32
    %607 = vector.broadcast %cst_134 : f32 to vector<16x1xf32>
    %608 = arith.divf %606, %607 : vector<16x1xf32>
    %609 = vector.broadcast %601 : vector<16x1xf32> to vector<16x32xf32>
    %610 = arith.subf %597, %609 : vector<16x32xf32>
    %cst_135 = arith.constant 9.99999974E-6 : f32
    %611 = vector.broadcast %cst_135 : f32 to vector<16x1xf32>
    %612 = arith.addf %608, %611 : vector<16x1xf32>
    %613 = math.rsqrt %612 : vector<16x1xf32>
    %614 = vector.broadcast %613 : vector<16x1xf32> to vector<16x32xf32>
    %615 = arith.mulf %610, %614 : vector<16x32xf32>
    %616 = vector.broadcast %461 : vector<1x32xf32> to vector<16x32xf32>
    %617 = arith.mulf %615, %616 : vector<16x32xf32>
    %618 = vector.broadcast %462 : vector<1x32xf32> to vector<16x32xf32>
    %619 = arith.addf %617, %618 : vector<16x32xf32>
    %c0_136 = arith.constant 0 : index
    %c0_137 = arith.constant 0 : index
    %c0_138 = arith.constant 0 : index
    %620 = vector.load %arg14[%c0_136, %c0_137, %c0_138] : memref<2x32x32xbf16, #tpu.memory_space<vmem>>, vector<1x32x32xbf16>
    %621 = vector.shape_cast %620 : vector<1x32x32xbf16> to vector<32x32xbf16>
    %622 = arith.truncf %619 : vector<16x32xf32> to vector<16x32xbf16>
    %cst_139 = arith.constant dense<0.000000e+00> : vector<16x32xf32>
    %623 = tpu.matmul %622, %621, %cst_139 {dimension_numbers = #tpu.dot_dimension_numbers<[1], [0], [0], [1], [0, 0, 1, 1], [], []>} : vector<16x32xbf16>, vector<32x32xbf16>, vector<16x32xf32> -> vector<16x32xf32>
    %624 = vector.broadcast %463 : vector<1x32xf32> to vector<16x32xf32>
    %625 = arith.addf %623, %624 : vector<16x32xf32>
    %c0_140 = arith.constant 0 : index
    %c0_141 = arith.constant 0 : index
    %c0_142 = arith.constant 0 : index
    %626 = vector.load %arg15[%c0_140, %c0_141, %c0_142] : memref<2x32x64xbf16, #tpu.memory_space<vmem>>, vector<1x32x64xbf16>
    %627 = vector.shape_cast %626 : vector<1x32x64xbf16> to vector<32x64xbf16>
    %628 = arith.truncf %456 : vector<16x32xf32> to vector<16x32xbf16>
    %cst_143 = arith.constant dense<0.000000e+00> : vector<16x64xf32>
    %629 = tpu.matmul %628, %627, %cst_143 {dimension_numbers = #tpu.dot_dimension_numbers<[1], [0], [0], [1], [0, 0, 1, 1], [], []>} : vector<16x32xbf16>, vector<32x64xbf16>, vector<16x64xf32> -> vector<16x64xf32>
    %630 = vector.broadcast %464 : vector<1x64xf32> to vector<16x64xf32>
    %631 = arith.addf %629, %630 : vector<16x64xf32>
    %632 = vector.extract_strided_slice %625 {offsets = [0, 0], sizes = [8, 32], strides = [1, 1]} : vector<16x32xf32> to vector<8x32xf32>
    %633 = vector.extract_strided_slice %631 {offsets = [0, 0], sizes = [8, 64], strides = [1, 1]} : vector<16x64xf32> to vector<8x64xf32>
    %634 = vector.extract_strided_slice %632 {offsets = [0, 0], sizes = [8, 8], strides = [1, 1]} : vector<8x32xf32> to vector<8x8xf32>
    %635 = vector.extract_strided_slice %632 {offsets = [0, 8], sizes = [8, 8], strides = [1, 1]} : vector<8x32xf32> to vector<8x8xf32>
    %636 = vector.extract_strided_slice %632 {offsets = [0, 16], sizes = [8, 8], strides = [1, 1]} : vector<8x32xf32> to vector<8x8xf32>
    %637 = vector.extract_strided_slice %632 {offsets = [0, 24], sizes = [8, 8], strides = [1, 1]} : vector<8x32xf32> to vector<8x8xf32>
    %638 = vector.shape_cast %634 : vector<8x8xf32> to vector<1x8x8xf32>
    %639 = vector.shape_cast %635 : vector<8x8xf32> to vector<1x8x8xf32>
    %640 = vector.shape_cast %636 : vector<8x8xf32> to vector<1x8x8xf32>
    %641 = vector.shape_cast %637 : vector<8x8xf32> to vector<1x8x8xf32>
    %642 = tpu.concatenate %638, %639, %640, %641 in 0 : vector<1x8x8xf32>, vector<1x8x8xf32>, vector<1x8x8xf32>, vector<1x8x8xf32> -> vector<4x8x8xf32>
    %643 = arith.truncf %642 : vector<4x8x8xf32> to vector<4x8x8xbf16>
    %644 = vector.extract_strided_slice %633 {offsets = [0, 0], sizes = [8, 8], strides = [1, 1]} : vector<8x64xf32> to vector<8x8xf32>
    %645 = vector.extract_strided_slice %633 {offsets = [0, 8], sizes = [8, 8], strides = [1, 1]} : vector<8x64xf32> to vector<8x8xf32>
    %646 = vector.extract_strided_slice %633 {offsets = [0, 16], sizes = [8, 8], strides = [1, 1]} : vector<8x64xf32> to vector<8x8xf32>
    %647 = vector.extract_strided_slice %633 {offsets = [0, 24], sizes = [8, 8], strides = [1, 1]} : vector<8x64xf32> to vector<8x8xf32>
    %648 = vector.shape_cast %644 : vector<8x8xf32> to vector<1x8x8xf32>
    %649 = vector.shape_cast %645 : vector<8x8xf32> to vector<1x8x8xf32>
    %650 = vector.shape_cast %646 : vector<8x8xf32> to vector<1x8x8xf32>
    %651 = vector.shape_cast %647 : vector<8x8xf32> to vector<1x8x8xf32>
    %652 = tpu.concatenate %648, %649, %650, %651 in 0 : vector<1x8x8xf32>, vector<1x8x8xf32>, vector<1x8x8xf32>, vector<1x8x8xf32> -> vector<4x8x8xf32>
    %653 = arith.truncf %652 : vector<4x8x8xf32> to vector<4x8x8xbf16>
    %654 = vector.extract_strided_slice %633 {offsets = [0, 32], sizes = [8, 8], strides = [1, 1]} : vector<8x64xf32> to vector<8x8xf32>
    %655 = vector.extract_strided_slice %633 {offsets = [0, 40], sizes = [8, 8], strides = [1, 1]} : vector<8x64xf32> to vector<8x8xf32>
    %656 = vector.extract_strided_slice %633 {offsets = [0, 48], sizes = [8, 8], strides = [1, 1]} : vector<8x64xf32> to vector<8x8xf32>
    %657 = vector.extract_strided_slice %633 {offsets = [0, 56], sizes = [8, 8], strides = [1, 1]} : vector<8x64xf32> to vector<8x8xf32>
    %658 = vector.shape_cast %654 : vector<8x8xf32> to vector<1x8x8xf32>
    %659 = vector.shape_cast %655 : vector<8x8xf32> to vector<1x8x8xf32>
    %660 = vector.shape_cast %656 : vector<8x8xf32> to vector<1x8x8xf32>
    %661 = vector.shape_cast %657 : vector<8x8xf32> to vector<1x8x8xf32>
    %662 = tpu.concatenate %658, %659, %660, %661 in 0 : vector<1x8x8xf32>, vector<1x8x8xf32>, vector<1x8x8xf32>, vector<1x8x8xf32> -> vector<4x8x8xf32>
    %663 = arith.truncf %662 : vector<4x8x8xf32> to vector<4x8x8xbf16>
    "tpu.trace_start"() <{level = 10 : i32, message = "hqd,hkd->hqk"}> : () -> ()
    %cst_144 = arith.constant dense<0.000000e+00> : vector<4x8x8xf32>
    %664 = tpu.matmul %643, %653, %cst_144 {dimension_numbers = #tpu.dot_dimension_numbers<[2], [2], [1], [1], [0, 0, 0, 1, 1, 1], [0], [0]>} : vector<4x8x8xbf16>, vector<4x8x8xbf16>, vector<4x8x8xf32> -> vector<4x8x8xf32>
    "tpu.trace_stop"() : () -> ()
    %cst_145 = arith.constant 0.353553385 : f32
    %665 = vector.broadcast %cst_145 : f32 to vector<4x8x8xf32>
    %666 = arith.mulf %664, %665 : vector<4x8x8xf32>
    %667 = vector.broadcast %8 : vector<1x1x8xf32> to vector<4x8x8xf32>
    %668 = arith.addf %666, %667 : vector<4x8x8xf32>
    %cst_146 = arith.constant dense<0xFF800000> : vector<4x8xf32>
    %669 = vector.multi_reduction <maximumf>, %668, %cst_146 [2] : vector<4x8x8xf32> to vector<4x8xf32>
    %670 = vector.shape_cast %669 : vector<4x8xf32> to vector<4x8x1xf32>
    %671 = vector.broadcast %670 : vector<4x8x1xf32> to vector<4x8x8xf32>
    %672 = arith.subf %668, %671 : vector<4x8x8xf32>
    %673 = math.exp %672 : vector<4x8x8xf32>
    %cst_147 = arith.constant dense<0.000000e+00> : vector<4x8xf32>
    %674 = vector.multi_reduction <add>, %673, %cst_147 [2] : vector<4x8x8xf32> to vector<4x8xf32>
    %675 = vector.shape_cast %674 : vector<4x8xf32> to vector<4x8x1xf32>
    %676 = vector.broadcast %675 : vector<4x8x1xf32> to vector<4x8x8xf32>
    %677 = arith.divf %673, %676 : vector<4x8x8xf32>
    %678 = arith.truncf %677 : vector<4x8x8xf32> to vector<4x8x8xbf16>
    "tpu.trace_start"() <{level = 10 : i32, message = "hqk,hkd->hqd"}> : () -> ()
    %cst_148 = arith.constant dense<0.000000e+00> : vector<4x8x8xf32>
    %679 = tpu.matmul %678, %663, %cst_148 {dimension_numbers = #tpu.dot_dimension_numbers<[2], [1], [1], [2], [0, 0, 0, 1, 1, 2], [0], [0]>} : vector<4x8x8xbf16>, vector<4x8x8xbf16>, vector<4x8x8xf32> -> vector<4x8x8xf32>
    "tpu.trace_stop"() : () -> ()
    %680 = vector.extract_strided_slice %679 {offsets = [0, 0, 0], sizes = [1, 8, 8], strides = [1, 1, 1]} : vector<4x8x8xf32> to vector<1x8x8xf32>
    %681 = vector.shape_cast %680 : vector<1x8x8xf32> to vector<8x8xf32>
    %682 = vector.extract_strided_slice %679 {offsets = [1, 0, 0], sizes = [1, 8, 8], strides = [1, 1, 1]} : vector<4x8x8xf32> to vector<1x8x8xf32>
    %683 = vector.shape_cast %682 : vector<1x8x8xf32> to vector<8x8xf32>
    %684 = vector.extract_strided_slice %679 {offsets = [2, 0, 0], sizes = [1, 8, 8], strides = [1, 1, 1]} : vector<4x8x8xf32> to vector<1x8x8xf32>
    %685 = vector.shape_cast %684 : vector<1x8x8xf32> to vector<8x8xf32>
    %686 = vector.extract_strided_slice %679 {offsets = [3, 0, 0], sizes = [1, 8, 8], strides = [1, 1, 1]} : vector<4x8x8xf32> to vector<1x8x8xf32>
    %687 = vector.shape_cast %686 : vector<1x8x8xf32> to vector<8x8xf32>
    %688 = tpu.concatenate %681, %683, %685, %687 in 1 : vector<8x8xf32>, vector<8x8xf32>, vector<8x8xf32>, vector<8x8xf32> -> vector<8x32xf32>
    %689 = vector.extract_strided_slice %625 {offsets = [8, 0], sizes = [8, 32], strides = [1, 1]} : vector<16x32xf32> to vector<8x32xf32>
    %690 = vector.extract_strided_slice %631 {offsets = [8, 0], sizes = [8, 64], strides = [1, 1]} : vector<16x64xf32> to vector<8x64xf32>
    %691 = vector.extract_strided_slice %689 {offsets = [0, 0], sizes = [8, 8], strides = [1, 1]} : vector<8x32xf32> to vector<8x8xf32>
    %692 = vector.extract_strided_slice %689 {offsets = [0, 8], sizes = [8, 8], strides = [1, 1]} : vector<8x32xf32> to vector<8x8xf32>
    %693 = vector.extract_strided_slice %689 {offsets = [0, 16], sizes = [8, 8], strides = [1, 1]} : vector<8x32xf32> to vector<8x8xf32>
    %694 = vector.extract_strided_slice %689 {offsets = [0, 24], sizes = [8, 8], strides = [1, 1]} : vector<8x32xf32> to vector<8x8xf32>
    %695 = vector.shape_cast %691 : vector<8x8xf32> to vector<1x8x8xf32>
    %696 = vector.shape_cast %692 : vector<8x8xf32> to vector<1x8x8xf32>
    %697 = vector.shape_cast %693 : vector<8x8xf32> to vector<1x8x8xf32>
    %698 = vector.shape_cast %694 : vector<8x8xf32> to vector<1x8x8xf32>
    %699 = tpu.concatenate %695, %696, %697, %698 in 0 : vector<1x8x8xf32>, vector<1x8x8xf32>, vector<1x8x8xf32>, vector<1x8x8xf32> -> vector<4x8x8xf32>
    %700 = arith.truncf %699 : vector<4x8x8xf32> to vector<4x8x8xbf16>
    %701 = vector.extract_strided_slice %690 {offsets = [0, 0], sizes = [8, 8], strides = [1, 1]} : vector<8x64xf32> to vector<8x8xf32>
    %702 = vector.extract_strided_slice %690 {offsets = [0, 8], sizes = [8, 8], strides = [1, 1]} : vector<8x64xf32> to vector<8x8xf32>
    %703 = vector.extract_strided_slice %690 {offsets = [0, 16], sizes = [8, 8], strides = [1, 1]} : vector<8x64xf32> to vector<8x8xf32>
    %704 = vector.extract_strided_slice %690 {offsets = [0, 24], sizes = [8, 8], strides = [1, 1]} : vector<8x64xf32> to vector<8x8xf32>
    %705 = vector.shape_cast %701 : vector<8x8xf32> to vector<1x8x8xf32>
    %706 = vector.shape_cast %702 : vector<8x8xf32> to vector<1x8x8xf32>
    %707 = vector.shape_cast %703 : vector<8x8xf32> to vector<1x8x8xf32>
    %708 = vector.shape_cast %704 : vector<8x8xf32> to vector<1x8x8xf32>
    %709 = tpu.concatenate %705, %706, %707, %708 in 0 : vector<1x8x8xf32>, vector<1x8x8xf32>, vector<1x8x8xf32>, vector<1x8x8xf32> -> vector<4x8x8xf32>
    %710 = arith.truncf %709 : vector<4x8x8xf32> to vector<4x8x8xbf16>
    %711 = vector.extract_strided_slice %690 {offsets = [0, 32], sizes = [8, 8], strides = [1, 1]} : vector<8x64xf32> to vector<8x8xf32>
    %712 = vector.extract_strided_slice %690 {offsets = [0, 40], sizes = [8, 8], strides = [1, 1]} : vector<8x64xf32> to vector<8x8xf32>
    %713 = vector.extract_strided_slice %690 {offsets = [0, 48], sizes = [8, 8], strides = [1, 1]} : vector<8x64xf32> to vector<8x8xf32>
    %714 = vector.extract_strided_slice %690 {offsets = [0, 56], sizes = [8, 8], strides = [1, 1]} : vector<8x64xf32> to vector<8x8xf32>
    %715 = vector.shape_cast %711 : vector<8x8xf32> to vector<1x8x8xf32>
    %716 = vector.shape_cast %712 : vector<8x8xf32> to vector<1x8x8xf32>
    %717 = vector.shape_cast %713 : vector<8x8xf32> to vector<1x8x8xf32>
    %718 = vector.shape_cast %714 : vector<8x8xf32> to vector<1x8x8xf32>
    %719 = tpu.concatenate %715, %716, %717, %718 in 0 : vector<1x8x8xf32>, vector<1x8x8xf32>, vector<1x8x8xf32>, vector<1x8x8xf32> -> vector<4x8x8xf32>
    %720 = arith.truncf %719 : vector<4x8x8xf32> to vector<4x8x8xbf16>
    "tpu.trace_start"() <{level = 10 : i32, message = "hqd,hkd->hqk"}> : () -> ()
    %cst_149 = arith.constant dense<0.000000e+00> : vector<4x8x8xf32>
    %721 = tpu.matmul %700, %710, %cst_149 {dimension_numbers = #tpu.dot_dimension_numbers<[2], [2], [1], [1], [0, 0, 0, 1, 1, 1], [0], [0]>} : vector<4x8x8xbf16>, vector<4x8x8xbf16>, vector<4x8x8xf32> -> vector<4x8x8xf32>
    "tpu.trace_stop"() : () -> ()
    %cst_150 = arith.constant 0.353553385 : f32
    %722 = vector.broadcast %cst_150 : f32 to vector<4x8x8xf32>
    %723 = arith.mulf %721, %722 : vector<4x8x8xf32>
    %724 = vector.broadcast %15 : vector<1x1x8xf32> to vector<4x8x8xf32>
    %725 = arith.addf %723, %724 : vector<4x8x8xf32>
    %cst_151 = arith.constant dense<0xFF800000> : vector<4x8xf32>
    %726 = vector.multi_reduction <maximumf>, %725, %cst_151 [2] : vector<4x8x8xf32> to vector<4x8xf32>
    %727 = vector.shape_cast %726 : vector<4x8xf32> to vector<4x8x1xf32>
    %728 = vector.broadcast %727 : vector<4x8x1xf32> to vector<4x8x8xf32>
    %729 = arith.subf %725, %728 : vector<4x8x8xf32>
    %730 = math.exp %729 : vector<4x8x8xf32>
    %cst_152 = arith.constant dense<0.000000e+00> : vector<4x8xf32>
    %731 = vector.multi_reduction <add>, %730, %cst_152 [2] : vector<4x8x8xf32> to vector<4x8xf32>
    %732 = vector.shape_cast %731 : vector<4x8xf32> to vector<4x8x1xf32>
    %733 = vector.broadcast %732 : vector<4x8x1xf32> to vector<4x8x8xf32>
    %734 = arith.divf %730, %733 : vector<4x8x8xf32>
    %735 = arith.truncf %734 : vector<4x8x8xf32> to vector<4x8x8xbf16>
    "tpu.trace_start"() <{level = 10 : i32, message = "hqk,hkd->hqd"}> : () -> ()
    %cst_153 = arith.constant dense<0.000000e+00> : vector<4x8x8xf32>
    %736 = tpu.matmul %735, %720, %cst_153 {dimension_numbers = #tpu.dot_dimension_numbers<[2], [1], [1], [2], [0, 0, 0, 1, 1, 2], [0], [0]>} : vector<4x8x8xbf16>, vector<4x8x8xbf16>, vector<4x8x8xf32> -> vector<4x8x8xf32>
    "tpu.trace_stop"() : () -> ()
    %737 = vector.extract_strided_slice %736 {offsets = [0, 0, 0], sizes = [1, 8, 8], strides = [1, 1, 1]} : vector<4x8x8xf32> to vector<1x8x8xf32>
    %738 = vector.shape_cast %737 : vector<1x8x8xf32> to vector<8x8xf32>
    %739 = vector.extract_strided_slice %736 {offsets = [1, 0, 0], sizes = [1, 8, 8], strides = [1, 1, 1]} : vector<4x8x8xf32> to vector<1x8x8xf32>
    %740 = vector.shape_cast %739 : vector<1x8x8xf32> to vector<8x8xf32>
    %741 = vector.extract_strided_slice %736 {offsets = [2, 0, 0], sizes = [1, 8, 8], strides = [1, 1, 1]} : vector<4x8x8xf32> to vector<1x8x8xf32>
    %742 = vector.shape_cast %741 : vector<1x8x8xf32> to vector<8x8xf32>
    %743 = vector.extract_strided_slice %736 {offsets = [3, 0, 0], sizes = [1, 8, 8], strides = [1, 1, 1]} : vector<4x8x8xf32> to vector<1x8x8xf32>
    %744 = vector.shape_cast %743 : vector<1x8x8xf32> to vector<8x8xf32>
    %745 = tpu.concatenate %738, %740, %742, %744 in 1 : vector<8x8xf32>, vector<8x8xf32>, vector<8x8xf32>, vector<8x8xf32> -> vector<8x32xf32>
    %746 = tpu.concatenate %688, %745 in 0 : vector<8x32xf32>, vector<8x32xf32> -> vector<16x32xf32>
    %c0_154 = arith.constant 0 : index
    %c0_155 = arith.constant 0 : index
    %c0_156 = arith.constant 0 : index
    %747 = vector.load %arg16[%c0_154, %c0_155, %c0_156] : memref<2x32x32xbf16, #tpu.memory_space<vmem>>, vector<1x32x32xbf16>
    %748 = vector.shape_cast %747 : vector<1x32x32xbf16> to vector<32x32xbf16>
    %749 = arith.truncf %746 : vector<16x32xf32> to vector<16x32xbf16>
    %cst_157 = arith.constant dense<0.000000e+00> : vector<16x32xf32>
    %750 = tpu.matmul %749, %748, %cst_157 {dimension_numbers = #tpu.dot_dimension_numbers<[1], [0], [0], [1], [0, 0, 1, 1], [], []>} : vector<16x32xbf16>, vector<32x32xbf16>, vector<16x32xf32> -> vector<16x32xf32>
    %751 = vector.broadcast %465 : vector<1x32xf32> to vector<16x32xf32>
    %752 = arith.addf %750, %751 : vector<16x32xf32>
    %753 = arith.addf %619, %752 : vector<16x32xf32>
    %cst_158 = arith.constant dense<0.000000e+00> : vector<16xf32>
    %754 = vector.multi_reduction <add>, %753, %cst_158 [1] : vector<16x32xf32> to vector<16xf32>
    %755 = vector.shape_cast %754 : vector<16xf32> to vector<16x1xf32>
    %cst_159 = arith.constant 3.200000e+01 : f32
    %756 = vector.broadcast %cst_159 : f32 to vector<16x1xf32>
    %757 = arith.divf %755, %756 : vector<16x1xf32>
    %758 = vector.broadcast %757 : vector<16x1xf32> to vector<16x32xf32>
    %759 = arith.subf %753, %758 : vector<16x32xf32>
    %760 = arith.mulf %759, %759 : vector<16x32xf32>
    %cst_160 = arith.constant dense<0.000000e+00> : vector<16xf32>
    %761 = vector.multi_reduction <add>, %760, %cst_160 [1] : vector<16x32xf32> to vector<16xf32>
    %762 = vector.shape_cast %761 : vector<16xf32> to vector<16x1xf32>
    %cst_161 = arith.constant 3.200000e+01 : f32
    %763 = vector.broadcast %cst_161 : f32 to vector<16x1xf32>
    %764 = arith.divf %762, %763 : vector<16x1xf32>
    %765 = vector.broadcast %757 : vector<16x1xf32> to vector<16x32xf32>
    %766 = arith.subf %753, %765 : vector<16x32xf32>
    %cst_162 = arith.constant 9.99999974E-6 : f32
    %767 = vector.broadcast %cst_162 : f32 to vector<16x1xf32>
    %768 = arith.addf %764, %767 : vector<16x1xf32>
    %769 = math.rsqrt %768 : vector<16x1xf32>
    %770 = vector.broadcast %769 : vector<16x1xf32> to vector<16x32xf32>
    %771 = arith.mulf %766, %770 : vector<16x32xf32>
    %772 = vector.broadcast %466 : vector<1x32xf32> to vector<16x32xf32>
    %773 = arith.mulf %771, %772 : vector<16x32xf32>
    %774 = vector.broadcast %467 : vector<1x32xf32> to vector<16x32xf32>
    %775 = arith.addf %773, %774 : vector<16x32xf32>
    %c0_163 = arith.constant 0 : index
    %c0_164 = arith.constant 0 : index
    %c0_165 = arith.constant 0 : index
    %776 = vector.load %arg17[%c0_163, %c0_164, %c0_165] : memref<2x32x64xbf16, #tpu.memory_space<vmem>>, vector<1x32x64xbf16>
    %777 = vector.shape_cast %776 : vector<1x32x64xbf16> to vector<32x64xbf16>
    %778 = arith.truncf %775 : vector<16x32xf32> to vector<16x32xbf16>
    %cst_166 = arith.constant dense<0.000000e+00> : vector<16x64xf32>
    %779 = tpu.matmul %778, %777, %cst_166 {dimension_numbers = #tpu.dot_dimension_numbers<[1], [0], [0], [1], [0, 0, 1, 1], [], []>} : vector<16x32xbf16>, vector<32x64xbf16>, vector<16x64xf32> -> vector<16x64xf32>
    %780 = vector.broadcast %468 : vector<1x64xf32> to vector<16x64xf32>
    %781 = arith.addf %779, %780 : vector<16x64xf32>
    %cst_167 = arith.constant 0.000000e+00 : f32
    %782 = vector.broadcast %cst_167 : f32 to vector<16x64xf32>
    %783 = arith.maximumf %781, %782 : vector<16x64xf32>
    %c0_168 = arith.constant 0 : index
    %c0_169 = arith.constant 0 : index
    %c0_170 = arith.constant 0 : index
    %784 = vector.load %arg18[%c0_168, %c0_169, %c0_170] : memref<2x64x32xbf16, #tpu.memory_space<vmem>>, vector<1x64x32xbf16>
    %785 = vector.shape_cast %784 : vector<1x64x32xbf16> to vector<64x32xbf16>
    %786 = arith.truncf %783 : vector<16x64xf32> to vector<16x64xbf16>
    %cst_171 = arith.constant dense<0.000000e+00> : vector<16x32xf32>
    %787 = tpu.matmul %786, %785, %cst_171 {dimension_numbers = #tpu.dot_dimension_numbers<[1], [0], [0], [1], [0, 0, 1, 1], [], []>} : vector<16x64xbf16>, vector<64x32xbf16>, vector<16x32xf32> -> vector<16x32xf32>
    %788 = vector.broadcast %469 : vector<1x32xf32> to vector<16x32xf32>
    %789 = arith.addf %787, %788 : vector<16x32xf32>
    %790 = arith.addf %775, %789 : vector<16x32xf32>
    %cst_172 = arith.constant dense<0.000000e+00> : vector<16xf32>
    %791 = vector.multi_reduction <add>, %790, %cst_172 [1] : vector<16x32xf32> to vector<16xf32>
    %792 = vector.shape_cast %791 : vector<16xf32> to vector<16x1xf32>
    %cst_173 = arith.constant 3.200000e+01 : f32
    %793 = vector.broadcast %cst_173 : f32 to vector<16x1xf32>
    %794 = arith.divf %792, %793 : vector<16x1xf32>
    %795 = vector.broadcast %794 : vector<16x1xf32> to vector<16x32xf32>
    %796 = arith.subf %790, %795 : vector<16x32xf32>
    %797 = arith.mulf %796, %796 : vector<16x32xf32>
    %cst_174 = arith.constant dense<0.000000e+00> : vector<16xf32>
    %798 = vector.multi_reduction <add>, %797, %cst_174 [1] : vector<16x32xf32> to vector<16xf32>
    %799 = vector.shape_cast %798 : vector<16xf32> to vector<16x1xf32>
    %cst_175 = arith.constant 3.200000e+01 : f32
    %800 = vector.broadcast %cst_175 : f32 to vector<16x1xf32>
    %801 = arith.divf %799, %800 : vector<16x1xf32>
    %802 = vector.broadcast %794 : vector<16x1xf32> to vector<16x32xf32>
    %803 = arith.subf %790, %802 : vector<16x32xf32>
    %cst_176 = arith.constant 9.99999974E-6 : f32
    %804 = vector.broadcast %cst_176 : f32 to vector<16x1xf32>
    %805 = arith.addf %801, %804 : vector<16x1xf32>
    %806 = math.rsqrt %805 : vector<16x1xf32>
    %807 = vector.broadcast %806 : vector<16x1xf32> to vector<16x32xf32>
    %808 = arith.mulf %803, %807 : vector<16x32xf32>
    %809 = vector.broadcast %470 : vector<1x32xf32> to vector<16x32xf32>
    %810 = arith.mulf %808, %809 : vector<16x32xf32>
    %811 = vector.broadcast %471 : vector<1x32xf32> to vector<16x32xf32>
    %812 = arith.addf %810, %811 : vector<16x32xf32>
    %c1_177 = arith.constant 1 : index
    %c0_178 = arith.constant 0 : index
    %c0_179 = arith.constant 0 : index
    %813 = vector.load %arg19[%c1_177, %c0_178, %c0_179] : memref<2x13x128xf32, #tpu.memory_space<vmem>>, vector<1x13x128xf32>
    %814 = vector.shape_cast %813 : vector<1x13x128xf32> to vector<13x128xf32>
    %815 = vector.extract_strided_slice %814 {offsets = [0, 0], sizes = [1, 96], strides = [1, 1]} : vector<13x128xf32> to vector<1x96xf32>
    %816 = vector.extract_strided_slice %814 {offsets = [1, 0], sizes = [1, 32], strides = [1, 1]} : vector<13x128xf32> to vector<1x32xf32>
    %817 = vector.extract_strided_slice %814 {offsets = [2, 0], sizes = [1, 32], strides = [1, 1]} : vector<13x128xf32> to vector<1x32xf32>
    %818 = vector.extract_strided_slice %814 {offsets = [3, 0], sizes = [1, 32], strides = [1, 1]} : vector<13x128xf32> to vector<1x32xf32>
    %819 = vector.extract_strided_slice %814 {offsets = [4, 0], sizes = [1, 32], strides = [1, 1]} : vector<13x128xf32> to vector<1x32xf32>
    %820 = vector.extract_strided_slice %814 {offsets = [5, 0], sizes = [1, 64], strides = [1, 1]} : vector<13x128xf32> to vector<1x64xf32>
    %821 = vector.extract_strided_slice %814 {offsets = [6, 0], sizes = [1, 32], strides = [1, 1]} : vector<13x128xf32> to vector<1x32xf32>
    %822 = vector.extract_strided_slice %814 {offsets = [7, 0], sizes = [1, 32], strides = [1, 1]} : vector<13x128xf32> to vector<1x32xf32>
    %823 = vector.extract_strided_slice %814 {offsets = [8, 0], sizes = [1, 32], strides = [1, 1]} : vector<13x128xf32> to vector<1x32xf32>
    %824 = vector.extract_strided_slice %814 {offsets = [9, 0], sizes = [1, 64], strides = [1, 1]} : vector<13x128xf32> to vector<1x64xf32>
    %825 = vector.extract_strided_slice %814 {offsets = [10, 0], sizes = [1, 32], strides = [1, 1]} : vector<13x128xf32> to vector<1x32xf32>
    %826 = vector.extract_strided_slice %814 {offsets = [11, 0], sizes = [1, 32], strides = [1, 1]} : vector<13x128xf32> to vector<1x32xf32>
    %827 = vector.extract_strided_slice %814 {offsets = [12, 0], sizes = [1, 32], strides = [1, 1]} : vector<13x128xf32> to vector<1x32xf32>
    %c1_180 = arith.constant 1 : index
    %c0_181 = arith.constant 0 : index
    %c0_182 = arith.constant 0 : index
    %828 = vector.load %arg12[%c1_180, %c0_181, %c0_182] : memref<2x32x96xbf16, #tpu.memory_space<vmem>>, vector<1x32x96xbf16>
    %829 = vector.shape_cast %828 : vector<1x32x96xbf16> to vector<32x96xbf16>
    %830 = arith.truncf %812 : vector<16x32xf32> to vector<16x32xbf16>
    %cst_183 = arith.constant dense<0.000000e+00> : vector<16x96xf32>
    %831 = tpu.matmul %830, %829, %cst_183 {dimension_numbers = #tpu.dot_dimension_numbers<[1], [0], [0], [1], [0, 0, 1, 1], [], []>} : vector<16x32xbf16>, vector<32x96xbf16>, vector<16x96xf32> -> vector<16x96xf32>
    %832 = vector.broadcast %815 : vector<1x96xf32> to vector<16x96xf32>
    %833 = arith.addf %831, %832 : vector<16x96xf32>
    %834 = vector.extract_strided_slice %833 {offsets = [0, 0], sizes = [8, 96], strides = [1, 1]} : vector<16x96xf32> to vector<8x96xf32>
    %835 = vector.extract_strided_slice %834 {offsets = [0, 0], sizes = [8, 8], strides = [1, 1]} : vector<8x96xf32> to vector<8x8xf32>
    %836 = vector.extract_strided_slice %834 {offsets = [0, 8], sizes = [8, 8], strides = [1, 1]} : vector<8x96xf32> to vector<8x8xf32>
    %837 = vector.extract_strided_slice %834 {offsets = [0, 16], sizes = [8, 8], strides = [1, 1]} : vector<8x96xf32> to vector<8x8xf32>
    %838 = vector.extract_strided_slice %834 {offsets = [0, 24], sizes = [8, 8], strides = [1, 1]} : vector<8x96xf32> to vector<8x8xf32>
    %839 = vector.shape_cast %835 : vector<8x8xf32> to vector<1x8x8xf32>
    %840 = vector.shape_cast %836 : vector<8x8xf32> to vector<1x8x8xf32>
    %841 = vector.shape_cast %837 : vector<8x8xf32> to vector<1x8x8xf32>
    %842 = vector.shape_cast %838 : vector<8x8xf32> to vector<1x8x8xf32>
    %843 = tpu.concatenate %839, %840, %841, %842 in 0 : vector<1x8x8xf32>, vector<1x8x8xf32>, vector<1x8x8xf32>, vector<1x8x8xf32> -> vector<4x8x8xf32>
    %844 = arith.truncf %843 : vector<4x8x8xf32> to vector<4x8x8xbf16>
    %845 = vector.extract_strided_slice %834 {offsets = [0, 32], sizes = [8, 8], strides = [1, 1]} : vector<8x96xf32> to vector<8x8xf32>
    %846 = vector.extract_strided_slice %834 {offsets = [0, 40], sizes = [8, 8], strides = [1, 1]} : vector<8x96xf32> to vector<8x8xf32>
    %847 = vector.extract_strided_slice %834 {offsets = [0, 48], sizes = [8, 8], strides = [1, 1]} : vector<8x96xf32> to vector<8x8xf32>
    %848 = vector.extract_strided_slice %834 {offsets = [0, 56], sizes = [8, 8], strides = [1, 1]} : vector<8x96xf32> to vector<8x8xf32>
    %849 = vector.shape_cast %845 : vector<8x8xf32> to vector<1x8x8xf32>
    %850 = vector.shape_cast %846 : vector<8x8xf32> to vector<1x8x8xf32>
    %851 = vector.shape_cast %847 : vector<8x8xf32> to vector<1x8x8xf32>
    %852 = vector.shape_cast %848 : vector<8x8xf32> to vector<1x8x8xf32>
    %853 = tpu.concatenate %849, %850, %851, %852 in 0 : vector<1x8x8xf32>, vector<1x8x8xf32>, vector<1x8x8xf32>, vector<1x8x8xf32> -> vector<4x8x8xf32>
    %854 = arith.truncf %853 : vector<4x8x8xf32> to vector<4x8x8xbf16>
    %855 = vector.extract_strided_slice %834 {offsets = [0, 64], sizes = [8, 8], strides = [1, 1]} : vector<8x96xf32> to vector<8x8xf32>
    %856 = vector.extract_strided_slice %834 {offsets = [0, 72], sizes = [8, 8], strides = [1, 1]} : vector<8x96xf32> to vector<8x8xf32>
    %857 = vector.extract_strided_slice %834 {offsets = [0, 80], sizes = [8, 8], strides = [1, 1]} : vector<8x96xf32> to vector<8x8xf32>
    %858 = vector.extract_strided_slice %834 {offsets = [0, 88], sizes = [8, 8], strides = [1, 1]} : vector<8x96xf32> to vector<8x8xf32>
    %859 = vector.shape_cast %855 : vector<8x8xf32> to vector<1x8x8xf32>
    %860 = vector.shape_cast %856 : vector<8x8xf32> to vector<1x8x8xf32>
    %861 = vector.shape_cast %857 : vector<8x8xf32> to vector<1x8x8xf32>
    %862 = vector.shape_cast %858 : vector<8x8xf32> to vector<1x8x8xf32>
    %863 = tpu.concatenate %859, %860, %861, %862 in 0 : vector<1x8x8xf32>, vector<1x8x8xf32>, vector<1x8x8xf32>, vector<1x8x8xf32> -> vector<4x8x8xf32>
    %864 = arith.truncf %863 : vector<4x8x8xf32> to vector<4x8x8xbf16>
    "tpu.trace_start"() <{level = 10 : i32, message = "hqd,hkd->hqk"}> : () -> ()
    %cst_184 = arith.constant dense<0.000000e+00> : vector<4x8x8xf32>
    %865 = tpu.matmul %844, %854, %cst_184 {dimension_numbers = #tpu.dot_dimension_numbers<[2], [2], [1], [1], [0, 0, 0, 1, 1, 1], [0], [0]>} : vector<4x8x8xbf16>, vector<4x8x8xbf16>, vector<4x8x8xf32> -> vector<4x8x8xf32>
    "tpu.trace_stop"() : () -> ()
    %cst_185 = arith.constant 0.353553385 : f32
    %866 = vector.broadcast %cst_185 : f32 to vector<4x8x8xf32>
    %867 = arith.mulf %865, %866 : vector<4x8x8xf32>
    %868 = vector.broadcast %32 : vector<1x8x8xf32> to vector<4x8x8xf32>
    %869 = arith.addf %867, %868 : vector<4x8x8xf32>
    %cst_186 = arith.constant dense<0xFF800000> : vector<4x8xf32>
    %870 = vector.multi_reduction <maximumf>, %869, %cst_186 [2] : vector<4x8x8xf32> to vector<4x8xf32>
    %871 = vector.shape_cast %870 : vector<4x8xf32> to vector<4x8x1xf32>
    %872 = vector.broadcast %871 : vector<4x8x1xf32> to vector<4x8x8xf32>
    %873 = arith.subf %869, %872 : vector<4x8x8xf32>
    %874 = math.exp %873 : vector<4x8x8xf32>
    %cst_187 = arith.constant dense<0.000000e+00> : vector<4x8xf32>
    %875 = vector.multi_reduction <add>, %874, %cst_187 [2] : vector<4x8x8xf32> to vector<4x8xf32>
    %876 = vector.shape_cast %875 : vector<4x8xf32> to vector<4x8x1xf32>
    %877 = vector.broadcast %876 : vector<4x8x1xf32> to vector<4x8x8xf32>
    %878 = arith.divf %874, %877 : vector<4x8x8xf32>
    %879 = arith.truncf %878 : vector<4x8x8xf32> to vector<4x8x8xbf16>
    "tpu.trace_start"() <{level = 10 : i32, message = "hqk,hkd->hqd"}> : () -> ()
    %cst_188 = arith.constant dense<0.000000e+00> : vector<4x8x8xf32>
    %880 = tpu.matmul %879, %864, %cst_188 {dimension_numbers = #tpu.dot_dimension_numbers<[2], [1], [1], [2], [0, 0, 0, 1, 1, 2], [0], [0]>} : vector<4x8x8xbf16>, vector<4x8x8xbf16>, vector<4x8x8xf32> -> vector<4x8x8xf32>
    "tpu.trace_stop"() : () -> ()
    %881 = vector.extract_strided_slice %880 {offsets = [0, 0, 0], sizes = [1, 8, 8], strides = [1, 1, 1]} : vector<4x8x8xf32> to vector<1x8x8xf32>
    %882 = vector.shape_cast %881 : vector<1x8x8xf32> to vector<8x8xf32>
    %883 = vector.extract_strided_slice %880 {offsets = [1, 0, 0], sizes = [1, 8, 8], strides = [1, 1, 1]} : vector<4x8x8xf32> to vector<1x8x8xf32>
    %884 = vector.shape_cast %883 : vector<1x8x8xf32> to vector<8x8xf32>
    %885 = vector.extract_strided_slice %880 {offsets = [2, 0, 0], sizes = [1, 8, 8], strides = [1, 1, 1]} : vector<4x8x8xf32> to vector<1x8x8xf32>
    %886 = vector.shape_cast %885 : vector<1x8x8xf32> to vector<8x8xf32>
    %887 = vector.extract_strided_slice %880 {offsets = [3, 0, 0], sizes = [1, 8, 8], strides = [1, 1, 1]} : vector<4x8x8xf32> to vector<1x8x8xf32>
    %888 = vector.shape_cast %887 : vector<1x8x8xf32> to vector<8x8xf32>
    %889 = tpu.concatenate %882, %884, %886, %888 in 1 : vector<8x8xf32>, vector<8x8xf32>, vector<8x8xf32>, vector<8x8xf32> -> vector<8x32xf32>
    %890 = vector.extract_strided_slice %833 {offsets = [8, 0], sizes = [8, 96], strides = [1, 1]} : vector<16x96xf32> to vector<8x96xf32>
    %891 = vector.extract_strided_slice %890 {offsets = [0, 0], sizes = [8, 8], strides = [1, 1]} : vector<8x96xf32> to vector<8x8xf32>
    %892 = vector.extract_strided_slice %890 {offsets = [0, 8], sizes = [8, 8], strides = [1, 1]} : vector<8x96xf32> to vector<8x8xf32>
    %893 = vector.extract_strided_slice %890 {offsets = [0, 16], sizes = [8, 8], strides = [1, 1]} : vector<8x96xf32> to vector<8x8xf32>
    %894 = vector.extract_strided_slice %890 {offsets = [0, 24], sizes = [8, 8], strides = [1, 1]} : vector<8x96xf32> to vector<8x8xf32>
    %895 = vector.shape_cast %891 : vector<8x8xf32> to vector<1x8x8xf32>
    %896 = vector.shape_cast %892 : vector<8x8xf32> to vector<1x8x8xf32>
    %897 = vector.shape_cast %893 : vector<8x8xf32> to vector<1x8x8xf32>
    %898 = vector.shape_cast %894 : vector<8x8xf32> to vector<1x8x8xf32>
    %899 = tpu.concatenate %895, %896, %897, %898 in 0 : vector<1x8x8xf32>, vector<1x8x8xf32>, vector<1x8x8xf32>, vector<1x8x8xf32> -> vector<4x8x8xf32>
    %900 = arith.truncf %899 : vector<4x8x8xf32> to vector<4x8x8xbf16>
    %901 = vector.extract_strided_slice %890 {offsets = [0, 32], sizes = [8, 8], strides = [1, 1]} : vector<8x96xf32> to vector<8x8xf32>
    %902 = vector.extract_strided_slice %890 {offsets = [0, 40], sizes = [8, 8], strides = [1, 1]} : vector<8x96xf32> to vector<8x8xf32>
    %903 = vector.extract_strided_slice %890 {offsets = [0, 48], sizes = [8, 8], strides = [1, 1]} : vector<8x96xf32> to vector<8x8xf32>
    %904 = vector.extract_strided_slice %890 {offsets = [0, 56], sizes = [8, 8], strides = [1, 1]} : vector<8x96xf32> to vector<8x8xf32>
    %905 = vector.shape_cast %901 : vector<8x8xf32> to vector<1x8x8xf32>
    %906 = vector.shape_cast %902 : vector<8x8xf32> to vector<1x8x8xf32>
    %907 = vector.shape_cast %903 : vector<8x8xf32> to vector<1x8x8xf32>
    %908 = vector.shape_cast %904 : vector<8x8xf32> to vector<1x8x8xf32>
    %909 = tpu.concatenate %905, %906, %907, %908 in 0 : vector<1x8x8xf32>, vector<1x8x8xf32>, vector<1x8x8xf32>, vector<1x8x8xf32> -> vector<4x8x8xf32>
    %910 = arith.truncf %909 : vector<4x8x8xf32> to vector<4x8x8xbf16>
    %911 = vector.extract_strided_slice %890 {offsets = [0, 64], sizes = [8, 8], strides = [1, 1]} : vector<8x96xf32> to vector<8x8xf32>
    %912 = vector.extract_strided_slice %890 {offsets = [0, 72], sizes = [8, 8], strides = [1, 1]} : vector<8x96xf32> to vector<8x8xf32>
    %913 = vector.extract_strided_slice %890 {offsets = [0, 80], sizes = [8, 8], strides = [1, 1]} : vector<8x96xf32> to vector<8x8xf32>
    %914 = vector.extract_strided_slice %890 {offsets = [0, 88], sizes = [8, 8], strides = [1, 1]} : vector<8x96xf32> to vector<8x8xf32>
    %915 = vector.shape_cast %911 : vector<8x8xf32> to vector<1x8x8xf32>
    %916 = vector.shape_cast %912 : vector<8x8xf32> to vector<1x8x8xf32>
    %917 = vector.shape_cast %913 : vector<8x8xf32> to vector<1x8x8xf32>
    %918 = vector.shape_cast %914 : vector<8x8xf32> to vector<1x8x8xf32>
    %919 = tpu.concatenate %915, %916, %917, %918 in 0 : vector<1x8x8xf32>, vector<1x8x8xf32>, vector<1x8x8xf32>, vector<1x8x8xf32> -> vector<4x8x8xf32>
    %920 = arith.truncf %919 : vector<4x8x8xf32> to vector<4x8x8xbf16>
    "tpu.trace_start"() <{level = 10 : i32, message = "hqd,hkd->hqk"}> : () -> ()
    %cst_189 = arith.constant dense<0.000000e+00> : vector<4x8x8xf32>
    %921 = tpu.matmul %900, %910, %cst_189 {dimension_numbers = #tpu.dot_dimension_numbers<[2], [2], [1], [1], [0, 0, 0, 1, 1, 1], [0], [0]>} : vector<4x8x8xbf16>, vector<4x8x8xbf16>, vector<4x8x8xf32> -> vector<4x8x8xf32>
    "tpu.trace_stop"() : () -> ()
    %cst_190 = arith.constant 0.353553385 : f32
    %922 = vector.broadcast %cst_190 : f32 to vector<4x8x8xf32>
    %923 = arith.mulf %921, %922 : vector<4x8x8xf32>
    %924 = vector.broadcast %41 : vector<1x8x8xf32> to vector<4x8x8xf32>
    %925 = arith.addf %923, %924 : vector<4x8x8xf32>
    %cst_191 = arith.constant dense<0xFF800000> : vector<4x8xf32>
    %926 = vector.multi_reduction <maximumf>, %925, %cst_191 [2] : vector<4x8x8xf32> to vector<4x8xf32>
    %927 = vector.shape_cast %926 : vector<4x8xf32> to vector<4x8x1xf32>
    %928 = vector.broadcast %927 : vector<4x8x1xf32> to vector<4x8x8xf32>
    %929 = arith.subf %925, %928 : vector<4x8x8xf32>
    %930 = math.exp %929 : vector<4x8x8xf32>
    %cst_192 = arith.constant dense<0.000000e+00> : vector<4x8xf32>
    %931 = vector.multi_reduction <add>, %930, %cst_192 [2] : vector<4x8x8xf32> to vector<4x8xf32>
    %932 = vector.shape_cast %931 : vector<4x8xf32> to vector<4x8x1xf32>
    %933 = vector.broadcast %932 : vector<4x8x1xf32> to vector<4x8x8xf32>
    %934 = arith.divf %930, %933 : vector<4x8x8xf32>
    %935 = arith.truncf %934 : vector<4x8x8xf32> to vector<4x8x8xbf16>
    "tpu.trace_start"() <{level = 10 : i32, message = "hqk,hkd->hqd"}> : () -> ()
    %cst_193 = arith.constant dense<0.000000e+00> : vector<4x8x8xf32>
    %936 = tpu.matmul %935, %920, %cst_193 {dimension_numbers = #tpu.dot_dimension_numbers<[2], [1], [1], [2], [0, 0, 0, 1, 1, 2], [0], [0]>} : vector<4x8x8xbf16>, vector<4x8x8xbf16>, vector<4x8x8xf32> -> vector<4x8x8xf32>
    "tpu.trace_stop"() : () -> ()
    %937 = vector.extract_strided_slice %936 {offsets = [0, 0, 0], sizes = [1, 8, 8], strides = [1, 1, 1]} : vector<4x8x8xf32> to vector<1x8x8xf32>
    %938 = vector.shape_cast %937 : vector<1x8x8xf32> to vector<8x8xf32>
    %939 = vector.extract_strided_slice %936 {offsets = [1, 0, 0], sizes = [1, 8, 8], strides = [1, 1, 1]} : vector<4x8x8xf32> to vector<1x8x8xf32>
    %940 = vector.shape_cast %939 : vector<1x8x8xf32> to vector<8x8xf32>
    %941 = vector.extract_strided_slice %936 {offsets = [2, 0, 0], sizes = [1, 8, 8], strides = [1, 1, 1]} : vector<4x8x8xf32> to vector<1x8x8xf32>
    %942 = vector.shape_cast %941 : vector<1x8x8xf32> to vector<8x8xf32>
    %943 = vector.extract_strided_slice %936 {offsets = [3, 0, 0], sizes = [1, 8, 8], strides = [1, 1, 1]} : vector<4x8x8xf32> to vector<1x8x8xf32>
    %944 = vector.shape_cast %943 : vector<1x8x8xf32> to vector<8x8xf32>
    %945 = tpu.concatenate %938, %940, %942, %944 in 1 : vector<8x8xf32>, vector<8x8xf32>, vector<8x8xf32>, vector<8x8xf32> -> vector<8x32xf32>
    %946 = tpu.concatenate %889, %945 in 0 : vector<8x32xf32>, vector<8x32xf32> -> vector<16x32xf32>
    %c1_194 = arith.constant 1 : index
    %c0_195 = arith.constant 0 : index
    %c0_196 = arith.constant 0 : index
    %947 = vector.load %arg13[%c1_194, %c0_195, %c0_196] : memref<2x32x32xbf16, #tpu.memory_space<vmem>>, vector<1x32x32xbf16>
    %948 = vector.shape_cast %947 : vector<1x32x32xbf16> to vector<32x32xbf16>
    %949 = arith.truncf %946 : vector<16x32xf32> to vector<16x32xbf16>
    %cst_197 = arith.constant dense<0.000000e+00> : vector<16x32xf32>
    %950 = tpu.matmul %949, %948, %cst_197 {dimension_numbers = #tpu.dot_dimension_numbers<[1], [0], [0], [1], [0, 0, 1, 1], [], []>} : vector<16x32xbf16>, vector<32x32xbf16>, vector<16x32xf32> -> vector<16x32xf32>
    %951 = vector.broadcast %816 : vector<1x32xf32> to vector<16x32xf32>
    %952 = arith.addf %950, %951 : vector<16x32xf32>
    %953 = arith.addf %812, %952 : vector<16x32xf32>
    %cst_198 = arith.constant dense<0.000000e+00> : vector<16xf32>
    %954 = vector.multi_reduction <add>, %953, %cst_198 [1] : vector<16x32xf32> to vector<16xf32>
    %955 = vector.shape_cast %954 : vector<16xf32> to vector<16x1xf32>
    %cst_199 = arith.constant 3.200000e+01 : f32
    %956 = vector.broadcast %cst_199 : f32 to vector<16x1xf32>
    %957 = arith.divf %955, %956 : vector<16x1xf32>
    %958 = vector.broadcast %957 : vector<16x1xf32> to vector<16x32xf32>
    %959 = arith.subf %953, %958 : vector<16x32xf32>
    %960 = arith.mulf %959, %959 : vector<16x32xf32>
    %cst_200 = arith.constant dense<0.000000e+00> : vector<16xf32>
    %961 = vector.multi_reduction <add>, %960, %cst_200 [1] : vector<16x32xf32> to vector<16xf32>
    %962 = vector.shape_cast %961 : vector<16xf32> to vector<16x1xf32>
    %cst_201 = arith.constant 3.200000e+01 : f32
    %963 = vector.broadcast %cst_201 : f32 to vector<16x1xf32>
    %964 = arith.divf %962, %963 : vector<16x1xf32>
    %965 = vector.broadcast %957 : vector<16x1xf32> to vector<16x32xf32>
    %966 = arith.subf %953, %965 : vector<16x32xf32>
    %cst_202 = arith.constant 9.99999974E-6 : f32
    %967 = vector.broadcast %cst_202 : f32 to vector<16x1xf32>
    %968 = arith.addf %964, %967 : vector<16x1xf32>
    %969 = math.rsqrt %968 : vector<16x1xf32>
    %970 = vector.broadcast %969 : vector<16x1xf32> to vector<16x32xf32>
    %971 = arith.mulf %966, %970 : vector<16x32xf32>
    %972 = vector.broadcast %817 : vector<1x32xf32> to vector<16x32xf32>
    %973 = arith.mulf %971, %972 : vector<16x32xf32>
    %974 = vector.broadcast %818 : vector<1x32xf32> to vector<16x32xf32>
    %975 = arith.addf %973, %974 : vector<16x32xf32>
    %c1_203 = arith.constant 1 : index
    %c0_204 = arith.constant 0 : index
    %c0_205 = arith.constant 0 : index
    %976 = vector.load %arg14[%c1_203, %c0_204, %c0_205] : memref<2x32x32xbf16, #tpu.memory_space<vmem>>, vector<1x32x32xbf16>
    %977 = vector.shape_cast %976 : vector<1x32x32xbf16> to vector<32x32xbf16>
    %978 = arith.truncf %975 : vector<16x32xf32> to vector<16x32xbf16>
    %cst_206 = arith.constant dense<0.000000e+00> : vector<16x32xf32>
    %979 = tpu.matmul %978, %977, %cst_206 {dimension_numbers = #tpu.dot_dimension_numbers<[1], [0], [0], [1], [0, 0, 1, 1], [], []>} : vector<16x32xbf16>, vector<32x32xbf16>, vector<16x32xf32> -> vector<16x32xf32>
    %980 = vector.broadcast %819 : vector<1x32xf32> to vector<16x32xf32>
    %981 = arith.addf %979, %980 : vector<16x32xf32>
    %c1_207 = arith.constant 1 : index
    %c0_208 = arith.constant 0 : index
    %c0_209 = arith.constant 0 : index
    %982 = vector.load %arg15[%c1_207, %c0_208, %c0_209] : memref<2x32x64xbf16, #tpu.memory_space<vmem>>, vector<1x32x64xbf16>
    %983 = vector.shape_cast %982 : vector<1x32x64xbf16> to vector<32x64xbf16>
    %984 = arith.truncf %456 : vector<16x32xf32> to vector<16x32xbf16>
    %cst_210 = arith.constant dense<0.000000e+00> : vector<16x64xf32>
    %985 = tpu.matmul %984, %983, %cst_210 {dimension_numbers = #tpu.dot_dimension_numbers<[1], [0], [0], [1], [0, 0, 1, 1], [], []>} : vector<16x32xbf16>, vector<32x64xbf16>, vector<16x64xf32> -> vector<16x64xf32>
    %986 = vector.broadcast %820 : vector<1x64xf32> to vector<16x64xf32>
    %987 = arith.addf %985, %986 : vector<16x64xf32>
    %988 = vector.extract_strided_slice %981 {offsets = [0, 0], sizes = [8, 32], strides = [1, 1]} : vector<16x32xf32> to vector<8x32xf32>
    %989 = vector.extract_strided_slice %987 {offsets = [0, 0], sizes = [8, 64], strides = [1, 1]} : vector<16x64xf32> to vector<8x64xf32>
    %990 = vector.extract_strided_slice %988 {offsets = [0, 0], sizes = [8, 8], strides = [1, 1]} : vector<8x32xf32> to vector<8x8xf32>
    %991 = vector.extract_strided_slice %988 {offsets = [0, 8], sizes = [8, 8], strides = [1, 1]} : vector<8x32xf32> to vector<8x8xf32>
    %992 = vector.extract_strided_slice %988 {offsets = [0, 16], sizes = [8, 8], strides = [1, 1]} : vector<8x32xf32> to vector<8x8xf32>
    %993 = vector.extract_strided_slice %988 {offsets = [0, 24], sizes = [8, 8], strides = [1, 1]} : vector<8x32xf32> to vector<8x8xf32>
    %994 = vector.shape_cast %990 : vector<8x8xf32> to vector<1x8x8xf32>
    %995 = vector.shape_cast %991 : vector<8x8xf32> to vector<1x8x8xf32>
    %996 = vector.shape_cast %992 : vector<8x8xf32> to vector<1x8x8xf32>
    %997 = vector.shape_cast %993 : vector<8x8xf32> to vector<1x8x8xf32>
    %998 = tpu.concatenate %994, %995, %996, %997 in 0 : vector<1x8x8xf32>, vector<1x8x8xf32>, vector<1x8x8xf32>, vector<1x8x8xf32> -> vector<4x8x8xf32>
    %999 = arith.truncf %998 : vector<4x8x8xf32> to vector<4x8x8xbf16>
    %1000 = vector.extract_strided_slice %989 {offsets = [0, 0], sizes = [8, 8], strides = [1, 1]} : vector<8x64xf32> to vector<8x8xf32>
    %1001 = vector.extract_strided_slice %989 {offsets = [0, 8], sizes = [8, 8], strides = [1, 1]} : vector<8x64xf32> to vector<8x8xf32>
    %1002 = vector.extract_strided_slice %989 {offsets = [0, 16], sizes = [8, 8], strides = [1, 1]} : vector<8x64xf32> to vector<8x8xf32>
    %1003 = vector.extract_strided_slice %989 {offsets = [0, 24], sizes = [8, 8], strides = [1, 1]} : vector<8x64xf32> to vector<8x8xf32>
    %1004 = vector.shape_cast %1000 : vector<8x8xf32> to vector<1x8x8xf32>
    %1005 = vector.shape_cast %1001 : vector<8x8xf32> to vector<1x8x8xf32>
    %1006 = vector.shape_cast %1002 : vector<8x8xf32> to vector<1x8x8xf32>
    %1007 = vector.shape_cast %1003 : vector<8x8xf32> to vector<1x8x8xf32>
    %1008 = tpu.concatenate %1004, %1005, %1006, %1007 in 0 : vector<1x8x8xf32>, vector<1x8x8xf32>, vector<1x8x8xf32>, vector<1x8x8xf32> -> vector<4x8x8xf32>
    %1009 = arith.truncf %1008 : vector<4x8x8xf32> to vector<4x8x8xbf16>
    %1010 = vector.extract_strided_slice %989 {offsets = [0, 32], sizes = [8, 8], strides = [1, 1]} : vector<8x64xf32> to vector<8x8xf32>
    %1011 = vector.extract_strided_slice %989 {offsets = [0, 40], sizes = [8, 8], strides = [1, 1]} : vector<8x64xf32> to vector<8x8xf32>
    %1012 = vector.extract_strided_slice %989 {offsets = [0, 48], sizes = [8, 8], strides = [1, 1]} : vector<8x64xf32> to vector<8x8xf32>
    %1013 = vector.extract_strided_slice %989 {offsets = [0, 56], sizes = [8, 8], strides = [1, 1]} : vector<8x64xf32> to vector<8x8xf32>
    %1014 = vector.shape_cast %1010 : vector<8x8xf32> to vector<1x8x8xf32>
    %1015 = vector.shape_cast %1011 : vector<8x8xf32> to vector<1x8x8xf32>
    %1016 = vector.shape_cast %1012 : vector<8x8xf32> to vector<1x8x8xf32>
    %1017 = vector.shape_cast %1013 : vector<8x8xf32> to vector<1x8x8xf32>
    %1018 = tpu.concatenate %1014, %1015, %1016, %1017 in 0 : vector<1x8x8xf32>, vector<1x8x8xf32>, vector<1x8x8xf32>, vector<1x8x8xf32> -> vector<4x8x8xf32>
    %1019 = arith.truncf %1018 : vector<4x8x8xf32> to vector<4x8x8xbf16>
    "tpu.trace_start"() <{level = 10 : i32, message = "hqd,hkd->hqk"}> : () -> ()
    %cst_211 = arith.constant dense<0.000000e+00> : vector<4x8x8xf32>
    %1020 = tpu.matmul %999, %1009, %cst_211 {dimension_numbers = #tpu.dot_dimension_numbers<[2], [2], [1], [1], [0, 0, 0, 1, 1, 1], [0], [0]>} : vector<4x8x8xbf16>, vector<4x8x8xbf16>, vector<4x8x8xf32> -> vector<4x8x8xf32>
    "tpu.trace_stop"() : () -> ()
    %cst_212 = arith.constant 0.353553385 : f32
    %1021 = vector.broadcast %cst_212 : f32 to vector<4x8x8xf32>
    %1022 = arith.mulf %1020, %1021 : vector<4x8x8xf32>
    %1023 = vector.broadcast %8 : vector<1x1x8xf32> to vector<4x8x8xf32>
    %1024 = arith.addf %1022, %1023 : vector<4x8x8xf32>
    %cst_213 = arith.constant dense<0xFF800000> : vector<4x8xf32>
    %1025 = vector.multi_reduction <maximumf>, %1024, %cst_213 [2] : vector<4x8x8xf32> to vector<4x8xf32>
    %1026 = vector.shape_cast %1025 : vector<4x8xf32> to vector<4x8x1xf32>
    %1027 = vector.broadcast %1026 : vector<4x8x1xf32> to vector<4x8x8xf32>
    %1028 = arith.subf %1024, %1027 : vector<4x8x8xf32>
    %1029 = math.exp %1028 : vector<4x8x8xf32>
    %cst_214 = arith.constant dense<0.000000e+00> : vector<4x8xf32>
    %1030 = vector.multi_reduction <add>, %1029, %cst_214 [2] : vector<4x8x8xf32> to vector<4x8xf32>
    %1031 = vector.shape_cast %1030 : vector<4x8xf32> to vector<4x8x1xf32>
    %1032 = vector.broadcast %1031 : vector<4x8x1xf32> to vector<4x8x8xf32>
    %1033 = arith.divf %1029, %1032 : vector<4x8x8xf32>
    %1034 = arith.truncf %1033 : vector<4x8x8xf32> to vector<4x8x8xbf16>
    "tpu.trace_start"() <{level = 10 : i32, message = "hqk,hkd->hqd"}> : () -> ()
    %cst_215 = arith.constant dense<0.000000e+00> : vector<4x8x8xf32>
    %1035 = tpu.matmul %1034, %1019, %cst_215 {dimension_numbers = #tpu.dot_dimension_numbers<[2], [1], [1], [2], [0, 0, 0, 1, 1, 2], [0], [0]>} : vector<4x8x8xbf16>, vector<4x8x8xbf16>, vector<4x8x8xf32> -> vector<4x8x8xf32>
    "tpu.trace_stop"() : () -> ()
    %1036 = vector.extract_strided_slice %1035 {offsets = [0, 0, 0], sizes = [1, 8, 8], strides = [1, 1, 1]} : vector<4x8x8xf32> to vector<1x8x8xf32>
    %1037 = vector.shape_cast %1036 : vector<1x8x8xf32> to vector<8x8xf32>
    %1038 = vector.extract_strided_slice %1035 {offsets = [1, 0, 0], sizes = [1, 8, 8], strides = [1, 1, 1]} : vector<4x8x8xf32> to vector<1x8x8xf32>
    %1039 = vector.shape_cast %1038 : vector<1x8x8xf32> to vector<8x8xf32>
    %1040 = vector.extract_strided_slice %1035 {offsets = [2, 0, 0], sizes = [1, 8, 8], strides = [1, 1, 1]} : vector<4x8x8xf32> to vector<1x8x8xf32>
    %1041 = vector.shape_cast %1040 : vector<1x8x8xf32> to vector<8x8xf32>
    %1042 = vector.extract_strided_slice %1035 {offsets = [3, 0, 0], sizes = [1, 8, 8], strides = [1, 1, 1]} : vector<4x8x8xf32> to vector<1x8x8xf32>
    %1043 = vector.shape_cast %1042 : vector<1x8x8xf32> to vector<8x8xf32>
    %1044 = tpu.concatenate %1037, %1039, %1041, %1043 in 1 : vector<8x8xf32>, vector<8x8xf32>, vector<8x8xf32>, vector<8x8xf32> -> vector<8x32xf32>
    %1045 = vector.extract_strided_slice %981 {offsets = [8, 0], sizes = [8, 32], strides = [1, 1]} : vector<16x32xf32> to vector<8x32xf32>
    %1046 = vector.extract_strided_slice %987 {offsets = [8, 0], sizes = [8, 64], strides = [1, 1]} : vector<16x64xf32> to vector<8x64xf32>
    %1047 = vector.extract_strided_slice %1045 {offsets = [0, 0], sizes = [8, 8], strides = [1, 1]} : vector<8x32xf32> to vector<8x8xf32>
    %1048 = vector.extract_strided_slice %1045 {offsets = [0, 8], sizes = [8, 8], strides = [1, 1]} : vector<8x32xf32> to vector<8x8xf32>
    %1049 = vector.extract_strided_slice %1045 {offsets = [0, 16], sizes = [8, 8], strides = [1, 1]} : vector<8x32xf32> to vector<8x8xf32>
    %1050 = vector.extract_strided_slice %1045 {offsets = [0, 24], sizes = [8, 8], strides = [1, 1]} : vector<8x32xf32> to vector<8x8xf32>
    %1051 = vector.shape_cast %1047 : vector<8x8xf32> to vector<1x8x8xf32>
    %1052 = vector.shape_cast %1048 : vector<8x8xf32> to vector<1x8x8xf32>
    %1053 = vector.shape_cast %1049 : vector<8x8xf32> to vector<1x8x8xf32>
    %1054 = vector.shape_cast %1050 : vector<8x8xf32> to vector<1x8x8xf32>
    %1055 = tpu.concatenate %1051, %1052, %1053, %1054 in 0 : vector<1x8x8xf32>, vector<1x8x8xf32>, vector<1x8x8xf32>, vector<1x8x8xf32> -> vector<4x8x8xf32>
    %1056 = arith.truncf %1055 : vector<4x8x8xf32> to vector<4x8x8xbf16>
    %1057 = vector.extract_strided_slice %1046 {offsets = [0, 0], sizes = [8, 8], strides = [1, 1]} : vector<8x64xf32> to vector<8x8xf32>
    %1058 = vector.extract_strided_slice %1046 {offsets = [0, 8], sizes = [8, 8], strides = [1, 1]} : vector<8x64xf32> to vector<8x8xf32>
    %1059 = vector.extract_strided_slice %1046 {offsets = [0, 16], sizes = [8, 8], strides = [1, 1]} : vector<8x64xf32> to vector<8x8xf32>
    %1060 = vector.extract_strided_slice %1046 {offsets = [0, 24], sizes = [8, 8], strides = [1, 1]} : vector<8x64xf32> to vector<8x8xf32>
    %1061 = vector.shape_cast %1057 : vector<8x8xf32> to vector<1x8x8xf32>
    %1062 = vector.shape_cast %1058 : vector<8x8xf32> to vector<1x8x8xf32>
    %1063 = vector.shape_cast %1059 : vector<8x8xf32> to vector<1x8x8xf32>
    %1064 = vector.shape_cast %1060 : vector<8x8xf32> to vector<1x8x8xf32>
    %1065 = tpu.concatenate %1061, %1062, %1063, %1064 in 0 : vector<1x8x8xf32>, vector<1x8x8xf32>, vector<1x8x8xf32>, vector<1x8x8xf32> -> vector<4x8x8xf32>
    %1066 = arith.truncf %1065 : vector<4x8x8xf32> to vector<4x8x8xbf16>
    %1067 = vector.extract_strided_slice %1046 {offsets = [0, 32], sizes = [8, 8], strides = [1, 1]} : vector<8x64xf32> to vector<8x8xf32>
    %1068 = vector.extract_strided_slice %1046 {offsets = [0, 40], sizes = [8, 8], strides = [1, 1]} : vector<8x64xf32> to vector<8x8xf32>
    %1069 = vector.extract_strided_slice %1046 {offsets = [0, 48], sizes = [8, 8], strides = [1, 1]} : vector<8x64xf32> to vector<8x8xf32>
    %1070 = vector.extract_strided_slice %1046 {offsets = [0, 56], sizes = [8, 8], strides = [1, 1]} : vector<8x64xf32> to vector<8x8xf32>
    %1071 = vector.shape_cast %1067 : vector<8x8xf32> to vector<1x8x8xf32>
    %1072 = vector.shape_cast %1068 : vector<8x8xf32> to vector<1x8x8xf32>
    %1073 = vector.shape_cast %1069 : vector<8x8xf32> to vector<1x8x8xf32>
    %1074 = vector.shape_cast %1070 : vector<8x8xf32> to vector<1x8x8xf32>
    %1075 = tpu.concatenate %1071, %1072, %1073, %1074 in 0 : vector<1x8x8xf32>, vector<1x8x8xf32>, vector<1x8x8xf32>, vector<1x8x8xf32> -> vector<4x8x8xf32>
    %1076 = arith.truncf %1075 : vector<4x8x8xf32> to vector<4x8x8xbf16>
    "tpu.trace_start"() <{level = 10 : i32, message = "hqd,hkd->hqk"}> : () -> ()
    %cst_216 = arith.constant dense<0.000000e+00> : vector<4x8x8xf32>
    %1077 = tpu.matmul %1056, %1066, %cst_216 {dimension_numbers = #tpu.dot_dimension_numbers<[2], [2], [1], [1], [0, 0, 0, 1, 1, 1], [0], [0]>} : vector<4x8x8xbf16>, vector<4x8x8xbf16>, vector<4x8x8xf32> -> vector<4x8x8xf32>
    "tpu.trace_stop"() : () -> ()
    %cst_217 = arith.constant 0.353553385 : f32
    %1078 = vector.broadcast %cst_217 : f32 to vector<4x8x8xf32>
    %1079 = arith.mulf %1077, %1078 : vector<4x8x8xf32>
    %1080 = vector.broadcast %15 : vector<1x1x8xf32> to vector<4x8x8xf32>
    %1081 = arith.addf %1079, %1080 : vector<4x8x8xf32>
    %cst_218 = arith.constant dense<0xFF800000> : vector<4x8xf32>
    %1082 = vector.multi_reduction <maximumf>, %1081, %cst_218 [2] : vector<4x8x8xf32> to vector<4x8xf32>
    %1083 = vector.shape_cast %1082 : vector<4x8xf32> to vector<4x8x1xf32>
    %1084 = vector.broadcast %1083 : vector<4x8x1xf32> to vector<4x8x8xf32>
    %1085 = arith.subf %1081, %1084 : vector<4x8x8xf32>
    %1086 = math.exp %1085 : vector<4x8x8xf32>
    %cst_219 = arith.constant dense<0.000000e+00> : vector<4x8xf32>
    %1087 = vector.multi_reduction <add>, %1086, %cst_219 [2] : vector<4x8x8xf32> to vector<4x8xf32>
    %1088 = vector.shape_cast %1087 : vector<4x8xf32> to vector<4x8x1xf32>
    %1089 = vector.broadcast %1088 : vector<4x8x1xf32> to vector<4x8x8xf32>
    %1090 = arith.divf %1086, %1089 : vector<4x8x8xf32>
    %1091 = arith.truncf %1090 : vector<4x8x8xf32> to vector<4x8x8xbf16>
    "tpu.trace_start"() <{level = 10 : i32, message = "hqk,hkd->hqd"}> : () -> ()
    %cst_220 = arith.constant dense<0.000000e+00> : vector<4x8x8xf32>
    %1092 = tpu.matmul %1091, %1076, %cst_220 {dimension_numbers = #tpu.dot_dimension_numbers<[2], [1], [1], [2], [0, 0, 0, 1, 1, 2], [0], [0]>} : vector<4x8x8xbf16>, vector<4x8x8xbf16>, vector<4x8x8xf32> -> vector<4x8x8xf32>
    "tpu.trace_stop"() : () -> ()
    %1093 = vector.extract_strided_slice %1092 {offsets = [0, 0, 0], sizes = [1, 8, 8], strides = [1, 1, 1]} : vector<4x8x8xf32> to vector<1x8x8xf32>
    %1094 = vector.shape_cast %1093 : vector<1x8x8xf32> to vector<8x8xf32>
    %1095 = vector.extract_strided_slice %1092 {offsets = [1, 0, 0], sizes = [1, 8, 8], strides = [1, 1, 1]} : vector<4x8x8xf32> to vector<1x8x8xf32>
    %1096 = vector.shape_cast %1095 : vector<1x8x8xf32> to vector<8x8xf32>
    %1097 = vector.extract_strided_slice %1092 {offsets = [2, 0, 0], sizes = [1, 8, 8], strides = [1, 1, 1]} : vector<4x8x8xf32> to vector<1x8x8xf32>
    %1098 = vector.shape_cast %1097 : vector<1x8x8xf32> to vector<8x8xf32>
    %1099 = vector.extract_strided_slice %1092 {offsets = [3, 0, 0], sizes = [1, 8, 8], strides = [1, 1, 1]} : vector<4x8x8xf32> to vector<1x8x8xf32>
    %1100 = vector.shape_cast %1099 : vector<1x8x8xf32> to vector<8x8xf32>
    %1101 = tpu.concatenate %1094, %1096, %1098, %1100 in 1 : vector<8x8xf32>, vector<8x8xf32>, vector<8x8xf32>, vector<8x8xf32> -> vector<8x32xf32>
    %1102 = tpu.concatenate %1044, %1101 in 0 : vector<8x32xf32>, vector<8x32xf32> -> vector<16x32xf32>
    %c1_221 = arith.constant 1 : index
    %c0_222 = arith.constant 0 : index
    %c0_223 = arith.constant 0 : index
    %1103 = vector.load %arg16[%c1_221, %c0_222, %c0_223] : memref<2x32x32xbf16, #tpu.memory_space<vmem>>, vector<1x32x32xbf16>
    %1104 = vector.shape_cast %1103 : vector<1x32x32xbf16> to vector<32x32xbf16>
    %1105 = arith.truncf %1102 : vector<16x32xf32> to vector<16x32xbf16>
    %cst_224 = arith.constant dense<0.000000e+00> : vector<16x32xf32>
    %1106 = tpu.matmul %1105, %1104, %cst_224 {dimension_numbers = #tpu.dot_dimension_numbers<[1], [0], [0], [1], [0, 0, 1, 1], [], []>} : vector<16x32xbf16>, vector<32x32xbf16>, vector<16x32xf32> -> vector<16x32xf32>
    %1107 = vector.broadcast %821 : vector<1x32xf32> to vector<16x32xf32>
    %1108 = arith.addf %1106, %1107 : vector<16x32xf32>
    %1109 = arith.addf %975, %1108 : vector<16x32xf32>
    %cst_225 = arith.constant dense<0.000000e+00> : vector<16xf32>
    %1110 = vector.multi_reduction <add>, %1109, %cst_225 [1] : vector<16x32xf32> to vector<16xf32>
    %1111 = vector.shape_cast %1110 : vector<16xf32> to vector<16x1xf32>
    %cst_226 = arith.constant 3.200000e+01 : f32
    %1112 = vector.broadcast %cst_226 : f32 to vector<16x1xf32>
    %1113 = arith.divf %1111, %1112 : vector<16x1xf32>
    %1114 = vector.broadcast %1113 : vector<16x1xf32> to vector<16x32xf32>
    %1115 = arith.subf %1109, %1114 : vector<16x32xf32>
    %1116 = arith.mulf %1115, %1115 : vector<16x32xf32>
    %cst_227 = arith.constant dense<0.000000e+00> : vector<16xf32>
    %1117 = vector.multi_reduction <add>, %1116, %cst_227 [1] : vector<16x32xf32> to vector<16xf32>
    %1118 = vector.shape_cast %1117 : vector<16xf32> to vector<16x1xf32>
    %cst_228 = arith.constant 3.200000e+01 : f32
    %1119 = vector.broadcast %cst_228 : f32 to vector<16x1xf32>
    %1120 = arith.divf %1118, %1119 : vector<16x1xf32>
    %1121 = vector.broadcast %1113 : vector<16x1xf32> to vector<16x32xf32>
    %1122 = arith.subf %1109, %1121 : vector<16x32xf32>
    %cst_229 = arith.constant 9.99999974E-6 : f32
    %1123 = vector.broadcast %cst_229 : f32 to vector<16x1xf32>
    %1124 = arith.addf %1120, %1123 : vector<16x1xf32>
    %1125 = math.rsqrt %1124 : vector<16x1xf32>
    %1126 = vector.broadcast %1125 : vector<16x1xf32> to vector<16x32xf32>
    %1127 = arith.mulf %1122, %1126 : vector<16x32xf32>
    %1128 = vector.broadcast %822 : vector<1x32xf32> to vector<16x32xf32>
    %1129 = arith.mulf %1127, %1128 : vector<16x32xf32>
    %1130 = vector.broadcast %823 : vector<1x32xf32> to vector<16x32xf32>
    %1131 = arith.addf %1129, %1130 : vector<16x32xf32>
    %c1_230 = arith.constant 1 : index
    %c0_231 = arith.constant 0 : index
    %c0_232 = arith.constant 0 : index
    %1132 = vector.load %arg17[%c1_230, %c0_231, %c0_232] : memref<2x32x64xbf16, #tpu.memory_space<vmem>>, vector<1x32x64xbf16>
    %1133 = vector.shape_cast %1132 : vector<1x32x64xbf16> to vector<32x64xbf16>
    %1134 = arith.truncf %1131 : vector<16x32xf32> to vector<16x32xbf16>
    %cst_233 = arith.constant dense<0.000000e+00> : vector<16x64xf32>
    %1135 = tpu.matmul %1134, %1133, %cst_233 {dimension_numbers = #tpu.dot_dimension_numbers<[1], [0], [0], [1], [0, 0, 1, 1], [], []>} : vector<16x32xbf16>, vector<32x64xbf16>, vector<16x64xf32> -> vector<16x64xf32>
    %1136 = vector.broadcast %824 : vector<1x64xf32> to vector<16x64xf32>
    %1137 = arith.addf %1135, %1136 : vector<16x64xf32>
    %cst_234 = arith.constant 0.000000e+00 : f32
    %1138 = vector.broadcast %cst_234 : f32 to vector<16x64xf32>
    %1139 = arith.maximumf %1137, %1138 : vector<16x64xf32>
    %c1_235 = arith.constant 1 : index
    %c0_236 = arith.constant 0 : index
    %c0_237 = arith.constant 0 : index
    %1140 = vector.load %arg18[%c1_235, %c0_236, %c0_237] : memref<2x64x32xbf16, #tpu.memory_space<vmem>>, vector<1x64x32xbf16>
    %1141 = vector.shape_cast %1140 : vector<1x64x32xbf16> to vector<64x32xbf16>
    %1142 = arith.truncf %1139 : vector<16x64xf32> to vector<16x64xbf16>
    %cst_238 = arith.constant dense<0.000000e+00> : vector<16x32xf32>
    %1143 = tpu.matmul %1142, %1141, %cst_238 {dimension_numbers = #tpu.dot_dimension_numbers<[1], [0], [0], [1], [0, 0, 1, 1], [], []>} : vector<16x64xbf16>, vector<64x32xbf16>, vector<16x32xf32> -> vector<16x32xf32>
    %1144 = vector.broadcast %825 : vector<1x32xf32> to vector<16x32xf32>
    %1145 = arith.addf %1143, %1144 : vector<16x32xf32>
    %1146 = arith.addf %1131, %1145 : vector<16x32xf32>
    %cst_239 = arith.constant dense<0.000000e+00> : vector<16xf32>
    %1147 = vector.multi_reduction <add>, %1146, %cst_239 [1] : vector<16x32xf32> to vector<16xf32>
    %1148 = vector.shape_cast %1147 : vector<16xf32> to vector<16x1xf32>
    %cst_240 = arith.constant 3.200000e+01 : f32
    %1149 = vector.broadcast %cst_240 : f32 to vector<16x1xf32>
    %1150 = arith.divf %1148, %1149 : vector<16x1xf32>
    %1151 = vector.broadcast %1150 : vector<16x1xf32> to vector<16x32xf32>
    %1152 = arith.subf %1146, %1151 : vector<16x32xf32>
    %1153 = arith.mulf %1152, %1152 : vector<16x32xf32>
    %cst_241 = arith.constant dense<0.000000e+00> : vector<16xf32>
    %1154 = vector.multi_reduction <add>, %1153, %cst_241 [1] : vector<16x32xf32> to vector<16xf32>
    %1155 = vector.shape_cast %1154 : vector<16xf32> to vector<16x1xf32>
    %cst_242 = arith.constant 3.200000e+01 : f32
    %1156 = vector.broadcast %cst_242 : f32 to vector<16x1xf32>
    %1157 = arith.divf %1155, %1156 : vector<16x1xf32>
    %1158 = vector.broadcast %1150 : vector<16x1xf32> to vector<16x32xf32>
    %1159 = arith.subf %1146, %1158 : vector<16x32xf32>
    %cst_243 = arith.constant 9.99999974E-6 : f32
    %1160 = vector.broadcast %cst_243 : f32 to vector<16x1xf32>
    %1161 = arith.addf %1157, %1160 : vector<16x1xf32>
    %1162 = math.rsqrt %1161 : vector<16x1xf32>
    %1163 = vector.broadcast %1162 : vector<16x1xf32> to vector<16x32xf32>
    %1164 = arith.mulf %1159, %1163 : vector<16x32xf32>
    %1165 = vector.broadcast %826 : vector<1x32xf32> to vector<16x32xf32>
    %1166 = arith.mulf %1164, %1165 : vector<16x32xf32>
    %1167 = vector.broadcast %827 : vector<1x32xf32> to vector<16x32xf32>
    %1168 = arith.addf %1166, %1167 : vector<16x32xf32>
    %c0_244 = arith.constant 0 : index
    %c0_245 = arith.constant 0 : index
    %1169 = vector.load %arg20[%c0_244, %c0_245] : memref<32x128xbf16, #tpu.memory_space<vmem>>, vector<32x128xbf16>
    %1170 = arith.truncf %1168 : vector<16x32xf32> to vector<16x32xbf16>
    %cst_246 = arith.constant dense<0.000000e+00> : vector<16x128xf32>
    %1171 = tpu.matmul %1170, %1169, %cst_246 {dimension_numbers = #tpu.dot_dimension_numbers<[1], [0], [0], [1], [0, 0, 1, 1], [], []>} : vector<16x32xbf16>, vector<32x128xbf16>, vector<16x128xf32> -> vector<16x128xf32>
    %c0_247 = arith.constant 0 : index
    %c0_248 = arith.constant 0 : index
    %1172 = vector.load %arg21[%c0_247, %c0_248] : memref<1x128xf32, #tpu.memory_space<vmem>>, vector<1x128xf32>
    %1173 = vector.broadcast %1172 : vector<1x128xf32> to vector<16x128xf32>
    %1174 = arith.addf %1171, %1173 : vector<16x128xf32>
    %1175 = vector.shape_cast %1174 : vector<16x128xf32> to vector<2x8x128xf32>
    %c0_249 = arith.constant 0 : index
    %c0_250 = arith.constant 0 : index
    %c0_251 = arith.constant 0 : index
    %1176 = vector.load %arg22[%c0_249, %c0_250, %c0_251] : memref<2x8x128xf32, #tpu.memory_space<vmem>>, vector<2x8x128xf32>
    tpu.vector_store %arg22[%c0_249, %c0_250, %c0_251], %1175 {strides = array<i32>} : memref<2x8x128xf32, #tpu.memory_space<vmem>>, vector<2x8x128xf32>,
    return
  }
  func.func @transform_0(%arg0: i32) -> (i32, i32, i32) {
    %c0_i32 = arith.constant 0 : i32
    %c0_i32_0 = arith.constant 0 : i32
    %c0_i32_1 = arith.constant 0 : i32
    return %arg0, %c0_i32, %c0_i32_0 : i32, i32, i32
  }
  func.func @transform_1(%arg0: i32) -> (i32, i32, i32) {
    %c0_i32 = arith.constant 0 : i32
    %c0_i32_0 = arith.constant 0 : i32
    %c0_i32_1 = arith.constant 0 : i32
    return %arg0, %c0_i32, %c0_i32_0 : i32, i32, i32
  }
  func.func @transform_2(%arg0: i32) -> (i32, i32, i32) {
    %c0_i32 = arith.constant 0 : i32
    %c0_i32_0 = arith.constant 0 : i32
    %c0_i32_1 = arith.constant 0 : i32
    return %arg0, %c0_i32, %c0_i32_0 : i32, i32, i32
  }
  func.func @transform_3(%arg0: i32) -> (i32, i32) {
    %c0_i32 = arith.constant 0 : i32
    %c0_i32_0 = arith.constant 0 : i32
    %c0_i32_1 = arith.constant 0 : i32
    return %c0_i32, %c0_i32_0 : i32, i32
  }
  func.func @transform_4(%arg0: i32) -> (i32, i32) {
    %c0_i32 = arith.constant 0 : i32
    %c0_i32_0 = arith.constant 0 : i32
    %c0_i32_1 = arith.constant 0 : i32
    return %c0_i32, %c0_i32_0 : i32, i32
  }
  func.func @transform_5(%arg0: i32) -> (i32, i32) {
    %c0_i32 = arith.constant 0 : i32
    %c0_i32_0 = arith.constant 0 : i32
    %c0_i32_1 = arith.constant 0 : i32
    return %c0_i32, %c0_i32_0 : i32, i32
  }
  func.func @transform_6(%arg0: i32) -> (i32, i32, i32) {
    %c0_i32 = arith.constant 0 : i32
    %c0_i32_0 = arith.constant 0 : i32
    %c0_i32_1 = arith.constant 0 : i32
    %c0_i32_2 = arith.constant 0 : i32
    return %c0_i32, %c0_i32_0, %c0_i32_1 : i32, i32, i32
  }
  func.func @transform_7(%arg0: i32) -> (i32, i32, i32) {
    %c0_i32 = arith.constant 0 : i32
    %c0_i32_0 = arith.constant 0 : i32
    %c0_i32_1 = arith.constant 0 : i32
    %c0_i32_2 = arith.constant 0 : i32
    return %c0_i32, %c0_i32_0, %c0_i32_1 : i32, i32, i32
  }
  func.func @transform_8(%arg0: i32) -> (i32, i32, i32) {
    %c0_i32 = arith.constant 0 : i32
    %c0_i32_0 = arith.constant 0 : i32
    %c0_i32_1 = arith.constant 0 : i32
    %c0_i32_2 = arith.constant 0 : i32
    return %c0_i32, %c0_i32_0, %c0_i32_1 : i32, i32, i32
  }
  func.func @transform_9(%arg0: i32) -> (i32, i32, i32) {
    %c0_i32 = arith.constant 0 : i32
    %c0_i32_0 = arith.constant 0 : i32
    %c0_i32_1 = arith.constant 0 : i32
    %c0_i32_2 = arith.constant 0 : i32
    return %c0_i32, %c0_i32_0, %c0_i32_1 : i32, i32, i32
  }
  func.func @transform_10(%arg0: i32) -> (i32, i32, i32) {
    %c0_i32 = arith.constant 0 : i32
    %c0_i32_0 = arith.constant 0 : i32
    %c0_i32_1 = arith.constant 0 : i32
    %c0_i32_2 = arith.constant 0 : i32
    return %c0_i32, %c0_i32_0, %c0_i32_1 : i32, i32, i32
  }
  func.func @transform_11(%arg0: i32) -> (i32, i32, i32) {
    %c0_i32 = arith.constant 0 : i32
    %c0_i32_0 = arith.constant 0 : i32
    %c0_i32_1 = arith.constant 0 : i32
    %c0_i32_2 = arith.constant 0 : i32
    return %c0_i32, %c0_i32_0, %c0_i32_1 : i32, i32, i32
  }
  func.func @transform_12(%arg0: i32) -> (i32, i32, i32) {
    %c0_i32 = arith.constant 0 : i32
    %c0_i32_0 = arith.constant 0 : i32
    %c0_i32_1 = arith.constant 0 : i32
    %c0_i32_2 = arith.constant 0 : i32
    return %c0_i32, %c0_i32_0, %c0_i32_1 : i32, i32, i32
  }
  func.func @transform_13(%arg0: i32) -> (i32, i32, i32) {
    %c0_i32 = arith.constant 0 : i32
    %c0_i32_0 = arith.constant 0 : i32
    %c0_i32_1 = arith.constant 0 : i32
    %c0_i32_2 = arith.constant 0 : i32
    return %c0_i32, %c0_i32_0, %c0_i32_1 : i32, i32, i32
  }
  func.func @transform_14(%arg0: i32) -> (i32, i32, i32) {
    %c0_i32 = arith.constant 0 : i32
    %c0_i32_0 = arith.constant 0 : i32
    %c0_i32_1 = arith.constant 0 : i32
    %c0_i32_2 = arith.constant 0 : i32
    return %c0_i32, %c0_i32_0, %c0_i32_1 : i32, i32, i32
  }
  func.func @transform_15(%arg0: i32) -> (i32, i32, i32) {
    %c0_i32 = arith.constant 0 : i32
    %c0_i32_0 = arith.constant 0 : i32
    %c0_i32_1 = arith.constant 0 : i32
    %c0_i32_2 = arith.constant 0 : i32
    return %c0_i32, %c0_i32_0, %c0_i32_1 : i32, i32, i32
  }
  func.func @transform_16(%arg0: i32) -> (i32, i32, i32) {
    %c0_i32 = arith.constant 0 : i32
    %c0_i32_0 = arith.constant 0 : i32
    %c0_i32_1 = arith.constant 0 : i32
    %c0_i32_2 = arith.constant 0 : i32
    return %c0_i32, %c0_i32_0, %c0_i32_1 : i32, i32, i32
  }
  func.func @transform_17(%arg0: i32) -> (i32, i32, i32) {
    %c0_i32 = arith.constant 0 : i32
    %c0_i32_0 = arith.constant 0 : i32
    %c0_i32_1 = arith.constant 0 : i32
    %c0_i32_2 = arith.constant 0 : i32
    return %c0_i32, %c0_i32_0, %c0_i32_1 : i32, i32, i32
  }
  func.func @transform_18(%arg0: i32) -> (i32, i32, i32) {
    %c0_i32 = arith.constant 0 : i32
    %c0_i32_0 = arith.constant 0 : i32
    %c0_i32_1 = arith.constant 0 : i32
    %c0_i32_2 = arith.constant 0 : i32
    return %c0_i32, %c0_i32_0, %c0_i32_1 : i32, i32, i32
  }
  func.func @transform_19(%arg0: i32) -> (i32, i32) {
    %c0_i32 = arith.constant 0 : i32
    %c0_i32_0 = arith.constant 0 : i32
    %c0_i32_1 = arith.constant 0 : i32
    return %c0_i32, %c0_i32_0 : i32, i32
  }
  func.func @transform_20(%arg0: i32) -> (i32, i32) {
    %c0_i32 = arith.constant 0 : i32
    %c0_i32_0 = arith.constant 0 : i32
    %c0_i32_1 = arith.constant 0 : i32
    return %c0_i32, %c0_i32_0 : i32, i32
  }
  func.func @transform_21(%arg0: i32) -> (i32, i32, i32) {
    %c0_i32 = arith.constant 0 : i32
    %c0_i32_0 = arith.constant 0 : i32
    %c0_i32_1 = arith.constant 0 : i32
    return %arg0, %c0_i32, %c0_i32_0 : i32, i32, i32
  }
}

</mosaic_0001>

<llo_original>
// kernel: transformer_forward.1
$region0: #{transformer_forward.1}
  #allocation0 [shape = 'u32[]', space=smem, size = 0x4, offset = 0x4, fixed_abs, tag = 'smem constant byte address 0x4 - core index']
  #allocation1 [shape = 'u32[144,128]{1,0:T(1,128)}', space=vmem, size = 0x12000, scoped, tag = 'internal scratch']
  %s0 = inlined_call_operand.vmem [shape: s32[2,2,8], index: 0, kind: input, shape index: {}]
  %s1 = inlined_call_operand.vmem [shape: s32[2,16,1], index: 1, kind: input, shape index: {}]
  %s2 = inlined_call_operand.vmem [shape: s32[2,16,1], index: 2, kind: input, shape index: {}]
  %s3 = inlined_call_operand.hbm [shape: bf16[32,32], index: 3, kind: input, shape index: {}]
  %s4 = inlined_call_operand.hbm [shape: bf16[32,32], index: 4, kind: input, shape index: {}]
  %s5 = inlined_call_operand.vmem [shape: f32[8,32], index: 5, kind: input, shape index: {}]
  %s6 = inlined_call_operand.vmem [shape: bf16[2,32,96], index: 6, kind: input, shape index: {}]
  %s7 = inlined_call_operand.vmem [shape: bf16[2,32,32], index: 7, kind: input, shape index: {}]
  %s8 = inlined_call_operand.vmem [shape: bf16[2,32,64], index: 8, kind: input, shape index: {}]
  %s9 = inlined_call_operand.vmem [shape: bf16[2,64,32], index: 9, kind: input, shape index: {}]
  %s10 = inlined_call_operand.hbm [shape: f32[2,8,128], index: 10, kind: input, shape index: {}]
  %s11 = inlined_call_operand.vmem [shape: bf16[2,32,96], index: 11, kind: input, shape index: {}]
  %s12 = inlined_call_operand.vmem [shape: bf16[2,32,32], index: 12, kind: input, shape index: {}]
  %s13 = inlined_call_operand.vmem [shape: bf16[2,32,32], index: 13, kind: input, shape index: {}]
  %s14 = inlined_call_operand.vmem [shape: bf16[2,32,64], index: 14, kind: input, shape index: {}]
  %s15 = inlined_call_operand.vmem [shape: bf16[2,32,32], index: 15, kind: input, shape index: {}]
  %s16 = inlined_call_operand.vmem [shape: bf16[2,32,64], index: 16, kind: input, shape index: {}]
  %s17 = inlined_call_operand.vmem [shape: bf16[2,64,32], index: 17, kind: input, shape index: {}]
  %s18 = inlined_call_operand.vmem [shape: f32[2,13,128], index: 18, kind: input, shape index: {}]
  %s19 = inlined_call_operand.vmem [shape: bf16[32,128], index: 19, kind: input, shape index: {}]
  %s20 = inlined_call_operand.hbm [shape: f32[1,128], index: 20, kind: input, shape index: {}]
  %s21 = inlined_call_operand.hbm [shape: f32[4,8,128], index: 21, kind: output, shape index: {}]
  %s22 = sld [smem:[#allocation0]]
  $region133: #{transformer_forward.1} parent=0
    _
  %s24 = ssub.s32 1, %s22
  %s25 = scalar_select 0, %s24, %s22
  $region1: #{transformer_forward.1} parent=0
    #allocation2 [shape = 'u8[8192]{0}', space=vmem, size = 0x2000, scoped, tag = 'input window, operand 3, single buffered']
    #allocation3 [shape = 's32[2]{0}', space=sflag, size = 0x8, scoped, tag = 'scoped memory for transformer_forward.1']
    #allocation4 [shape = 's32[2]{0}', space=sflag, size = 0x8, scoped, tag = 'scoped memory for transformer_forward.1']
    #allocation5 [shape = 'u8[8192]{0}', space=vmem, size = 0x2000, scoped, tag = 'input window, operand 4, single buffered']
    #allocation6 [shape = 's32[1]{0}', space=sflag, size = 0x4, scoped, tag = 'scoped memory for transformer_forward.1']
    #allocation7 [shape = 'u8[8192]{0}', space=vmem, size = 0x2000, scoped, tag = 'input window, operand 10, single buffered']
    #allocation8 [shape = 'u8[512]{0}', space=vmem, size = 0x400, scoped, tag = 'input window, operand 20, single buffered']
    #allocation9 [shape = 's32[1]{0}', space=sflag, size = 0x4, scoped, tag = 'scoped memory for transformer_forward.1']
    #allocation10 [shape = 'u8[16384]{0}', space=vmem, size = 0x4000, scoped, tag = 'output window, operand 0']
    %26 = vsyncpa [#allocation3], 0
    %27 = vsyncpa [#allocation6], 0
    %28 = vsyncpa [#allocation9], 0
    %29 = vsyncpa [#allocation4], 0
    %s30 = scalar_lea.sflag [#allocation4], 1
    %31 = vsyncpa %s30, 0
    loop: start=0, step=1, limit=4
    $region2: #{transformer_forward.1} parent=1 // loop_pre_header
      _
    $region3: #{transformer_forward.1} parent=1 // loop_header
      %s33 = sphi 0, %s37
      %p34 = scmp.ge.s32.totalorder %s33, 4
      %s43 = sphi 0, %s45
      %s46 = sphi 0, %s43
      %s47 = sphi 0, %s46
      %s63 = sphi 0, %s47
      %s69 = sphi 0, %s71
      %s72 = sphi 0, %s69
      %s73 = sphi 0, %s72
      %s89 = sphi 0, %s73
      %s95 = sphi 0, %s97
      %s98 = sphi 0, %s95
      %s99 = sphi 0, %s98
      %s115 = sphi 0, %s99
      %s119 = sphi 0, %s119
      %s121 = sphi 0, %s119
      %s122 = sphi 0, %s121
      %s136 = sphi 0, %s122
      %s140 = sphi 0, %s140
      %s142 = sphi 0, %s140
      %s143 = sphi 0, %s142
      %s157 = sphi 0, %s143
      %s161 = sphi 0, %s161
      %s163 = sphi 0, %s161
      %s164 = sphi 0, %s163
      %s178 = sphi 0, %s164
      %s182 = sphi 0, %s182
      %s184 = sphi 0, %s182
      %s185 = sphi 0, %s184
      %s199 = sphi 0, %s185
      %s203 = sphi 0, %s203
      %s205 = sphi 0, %s203
      %s206 = sphi 0, %s205
      %s220 = sphi 0, %s206
      %s224 = sphi 0, %s224
      %s226 = sphi 0, %s224
      %s227 = sphi 0, %s226
      %s241 = sphi 0, %s227
      %s245 = sphi 0, %s245
      %s247 = sphi 0, %s245
      %s248 = sphi 0, %s247
      %s262 = sphi 0, %s248
      %s266 = sphi 0, %s266
      %s268 = sphi 0, %s266
      %s269 = sphi 0, %s268
      %s283 = sphi 0, %s269
      %s287 = sphi 0, %s287
      %s289 = sphi 0, %s287
      %s290 = sphi 0, %s289
      %s304 = sphi 0, %s290
      %s308 = sphi 0, %s308
      %s310 = sphi 0, %s308
      %s311 = sphi 0, %s310
      %s325 = sphi 0, %s311
      %s329 = sphi 0, %s329
      %s331 = sphi 0, %s329
      %s332 = sphi 0, %s331
      %s346 = sphi 0, %s332
      %s350 = sphi 0, %s350
      %s352 = sphi 0, %s350
      %s353 = sphi 0, %s352
      %s367 = sphi 0, %s353
      %s371 = sphi 0, %s371
      %s373 = sphi 0, %s371
      %s374 = sphi 0, %s373
      %s388 = sphi 0, %s374
      %s392 = sphi 0, %s392
      %s394 = sphi 0, %s392
      %s395 = sphi 0, %s394
      %s409 = sphi 0, %s395
      %s413 = sphi 0, %s413
      %s415 = sphi 0, %s413
      %s416 = sphi 0, %s415
      %s430 = sphi 0, %s416
      %s434 = sphi 0, %s434
      %s436 = sphi 0, %s434
      %s437 = sphi 0, %s436
      %s451 = sphi 0, %s437
      %s455 = sphi 0, %s455
      %s457 = sphi 0, %s455
      %s458 = sphi 0, %s457
      %s472 = sphi 0, %s458
      %s476 = sphi 0, %s476
      %s478 = sphi 0, %s476
      %s479 = sphi 0, %s478
      %s493 = sphi 0, %s479
      %s499 = sphi 0, %s501
      %s502 = sphi 0, %s499
      %s503 = sphi 0, %s502
      %s519 = sphi 0, %s503
    $region4: #{transformer_forward.1} parent=1 // loop_header_branch
      %36 = sbr.rel (%p34) target = $region8
    $region5: #{transformer_forward.1} parent=1 // loop_body
      %s38 = ssub.s32 %s33, 1
      %s39 = ssub.s32 %s33, 2
      %s40 = sadd.s32 %s33, 1
      %s41 = ssub.s32 %s33, %s40
      %p42 = scmp.eq.s32.totalorder %s41, 0
      %s44 = sadd.s32 %s43, 1
      %s45 = scalar_select %p42, %s43, %s44
      %p48 = pneg %p42
      %p49 = scmp.eq.s32.totalorder %s33, 1
      %p50 = por %p48, %p49
      %p51 = scmp.ne.s32.totalorder %s43, %s46
      %p52 = scmp.eq.s32.totalorder %s33, 0
      %p53 = por %p51, %p52
      %p54 = scmp.ne.s32.totalorder %s43, %s46
      %p55 = scmp.eq.s32.totalorder %s38, 1
      %p56 = por %p54, %p55
      %p57 = scmp.ne.s32.totalorder %s46, %s47
      %p58 = scmp.eq.s32.totalorder %s38, 0
      %p59 = por %p57, %p58
      %p60 = scmp.ne.s32.totalorder %s46, %s47
      %p61 = scmp.eq.s32.totalorder %s39, 1
      %p62 = por %p60, %p61
      %p64 = scmp.ne.s32.totalorder %s47, %s63
      %p65 = scmp.eq.s32.totalorder %s39, 0
      %p66 = por %p64, %p65
      %s67 = ssub.s32 %s33, %s40
      %p68 = scmp.eq.s32.totalorder %s67, 0
      %s70 = sadd.s32 %s69, 1
      %s71 = scalar_select %p68, %s69, %s70
      %p74 = pneg %p68
      %p75 = scmp.eq.s32.totalorder %s33, 1
      %p76 = por %p74, %p75
      %p77 = scmp.ne.s32.totalorder %s69, %s72
      %p78 = scmp.eq.s32.totalorder %s33, 0
      %p79 = por %p77, %p78
      %p80 = scmp.ne.s32.totalorder %s69, %s72
      %p81 = scmp.eq.s32.totalorder %s38, 1
      %p82 = por %p80, %p81
      %p83 = scmp.ne.s32.totalorder %s72, %s73
      %p84 = scmp.eq.s32.totalorder %s38, 0
      %p85 = por %p83, %p84
      %p86 = scmp.ne.s32.totalorder %s72, %s73
      %p87 = scmp.eq.s32.totalorder %s39, 1
      %p88 = por %p86, %p87
      %p90 = scmp.ne.s32.totalorder %s73, %s89
      %p91 = scmp.eq.s32.totalorder %s39, 0
      %p92 = por %p90, %p91
      %s93 = ssub.s32 %s33, %s40
      %p94 = scmp.eq.s32.totalorder %s93, 0
      %s96 = sadd.s32 %s95, 1
      %s97 = scalar_select %p94, %s95, %s96
      %p100 = pneg %p94
      %p101 = scmp.eq.s32.totalorder %s33, 1
      %p102 = por %p100, %p101
      %p103 = scmp.ne.s32.totalorder %s95, %s98
      %p104 = scmp.eq.s32.totalorder %s33, 0
      %p105 = por %p103, %p104
      %p106 = scmp.ne.s32.totalorder %s95, %s98
      %p107 = scmp.eq.s32.totalorder %s38, 1
      %p108 = por %p106, %p107
      %p109 = scmp.ne.s32.totalorder %s98, %s99
      %p110 = scmp.eq.s32.totalorder %s38, 0
      %p111 = por %p109, %p110
      %p112 = scmp.ne.s32.totalorder %s98, %s99
      %p113 = scmp.eq.s32.totalorder %s39, 1
      %p114 = por %p112, %p113
      %p116 = scmp.ne.s32.totalorder %s99, %s115
      %p117 = scmp.eq.s32.totalorder %s39, 0
      %p118 = por %p116, %p117
      %s120 = sadd.s32 %s119, 1
      %p123 = scmp.eq.s32.totalorder %s33, 1
      %p124 = scmp.ne.s32.totalorder %s119, %s121
      %p125 = scmp.eq.s32.totalorder %s33, 0
      %p126 = por %p124, %p125
      %p127 = scmp.ne.s32.totalorder %s119, %s121
      %p128 = scmp.eq.s32.totalorder %s38, 1
      %p129 = por %p127, %p128
      %p130 = scmp.ne.s32.totalorder %s121, %s122
      %p131 = scmp.eq.s32.totalorder %s38, 0
      %p132 = por %p130, %p131
      %p133 = scmp.ne.s32.totalorder %s121, %s122
      %p134 = scmp.eq.s32.totalorder %s39, 1
      %p135 = por %p133, %p134
      %p137 = scmp.ne.s32.totalorder %s122, %s136
      %p138 = scmp.eq.s32.totalorder %s39, 0
      %p139 = por %p137, %p138
      %s141 = sadd.s32 %s140, 1
      %p144 = scmp.eq.s32.totalorder %s33, 1
      %p145 = scmp.ne.s32.totalorder %s140, %s142
      %p146 = scmp.eq.s32.totalorder %s33, 0
      %p147 = por %p145, %p146
      %p148 = scmp.ne.s32.totalorder %s140, %s142
      %p149 = scmp.eq.s32.totalorder %s38, 1
      %p150 = por %p148, %p149
      %p151 = scmp.ne.s32.totalorder %s142, %s143
      %p152 = scmp.eq.s32.totalorder %s38, 0
      %p153 = por %p151, %p152
      %p154 = scmp.ne.s32.totalorder %s142, %s143
      %p155 = scmp.eq.s32.totalorder %s39, 1
      %p156 = por %p154, %p155
      %p158 = scmp.ne.s32.totalorder %s143, %s157
      %p159 = scmp.eq.s32.totalorder %s39, 0
      %p160 = por %p158, %p159
      %s162 = sadd.s32 %s161, 1
      %p165 = scmp.eq.s32.totalorder %s33, 1
      %p166 = scmp.ne.s32.totalorder %s161, %s163
      %p167 = scmp.eq.s32.totalorder %s33, 0
      %p168 = por %p166, %p167
      %p169 = scmp.ne.s32.totalorder %s161, %s163
      %p170 = scmp.eq.s32.totalorder %s38, 1
      %p171 = por %p169, %p170
      %p172 = scmp.ne.s32.totalorder %s163, %s164
      %p173 = scmp.eq.s32.totalorder %s38, 0
      %p174 = por %p172, %p173
      %p175 = scmp.ne.s32.totalorder %s163, %s164
      %p176 = scmp.eq.s32.totalorder %s39, 1
      %p177 = por %p175, %p176
      %p179 = scmp.ne.s32.totalorder %s164, %s178
      %p180 = scmp.eq.s32.totalorder %s39, 0
      %p181 = por %p179, %p180
      %s183 = sadd.s32 %s182, 1
      %p186 = scmp.eq.s32.totalorder %s33, 1
      %p187 = scmp.ne.s32.totalorder %s182, %s184
      %p188 = scmp.eq.s32.totalorder %s33, 0
      %p189 = por %p187, %p188
      %p190 = scmp.ne.s32.totalorder %s182, %s184
      %p191 = scmp.eq.s32.totalorder %s38, 1
      %p192 = por %p190, %p191
      %p193 = scmp.ne.s32.totalorder %s184, %s185
      %p194 = scmp.eq.s32.totalorder %s38, 0
      %p195 = por %p193, %p194
      %p196 = scmp.ne.s32.totalorder %s184, %s185
      %p197 = scmp.eq.s32.totalorder %s39, 1
      %p198 = por %p196, %p197
      %p200 = scmp.ne.s32.totalorder %s185, %s199
      %p201 = scmp.eq.s32.totalorder %s39, 0
      %p202 = por %p200, %p201
      %s204 = sadd.s32 %s203, 1
      %p207 = scmp.eq.s32.totalorder %s33, 1
      %p208 = scmp.ne.s32.totalorder %s203, %s205
      %p209 = scmp.eq.s32.totalorder %s33, 0
      %p210 = por %p208, %p209
      %p211 = scmp.ne.s32.totalorder %s203, %s205
      %p212 = scmp.eq.s32.totalorder %s38, 1
      %p213 = por %p211, %p212
      %p214 = scmp.ne.s32.totalorder %s205, %s206
      %p215 = scmp.eq.s32.totalorder %s38, 0
      %p216 = por %p214, %p215
      %p217 = scmp.ne.s32.totalorder %s205, %s206
      %p218 = scmp.eq.s32.totalorder %s39, 1
      %p219 = por %p217, %p218
      %p221 = scmp.ne.s32.totalorder %s206, %s220
      %p222 = scmp.eq.s32.totalorder %s39, 0
      %p223 = por %p221, %p222
      %s225 = sadd.s32 %s224, 1
      %p228 = scmp.eq.s32.totalorder %s33, 1
      %p229 = scmp.ne.s32.totalorder %s224, %s226
      %p230 = scmp.eq.s32.totalorder %s33, 0
      %p231 = por %p229, %p230
      %p232 = scmp.ne.s32.totalorder %s224, %s226
      %p233 = scmp.eq.s32.totalorder %s38, 1
      %p234 = por %p232, %p233
      %p235 = scmp.ne.s32.totalorder %s226, %s227
      %p236 = scmp.eq.s32.totalorder %s38, 0
      %p237 = por %p235, %p236
      %p238 = scmp.ne.s32.totalorder %s226, %s227
      %p239 = scmp.eq.s32.totalorder %s39, 1
      %p240 = por %p238, %p239
      %p242 = scmp.ne.s32.totalorder %s227, %s241
      %p243 = scmp.eq.s32.totalorder %s39, 0
      %p244 = por %p242, %p243
      %s246 = sadd.s32 %s245, 1
      %p249 = scmp.eq.s32.totalorder %s33, 1
      %p250 = scmp.ne.s32.totalorder %s245, %s247
      %p251 = scmp.eq.s32.totalorder %s33, 0
      %p252 = por %p250, %p251
      %p253 = scmp.ne.s32.totalorder %s245, %s247
      %p254 = scmp.eq.s32.totalorder %s38, 1
      %p255 = por %p253, %p254
      %p256 = scmp.ne.s32.totalorder %s247, %s248
      %p257 = scmp.eq.s32.totalorder %s38, 0
      %p258 = por %p256, %p257
      %p259 = scmp.ne.s32.totalorder %s247, %s248
      %p260 = scmp.eq.s32.totalorder %s39, 1
      %p261 = por %p259, %p260
      %p263 = scmp.ne.s32.totalorder %s248, %s262
      %p264 = scmp.eq.s32.totalorder %s39, 0
      %p265 = por %p263, %p264
      %s267 = sadd.s32 %s266, 1
      %p270 = scmp.eq.s32.totalorder %s33, 1
      %p271 = scmp.ne.s32.totalorder %s266, %s268
      %p272 = scmp.eq.s32.totalorder %s33, 0
      %p273 = por %p271, %p272
      %p274 = scmp.ne.s32.totalorder %s266, %s268
      %p275 = scmp.eq.s32.totalorder %s38, 1
      %p276 = por %p274, %p275
      %p277 = scmp.ne.s32.totalorder %s268, %s269
      %p278 = scmp.eq.s32.totalorder %s38, 0
      %p279 = por %p277, %p278
      %p280 = scmp.ne.s32.totalorder %s268, %s269
      %p281 = scmp.eq.s32.totalorder %s39, 1
      %p282 = por %p280, %p281
      %p284 = scmp.ne.s32.totalorder %s269, %s283
      %p285 = scmp.eq.s32.totalorder %s39, 0
      %p286 = por %p284, %p285
      %s288 = sadd.s32 %s287, 1
      %p291 = scmp.eq.s32.totalorder %s33, 1
      %p292 = scmp.ne.s32.totalorder %s287, %s289
      %p293 = scmp.eq.s32.totalorder %s33, 0
      %p294 = por %p292, %p293
      %p295 = scmp.ne.s32.totalorder %s287, %s289
      %p296 = scmp.eq.s32.totalorder %s38, 1
      %p297 = por %p295, %p296
      %p298 = scmp.ne.s32.totalorder %s289, %s290
      %p299 = scmp.eq.s32.totalorder %s38, 0
      %p300 = por %p298, %p299
      %p301 = scmp.ne.s32.totalorder %s289, %s290
      %p302 = scmp.eq.s32.totalorder %s39, 1
      %p303 = por %p301, %p302
      %p305 = scmp.ne.s32.totalorder %s290, %s304
      %p306 = scmp.eq.s32.totalorder %s39, 0
      %p307 = por %p305, %p306
      %s309 = sadd.s32 %s308, 1
      %p312 = scmp.eq.s32.totalorder %s33, 1
      %p313 = scmp.ne.s32.totalorder %s308, %s310
      %p314 = scmp.eq.s32.totalorder %s33, 0
      %p315 = por %p313, %p314
      %p316 = scmp.ne.s32.totalorder %s308, %s310
      %p317 = scmp.eq.s32.totalorder %s38, 1
      %p318 = por %p316, %p317
      %p319 = scmp.ne.s32.totalorder %s310, %s311
      %p320 = scmp.eq.s32.totalorder %s38, 0
      %p321 = por %p319, %p320
      %p322 = scmp.ne.s32.totalorder %s310, %s311
      %p323 = scmp.eq.s32.totalorder %s39, 1
      %p324 = por %p322, %p323
      %p326 = scmp.ne.s32.totalorder %s311, %s325
      %p327 = scmp.eq.s32.totalorder %s39, 0
      %p328 = por %p326, %p327
      %s330 = sadd.s32 %s329, 1
      %p333 = scmp.eq.s32.totalorder %s33, 1
      %p334 = scmp.ne.s32.totalorder %s329, %s331
      %p335 = scmp.eq.s32.totalorder %s33, 0
      %p336 = por %p334, %p335
      %p337 = scmp.ne.s32.totalorder %s329, %s331
      %p338 = scmp.eq.s32.totalorder %s38, 1
      %p339 = por %p337, %p338
      %p340 = scmp.ne.s32.totalorder %s331, %s332
      %p341 = scmp.eq.s32.totalorder %s38, 0
      %p342 = por %p340, %p341
      %p343 = scmp.ne.s32.totalorder %s331, %s332
      %p344 = scmp.eq.s32.totalorder %s39, 1
      %p345 = por %p343, %p344
      %p347 = scmp.ne.s32.totalorder %s332, %s346
      %p348 = scmp.eq.s32.totalorder %s39, 0
      %p349 = por %p347, %p348
      %s351 = sadd.s32 %s350, 1
      %p354 = scmp.eq.s32.totalorder %s33, 1
      %p355 = scmp.ne.s32.totalorder %s350, %s352
      %p356 = scmp.eq.s32.totalorder %s33, 0
      %p357 = por %p355, %p356
      %p358 = scmp.ne.s32.totalorder %s350, %s352
      %p359 = scmp.eq.s32.totalorder %s38, 1
      %p360 = por %p358, %p359
      %p361 = scmp.ne.s32.totalorder %s352, %s353
      %p362 = scmp.eq.s32.totalorder %s38, 0
      %p363 = por %p361, %p362
      %p364 = scmp.ne.s32.totalorder %s352, %s353
      %p365 = scmp.eq.s32.totalorder %s39, 1
      %p366 = por %p364, %p365
      %p368 = scmp.ne.s32.totalorder %s353, %s367
      %p369 = scmp.eq.s32.totalorder %s39, 0
      %p370 = por %p368, %p369
      %s372 = sadd.s32 %s371, 1
      %p375 = scmp.eq.s32.totalorder %s33, 1
      %p376 = scmp.ne.s32.totalorder %s371, %s373
      %p377 = scmp.eq.s32.totalorder %s33, 0
      %p378 = por %p376, %p377
      %p379 = scmp.ne.s32.totalorder %s371, %s373
      %p380 = scmp.eq.s32.totalorder %s38, 1
      %p381 = por %p379, %p380
      %p382 = scmp.ne.s32.totalorder %s373, %s374
      %p383 = scmp.eq.s32.totalorder %s38, 0
      %p384 = por %p382, %p383
      %p385 = scmp.ne.s32.totalorder %s373, %s374
      %p386 = scmp.eq.s32.totalorder %s39, 1
      %p387 = por %p385, %p386
      %p389 = scmp.ne.s32.totalorder %s374, %s388
      %p390 = scmp.eq.s32.totalorder %s39, 0
      %p391 = por %p389, %p390
      %s393 = sadd.s32 %s392, 1
      %p396 = scmp.eq.s32.totalorder %s33, 1
      %p397 = scmp.ne.s32.totalorder %s392, %s394
      %p398 = scmp.eq.s32.totalorder %s33, 0
      %p399 = por %p397, %p398
      %p400 = scmp.ne.s32.totalorder %s392, %s394
      %p401 = scmp.eq.s32.totalorder %s38, 1
      %p402 = por %p400, %p401
      %p403 = scmp.ne.s32.totalorder %s394, %s395
      %p404 = scmp.eq.s32.totalorder %s38, 0
      %p405 = por %p403, %p404
      %p406 = scmp.ne.s32.totalorder %s394, %s395
      %p407 = scmp.eq.s32.totalorder %s39, 1
      %p408 = por %p406, %p407
      %p410 = scmp.ne.s32.totalorder %s395, %s409
      %p411 = scmp.eq.s32.totalorder %s39, 0
      %p412 = por %p410, %p411
      %s414 = sadd.s32 %s413, 1
      %p417 = scmp.eq.s32.totalorder %s33, 1
      %p418 = scmp.ne.s32.totalorder %s413, %s415
      %p419 = scmp.eq.s32.totalorder %s33, 0
      %p420 = por %p418, %p419
      %p421 = scmp.ne.s32.totalorder %s413, %s415
      %p422 = scmp.eq.s32.totalorder %s38, 1
      %p423 = por %p421, %p422
      %p424 = scmp.ne.s32.totalorder %s415, %s416
      %p425 = scmp.eq.s32.totalorder %s38, 0
      %p426 = por %p424, %p425
      %p427 = scmp.ne.s32.totalorder %s415, %s416
      %p428 = scmp.eq.s32.totalorder %s39, 1
      %p429 = por %p427, %p428
      %p431 = scmp.ne.s32.totalorder %s416, %s430
      %p432 = scmp.eq.s32.totalorder %s39, 0
      %p433 = por %p431, %p432
      %s435 = sadd.s32 %s434, 1
      %p438 = scmp.eq.s32.totalorder %s33, 1
      %p439 = scmp.ne.s32.totalorder %s434, %s436
      %p440 = scmp.eq.s32.totalorder %s33, 0
      %p441 = por %p439, %p440
      %p442 = scmp.ne.s32.totalorder %s434, %s436
      %p443 = scmp.eq.s32.totalorder %s38, 1
      %p444 = por %p442, %p443
      %p445 = scmp.ne.s32.totalorder %s436, %s437
      %p446 = scmp.eq.s32.totalorder %s38, 0
      %p447 = por %p445, %p446
      %p448 = scmp.ne.s32.totalorder %s436, %s437
      %p449 = scmp.eq.s32.totalorder %s39, 1
      %p450 = por %p448, %p449
      %p452 = scmp.ne.s32.totalorder %s437, %s451
      %p453 = scmp.eq.s32.totalorder %s39, 0
      %p454 = por %p452, %p453
      %s456 = sadd.s32 %s455, 1
      %p459 = scmp.eq.s32.totalorder %s33, 1
      %p460 = scmp.ne.s32.totalorder %s455, %s457
      %p461 = scmp.eq.s32.totalorder %s33, 0
      %p462 = por %p460, %p461
      %p463 = scmp.ne.s32.totalorder %s455, %s457
      %p464 = scmp.eq.s32.totalorder %s38, 1
      %p465 = por %p463, %p464
      %p466 = scmp.ne.s32.totalorder %s457, %s458
      %p467 = scmp.eq.s32.totalorder %s38, 0
      %p468 = por %p466, %p467
      %p469 = scmp.ne.s32.totalorder %s457, %s458
      %p470 = scmp.eq.s32.totalorder %s39, 1
      %p471 = por %p469, %p470
      %p473 = scmp.ne.s32.totalorder %s458, %s472
      %p474 = scmp.eq.s32.totalorder %s39, 0
      %p475 = por %p473, %p474
      %s477 = sadd.s32 %s476, 1
      %p480 = scmp.eq.s32.totalorder %s33, 1
      %p481 = scmp.ne.s32.totalorder %s476, %s478
      %p482 = scmp.eq.s32.totalorder %s33, 0
      %p483 = por %p481, %p482
      %p484 = scmp.ne.s32.totalorder %s476, %s478
      %p485 = scmp.eq.s32.totalorder %s38, 1
      %p486 = por %p484, %p485
      %p487 = scmp.ne.s32.totalorder %s478, %s479
      %p488 = scmp.eq.s32.totalorder %s38, 0
      %p489 = por %p487, %p488
      %p490 = scmp.ne.s32.totalorder %s478, %s479
      %p491 = scmp.eq.s32.totalorder %s39, 1
      %p492 = por %p490, %p491
      %p494 = scmp.ne.s32.totalorder %s479, %s493
      %p495 = scmp.eq.s32.totalorder %s39, 0
      %p496 = por %p494, %p495
      %s497 = ssub.s32 %s33, %s40
      %p498 = scmp.eq.s32.totalorder %s497, 0
      %s500 = sadd.s32 %s499, 1
      %s501 = scalar_select %p498, %s499, %s500
      %p504 = pneg %p498
      %p505 = scmp.eq.s32.totalorder %s33, 1
      %p506 = por %p504, %p505
      %p507 = scmp.ne.s32.totalorder %s499, %s502
      %p508 = scmp.eq.s32.totalorder %s33, 0
      %p509 = por %p507, %p508
      %p510 = scmp.ne.s32.totalorder %s499, %s502
      %p511 = scmp.eq.s32.totalorder %s38, 1
      %p512 = por %p510, %p511
      %p513 = scmp.ne.s32.totalorder %s502, %s503
      %p514 = scmp.eq.s32.totalorder %s38, 0
      %p515 = por %p513, %p514
      %p516 = scmp.ne.s32.totalorder %s502, %s503
      %p517 = scmp.eq.s32.totalorder %s39, 1
      %p518 = por %p516, %p517
      %p520 = scmp.ne.s32.totalorder %s503, %s519
      %p521 = scmp.eq.s32.totalorder %s39, 0
      %p522 = por %p520, %p521
      %p523 = scmp.le.s32.totalorder 1, %s33
      %p524 = scmp.lt.s32.totalorder %s33, 3
      %p525 = pnand %p523, %p524
      %p526 = pneg %p525
      // Predicated region
      $region9: #{transformer_forward.1} parent=5 // pred_check
        _
      $region10: #{transformer_forward.1} parent=5 // pred_check_branch
        %528 = sbr.rel (%p525) target = $region12
      $region11: #{transformer_forward.1} parent=5 // pred_region
        %s529 = ssub.s32 %s33, 1
        // Predicated region
        $region13: #{transformer_forward.1} parent=11 // pred_check
          %p530 = pneg %p132
        $region14: #{transformer_forward.1} parent=11 // pred_check_branch
          %532 = sbr.rel (%p530) target = $region16
        $region15: #{transformer_forward.1} parent=11 // pred_region
          %s534 = ssub.s32 256, 256
          %535 = vsyncadd [#allocation3], %s534
          %s536 = sshll.u32 [#allocation2], 4
          %s537 = int_to_ptr.vmem [resolvable:$true] %s536
          %542 = dma.hbm_to_vmem [thread:$0]  %s3, 256, %s537, [#allocation3], 64, 64, 4
        $region16: #{transformer_forward.1} parent=11 // pred_fallthru
          _
        // Predicated region
        $region17: #{transformer_forward.1} parent=11 // pred_check
          %p543 = pneg %p153
        $region18: #{transformer_forward.1} parent=11 // pred_check_branch
          %545 = sbr.rel (%p543) target = $region20
        $region19: #{transformer_forward.1} parent=11 // pred_region
          %s547 = ssub.s32 256, 256
          %548 = vsyncadd [#allocation6], %s547
          %s549 = sshll.u32 [#allocation5], 4
          %s550 = int_to_ptr.vmem [resolvable:$true] %s549
          %555 = dma.hbm_to_vmem [thread:$0]  %s4, 256, %s550, [#allocation6], 64, 64, 4
        $region20: #{transformer_forward.1} parent=11 // pred_fallthru
          _
        // Predicated region
        $region21: #{transformer_forward.1} parent=11 // pred_check
          %p556 = pneg %p174
        $region22: #{transformer_forward.1} parent=11 // pred_check_branch
          %558 = sbr.rel (%p556) target = $region24
        $region23: #{transformer_forward.1} parent=11 // pred_region
          _
        $region24: #{transformer_forward.1} parent=11 // pred_fallthru
          _
        // Predicated region
        $region25: #{transformer_forward.1} parent=11 // pred_check
          %p559 = pneg %p195
        $region26: #{transformer_forward.1} parent=11 // pred_check_branch
          %561 = sbr.rel (%p559) target = $region28
        $region27: #{transformer_forward.1} parent=11 // pred_region
          _
        $region28: #{transformer_forward.1} parent=11 // pred_fallthru
          _
        // Predicated region
        $region29: #{transformer_forward.1} parent=11 // pred_check
          %p562 = pneg %p216
        $region30: #{transformer_forward.1} parent=11 // pred_check_branch
          %564 = sbr.rel (%p562) target = $region32
        $region31: #{transformer_forward.1} parent=11 // pred_region
          _
        $region32: #{transformer_forward.1} parent=11 // pred_fallthru
          _
        // Predicated region
        $region33: #{transformer_forward.1} parent=11 // pred_check
          %p565 = pneg %p237
        $region34: #{transformer_forward.1} parent=11 // pred_check_branch
          %567 = sbr.rel (%p565) target = $region36
        $region35: #{transformer_forward.1} parent=11 // pred_region
          _
        $region36: #{transformer_forward.1} parent=11 // pred_fallthru
          _
        // Predicated region
        $region37: #{transformer_forward.1} parent=11 // pred_check
          %p568 = pneg %p258
        $region38: #{transformer_forward.1} parent=11 // pred_check_branch
          %570 = sbr.rel (%p568) target = $region40
        $region39: #{transformer_forward.1} parent=11 // pred_region
          _
        $region40: #{transformer_forward.1} parent=11 // pred_fallthru
          _
        // Predicated region
        $region41: #{transformer_forward.1} parent=11 // pred_check
          %p571 = pneg %p279
        $region42: #{transformer_forward.1} parent=11 // pred_check_branch
          %573 = sbr.rel (%p571) target = $region44
        $region43: #{transformer_forward.1} parent=11 // pred_region
          %s575 = ssub.s32 256, 256
          %576 = vsyncadd [#allocation6], %s575
          %s577 = sshll.u32 [#allocation7], 4
          %s578 = int_to_ptr.vmem [resolvable:$true] %s577
          %583 = dma.hbm_to_vmem [thread:$0]  %s10, 256, %s578, [#allocation6], 128, 128, 8
        $region44: #{transformer_forward.1} parent=11 // pred_fallthru
          _
        // Predicated region
        $region45: #{transformer_forward.1} parent=11 // pred_check
          %p584 = pneg %p300
        $region46: #{transformer_forward.1} parent=11 // pred_check_branch
          %586 = sbr.rel (%p584) target = $region48
        $region47: #{transformer_forward.1} parent=11 // pred_region
          _
        $region48: #{transformer_forward.1} parent=11 // pred_fallthru
          _
        // Predicated region
        $region49: #{transformer_forward.1} parent=11 // pred_check
          %p587 = pneg %p321
        $region50: #{transformer_forward.1} parent=11 // pred_check_branch
          %589 = sbr.rel (%p587) target = $region52
        $region51: #{transformer_forward.1} parent=11 // pred_region
          _
        $region52: #{transformer_forward.1} parent=11 // pred_fallthru
          _
        // Predicated region
        $region53: #{transformer_forward.1} parent=11 // pred_check
          %p590 = pneg %p342
        $region54: #{transformer_forward.1} parent=11 // pred_check_branch
          %592 = sbr.rel (%p590) target = $region56
        $region55: #{transformer_forward.1} parent=11 // pred_region
          _
        $region56: #{transformer_forward.1} parent=11 // pred_fallthru
          _
        // Predicated region
        $region57: #{transformer_forward.1} parent=11 // pred_check
          %p593 = pneg %p363
        $region58: #{transformer_forward.1} parent=11 // pred_check_branch
          %595 = sbr.rel (%p593) target = $region60
        $region59: #{transformer_forward.1} parent=11 // pred_region
          _
        $region60: #{transformer_forward.1} parent=11 // pred_fallthru
          _
        // Predicated region
        $region61: #{transformer_forward.1} parent=11 // pred_check
          %p596 = pneg %p384
        $region62: #{transformer_forward.1} parent=11 // pred_check_branch
          %598 = sbr.rel (%p596) target = $region64
        $region63: #{transformer_forward.1} parent=11 // pred_region
          _
        $region64: #{transformer_forward.1} parent=11 // pred_fallthru
          _
        // Predicated region
        $region65: #{transformer_forward.1} parent=11 // pred_check
          %p599 = pneg %p405
        $region66: #{transformer_forward.1} parent=11 // pred_check_branch
          %601 = sbr.rel (%p599) target = $region68
        $region67: #{transformer_forward.1} parent=11 // pred_region
          _
        $region68: #{transformer_forward.1} parent=11 // pred_fallthru
          _
        // Predicated region
        $region69: #{transformer_forward.1} parent=11 // pred_check
          %p602 = pneg %p426
        $region70: #{transformer_forward.1} parent=11 // pred_check_branch
          %604 = sbr.rel (%p602) target = $region72
        $region71: #{transformer_forward.1} parent=11 // pred_region
          _
        $region72: #{transformer_forward.1} parent=11 // pred_fallthru
          _
        // Predicated region
        $region73: #{transformer_forward.1} parent=11 // pred_check
          %p605 = pneg %p447
        $region74: #{transformer_forward.1} parent=11 // pred_check_branch
          %607 = sbr.rel (%p605) target = $region76
        $region75: #{transformer_forward.1} parent=11 // pred_region
          _
        $region76: #{transformer_forward.1} parent=11 // pred_fallthru
          _
        // Predicated region
        $region77: #{transformer_forward.1} parent=11 // pred_check
          %p608 = pneg %p468
        $region78: #{transformer_forward.1} parent=11 // pred_check_branch
          %610 = sbr.rel (%p608) target = $region80
        $region79: #{transformer_forward.1} parent=11 // pred_region
          _
        $region80: #{transformer_forward.1} parent=11 // pred_fallthru
          _
        // Predicated region
        $region81: #{transformer_forward.1} parent=11 // pred_check
          %p611 = pneg %p489
        $region82: #{transformer_forward.1} parent=11 // pred_check_branch
          %613 = sbr.rel (%p611) target = $region84
        $region83: #{transformer_forward.1} parent=11 // pred_region
          %s615 = ssub.s32 16, 16
          %616 = vsyncadd [#allocation9], %s615
          %s618 = sshll.u32 [#allocation8], 4
          %s619 = int_to_ptr.vmem [resolvable:$true] %s618
          %621 = dma.hbm_to_vmem [thread:$0]  %s20, 16, %s619, [#allocation9]
        $region84: #{transformer_forward.1} parent=11 // pred_fallthru
          _
      $region12: #{transformer_forward.1} parent=5 // pred_fallthru
        _
      %p622 = scmp.lt.s32.totalorder %s33, 2
      // Predicated region
      $region85: #{transformer_forward.1} parent=5 // pred_check
        %p623 = pneg %p622
      $region86: #{transformer_forward.1} parent=5 // pred_check_branch
        %625 = sbr.rel (%p623) target = $region88
      $region87: #{transformer_forward.1} parent=5 // pred_region
        // Predicated region
        $region89: #{transformer_forward.1} parent=87 // pred_check
          %p626 = pneg %p53
        $region90: #{transformer_forward.1} parent=87 // pred_check_branch
          %628 = sbr.rel (%p626) target = $region92
        $region91: #{transformer_forward.1} parent=87 // pred_region
          %p629 = scmp.lt.s32.totalorder %s33, 1
          %s630 = scalar_select %p629, %s33, 1
          %s631 = smul.addr %s630, 2
          %s632 = scalar_lea.vmem %s0, %s631
        $region92: #{transformer_forward.1} parent=87 // pred_fallthru
          _
        // Predicated region
        $region93: #{transformer_forward.1} parent=87 // pred_check
          %p633 = pneg %p79
        $region94: #{transformer_forward.1} parent=87 // pred_check_branch
          %635 = sbr.rel (%p633) target = $region96
        $region95: #{transformer_forward.1} parent=87 // pred_region
          %p636 = scmp.lt.s32.totalorder %s33, 1
          %s637 = scalar_select %p636, %s33, 1
          %s638 = smul.addr %s637, 2
          %s639 = smul.addr %s638, 8
          %s640 = scalar_lea.vmem %s1, %s639
        $region96: #{transformer_forward.1} parent=87 // pred_fallthru
          _
        // Predicated region
        $region97: #{transformer_forward.1} parent=87 // pred_check
          %p641 = pneg %p105
        $region98: #{transformer_forward.1} parent=87 // pred_check_branch
          %643 = sbr.rel (%p641) target = $region100
        $region99: #{transformer_forward.1} parent=87 // pred_region
          %p644 = scmp.lt.s32.totalorder %s33, 1
          %s645 = scalar_select %p644, %s33, 1
          %s646 = smul.addr %s645, 2
          %s647 = smul.addr %s646, 8
          %s648 = scalar_lea.vmem %s2, %s647
        $region100: #{transformer_forward.1} parent=87 // pred_fallthru
          _
      $region88: #{transformer_forward.1} parent=5 // pred_fallthru
        _
      %p649 = scmp.le.s32.totalorder 1, %s33
      %p650 = scmp.lt.s32.totalorder %s33, 3
      %p651 = pnand %p649, %p650
      %p652 = pneg %p651
      // Predicated region
      $region101: #{transformer_forward.1} parent=5 // pred_check
        _
      $region102: #{transformer_forward.1} parent=5 // pred_check_branch
        %654 = sbr.rel (%p651) target = $region104
      $region103: #{transformer_forward.1} parent=5 // pred_region
        %s655 = ssub.s32 %s33, 1
        // Predicated region
        $region105: #{transformer_forward.1} parent=103 // pred_check
          %p656 = pneg %p132
        $region106: #{transformer_forward.1} parent=103 // pred_check_branch
          %658 = sbr.rel (%p656) target = $region108
        $region107: #{transformer_forward.1} parent=103 // pred_region
          %659 = dma.done [#allocation3], 256
        $region108: #{transformer_forward.1} parent=103 // pred_fallthru
          _
        // Predicated region
        $region109: #{transformer_forward.1} parent=103 // pred_check
          %p660 = pneg %p153
        $region110: #{transformer_forward.1} parent=103 // pred_check_branch
          %662 = sbr.rel (%p660) target = $region112
        $region111: #{transformer_forward.1} parent=103 // pred_region
          %663 = dma.done [#allocation6], 256
        $region112: #{transformer_forward.1} parent=103 // pred_fallthru
          _
        // Predicated region
        $region113: #{transformer_forward.1} parent=103 // pred_check
          %p664 = pneg %p279
        $region114: #{transformer_forward.1} parent=103 // pred_check_branch
          %666 = sbr.rel (%p664) target = $region116
        $region115: #{transformer_forward.1} parent=103 // pred_region
          %667 = dma.done [#allocation6], 256
        $region116: #{transformer_forward.1} parent=103 // pred_fallthru
          _
        // Predicated region
        $region117: #{transformer_forward.1} parent=103 // pred_check
          %p668 = pneg %p489
        $region118: #{transformer_forward.1} parent=103 // pred_check_branch
          %670 = sbr.rel (%p668) target = $region120
        $region119: #{transformer_forward.1} parent=103 // pred_region
          %671 = dma.done [#allocation9], 16
        $region120: #{transformer_forward.1} parent=103 // pred_fallthru
          _
        %p672 = scmp.lt.s32.totalorder %s38, 1
        %s673 = scalar_select %p672, %s38, 1
        %s674 = smul.addr %s673, 2
        %s675 = scalar_lea.vmem %s0, %s674
        %p676 = pneg %p59
        %p677 = pneg %p56
        %p678 = scmp.lt.s32.totalorder %s38, 1
        %s679 = scalar_select %p678, %s38, 1
        %s680 = smul.addr %s679, 2
        %s681 = smul.addr %s680, 8
        %s682 = scalar_lea.vmem %s1, %s681
        %p683 = pneg %p85
        %p684 = pneg %p82
        %p685 = scmp.lt.s32.totalorder %s38, 1
        %s686 = scalar_select %p685, %s38, 1
        %s687 = smul.addr %s686, 2
        %s688 = smul.addr %s687, 8
        %s689 = scalar_lea.vmem %s2, %s688
        %p690 = pneg %p111
        %p691 = pneg %p108
        %p692 = pneg %p132
        %p693 = pneg %p129
        %p694 = pneg %p153
        %p695 = pneg %p150
        %p696 = pneg %p174
        %p697 = pneg %p171
        %p698 = pneg %p195
        %p699 = pneg %p192
        %p700 = pneg %p216
        %p701 = pneg %p213
        %p702 = pneg %p237
        %p703 = pneg %p234
        %p704 = pneg %p258
        %p705 = pneg %p255
        %p706 = pneg %p279
        %p707 = pneg %p276
        %p708 = pneg %p300
        %p709 = pneg %p297
        %p710 = pneg %p321
        %p711 = pneg %p318
        %p712 = pneg %p342
        %p713 = pneg %p339
        %p714 = pneg %p363
        %p715 = pneg %p360
        %p716 = pneg %p384
        %p717 = pneg %p381
        %p718 = pneg %p405
        %p719 = pneg %p402
        %p720 = pneg %p426
        %p721 = pneg %p423
        %p722 = pneg %p447
        %p723 = pneg %p444
        %p724 = pneg %p468
        %p725 = pneg %p465
        %p726 = pneg %p489
        %p727 = pneg %p486
        %p728 = pneg %p515
        %p729 = pneg %p512
        %s730 = sand.u32 %s502, 1
        %s731 = scalar_lea.sflag [#allocation4], %s730
        %s732 = sand.u32 %s502, 1
        %s733 = smul.addr %s732, 16
        %s734 = scalar_lea.vmem [#allocation10], %s733
        %p735 = scmp.lt.s32.totalorder %s38, 1
        %s736 = scalar_select %p735, %s38, 1
        %s737 = smul.addr %s736, 2
        %s738 = scalar_lea.vmem %s0, %s737
        %p739 = scmp.lt.s32.totalorder %s38, 1
        %s740 = scalar_select %p739, %s38, 1
        %s741 = smul.addr %s740, 2
        %s742 = smul.addr %s741, 8
        %s743 = scalar_lea.vmem %s1, %s742
        %p744 = scmp.lt.s32.totalorder %s38, 1
        %s745 = scalar_select %p744, %s38, 1
        %s746 = smul.addr %s745, 2
        %s747 = smul.addr %s746, 8
        %s748 = scalar_lea.vmem %s2, %s747
        %s749 = smul.u32 2, %s38
        %v751 = vld [vmem:[%s738] sm:$0x3]
        %vm752 = vcmp.ne.s32.totalorder %v751, 0
        %v753 = vsel %vm752, 0.0, -1e+09
        %v754 = vlaneseq
        %v755 = vshrl.u32 %v754, 7
        %v756 = vlaneseq
        %v757 = vand.u32 %v756, 127
        %vm758 = vcmp.ge.s32.totalorder %v755, %v757
        %v759 = vsel %vm758, 0.0, -1e+09
        %v760 = vld [vmem:[%s748] sm:$0xff]
        %v761 = vld [vmem:[%s748 + $0x8] sm:$0xff]
        %vm762 = vcmp.ne.s32.totalorder %v760, 0
        %v763 = vsel %vm762, 0.0, -1e+09
        %765 = vset.pattern.permute.xlu0 0
        %766 = vperm.xlu0 %765, %v763
        %v767 = vpop.permute.xlu0 %766
        %v769 = vadd.f32 %v759, %v767
        %vm770 = vcmp.ne.s32.totalorder %v761, 0
        %v771 = vsel %vm770, 0.0, -1e+09
        %773 = vset.pattern.permute.xlu0 0
        %774 = vperm.xlu0 %773, %v771
        %v775 = vpop.permute.xlu0 %774
        %v777 = vadd.f32 %v759, %v775
        %v778 = vld [vmem:[%s5] sm:$0xff]
        %v779 = vld [vmem:[%s743] sm:$0xff]
        %v780 = vld [vmem:[%s743 + $0x8] sm:$0xff]
        %781 = vset.pattern.permute.xlu0 0
        %782 = vperm.xlu0 %781, %v779
        %v783 = vpop.permute.xlu0 %782
        %784 = vset.pattern.permute.xlu0 0
        %785 = vperm.xlu0 %784, %v780
        %v786 = vpop.permute.xlu0 %785
        %vm787 = vcmp.eq.s32.totalorder %v757, %v783
        %vm788 = vcmp.eq.s32.totalorder %v757, %v786
        %v789 = vsel %vm787, 1, 0
        %v790 = vsel %vm788, 1, 0
        %v791 = vcvt.s32.f32 %v789
        %v792 = vcvt.s32.f32 %v790
        %v793 = vpack.c.bf16 %v792, %v791
        %v794 = vld [vmem:[#allocation2] sm:$0xf]
        %v795 = vld [vmem:[#allocation2 + $0x4] sm:$0xf]
        %v796 = vld [vmem:[#allocation2 + $0x8] sm:$0xf]
        %v797 = vld [vmem:[#allocation2 + $0xc] sm:$0xf]
        %v802 = vunpack.c.l.b16 %v794
        %v803 = vunpack.c.l.b16 %v795
        %v804 = vunpack.c.l.b16 %v796
        %v805 = vunpack.c.l.b16 %v797
        %v806 = vpack.c.b16 %v803, %v802
        %v807 = vpack.c.b16 %v805, %v804
        %vm810 = vcmask 261120
        %v812 = vsel %vm810, %v793, 0
        %814 = vmatprep.subr.bf16.mxu0 0
        %815 = vmatpush1.bf16.msra.mxu0 %v806
        %816 = vmatprep.subr.bf16.mxu0 0
        %817 = vmatpush1.bf16.msra.mxu0 %v807
        %818 = vmatprep.subr.bf16.mxu0 0
        %819 = vmatpush1.bf16.msra.mxu0 0
        %820 = vmatprep.subr.bf16.mxu0 0
        %821 = vmatpush1.bf16.msra.mxu0 0
        %822 = vmatprep.subr.bf16.mxu0 0
        %823 = vmatpush1.bf16.msra.mxu0 0
        %824 = vmatprep.subr.bf16.mxu0 0
        %825 = vmatpush1.bf16.msra.mxu0 0
        %826 = vmatprep.subr.bf16.mxu0 0
        %827 = vmatpush1.bf16.msra.mxu0 0
        %828 = vmatprep.subr.bf16.mxu0 0
        %829 = vmatpush1.bf16.msra.mxu0 0
        %830 = vmatprep.subr.bf16.mxu0 0
        %831 = vmatpush1.bf16.msra.mxu0 0
        %832 = vmatprep.subr.bf16.mxu0 0
        %833 = vmatpush1.bf16.msra.mxu0 0
        %834 = vmatprep.subr.bf16.mxu0 0
        %835 = vmatpush1.bf16.msra.mxu0 0
        %836 = vmatprep.subr.bf16.mxu0 0
        %837 = vmatpush1.bf16.msra.mxu0 0
        %838 = vmatprep.subr.bf16.mxu0 0
        %839 = vmatpush1.bf16.msra.mxu0 0
        %840 = vmatprep.subr.bf16.mxu0 0
        %841 = vmatpush1.bf16.msra.mxu0 0
        %842 = vmatprep.subr.bf16.mxu0 0
        %843 = vmatpush1.bf16.msra.mxu0 0
        %844 = vmatprep.subr.bf16.mxu0 0
        %845 = vmatpush1.bf16.msra.mxu0 0
        %846 = vmatprep.mubr.bf16.mxu0 0
        %847 = vmatmul.mubr.bf16.gmra.mrb[0].mxu0 %v812
        %v848 = vpop.f32.mrb[0].mxu0
        %v849 = vadd.f32 %v778, %v848
        %v850 = vpop.f32.mrb[0].mxu0
        %v851 = vpop.f32.mrb[0].mxu0
        %v852 = vadd.f32 %v778, %v851
        %v853 = vpop.f32.mrb[0].mxu0
        %854 = vdwg.mxu0
        %855 = vset.pattern.permute.xlu0 0
        %856 = vperm.xlu0 %855, %v760
        %v857 = vpop.permute.xlu0 %856
        %858 = vset.pattern.permute.xlu0 0
        %859 = vperm.xlu0 %858, %v761
        %v860 = vpop.permute.xlu0 %859
        %vm861 = vcmp.eq.s32.totalorder %v757, %v857
        %vm862 = vcmp.eq.s32.totalorder %v757, %v860
        %v863 = vsel %vm861, 1, 0
        %v864 = vsel %vm862, 1, 0
        %v865 = vcvt.s32.f32 %v863
        %v866 = vcvt.s32.f32 %v864
        %v867 = vpack.c.bf16 %v866, %v865
        %v868 = vld [vmem:[#allocation5] sm:$0xf]
        %v869 = vld [vmem:[#allocation5 + $0x4] sm:$0xf]
        %v870 = vld [vmem:[#allocation5 + $0x8] sm:$0xf]
        %v871 = vld [vmem:[#allocation5 + $0xc] sm:$0xf]
        %v876 = vunpack.c.l.b16 %v868
        %v877 = vunpack.c.l.b16 %v869
        %v878 = vunpack.c.l.b16 %v870
        %v879 = vunpack.c.l.b16 %v871
        %v880 = vpack.c.b16 %v877, %v876
        %v881 = vpack.c.b16 %v879, %v878
        %v885 = vsel %vm810, %v867, 0
        %887 = vmatprep.subr.bf16.mxu0 0
        %888 = vmatpush1.bf16.msra.mxu0 %v880
        %889 = vmatprep.subr.bf16.mxu0 0
        %890 = vmatpush1.bf16.msra.mxu0 %v881
        %891 = vmatprep.subr.bf16.mxu0 0
        %892 = vmatpush1.bf16.msra.mxu0 0
        %893 = vmatprep.subr.bf16.mxu0 0
        %894 = vmatpush1.bf16.msra.mxu0 0
        %895 = vmatprep.subr.bf16.mxu0 0
        %896 = vmatpush1.bf16.msra.mxu0 0
        %897 = vmatprep.subr.bf16.mxu0 0
        %898 = vmatpush1.bf16.msra.mxu0 0
        %899 = vmatprep.subr.bf16.mxu0 0
        %900 = vmatpush1.bf16.msra.mxu0 0
        %901 = vmatprep.subr.bf16.mxu0 0
        %902 = vmatpush1.bf16.msra.mxu0 0
        %903 = vmatprep.subr.bf16.mxu0 0
        %904 = vmatpush1.bf16.msra.mxu0 0
        %905 = vmatprep.subr.bf16.mxu0 0
        %906 = vmatpush1.bf16.msra.mxu0 0
        %907 = vmatprep.subr.bf16.mxu0 0
        %908 = vmatpush1.bf16.msra.mxu0 0
        %909 = vmatprep.subr.bf16.mxu0 0
        %910 = vmatpush1.bf16.msra.mxu0 0
        %911 = vmatprep.subr.bf16.mxu0 0
        %912 = vmatpush1.bf16.msra.mxu0 0
        %913 = vmatprep.subr.bf16.mxu0 0
        %914 = vmatpush1.bf16.msra.mxu0 0
        %915 = vmatprep.subr.bf16.mxu0 0
        %916 = vmatpush1.bf16.msra.mxu0 0
        %917 = vmatprep.subr.bf16.mxu0 0
        %918 = vmatpush1.bf16.msra.mxu0 0
        %919 = vmatprep.mubr.bf16.mxu0 0
        %920 = vmatmul.mubr.bf16.gmra.mrb[0].mxu0 %v885
        %v921 = vpop.f32.mrb[0].mxu0
        %v922 = vadd.f32 %v778, %v921
        %v923 = vpop.f32.mrb[0].mxu0
        %v924 = vpop.f32.mrb[0].mxu0
        %v925 = vadd.f32 %v778, %v924
        %v926 = vpop.f32.mrb[0].mxu0
        %927 = vdwg.mxu0
        %v928 = vld [vmem:[#allocation7] sm:$0xff]
        %v929 = vld [vmem:[%s6] sm:$0xf]
        %v930 = vld [vmem:[%s6 + $0x4] sm:$0xf]
        %v931 = vld [vmem:[%s6 + $0x8] sm:$0xf]
        %v932 = vld [vmem:[%s6 + $0xc] sm:$0xf]
        %v933 = vpack.c.bf16 %v852, %v849
        %v934 = vlaneseq
        %v935 = vshrl.u32 %v934, 7
        %v936 = vsub.s32 0, %v935
        %v937 = vrot.slane %v928, %v936
        %v942 = vunpack.c.l.b16 %v929
        %v943 = vunpack.c.l.b16 %v930
        %v944 = vunpack.c.l.b16 %v931
        %v945 = vunpack.c.l.b16 %v932
        %v946 = vpack.c.b16 %v943, %v942
        %v947 = vpack.c.b16 %v945, %v944
        %v951 = vsel %vm810, %v933, 0
        %953 = vmatprep.subr.bf16.mxu0 0
        %954 = vmatpush1.bf16.msra.mxu0 %v946
        %955 = vmatprep.subr.bf16.mxu0 0
        %956 = vmatpush1.bf16.msra.mxu0 %v947
        %957 = vmatprep.subr.bf16.mxu0 0
        %958 = vmatpush1.bf16.msra.mxu0 0
        %959 = vmatprep.subr.bf16.mxu0 0
        %960 = vmatpush1.bf16.msra.mxu0 0
        %961 = vmatprep.subr.bf16.mxu0 0
        %962 = vmatpush1.bf16.msra.mxu0 0
        %963 = vmatprep.subr.bf16.mxu0 0
        %964 = vmatpush1.bf16.msra.mxu0 0
        %965 = vmatprep.subr.bf16.mxu0 0
        %966 = vmatpush1.bf16.msra.mxu0 0
        %967 = vmatprep.subr.bf16.mxu0 0
        %968 = vmatpush1.bf16.msra.mxu0 0
        %969 = vmatprep.subr.bf16.mxu0 0
        %970 = vmatpush1.bf16.msra.mxu0 0
        %971 = vmatprep.subr.bf16.mxu0 0
        %972 = vmatpush1.bf16.msra.mxu0 0
        %973 = vmatprep.subr.bf16.mxu0 0
        %974 = vmatpush1.bf16.msra.mxu0 0
        %975 = vmatprep.subr.bf16.mxu0 0
        %976 = vmatpush1.bf16.msra.mxu0 0
        %977 = vmatprep.subr.bf16.mxu0 0
        %978 = vmatpush1.bf16.msra.mxu0 0
        %979 = vmatprep.subr.bf16.mxu0 0
        %980 = vmatpush1.bf16.msra.mxu0 0
        %981 = vmatprep.subr.bf16.mxu0 0
        %982 = vmatpush1.bf16.msra.mxu0 0
        %983 = vmatprep.subr.bf16.mxu0 0
        %984 = vmatpush1.bf16.msra.mxu0 0
        %985 = vmatprep.mubr.bf16.mxu0 0
        %986 = vmatmul.mubr.bf16.gmra.mrb[0].mxu0 %v951
        %v987 = vpop.f32.mrb[0].mxu0
        %v988 = vadd.f32 %v937, %v987
        %v989 = vpop.f32.mrb[0].mxu0
        %v990 = vpop.f32.mrb[0].mxu0
        %v991 = vadd.f32 %v937, %v990
        %v992 = vpop.f32.mrb[0].mxu0
        %993 = vdwg.mxu0
        %995 = vrot.lane.b32.xlu0 %v988, 120
        %v996 = vpop.permute.xlu0 %995
        %998 = vrot.lane.b32.xlu0 %v988, 112
        %v999 = vpop.permute.xlu0 %998
        %1001 = vrot.lane.b32.xlu0 %v988, 104
        %v1002 = vpop.permute.xlu0 %1001
        %v1004 = vpack.c.bf16 %v988, %v988
        %v1005 = vpack.c.bf16 %v996, %v996
        %v1006 = vpack.c.bf16 %v999, %v999
        %v1007 = vpack.c.bf16 %v1002, %v1002
        %1009 = vrot.lane.b32.xlu0 %v1004, 96
        %v1010 = vpop.permute.xlu0 %1009
        %vm1011 = vcmask 64512
        %v1013 = vsel %vm1011, %v1004, 0
        %v1016 = vsel %vm1011, %v1010, 0
        %1018 = vmatprep.subr.bf16.mxu0 0
        %1019 = vmatpush1.bf16.xpose.msra.mxu0 %v1016
        %1020 = vmatprep.subr.bf16.mxu0 0
        %1021 = vmatpush1.bf16.xpose.msra.mxu0 0
        %1022 = vmatprep.subr.bf16.mxu0 0
        %1023 = vmatpush1.bf16.xpose.msra.mxu0 0
        %1024 = vmatprep.subr.bf16.mxu0 0
        %1025 = vmatpush1.bf16.xpose.msra.mxu0 0
        %1026 = vmatprep.subr.bf16.mxu0 0
        %1027 = vmatpush1.bf16.xpose.msra.mxu0 0
        %1028 = vmatprep.subr.bf16.mxu0 0
        %1029 = vmatpush1.bf16.xpose.msra.mxu0 0
        %1030 = vmatprep.subr.bf16.mxu0 0
        %1031 = vmatpush1.bf16.xpose.msra.mxu0 0
        %1032 = vmatprep.subr.bf16.mxu0 0
        %1033 = vmatpush1.bf16.xpose.msra.mxu0 0
        %1034 = vmatprep.subr.bf16.mxu0 0
        %1035 = vmatpush1.bf16.xpose.msra.mxu0 0
        %1036 = vmatprep.subr.bf16.mxu0 0
        %1037 = vmatpush1.bf16.xpose.msra.mxu0 0
        %1038 = vmatprep.subr.bf16.mxu0 0
        %1039 = vmatpush1.bf16.xpose.msra.mxu0 0
        %1040 = vmatprep.subr.bf16.mxu0 0
        %1041 = vmatpush1.bf16.xpose.msra.mxu0 0
        %1042 = vmatprep.subr.bf16.mxu0 0
        %1043 = vmatpush1.bf16.xpose.msra.mxu0 0
        %1044 = vmatprep.subr.bf16.mxu0 0
        %1045 = vmatpush1.bf16.xpose.msra.mxu0 0
        %1046 = vmatprep.subr.bf16.mxu0 0
        %1047 = vmatpush1.bf16.xpose.msra.mxu0 0
        %1048 = vmatprep.subr.bf16.mxu0 0
        %1049 = vmatpush1.bf16.xpose.msra.mxu0 0
        %1050 = vmatprep.mubr.bf16.mxu0 0
        %1051 = vmatmul.mubr.bf16.gmra.mrb[0].mxu0 %v1013
        %v1052 = vpop.f32.mrb[0].mxu0
        %v1053 = vadd.f32 0.0, %v1052
        %v1054 = vpop.f32.mrb[0].mxu0
        %v1055 = vpop.f32.mrb[0].mxu0
        %v1056 = vpop.f32.mrb[0].mxu0
        %1057 = vdwg.mxu0
        %1059 = vrot.lane.b32.xlu0 %v1005, 96
        %v1060 = vpop.permute.xlu0 %1059
        %v1062 = vsel %vm1011, %v1005, 0
        %v1065 = vsel %vm1011, %v1060, 0
        %1067 = vmatprep.subr.bf16.mxu0 0
        %1068 = vmatpush1.bf16.xpose.msra.mxu0 %v1065
        %1069 = vmatprep.subr.bf16.mxu0 0
        %1070 = vmatpush1.bf16.xpose.msra.mxu0 0
        %1071 = vmatprep.subr.bf16.mxu0 0
        %1072 = vmatpush1.bf16.xpose.msra.mxu0 0
        %1073 = vmatprep.subr.bf16.mxu0 0
        %1074 = vmatpush1.bf16.xpose.msra.mxu0 0
        %1075 = vmatprep.subr.bf16.mxu0 0
        %1076 = vmatpush1.bf16.xpose.msra.mxu0 0
        %1077 = vmatprep.subr.bf16.mxu0 0
        %1078 = vmatpush1.bf16.xpose.msra.mxu0 0
        %1079 = vmatprep.subr.bf16.mxu0 0
        %1080 = vmatpush1.bf16.xpose.msra.mxu0 0
        %1081 = vmatprep.subr.bf16.mxu0 0
        %1082 = vmatpush1.bf16.xpose.msra.mxu0 0
        %1083 = vmatprep.subr.bf16.mxu0 0
        %1084 = vmatpush1.bf16.xpose.msra.mxu0 0
        %1085 = vmatprep.subr.bf16.mxu0 0
        %1086 = vmatpush1.bf16.xpose.msra.mxu0 0
        %1087 = vmatprep.subr.bf16.mxu0 0
        %1088 = vmatpush1.bf16.xpose.msra.mxu0 0
        %1089 = vmatprep.subr.bf16.mxu0 0
        %1090 = vmatpush1.bf16.xpose.msra.mxu0 0
        %1091 = vmatprep.subr.bf16.mxu0 0
        %1092 = vmatpush1.bf16.xpose.msra.mxu0 0
        %1093 = vmatprep.subr.bf16.mxu0 0
        %1094 = vmatpush1.bf16.xpose.msra.mxu0 0
        %1095 = vmatprep.subr.bf16.mxu0 0
        %1096 = vmatpush1.bf16.xpose.msra.mxu0 0
        %1097 = vmatprep.subr.bf16.mxu0 0
        %1098 = vmatpush1.bf16.xpose.msra.mxu0 0
        %1099 = vmatprep.mubr.bf16.mxu0 0
        %1100 = vmatmul.mubr.bf16.gmra.mrb[0].mxu0 %v1062
        %v1101 = vpop.f32.mrb[0].mxu0
        %v1102 = vadd.f32 0.0, %v1101
        %v1103 = vpop.f32.mrb[0].mxu0
        %v1104 = vpop.f32.mrb[0].mxu0
        %v1105 = vpop.f32.mrb[0].mxu0
        %1106 = vdwg.mxu0
        %1108 = vrot.lane.b32.xlu0 %v1006, 96
        %v1109 = vpop.permute.xlu0 %1108
        %v1111 = vsel %vm1011, %v1006, 0
        %v1114 = vsel %vm1011, %v1109, 0
        %1116 = vmatprep.subr.bf16.mxu0 0
        %1117 = vmatpush1.bf16.xpose.msra.mxu0 %v1114
        %1118 = vmatprep.subr.bf16.mxu0 0
        %1119 = vmatpush1.bf16.xpose.msra.mxu0 0
        %1120 = vmatprep.subr.bf16.mxu0 0
        %1121 = vmatpush1.bf16.xpose.msra.mxu0 0
        %1122 = vmatprep.subr.bf16.mxu0 0
        %1123 = vmatpush1.bf16.xpose.msra.mxu0 0
        %1124 = vmatprep.subr.bf16.mxu0 0
        %1125 = vmatpush1.bf16.xpose.msra.mxu0 0
        %1126 = vmatprep.subr.bf16.mxu0 0
        %1127 = vmatpush1.bf16.xpose.msra.mxu0 0
        %1128 = vmatprep.subr.bf16.mxu0 0
        %1129 = vmatpush1.bf16.xpose.msra.mxu0 0
        %1130 = vmatprep.subr.bf16.mxu0 0
        %1131 = vmatpush1.bf16.xpose.msra.mxu0 0
        %1132 = vmatprep.subr.bf16.mxu0 0
        %1133 = vmatpush1.bf16.xpose.msra.mxu0 0
        %1134 = vmatprep.subr.bf16.mxu0 0
        %1135 = vmatpush1.bf16.xpose.msra.mxu0 0
        %1136 = vmatprep.subr.bf16.mxu0 0
        %1137 = vmatpush1.bf16.xpose.msra.mxu0 0
        %1138 = vmatprep.subr.bf16.mxu0 0
        %1139 = vmatpush1.bf16.xpose.msra.mxu0 0
        %1140 = vmatprep.subr.bf16.mxu0 0
        %1141 = vmatpush1.bf16.xpose.msra.mxu0 0
        %1142 = vmatprep.subr.bf16.mxu0 0
        %1143 = vmatpush1.bf16.xpose.msra.mxu0 0
        %1144 = vmatprep.subr.bf16.mxu0 0
        %1145 = vmatpush1.bf16.xpose.msra.mxu0 0
        %1146 = vmatprep.subr.bf16.mxu0 0
        %1147 = vmatpush1.bf16.xpose.msra.mxu0 0
        %1148 = vmatprep.mubr.bf16.mxu0 0
        %1149 = vmatmul.mubr.bf16.gmra.mrb[0].mxu0 %v1111
        %v1150 = vpop.f32.mrb[0].mxu0
        %v1151 = vadd.f32 0.0, %v1150
        %v1152 = vpop.f32.mrb[0].mxu0
        %v1153 = vpop.f32.mrb[0].mxu0
        %v1154 = vpop.f32.mrb[0].mxu0
        %1155 = vdwg.mxu0
        %1157 = vrot.lane.b32.xlu0 %v1007, 96
        %v1158 = vpop.permute.xlu0 %1157
        %v1160 = vsel %vm1011, %v1007, 0
        %v1163 = vsel %vm1011, %v1158, 0
        %1165 = vmatprep.subr.bf16.mxu0 0
        %1166 = vmatpush1.bf16.xpose.msra.mxu0 %v1163
        %1167 = vmatprep.subr.bf16.mxu0 0
        %1168 = vmatpush1.bf16.xpose.msra.mxu0 0
        %1169 = vmatprep.subr.bf16.mxu0 0
        %1170 = vmatpush1.bf16.xpose.msra.mxu0 0
        %1171 = vmatprep.subr.bf16.mxu0 0
        %1172 = vmatpush1.bf16.xpose.msra.mxu0 0
        %1173 = vmatprep.subr.bf16.mxu0 0
        %1174 = vmatpush1.bf16.xpose.msra.mxu0 0
        %1175 = vmatprep.subr.bf16.mxu0 0
        %1176 = vmatpush1.bf16.xpose.msra.mxu0 0
        %1177 = vmatprep.subr.bf16.mxu0 0
        %1178 = vmatpush1.bf16.xpose.msra.mxu0 0
        %1179 = vmatprep.subr.bf16.mxu0 0
        %1180 = vmatpush1.bf16.xpose.msra.mxu0 0
        %1181 = vmatprep.subr.bf16.mxu0 0
        %1182 = vmatpush1.bf16.xpose.msra.mxu0 0
        %1183 = vmatprep.subr.bf16.mxu0 0
        %1184 = vmatpush1.bf16.xpose.msra.mxu0 0
        %1185 = vmatprep.subr.bf16.mxu0 0
        %1186 = vmatpush1.bf16.xpose.msra.mxu0 0
        %1187 = vmatprep.subr.bf16.mxu0 0
        %1188 = vmatpush1.bf16.xpose.msra.mxu0 0
        %1189 = vmatprep.subr.bf16.mxu0 0
        %1190 = vmatpush1.bf16.xpose.msra.mxu0 0
        %1191 = vmatprep.subr.bf16.mxu0 0
        %1192 = vmatpush1.bf16.xpose.msra.mxu0 0
        %1193 = vmatprep.subr.bf16.mxu0 0
        %1194 = vmatpush1.bf16.xpose.msra.mxu0 0
        %1195 = vmatprep.subr.bf16.mxu0 0
        %1196 = vmatpush1.bf16.xpose.msra.mxu0 0
        %1197 = vmatprep.mubr.bf16.mxu0 0
        %1198 = vmatmul.mubr.bf16.gmra.mrb[0].mxu0 %v1160
        %v1199 = vpop.f32.mrb[0].mxu0
        %v1200 = vadd.f32 0.0, %v1199
        %v1201 = vpop.f32.mrb[0].mxu0
        %v1202 = vpop.f32.mrb[0].mxu0
        %v1203 = vpop.f32.mrb[0].mxu0
        %1204 = vdwg.mxu0
        %v1205 = vmul.f32 %v1053, 0.35355338
        %v1206 = vmul.f32 %v1102, 0.35355338
        %v1207 = vmul.f32 %v1151, 0.35355338
        %v1208 = vmul.f32 %v1200, 0.35355338
        %v1209 = vlaneseq
        %v1210 = vshrl.u32 %v1209, 7
        %v1211 = vsub.s32 0, %v1210
        %v1212 = vrot.slane %v753, %v1211
        %v1213 = vadd.f32 %v1205, %v1212
        %v1214 = vadd.f32 %v1206, %v1212
        %v1215 = vadd.f32 %v1207, %v1212
        %v1216 = vadd.f32 %v1208, %v1212
        %v1217 = vsel %vm1011, %v1213, -inf
        %1218 = vmax.xlane.f32.xlu0 %v1217
        %v1219 = vpop.xlane.xlu0 %1218
        %v1220 = vsel %vm1011, %v1214, -inf
        %1221 = vmax.xlane.f32.xlu0 %v1220
        %v1222 = vpop.xlane.xlu0 %1221
        %v1223 = vsel %vm1011, %v1215, -inf
        %1224 = vmax.xlane.f32.xlu0 %v1223
        %v1225 = vpop.xlane.xlu0 %1224
        %v1226 = vsel %vm1011, %v1216, -inf
        %1227 = vmax.xlane.f32.xlu0 %v1226
        %v1228 = vpop.xlane.xlu0 %1227
        %v1229 = vsub.f32 %v1213, %v1219
        %v1230 = vsub.f32 %v1214, %v1222
        %v1231 = vsub.f32 %v1215, %v1225
        %v1232 = vsub.f32 %v1216, %v1228
        %v1233 = vmul.f32 %v1229, 1.442695
        %v1234 = vpow.pop %v1233
        %v1235 = vmul.f32 %v1230, 1.442695
        %v1236 = vpow.pop %v1235
        %v1237 = vmul.f32 %v1231, 1.442695
        %v1238 = vpow.pop %v1237
        %v1239 = vmul.f32 %v1232, 1.442695
        %v1240 = vpow.pop %v1239
        %v1241 = vsel %vm1011, %v1234, 0.0
        %1242 = vadd.xlane.f32.xlu0 %v1241
        %v1243 = vpop.xlane.xlu0 %1242
        %v1244 = vsel %vm1011, %v1236, 0.0
        %1245 = vadd.xlane.f32.xlu0 %v1244
        %v1246 = vpop.xlane.xlu0 %1245
        %v1247 = vsel %vm1011, %v1238, 0.0
        %1248 = vadd.xlane.f32.xlu0 %v1247
        %v1249 = vpop.xlane.xlu0 %1248
        %v1250 = vsel %vm1011, %v1240, 0.0
        %1251 = vadd.xlane.f32.xlu0 %v1250
        %v1252 = vpop.xlane.xlu0 %1251
        %v1253 = vrcp.pop %v1243
        %v1254 = vmul.f32 %v1234, %v1253
        %v1255 = vrcp.pop %v1246
        %v1256 = vmul.f32 %v1236, %v1255
        %v1257 = vrcp.pop %v1249
        %v1258 = vmul.f32 %v1238, %v1257
        %v1259 = vrcp.pop %v1252
        %v1260 = vmul.f32 %v1240, %v1259
        %v1261 = vpack.c.bf16 %v1254, %v1254
        %v1262 = vpack.c.bf16 %v1256, %v1256
        %v1263 = vpack.c.bf16 %v1258, %v1258
        %v1264 = vpack.c.bf16 %v1260, %v1260
        %1265 = vrot.lane.b32.xlu0 %v1004, 64
        %v1266 = vpop.permute.xlu0 %1265
        %v1268 = vsel %vm1011, %v1261, 0
        %vm1270 = vcmask 1043456
        %v1272 = vsel %vm1270, %v1266, 0
        %1274 = vmatprep.subr.bf16.mxu0 0
        %1275 = vmatpush1.bf16.msra.mxu0 %v1272
        %1276 = vmatprep.subr.bf16.mxu0 0
        %1277 = vmatpush1.bf16.msra.mxu0 0
        %1278 = vmatprep.subr.bf16.mxu0 0
        %1279 = vmatpush1.bf16.msra.mxu0 0
        %1280 = vmatprep.subr.bf16.mxu0 0
        %1281 = vmatpush1.bf16.msra.mxu0 0
        %1282 = vmatprep.subr.bf16.mxu0 0
        %1283 = vmatpush1.bf16.msra.mxu0 0
        %1284 = vmatprep.subr.bf16.mxu0 0
        %1285 = vmatpush1.bf16.msra.mxu0 0
        %1286 = vmatprep.subr.bf16.mxu0 0
        %1287 = vmatpush1.bf16.msra.mxu0 0
        %1288 = vmatprep.subr.bf16.mxu0 0
        %1289 = vmatpush1.bf16.msra.mxu0 0
        %1290 = vmatprep.subr.bf16.mxu0 0
        %1291 = vmatpush1.bf16.msra.mxu0 0
        %1292 = vmatprep.subr.bf16.mxu0 0
        %1293 = vmatpush1.bf16.msra.mxu0 0
        %1294 = vmatprep.subr.bf16.mxu0 0
        %1295 = vmatpush1.bf16.msra.mxu0 0
        %1296 = vmatprep.subr.bf16.mxu0 0
        %1297 = vmatpush1.bf16.msra.mxu0 0
        %1298 = vmatprep.subr.bf16.mxu0 0
        %1299 = vmatpush1.bf16.msra.mxu0 0
        %1300 = vmatprep.subr.bf16.mxu0 0
        %1301 = vmatpush1.bf16.msra.mxu0 0
        %1302 = vmatprep.subr.bf16.mxu0 0
        %1303 = vmatpush1.bf16.msra.mxu0 0
        %1304 = vmatprep.subr.bf16.mxu0 0
        %1305 = vmatpush1.bf16.msra.mxu0 0
        %1306 = vmatprep.mubr.bf16.mxu0 0
        %1307 = vmatmul.mubr.bf16.gmra.mrb[0].mxu0 %v1268
        %v1308 = vpop.f32.mrb[0].mxu0
        %v1309 = vadd.f32 0.0, %v1308
        %v1310 = vpop.f32.mrb[0].mxu0
        %v1311 = vpop.f32.mrb[0].mxu0
        %v1312 = vpop.f32.mrb[0].mxu0
        %1313 = vdwg.mxu0
        %1314 = vrot.lane.b32.xlu0 %v1005, 64
        %v1315 = vpop.permute.xlu0 %1314
        %v1317 = vsel %vm1011, %v1262, 0
        %v1320 = vsel %vm1270, %v1315, 0
        %1322 = vmatprep.subr.bf16.mxu0 0
        %1323 = vmatpush1.bf16.msra.mxu0 %v1320
        %1324 = vmatprep.subr.bf16.mxu0 0
        %1325 = vmatpush1.bf16.msra.mxu0 0
        %1326 = vmatprep.subr.bf16.mxu0 0
        %1327 = vmatpush1.bf16.msra.mxu0 0
        %1328 = vmatprep.subr.bf16.mxu0 0
        %1329 = vmatpush1.bf16.msra.mxu0 0
        %1330 = vmatprep.subr.bf16.mxu0 0
        %1331 = vmatpush1.bf16.msra.mxu0 0
        %1332 = vmatprep.subr.bf16.mxu0 0
        %1333 = vmatpush1.bf16.msra.mxu0 0
        %1334 = vmatprep.subr.bf16.mxu0 0
        %1335 = vmatpush1.bf16.msra.mxu0 0
        %1336 = vmatprep.subr.bf16.mxu0 0
        %1337 = vmatpush1.bf16.msra.mxu0 0
        %1338 = vmatprep.subr.bf16.mxu0 0
        %1339 = vmatpush1.bf16.msra.mxu0 0
        %1340 = vmatprep.subr.bf16.mxu0 0
        %1341 = vmatpush1.bf16.msra.mxu0 0
        %1342 = vmatprep.subr.bf16.mxu0 0
        %1343 = vmatpush1.bf16.msra.mxu0 0
        %1344 = vmatprep.subr.bf16.mxu0 0
        %1345 = vmatpush1.bf16.msra.mxu0 0
        %1346 = vmatprep.subr.bf16.mxu0 0
        %1347 = vmatpush1.bf16.msra.mxu0 0
        %1348 = vmatprep.subr.bf16.mxu0 0
        %1349 = vmatpush1.bf16.msra.mxu0 0
        %1350 = vmatprep.subr.bf16.mxu0 0
        %1351 = vmatpush1.bf16.msra.mxu0 0
        %1352 = vmatprep.subr.bf16.mxu0 0
        %1353 = vmatpush1.bf16.msra.mxu0 0
        %1354 = vmatprep.mubr.bf16.mxu0 0
        %1355 = vmatmul.mubr.bf16.gmra.mrb[0].mxu0 %v1317
        %v1356 = vpop.f32.mrb[0].mxu0
        %v1357 = vadd.f32 0.0, %v1356
        %v1358 = vpop.f32.mrb[0].mxu0
        %v1359 = vpop.f32.mrb[0].mxu0
        %v1360 = vpop.f32.mrb[0].mxu0
        %1361 = vdwg.mxu0
        %1362 = vrot.lane.b32.xlu0 %v1006, 64
        %v1363 = vpop.permute.xlu0 %1362
        %v1365 = vsel %vm1011, %v1263, 0
        %v1368 = vsel %vm1270, %v1363, 0
        %1370 = vmatprep.subr.bf16.mxu0 0
        %1371 = vmatpush1.bf16.msra.mxu0 %v1368
        %1372 = vmatprep.subr.bf16.mxu0 0
        %1373 = vmatpush1.bf16.msra.mxu0 0
        %1374 = vmatprep.subr.bf16.mxu0 0
        %1375 = vmatpush1.bf16.msra.mxu0 0
        %1376 = vmatprep.subr.bf16.mxu0 0
        %1377 = vmatpush1.bf16.msra.mxu0 0
        %1378 = vmatprep.subr.bf16.mxu0 0
        %1379 = vmatpush1.bf16.msra.mxu0 0
        %1380 = vmatprep.subr.bf16.mxu0 0
        %1381 = vmatpush1.bf16.msra.mxu0 0
        %1382 = vmatprep.subr.bf16.mxu0 0
        %1383 = vmatpush1.bf16.msra.mxu0 0
        %1384 = vmatprep.subr.bf16.mxu0 0
        %1385 = vmatpush1.bf16.msra.mxu0 0
        %1386 = vmatprep.subr.bf16.mxu0 0
        %1387 = vmatpush1.bf16.msra.mxu0 0
        %1388 = vmatprep.subr.bf16.mxu0 0
        %1389 = vmatpush1.bf16.msra.mxu0 0
        %1390 = vmatprep.subr.bf16.mxu0 0
        %1391 = vmatpush1.bf16.msra.mxu0 0
        %1392 = vmatprep.subr.bf16.mxu0 0
        %1393 = vmatpush1.bf16.msra.mxu0 0
        %1394 = vmatprep.subr.bf16.mxu0 0
        %1395 = vmatpush1.bf16.msra.mxu0 0
        %1396 = vmatprep.subr.bf16.mxu0 0
        %1397 = vmatpush1.bf16.msra.mxu0 0
        %1398 = vmatprep.subr.bf16.mxu0 0
        %1399 = vmatpush1.bf16.msra.mxu0 0
        %1400 = vmatprep.subr.bf16.mxu0 0
        %1401 = vmatpush1.bf16.msra.mxu0 0
        %1402 = vmatprep.mubr.bf16.mxu0 0
        %1403 = vmatmul.mubr.bf16.gmra.mrb[0].mxu0 %v1365
        %v1404 = vpop.f32.mrb[0].mxu0
        %v1405 = vadd.f32 0.0, %v1404
        %v1406 = vpop.f32.mrb[0].mxu0
        %v1407 = vpop.f32.mrb[0].mxu0
        %v1408 = vpop.f32.mrb[0].mxu0
        %1409 = vdwg.mxu0
        %1410 = vrot.lane.b32.xlu0 %v1007, 64
        %v1411 = vpop.permute.xlu0 %1410
        %v1413 = vsel %vm1011, %v1264, 0
        %v1416 = vsel %vm1270, %v1411, 0
        %1418 = vmatprep.subr.bf16.mxu0 0
        %1419 = vmatpush1.bf16.msra.mxu0 %v1416
        %1420 = vmatprep.subr.bf16.mxu0 0
        %1421 = vmatpush1.bf16.msra.mxu0 0
        %1422 = vmatprep.subr.bf16.mxu0 0
        %1423 = vmatpush1.bf16.msra.mxu0 0
        %1424 = vmatprep.subr.bf16.mxu0 0
        %1425 = vmatpush1.bf16.msra.mxu0 0
        %1426 = vmatprep.subr.bf16.mxu0 0
        %1427 = vmatpush1.bf16.msra.mxu0 0
        %1428 = vmatprep.subr.bf16.mxu0 0
        %1429 = vmatpush1.bf16.msra.mxu0 0
        %1430 = vmatprep.subr.bf16.mxu0 0
        %1431 = vmatpush1.bf16.msra.mxu0 0
        %1432 = vmatprep.subr.bf16.mxu0 0
        %1433 = vmatpush1.bf16.msra.mxu0 0
        %1434 = vmatprep.subr.bf16.mxu0 0
        %1435 = vmatpush1.bf16.msra.mxu0 0
        %1436 = vmatprep.subr.bf16.mxu0 0
        %1437 = vmatpush1.bf16.msra.mxu0 0
        %1438 = vmatprep.subr.bf16.mxu0 0
        %1439 = vmatpush1.bf16.msra.mxu0 0
        %1440 = vmatprep.subr.bf16.mxu0 0
        %1441 = vmatpush1.bf16.msra.mxu0 0
        %1442 = vmatprep.subr.bf16.mxu0 0
        %1443 = vmatpush1.bf16.msra.mxu0 0
        %1444 = vmatprep.subr.bf16.mxu0 0
        %1445 = vmatpush1.bf16.msra.mxu0 0
        %1446 = vmatprep.subr.bf16.mxu0 0
        %1447 = vmatpush1.bf16.msra.mxu0 0
        %1448 = vmatprep.subr.bf16.mxu0 0
        %1449 = vmatpush1.bf16.msra.mxu0 0
        %1450 = vmatprep.mubr.bf16.mxu0 0
        %1451 = vmatmul.mubr.bf16.gmra.mrb[0].mxu0 %v1413
        %v1452 = vpop.f32.mrb[0].mxu0
        %v1453 = vadd.f32 0.0, %v1452
        %v1454 = vpop.f32.mrb[0].mxu0
        %v1455 = vpop.f32.mrb[0].mxu0
        %v1456 = vpop.f32.mrb[0].mxu0
        %1457 = vdwg.mxu0
        %1459 = vrot.lane.b32.xlu0 %v1357, 8
        %v1460 = vpop.permute.xlu0 %1459
        %1463 = vrot.lane.b32.xlu0 %v1405, 16
        %v1464 = vpop.permute.xlu0 %1463
        %1467 = vrot.lane.b32.xlu0 %v1453, 24
        %v1468 = vpop.permute.xlu0 %1467
        %v1470 = vsel %vm1011, %v1309, %v1460
        %vm1471 = vcmask 130048
        %v1472 = vsel %vm1471, %v1470, %v1464
        %vm1473 = vcmask 195584
        %v1474 = vsel %vm1473, %v1472, %v1468
        %1476 = vrot.lane.b32.xlu0 %v991, 120
        %v1477 = vpop.permute.xlu0 %1476
        %1479 = vrot.lane.b32.xlu0 %v991, 112
        %v1480 = vpop.permute.xlu0 %1479
        %1482 = vrot.lane.b32.xlu0 %v991, 104
        %v1483 = vpop.permute.xlu0 %1482
        %v1485 = vpack.c.bf16 %v991, %v991
        %v1486 = vpack.c.bf16 %v1477, %v1477
        %v1487 = vpack.c.bf16 %v1480, %v1480
        %v1488 = vpack.c.bf16 %v1483, %v1483
        %1490 = vrot.lane.b32.xlu0 %v1485, 96
        %v1491 = vpop.permute.xlu0 %1490
        %v1493 = vsel %vm1011, %v1485, 0
        %v1496 = vsel %vm1011, %v1491, 0
        %1498 = vmatprep.subr.bf16.mxu0 0
        %1499 = vmatpush1.bf16.xpose.msra.mxu0 %v1496
        %1500 = vmatprep.subr.bf16.mxu0 0
        %1501 = vmatpush1.bf16.xpose.msra.mxu0 0
        %1502 = vmatprep.subr.bf16.mxu0 0
        %1503 = vmatpush1.bf16.xpose.msra.mxu0 0
        %1504 = vmatprep.subr.bf16.mxu0 0
        %1505 = vmatpush1.bf16.xpose.msra.mxu0 0
        %1506 = vmatprep.subr.bf16.mxu0 0
        %1507 = vmatpush1.bf16.xpose.msra.mxu0 0
        %1508 = vmatprep.subr.bf16.mxu0 0
        %1509 = vmatpush1.bf16.xpose.msra.mxu0 0
        %1510 = vmatprep.subr.bf16.mxu0 0
        %1511 = vmatpush1.bf16.xpose.msra.mxu0 0
        %1512 = vmatprep.subr.bf16.mxu0 0
        %1513 = vmatpush1.bf16.xpose.msra.mxu0 0
        %1514 = vmatprep.subr.bf16.mxu0 0
        %1515 = vmatpush1.bf16.xpose.msra.mxu0 0
        %1516 = vmatprep.subr.bf16.mxu0 0
        %1517 = vmatpush1.bf16.xpose.msra.mxu0 0
        %1518 = vmatprep.subr.bf16.mxu0 0
        %1519 = vmatpush1.bf16.xpose.msra.mxu0 0
        %1520 = vmatprep.subr.bf16.mxu0 0
        %1521 = vmatpush1.bf16.xpose.msra.mxu0 0
        %1522 = vmatprep.subr.bf16.mxu0 0
        %1523 = vmatpush1.bf16.xpose.msra.mxu0 0
        %1524 = vmatprep.subr.bf16.mxu0 0
        %1525 = vmatpush1.bf16.xpose.msra.mxu0 0
        %1526 = vmatprep.subr.bf16.mxu0 0
        %1527 = vmatpush1.bf16.xpose.msra.mxu0 0
        %1528 = vmatprep.subr.bf16.mxu0 0
        %1529 = vmatpush1.bf16.xpose.msra.mxu0 0
        %1530 = vmatprep.mubr.bf16.mxu0 0
        %1531 = vmatmul.mubr.bf16.gmra.mrb[0].mxu0 %v1493
        %v1532 = vpop.f32.mrb[0].mxu0
        %v1533 = vadd.f32 0.0, %v1532
        %v1534 = vpop.f32.mrb[0].mxu0
        %v1535 = vpop.f32.mrb[0].mxu0
        %v1536 = vpop.f32.mrb[0].mxu0
        %1537 = vdwg.mxu0
        %1539 = vrot.lane.b32.xlu0 %v1486, 96
        %v1540 = vpop.permute.xlu0 %1539
        %v1542 = vsel %vm1011, %v1486, 0
        %v1545 = vsel %vm1011, %v1540, 0
        %1547 = vmatprep.subr.bf16.mxu0 0
        %1548 = vmatpush1.bf16.xpose.msra.mxu0 %v1545
        %1549 = vmatprep.subr.bf16.mxu0 0
        %1550 = vmatpush1.bf16.xpose.msra.mxu0 0
        %1551 = vmatprep.subr.bf16.mxu0 0
        %1552 = vmatpush1.bf16.xpose.msra.mxu0 0
        %1553 = vmatprep.subr.bf16.mxu0 0
        %1554 = vmatpush1.bf16.xpose.msra.mxu0 0
        %1555 = vmatprep.subr.bf16.mxu0 0
        %1556 = vmatpush1.bf16.xpose.msra.mxu0 0
        %1557 = vmatprep.subr.bf16.mxu0 0
        %1558 = vmatpush1.bf16.xpose.msra.mxu0 0
        %1559 = vmatprep.subr.bf16.mxu0 0
        %1560 = vmatpush1.bf16.xpose.msra.mxu0 0
        %1561 = vmatprep.subr.bf16.mxu0 0
        %1562 = vmatpush1.bf16.xpose.msra.mxu0 0
        %1563 = vmatprep.subr.bf16.mxu0 0
        %1564 = vmatpush1.bf16.xpose.msra.mxu0 0
        %1565 = vmatprep.subr.bf16.mxu0 0
        %1566 = vmatpush1.bf16.xpose.msra.mxu0 0
        %1567 = vmatprep.subr.bf16.mxu0 0
        %1568 = vmatpush1.bf16.xpose.msra.mxu0 0
        %1569 = vmatprep.subr.bf16.mxu0 0
        %1570 = vmatpush1.bf16.xpose.msra.mxu0 0
        %1571 = vmatprep.subr.bf16.mxu0 0
        %1572 = vmatpush1.bf16.xpose.msra.mxu0 0
        %1573 = vmatprep.subr.bf16.mxu0 0
        %1574 = vmatpush1.bf16.xpose.msra.mxu0 0
        %1575 = vmatprep.subr.bf16.mxu0 0
        %1576 = vmatpush1.bf16.xpose.msra.mxu0 0
        %1577 = vmatprep.subr.bf16.mxu0 0
        %1578 = vmatpush1.bf16.xpose.msra.mxu0 0
        %1579 = vmatprep.mubr.bf16.mxu0 0
        %1580 = vmatmul.mubr.bf16.gmra.mrb[0].mxu0 %v1542
        %v1581 = vpop.f32.mrb[0].mxu0
        %v1582 = vadd.f32 0.0, %v1581
        %v1583 = vpop.f32.mrb[0].mxu0
        %v1584 = vpop.f32.mrb[0].mxu0
        %v1585 = vpop.f32.mrb[0].mxu0
        %1586 = vdwg.mxu0
        %1588 = vrot.lane.b32.xlu0 %v1487, 96
        %v1589 = vpop.permute.xlu0 %1588
        %v1591 = vsel %vm1011, %v1487, 0
        %v1594 = vsel %vm1011, %v1589, 0
        %1596 = vmatprep.subr.bf16.mxu0 0
        %1597 = vmatpush1.bf16.xpose.msra.mxu0 %v1594
        %1598 = vmatprep.subr.bf16.mxu0 0
        %1599 = vmatpush1.bf16.xpose.msra.mxu0 0
        %1600 = vmatprep.subr.bf16.mxu0 0
        %1601 = vmatpush1.bf16.xpose.msra.mxu0 0
        %1602 = vmatprep.subr.bf16.mxu0 0
        %1603 = vmatpush1.bf16.xpose.msra.mxu0 0
        %1604 = vmatprep.subr.bf16.mxu0 0
        %1605 = vmatpush1.bf16.xpose.msra.mxu0 0
        %1606 = vmatprep.subr.bf16.mxu0 0
        %1607 = vmatpush1.bf16.xpose.msra.mxu0 0
        %1608 = vmatprep.subr.bf16.mxu0 0
        %1609 = vmatpush1.bf16.xpose.msra.mxu0 0
        %1610 = vmatprep.subr.bf16.mxu0 0
        %1611 = vmatpush1.bf16.xpose.msra.mxu0 0
        %1612 = vmatprep.subr.bf16.mxu0 0
        %1613 = vmatpush1.bf16.xpose.msra.mxu0 0
        %1614 = vmatprep.subr.bf16.mxu0 0
        %1615 = vmatpush1.bf16.xpose.msra.mxu0 0
        %1616 = vmatprep.subr.bf16.mxu0 0
        %1617 = vmatpush1.bf16.xpose.msra.mxu0 0
        %1618 = vmatprep.subr.bf16.mxu0 0
        %1619 = vmatpush1.bf16.xpose.msra.mxu0 0
        %1620 = vmatprep.subr.bf16.mxu0 0
        %1621 = vmatpush1.bf16.xpose.msra.mxu0 0
        %1622 = vmatprep.subr.bf16.mxu0 0
        %1623 = vmatpush1.bf16.xpose.msra.mxu0 0
        %1624 = vmatprep.subr.bf16.mxu0 0
        %1625 = vmatpush1.bf16.xpose.msra.mxu0 0
        %1626 = vmatprep.subr.bf16.mxu0 0
        %1627 = vmatpush1.bf16.xpose.msra.mxu0 0
        %1628 = vmatprep.mubr.bf16.mxu0 0
        %1629 = vmatmul.mubr.bf16.gmra.mrb[0].mxu0 %v1591
        %v1630 = vpop.f32.mrb[0].mxu0
        %v1631 = vadd.f32 0.0, %v1630
        %v1632 = vpop.f32.mrb[0].mxu0
        %v1633 = vpop.f32.mrb[0].mxu0
        %v1634 = vpop.f32.mrb[0].mxu0
        %1635 = vdwg.mxu0
        %1637 = vrot.lane.b32.xlu0 %v1488, 96
        %v1638 = vpop.permute.xlu0 %1637
        %v1640 = vsel %vm1011, %v1488, 0
        %v1643 = vsel %vm1011, %v1638, 0
        %1645 = vmatprep.subr.bf16.mxu0 0
        %1646 = vmatpush1.bf16.xpose.msra.mxu0 %v1643
        %1647 = vmatprep.subr.bf16.mxu0 0
        %1648 = vmatpush1.bf16.xpose.msra.mxu0 0
        %1649 = vmatprep.subr.bf16.mxu0 0
        %1650 = vmatpush1.bf16.xpose.msra.mxu0 0
        %1651 = vmatprep.subr.bf16.mxu0 0
        %1652 = vmatpush1.bf16.xpose.msra.mxu0 0
        %1653 = vmatprep.subr.bf16.mxu0 0
        %1654 = vmatpush1.bf16.xpose.msra.mxu0 0
        %1655 = vmatprep.subr.bf16.mxu0 0
        %1656 = vmatpush1.bf16.xpose.msra.mxu0 0
        %1657 = vmatprep.subr.bf16.mxu0 0
        %1658 = vmatpush1.bf16.xpose.msra.mxu0 0
        %1659 = vmatprep.subr.bf16.mxu0 0
        %1660 = vmatpush1.bf16.xpose.msra.mxu0 0
        %1661 = vmatprep.subr.bf16.mxu0 0
        %1662 = vmatpush1.bf16.xpose.msra.mxu0 0
        %1663 = vmatprep.subr.bf16.mxu0 0
        %1664 = vmatpush1.bf16.xpose.msra.mxu0 0
        %1665 = vmatprep.subr.bf16.mxu0 0
        %1666 = vmatpush1.bf16.xpose.msra.mxu0 0
        %1667 = vmatprep.subr.bf16.mxu0 0
        %1668 = vmatpush1.bf16.xpose.msra.mxu0 0
        %1669 = vmatprep.subr.bf16.mxu0 0
        %1670 = vmatpush1.bf16.xpose.msra.mxu0 0
        %1671 = vmatprep.subr.bf16.mxu0 0
        %1672 = vmatpush1.bf16.xpose.msra.mxu0 0
        %1673 = vmatprep.subr.bf16.mxu0 0
        %1674 = vmatpush1.bf16.xpose.msra.mxu0 0
        %1675 = vmatprep.subr.bf16.mxu0 0
        %1676 = vmatpush1.bf16.xpose.msra.mxu0 0
        %1677 = vmatprep.mubr.bf16.mxu0 0
        %1678 = vmatmul.mubr.bf16.gmra.mrb[0].mxu0 %v1640
        %v1679 = vpop.f32.mrb[0].mxu0
        %v1680 = vadd.f32 0.0, %v1679
        %v1681 = vpop.f32.mrb[0].mxu0
        %v1682 = vpop.f32.mrb[0].mxu0
        %v1683 = vpop.f32.mrb[0].mxu0
        %1684 = vdwg.mxu0
        %v1685 = vmul.f32 %v1533, 0.35355338
        %v1686 = vmul.f32 %v1582, 0.35355338
        %v1687 = vmul.f32 %v1631, 0.35355338
        %v1688 = vmul.f32 %v1680, 0.35355338
        %v1689 = vlaneseq
        %v1690 = vshrl.u32 %v1689, 7
        %v1691 = vsub.s32 1, %v1690
        %v1692 = vrot.slane %v753, %v1691
        %v1693 = vadd.f32 %v1685, %v1692
        %v1694 = vadd.f32 %v1686, %v1692
        %v1695 = vadd.f32 %v1687, %v1692
        %v1696 = vadd.f32 %v1688, %v1692
        %v1697 = vsel %vm1011, %v1693, -inf
        %1698 = vmax.xlane.f32.xlu0 %v1697
        %v1699 = vpop.xlane.xlu0 %1698
        %v1700 = vsel %vm1011, %v1694, -inf
        %1701 = vmax.xlane.f32.xlu0 %v1700
        %v1702 = vpop.xlane.xlu0 %1701
        %v1703 = vsel %vm1011, %v1695, -inf
        %1704 = vmax.xlane.f32.xlu0 %v1703
        %v1705 = vpop.xlane.xlu0 %1704
        %v1706 = vsel %vm1011, %v1696, -inf
        %1707 = vmax.xlane.f32.xlu0 %v1706
        %v1708 = vpop.xlane.xlu0 %1707
        %v1709 = vsub.f32 %v1693, %v1699
        %v1710 = vsub.f32 %v1694, %v1702
        %v1711 = vsub.f32 %v1695, %v1705
        %v1712 = vsub.f32 %v1696, %v1708
        %v1713 = vmul.f32 %v1709, 1.442695
        %v1714 = vpow.pop %v1713
        %v1715 = vmul.f32 %v1710, 1.442695
        %v1716 = vpow.pop %v1715
        %v1717 = vmul.f32 %v1711, 1.442695
        %v1718 = vpow.pop %v1717
        %v1719 = vmul.f32 %v1712, 1.442695
        %v1720 = vpow.pop %v1719
        %v1721 = vsel %vm1011, %v1714, 0.0
        %1722 = vadd.xlane.f32.xlu0 %v1721
        %v1723 = vpop.xlane.xlu0 %1722
        %v1724 = vsel %vm1011, %v1716, 0.0
        %1725 = vadd.xlane.f32.xlu0 %v1724
        %v1726 = vpop.xlane.xlu0 %1725
        %v1727 = vsel %vm1011, %v1718, 0.0
        %1728 = vadd.xlane.f32.xlu0 %v1727
        %v1729 = vpop.xlane.xlu0 %1728
        %v1730 = vsel %vm1011, %v1720, 0.0
        %1731 = vadd.xlane.f32.xlu0 %v1730
        %v1732 = vpop.xlane.xlu0 %1731
        %v1733 = vrcp.pop %v1723
        %v1734 = vmul.f32 %v1714, %v1733
        %v1735 = vrcp.pop %v1726
        %v1736 = vmul.f32 %v1716, %v1735
        %v1737 = vrcp.pop %v1729
        %v1738 = vmul.f32 %v1718, %v1737
        %v1739 = vrcp.pop %v1732
        %v1740 = vmul.f32 %v1720, %v1739
        %v1741 = vpack.c.bf16 %v1734, %v1734
        %v1742 = vpack.c.bf16 %v1736, %v1736
        %v1743 = vpack.c.bf16 %v1738, %v1738
        %v1744 = vpack.c.bf16 %v1740, %v1740
        %1745 = vrot.lane.b32.xlu0 %v1485, 64
        %v1746 = vpop.permute.xlu0 %1745
        %v1748 = vsel %vm1011, %v1741, 0
        %v1751 = vsel %vm1270, %v1746, 0
        %1753 = vmatprep.subr.bf16.mxu0 0
        %1754 = vmatpush1.bf16.msra.mxu0 %v1751
        %1755 = vmatprep.subr.bf16.mxu0 0
        %1756 = vmatpush1.bf16.msra.mxu0 0
        %1757 = vmatprep.subr.bf16.mxu0 0
        %1758 = vmatpush1.bf16.msra.mxu0 0
        %1759 = vmatprep.subr.bf16.mxu0 0
        %1760 = vmatpush1.bf16.msra.mxu0 0
        %1761 = vmatprep.subr.bf16.mxu0 0
        %1762 = vmatpush1.bf16.msra.mxu0 0
        %1763 = vmatprep.subr.bf16.mxu0 0
        %1764 = vmatpush1.bf16.msra.mxu0 0
        %1765 = vmatprep.subr.bf16.mxu0 0
        %1766 = vmatpush1.bf16.msra.mxu0 0
        %1767 = vmatprep.subr.bf16.mxu0 0
        %1768 = vmatpush1.bf16.msra.mxu0 0
        %1769 = vmatprep.subr.bf16.mxu0 0
        %1770 = vmatpush1.bf16.msra.mxu0 0
        %1771 = vmatprep.subr.bf16.mxu0 0
        %1772 = vmatpush1.bf16.msra.mxu0 0
        %1773 = vmatprep.subr.bf16.mxu0 0
        %1774 = vmatpush1.bf16.msra.mxu0 0
        %1775 = vmatprep.subr.bf16.mxu0 0
        %1776 = vmatpush1.bf16.msra.mxu0 0
        %1777 = vmatprep.subr.bf16.mxu0 0
        %1778 = vmatpush1.bf16.msra.mxu0 0
        %1779 = vmatprep.subr.bf16.mxu0 0
        %1780 = vmatpush1.bf16.msra.mxu0 0
        %1781 = vmatprep.subr.bf16.mxu0 0
        %1782 = vmatpush1.bf16.msra.mxu0 0
        %1783 = vmatprep.subr.bf16.mxu0 0
        %1784 = vmatpush1.bf16.msra.mxu0 0
        %1785 = vmatprep.mubr.bf16.mxu0 0
        %1786 = vmatmul.mubr.bf16.gmra.mrb[0].mxu0 %v1748
        %v1787 = vpop.f32.mrb[0].mxu0
        %v1788 = vadd.f32 0.0, %v1787
        %v1789 = vpop.f32.mrb[0].mxu0
        %v1790 = vpop.f32.mrb[0].mxu0
        %v1791 = vpop.f32.mrb[0].mxu0
        %1792 = vdwg.mxu0
        %1793 = vrot.lane.b32.xlu0 %v1486, 64
        %v1794 = vpop.permute.xlu0 %1793
        %v1796 = vsel %vm1011, %v1742, 0
        %v1799 = vsel %vm1270, %v1794, 0
        %1801 = vmatprep.subr.bf16.mxu0 0
        %1802 = vmatpush1.bf16.msra.mxu0 %v1799
        %1803 = vmatprep.subr.bf16.mxu0 0
        %1804 = vmatpush1.bf16.msra.mxu0 0
        %1805 = vmatprep.subr.bf16.mxu0 0
        %1806 = vmatpush1.bf16.msra.mxu0 0
        %1807 = vmatprep.subr.bf16.mxu0 0
        %1808 = vmatpush1.bf16.msra.mxu0 0
        %1809 = vmatprep.subr.bf16.mxu0 0
        %1810 = vmatpush1.bf16.msra.mxu0 0
        %1811 = vmatprep.subr.bf16.mxu0 0
        %1812 = vmatpush1.bf16.msra.mxu0 0
        %1813 = vmatprep.subr.bf16.mxu0 0
        %1814 = vmatpush1.bf16.msra.mxu0 0
        %1815 = vmatprep.subr.bf16.mxu0 0
        %1816 = vmatpush1.bf16.msra.mxu0 0
        %1817 = vmatprep.subr.bf16.mxu0 0
        %1818 = vmatpush1.bf16.msra.mxu0 0
        %1819 = vmatprep.subr.bf16.mxu0 0
        %1820 = vmatpush1.bf16.msra.mxu0 0
        %1821 = vmatprep.subr.bf16.mxu0 0
        %1822 = vmatpush1.bf16.msra.mxu0 0
        %1823 = vmatprep.subr.bf16.mxu0 0
        %1824 = vmatpush1.bf16.msra.mxu0 0
        %1825 = vmatprep.subr.bf16.mxu0 0
        %1826 = vmatpush1.bf16.msra.mxu0 0
        %1827 = vmatprep.subr.bf16.mxu0 0
        %1828 = vmatpush1.bf16.msra.mxu0 0
        %1829 = vmatprep.subr.bf16.mxu0 0
        %1830 = vmatpush1.bf16.msra.mxu0 0
        %1831 = vmatprep.subr.bf16.mxu0 0
        %1832 = vmatpush1.bf16.msra.mxu0 0
        %1833 = vmatprep.mubr.bf16.mxu0 0
        %1834 = vmatmul.mubr.bf16.gmra.mrb[0].mxu0 %v1796
        %v1835 = vpop.f32.mrb[0].mxu0
        %v1836 = vadd.f32 0.0, %v1835
        %v1837 = vpop.f32.mrb[0].mxu0
        %v1838 = vpop.f32.mrb[0].mxu0
        %v1839 = vpop.f32.mrb[0].mxu0
        %1840 = vdwg.mxu0
        %1841 = vrot.lane.b32.xlu0 %v1487, 64
        %v1842 = vpop.permute.xlu0 %1841
        %v1844 = vsel %vm1011, %v1743, 0
        %v1847 = vsel %vm1270, %v1842, 0
        %1849 = vmatprep.subr.bf16.mxu0 0
        %1850 = vmatpush1.bf16.msra.mxu0 %v1847
        %1851 = vmatprep.subr.bf16.mxu0 0
        %1852 = vmatpush1.bf16.msra.mxu0 0
        %1853 = vmatprep.subr.bf16.mxu0 0
        %1854 = vmatpush1.bf16.msra.mxu0 0
        %1855 = vmatprep.subr.bf16.mxu0 0
        %1856 = vmatpush1.bf16.msra.mxu0 0
        %1857 = vmatprep.subr.bf16.mxu0 0
        %1858 = vmatpush1.bf16.msra.mxu0 0
        %1859 = vmatprep.subr.bf16.mxu0 0
        %1860 = vmatpush1.bf16.msra.mxu0 0
        %1861 = vmatprep.subr.bf16.mxu0 0
        %1862 = vmatpush1.bf16.msra.mxu0 0
        %1863 = vmatprep.subr.bf16.mxu0 0
        %1864 = vmatpush1.bf16.msra.mxu0 0
        %1865 = vmatprep.subr.bf16.mxu0 0
        %1866 = vmatpush1.bf16.msra.mxu0 0
        %1867 = vmatprep.subr.bf16.mxu0 0
        %1868 = vmatpush1.bf16.msra.mxu0 0
        %1869 = vmatprep.subr.bf16.mxu0 0
        %1870 = vmatpush1.bf16.msra.mxu0 0
        %1871 = vmatprep.subr.bf16.mxu0 0
        %1872 = vmatpush1.bf16.msra.mxu0 0
        %1873 = vmatprep.subr.bf16.mxu0 0
        %1874 = vmatpush1.bf16.msra.mxu0 0
        %1875 = vmatprep.subr.bf16.mxu0 0
        %1876 = vmatpush1.bf16.msra.mxu0 0
        %1877 = vmatprep.subr.bf16.mxu0 0
        %1878 = vmatpush1.bf16.msra.mxu0 0
        %1879 = vmatprep.subr.bf16.mxu0 0
        %1880 = vmatpush1.bf16.msra.mxu0 0
        %1881 = vmatprep.mubr.bf16.mxu0 0
        %1882 = vmatmul.mubr.bf16.gmra.mrb[0].mxu0 %v1844
        %v1883 = vpop.f32.mrb[0].mxu0
        %v1884 = vadd.f32 0.0, %v1883
        %v1885 = vpop.f32.mrb[0].mxu0
        %v1886 = vpop.f32.mrb[0].mxu0
        %v1887 = vpop.f32.mrb[0].mxu0
        %1888 = vdwg.mxu0
        %1889 = vrot.lane.b32.xlu0 %v1488, 64
        %v1890 = vpop.permute.xlu0 %1889
        %v1892 = vsel %vm1011, %v1744, 0
        %v1895 = vsel %vm1270, %v1890, 0
        %1897 = vmatprep.subr.bf16.mxu0 0
        %1898 = vmatpush1.bf16.msra.mxu0 %v1895
        %1899 = vmatprep.subr.bf16.mxu0 0
        %1900 = vmatpush1.bf16.msra.mxu0 0
        %1901 = vmatprep.subr.bf16.mxu0 0
        %1902 = vmatpush1.bf16.msra.mxu0 0
        %1903 = vmatprep.subr.bf16.mxu0 0
        %1904 = vmatpush1.bf16.msra.mxu0 0
        %1905 = vmatprep.subr.bf16.mxu0 0
        %1906 = vmatpush1.bf16.msra.mxu0 0
        %1907 = vmatprep.subr.bf16.mxu0 0
        %1908 = vmatpush1.bf16.msra.mxu0 0
        %1909 = vmatprep.subr.bf16.mxu0 0
        %1910 = vmatpush1.bf16.msra.mxu0 0
        %1911 = vmatprep.subr.bf16.mxu0 0
        %1912 = vmatpush1.bf16.msra.mxu0 0
        %1913 = vmatprep.subr.bf16.mxu0 0
        %1914 = vmatpush1.bf16.msra.mxu0 0
        %1915 = vmatprep.subr.bf16.mxu0 0
        %1916 = vmatpush1.bf16.msra.mxu0 0
        %1917 = vmatprep.subr.bf16.mxu0 0
        %1918 = vmatpush1.bf16.msra.mxu0 0
        %1919 = vmatprep.subr.bf16.mxu0 0
        %1920 = vmatpush1.bf16.msra.mxu0 0
        %1921 = vmatprep.subr.bf16.mxu0 0
        %1922 = vmatpush1.bf16.msra.mxu0 0
        %1923 = vmatprep.subr.bf16.mxu0 0
        %1924 = vmatpush1.bf16.msra.mxu0 0
        %1925 = vmatprep.subr.bf16.mxu0 0
        %1926 = vmatpush1.bf16.msra.mxu0 0
        %1927 = vmatprep.subr.bf16.mxu0 0
        %1928 = vmatpush1.bf16.msra.mxu0 0
        %1929 = vmatprep.mubr.bf16.mxu0 0
        %1930 = vmatmul.mubr.bf16.gmra.mrb[0].mxu0 %v1892
        %v1931 = vpop.f32.mrb[0].mxu0
        %v1932 = vadd.f32 0.0, %v1931
        %v1933 = vpop.f32.mrb[0].mxu0
        %v1934 = vpop.f32.mrb[0].mxu0
        %v1935 = vpop.f32.mrb[0].mxu0
        %1936 = vdwg.mxu0
        %1938 = vrot.lane.b32.xlu0 %v1836, 8
        %v1939 = vpop.permute.xlu0 %1938
        %1942 = vrot.lane.b32.xlu0 %v1884, 16
        %v1943 = vpop.permute.xlu0 %1942
        %1946 = vrot.lane.b32.xlu0 %v1932, 24
        %v1947 = vpop.permute.xlu0 %1946
        %v1949 = vsel %vm1011, %v1788, %v1939
        %v1950 = vsel %vm1471, %v1949, %v1943
        %v1951 = vsel %vm1473, %v1950, %v1947
        %v1952 = vld [vmem:[%s7] sm:$0xf]
        %v1953 = vld [vmem:[%s7 + $0x4] sm:$0xf]
        %v1954 = vld [vmem:[%s7 + $0x8] sm:$0xf]
        %v1955 = vld [vmem:[%s7 + $0xc] sm:$0xf]
        %v1956 = vpack.c.bf16 %v1951, %v1474
        %v1957 = vlaneseq
        %v1958 = vshrl.u32 %v1957, 7
        %v1959 = vsub.s32 1, %v1958
        %v1960 = vrot.slane %v928, %v1959
        %v1965 = vunpack.c.l.b16 %v1952
        %v1966 = vunpack.c.l.b16 %v1953
        %v1967 = vunpack.c.l.b16 %v1954
        %v1968 = vunpack.c.l.b16 %v1955
        %v1969 = vpack.c.b16 %v1966, %v1965
        %v1970 = vpack.c.b16 %v1968, %v1967
        %v1974 = vsel %vm810, %v1956, 0
        %1976 = vmatprep.subr.bf16.mxu0 0
        %1977 = vmatpush1.bf16.msra.mxu0 %v1969
        %1978 = vmatprep.subr.bf16.mxu0 0
        %1979 = vmatpush1.bf16.msra.mxu0 %v1970
        %1980 = vmatprep.subr.bf16.mxu0 0
        %1981 = vmatpush1.bf16.msra.mxu0 0
        %1982 = vmatprep.subr.bf16.mxu0 0
        %1983 = vmatpush1.bf16.msra.mxu0 0
        %1984 = vmatprep.subr.bf16.mxu0 0
        %1985 = vmatpush1.bf16.msra.mxu0 0
        %1986 = vmatprep.subr.bf16.mxu0 0
        %1987 = vmatpush1.bf16.msra.mxu0 0
        %1988 = vmatprep.subr.bf16.mxu0 0
        %1989 = vmatpush1.bf16.msra.mxu0 0
        %1990 = vmatprep.subr.bf16.mxu0 0
        %1991 = vmatpush1.bf16.msra.mxu0 0
        %1992 = vmatprep.subr.bf16.mxu0 0
        %1993 = vmatpush1.bf16.msra.mxu0 0
        %1994 = vmatprep.subr.bf16.mxu0 0
        %1995 = vmatpush1.bf16.msra.mxu0 0
        %1996 = vmatprep.subr.bf16.mxu0 0
        %1997 = vmatpush1.bf16.msra.mxu0 0
        %1998 = vmatprep.subr.bf16.mxu0 0
        %1999 = vmatpush1.bf16.msra.mxu0 0
        %2000 = vmatprep.subr.bf16.mxu0 0
        %2001 = vmatpush1.bf16.msra.mxu0 0
        %2002 = vmatprep.subr.bf16.mxu0 0
        %2003 = vmatpush1.bf16.msra.mxu0 0
        %2004 = vmatprep.subr.bf16.mxu0 0
        %2005 = vmatpush1.bf16.msra.mxu0 0
        %2006 = vmatprep.subr.bf16.mxu0 0
        %2007 = vmatpush1.bf16.msra.mxu0 0
        %2008 = vmatprep.mubr.bf16.mxu0 0
        %2009 = vmatmul.mubr.bf16.gmra.mrb[0].mxu0 %v1974
        %v2010 = vpop.f32.mrb[0].mxu0
        %v2011 = vadd.f32 %v1960, %v2010
        %v2012 = vpop.f32.mrb[0].mxu0
        %v2013 = vpop.f32.mrb[0].mxu0
        %v2014 = vadd.f32 %v1960, %v2013
        %v2015 = vpop.f32.mrb[0].mxu0
        %2016 = vdwg.mxu0
        %v2017 = vadd.f32 %v849, %v2011
        %v2018 = vadd.f32 %v852, %v2014
        %v2019 = vsel %vm810, %v2017, 0.0
        %2020 = vadd.xlane.f32.xlu0 %v2019
        %v2021 = vpop.xlane.xlu0 %2020
        %v2022 = vsel %vm810, %v2018, 0.0
        %2023 = vadd.xlane.f32.xlu0 %v2022
        %v2024 = vpop.xlane.xlu0 %2023
        %v2025 = vrcp.pop 32.0
        %v2026 = vmul.f32 %v2021, %v2025
        %v2027 = vmul.f32 %v2024, %v2025
        %v2028 = vsub.f32 %v2017, %v2026
        %v2029 = vsub.f32 %v2018, %v2027
        %v2030 = vmul.f32 %v2028, %v2028
        %v2031 = vmul.f32 %v2029, %v2029
        %v2032 = vsel %vm810, %v2030, 0.0
        %2033 = vadd.xlane.f32.xlu0 %v2032
        %v2034 = vpop.xlane.xlu0 %2033
        %v2035 = vsel %vm810, %v2031, 0.0
        %2036 = vadd.xlane.f32.xlu0 %v2035
        %v2037 = vpop.xlane.xlu0 %2036
        %v2038 = vmul.f32 %v2034, %v2025
        %v2039 = vmul.f32 %v2037, %v2025
        %v2040 = vadd.f32 %v2038, 1e-05
        %v2041 = vadd.f32 %v2039, 1e-05
        %v2042 = vrsqrt.pop %v2040
        %v2043 = vrsqrt.pop %v2041
        %v2044 = vmul.f32 %v2028, %v2042
        %v2045 = vmul.f32 %v2029, %v2043
        %v2046 = vlaneseq
        %v2047 = vshrl.u32 %v2046, 7
        %v2048 = vsub.s32 2, %v2047
        %v2049 = vrot.slane %v928, %v2048
        %v2050 = vmul.f32 %v2044, %v2049
        %v2051 = vmul.f32 %v2045, %v2049
        %v2052 = vlaneseq
        %v2053 = vshrl.u32 %v2052, 7
        %v2054 = vsub.s32 3, %v2053
        %v2055 = vrot.slane %v928, %v2054
        %v2056 = vadd.f32 %v2050, %v2055
        %v2057 = vadd.f32 %v2051, %v2055
        %v2058 = vld [vmem:[%s8] sm:$0xf]
        %v2059 = vld [vmem:[%s8 + $0x4] sm:$0xf]
        %v2060 = vld [vmem:[%s8 + $0x8] sm:$0xf]
        %v2061 = vld [vmem:[%s8 + $0xc] sm:$0xf]
        %v2062 = vpack.c.bf16 %v2057, %v2056
        %v2063 = vlaneseq
        %v2064 = vshrl.u32 %v2063, 7
        %v2065 = vsub.s32 4, %v2064
        %v2066 = vrot.slane %v928, %v2065
        %v2071 = vunpack.c.l.b16 %v2058
        %v2072 = vunpack.c.l.b16 %v2059
        %v2073 = vunpack.c.l.b16 %v2060
        %v2074 = vunpack.c.l.b16 %v2061
        %v2075 = vpack.c.b16 %v2072, %v2071
        %v2076 = vpack.c.b16 %v2074, %v2073
        %v2080 = vsel %vm810, %v2062, 0
        %2082 = vmatprep.subr.bf16.mxu0 0
        %2083 = vmatpush1.bf16.msra.mxu0 %v2075
        %2084 = vmatprep.subr.bf16.mxu0 0
        %2085 = vmatpush1.bf16.msra.mxu0 %v2076
        %2086 = vmatprep.subr.bf16.mxu0 0
        %2087 = vmatpush1.bf16.msra.mxu0 0
        %2088 = vmatprep.subr.bf16.mxu0 0
        %2089 = vmatpush1.bf16.msra.mxu0 0
        %2090 = vmatprep.subr.bf16.mxu0 0
        %2091 = vmatpush1.bf16.msra.mxu0 0
        %2092 = vmatprep.subr.bf16.mxu0 0
        %2093 = vmatpush1.bf16.msra.mxu0 0
        %2094 = vmatprep.subr.bf16.mxu0 0
        %2095 = vmatpush1.bf16.msra.mxu0 0
        %2096 = vmatprep.subr.bf16.mxu0 0
        %2097 = vmatpush1.bf16.msra.mxu0 0
        %2098 = vmatprep.subr.bf16.mxu0 0
        %2099 = vmatpush1.bf16.msra.mxu0 0
        %2100 = vmatprep.subr.bf16.mxu0 0
        %2101 = vmatpush1.bf16.msra.mxu0 0
        %2102 = vmatprep.subr.bf16.mxu0 0
        %2103 = vmatpush1.bf16.msra.mxu0 0
        %2104 = vmatprep.subr.bf16.mxu0 0
        %2105 = vmatpush1.bf16.msra.mxu0 0
        %2106 = vmatprep.subr.bf16.mxu0 0
        %2107 = vmatpush1.bf16.msra.mxu0 0
        %2108 = vmatprep.subr.bf16.mxu0 0
        %2109 = vmatpush1.bf16.msra.mxu0 0
        %2110 = vmatprep.subr.bf16.mxu0 0
        %2111 = vmatpush1.bf16.msra.mxu0 0
        %2112 = vmatprep.subr.bf16.mxu0 0
        %2113 = vmatpush1.bf16.msra.mxu0 0
        %2114 = vmatprep.mubr.bf16.mxu0 0
        %2115 = vmatmul.mubr.bf16.gmra.mrb[0].mxu0 %v2080
        %v2116 = vpop.f32.mrb[0].mxu0
        %v2117 = vadd.f32 %v2066, %v2116
        %v2118 = vpop.f32.mrb[0].mxu0
        %v2119 = vpop.f32.mrb[0].mxu0
        %v2120 = vadd.f32 %v2066, %v2119
        %v2121 = vpop.f32.mrb[0].mxu0
        %2122 = vdwg.mxu0
        %v2123 = vmax.f32 %v2117, 0.0
        %v2124 = vmax.f32 %v2120, 0.0
        %v2125 = vld [vmem:[%s9] sm:$0xf]
        %v2126 = vld [vmem:[%s9 + $0x4] sm:$0xf]
        %v2127 = vld [vmem:[%s9 + $0x8] sm:$0xf]
        %v2128 = vld [vmem:[%s9 + $0xc] sm:$0xf]
        %v2129 = vld [vmem:[%s9 + $0x10] sm:$0xf]
        %v2130 = vld [vmem:[%s9 + $0x14] sm:$0xf]
        %v2131 = vld [vmem:[%s9 + $0x18] sm:$0xf]
        %v2132 = vld [vmem:[%s9 + $0x1c] sm:$0xf]
        %v2133 = vpack.c.bf16 %v2124, %v2123
        %v2134 = vlaneseq
        %v2135 = vshrl.u32 %v2134, 7
        %v2136 = vsub.s32 5, %v2135
        %v2137 = vrot.slane %v928, %v2136
        %v2146 = vunpack.c.l.b16 %v2125
        %v2147 = vunpack.c.l.b16 %v2126
        %v2148 = vunpack.c.l.b16 %v2127
        %v2149 = vunpack.c.l.b16 %v2128
        %v2150 = vunpack.c.l.b16 %v2129
        %v2151 = vunpack.c.l.b16 %v2130
        %v2152 = vunpack.c.l.b16 %v2131
        %v2153 = vunpack.c.l.b16 %v2132
        %v2154 = vpack.c.b16 %v2147, %v2146
        %v2155 = vpack.c.b16 %v2149, %v2148
        %v2156 = vpack.c.b16 %v2151, %v2150
        %v2157 = vpack.c.b16 %v2153, %v2152
        %vm2162 = vcmask 523264
        %v2164 = vsel %vm2162, %v2133, 0
        %2166 = vmatprep.subr.bf16.mxu0 0
        %2167 = vmatpush1.bf16.msra.mxu0 %v2154
        %2168 = vmatprep.subr.bf16.mxu0 0
        %2169 = vmatpush1.bf16.msra.mxu0 %v2155
        %2170 = vmatprep.subr.bf16.mxu0 0
        %2171 = vmatpush1.bf16.msra.mxu0 %v2156
        %2172 = vmatprep.subr.bf16.mxu0 0
        %2173 = vmatpush1.bf16.msra.mxu0 %v2157
        %2174 = vmatprep.subr.bf16.mxu0 0
        %2175 = vmatpush1.bf16.msra.mxu0 0
        %2176 = vmatprep.subr.bf16.mxu0 0
        %2177 = vmatpush1.bf16.msra.mxu0 0
        %2178 = vmatprep.subr.bf16.mxu0 0
        %2179 = vmatpush1.bf16.msra.mxu0 0
        %2180 = vmatprep.subr.bf16.mxu0 0
        %2181 = vmatpush1.bf16.msra.mxu0 0
        %2182 = vmatprep.subr.bf16.mxu0 0
        %2183 = vmatpush1.bf16.msra.mxu0 0
        %2184 = vmatprep.subr.bf16.mxu0 0
        %2185 = vmatpush1.bf16.msra.mxu0 0
        %2186 = vmatprep.subr.bf16.mxu0 0
        %2187 = vmatpush1.bf16.msra.mxu0 0
        %2188 = vmatprep.subr.bf16.mxu0 0
        %2189 = vmatpush1.bf16.msra.mxu0 0
        %2190 = vmatprep.subr.bf16.mxu0 0
        %2191 = vmatpush1.bf16.msra.mxu0 0
        %2192 = vmatprep.subr.bf16.mxu0 0
        %2193 = vmatpush1.bf16.msra.mxu0 0
        %2194 = vmatprep.subr.bf16.mxu0 0
        %2195 = vmatpush1.bf16.msra.mxu0 0
        %2196 = vmatprep.subr.bf16.mxu0 0
        %2197 = vmatpush1.bf16.msra.mxu0 0
        %2198 = vmatprep.mubr.bf16.mxu0 0
        %2199 = vmatmul.mubr.bf16.gmra.mrb[0].mxu0 %v2164
        %v2200 = vpop.f32.mrb[0].mxu0
        %v2201 = vadd.f32 %v2137, %v2200
        %v2202 = vpop.f32.mrb[0].mxu0
        %v2203 = vpop.f32.mrb[0].mxu0
        %v2204 = vadd.f32 %v2137, %v2203
        %v2205 = vpop.f32.mrb[0].mxu0
        %2206 = vdwg.mxu0
        %v2207 = vadd.f32 %v2056, %v2201
        %v2208 = vadd.f32 %v2057, %v2204
        %v2209 = vsel %vm810, %v2207, 0.0
        %2210 = vadd.xlane.f32.xlu0 %v2209
        %v2211 = vpop.xlane.xlu0 %2210
        %v2212 = vsel %vm810, %v2208, 0.0
        %2213 = vadd.xlane.f32.xlu0 %v2212
        %v2214 = vpop.xlane.xlu0 %2213
        %v2215 = vmul.f32 %v2211, %v2025
        %v2216 = vmul.f32 %v2214, %v2025
        %v2217 = vsub.f32 %v2207, %v2215
        %v2218 = vsub.f32 %v2208, %v2216
        %v2219 = vmul.f32 %v2217, %v2217
        %v2220 = vmul.f32 %v2218, %v2218
        %v2221 = vsel %vm810, %v2219, 0.0
        %2222 = vadd.xlane.f32.xlu0 %v2221
        %v2223 = vpop.xlane.xlu0 %2222
        %v2224 = vsel %vm810, %v2220, 0.0
        %2225 = vadd.xlane.f32.xlu0 %v2224
        %v2226 = vpop.xlane.xlu0 %2225
        %v2227 = vmul.f32 %v2223, %v2025
        %v2228 = vmul.f32 %v2226, %v2025
        %v2229 = vadd.f32 %v2227, 1e-05
        %v2230 = vadd.f32 %v2228, 1e-05
        %v2231 = vrsqrt.pop %v2229
        %v2232 = vrsqrt.pop %v2230
        %v2233 = vmul.f32 %v2217, %v2231
        %v2234 = vmul.f32 %v2218, %v2232
        %v2235 = vlaneseq
        %v2236 = vshrl.u32 %v2235, 7
        %v2237 = vsub.s32 6, %v2236
        %v2238 = vrot.slane %v928, %v2237
        %v2239 = vmul.f32 %v2233, %v2238
        %v2240 = vmul.f32 %v2234, %v2238
        %v2241 = vlaneseq
        %v2242 = vshrl.u32 %v2241, 7
        %v2243 = vsub.s32 7, %v2242
        %v2244 = vrot.slane %v928, %v2243
        %v2245 = vadd.f32 %v2239, %v2244
        %v2246 = vadd.f32 %v2240, %v2244
        %s2247 = scalar_lea.vmem [#allocation7], 8
        %v2248 = vld [vmem:[%s2247] sm:$0xff]
        %s2249 = scalar_lea.vmem %s6, 16
        %v2250 = vld [vmem:[%s2249] sm:$0xf]
        %v2251 = vld [vmem:[%s2249 + $0x4] sm:$0xf]
        %v2252 = vld [vmem:[%s2249 + $0x8] sm:$0xf]
        %v2253 = vld [vmem:[%s2249 + $0xc] sm:$0xf]
        %v2254 = vpack.c.bf16 %v2246, %v2245
        %v2255 = vlaneseq
        %v2256 = vshrl.u32 %v2255, 7
        %v2257 = vsub.s32 0, %v2256
        %v2258 = vrot.slane %v2248, %v2257
        %v2263 = vunpack.c.l.b16 %v2250
        %v2264 = vunpack.c.l.b16 %v2251
        %v2265 = vunpack.c.l.b16 %v2252
        %v2266 = vunpack.c.l.b16 %v2253
        %v2267 = vpack.c.b16 %v2264, %v2263
        %v2268 = vpack.c.b16 %v2266, %v2265
        %v2272 = vsel %vm810, %v2254, 0
        %2274 = vmatprep.subr.bf16.mxu0 0
        %2275 = vmatpush1.bf16.msra.mxu0 %v2267
        %2276 = vmatprep.subr.bf16.mxu0 0
        %2277 = vmatpush1.bf16.msra.mxu0 %v2268
        %2278 = vmatprep.subr.bf16.mxu0 0
        %2279 = vmatpush1.bf16.msra.mxu0 0
        %2280 = vmatprep.subr.bf16.mxu0 0
        %2281 = vmatpush1.bf16.msra.mxu0 0
        %2282 = vmatprep.subr.bf16.mxu0 0
        %2283 = vmatpush1.bf16.msra.mxu0 0
        %2284 = vmatprep.subr.bf16.mxu0 0
        %2285 = vmatpush1.bf16.msra.mxu0 0
        %2286 = vmatprep.subr.bf16.mxu0 0
        %2287 = vmatpush1.bf16.msra.mxu0 0
        %2288 = vmatprep.subr.bf16.mxu0 0
        %2289 = vmatpush1.bf16.msra.mxu0 0
        %2290 = vmatprep.subr.bf16.mxu0 0
        %2291 = vmatpush1.bf16.msra.mxu0 0
        %2292 = vmatprep.subr.bf16.mxu0 0
        %2293 = vmatpush1.bf16.msra.mxu0 0
        %2294 = vmatprep.subr.bf16.mxu0 0
        %2295 = vmatpush1.bf16.msra.mxu0 0
        %2296 = vmatprep.subr.bf16.mxu0 0
        %2297 = vmatpush1.bf16.msra.mxu0 0
        %2298 = vmatprep.subr.bf16.mxu0 0
        %2299 = vmatpush1.bf16.msra.mxu0 0
        %2300 = vmatprep.subr.bf16.mxu0 0
        %2301 = vmatpush1.bf16.msra.mxu0 0
        %2302 = vmatprep.subr.bf16.mxu0 0
        %2303 = vmatpush1.bf16.msra.mxu0 0
        %2304 = vmatprep.subr.bf16.mxu0 0
        %2305 = vmatpush1.bf16.msra.mxu0 0
        %2306 = vmatprep.mubr.bf16.mxu0 0
        %2307 = vmatmul.mubr.bf16.gmra.mrb[0].mxu0 %v2272
        %v2308 = vpop.f32.mrb[0].mxu0
        %v2309 = vadd.f32 %v2258, %v2308
        %v2310 = vpop.f32.mrb[0].mxu0
        %v2311 = vpop.f32.mrb[0].mxu0
        %v2312 = vadd.f32 %v2258, %v2311
        %v2313 = vpop.f32.mrb[0].mxu0
        %2314 = vdwg.mxu0
        %2316 = vrot.lane.b32.xlu0 %v2309, 120
        %v2317 = vpop.permute.xlu0 %2316
        %2319 = vrot.lane.b32.xlu0 %v2309, 112
        %v2320 = vpop.permute.xlu0 %2319
        %2322 = vrot.lane.b32.xlu0 %v2309, 104
        %v2323 = vpop.permute.xlu0 %2322
        %v2325 = vpack.c.bf16 %v2309, %v2309
        %v2326 = vpack.c.bf16 %v2317, %v2317
        %v2327 = vpack.c.bf16 %v2320, %v2320
        %v2328 = vpack.c.bf16 %v2323, %v2323
        %2330 = vrot.lane.b32.xlu0 %v2325, 96
        %v2331 = vpop.permute.xlu0 %2330
        %v2333 = vsel %vm1011, %v2325, 0
        %v2336 = vsel %vm1011, %v2331, 0
        %2338 = vmatprep.subr.bf16.mxu0 0
        %2339 = vmatpush1.bf16.xpose.msra.mxu0 %v2336
        %2340 = vmatprep.subr.bf16.mxu0 0
        %2341 = vmatpush1.bf16.xpose.msra.mxu0 0
        %2342 = vmatprep.subr.bf16.mxu0 0
        %2343 = vmatpush1.bf16.xpose.msra.mxu0 0
        %2344 = vmatprep.subr.bf16.mxu0 0
        %2345 = vmatpush1.bf16.xpose.msra.mxu0 0
        %2346 = vmatprep.subr.bf16.mxu0 0
        %2347 = vmatpush1.bf16.xpose.msra.mxu0 0
        %2348 = vmatprep.subr.bf16.mxu0 0
        %2349 = vmatpush1.bf16.xpose.msra.mxu0 0
        %2350 = vmatprep.subr.bf16.mxu0 0
        %2351 = vmatpush1.bf16.xpose.msra.mxu0 0
        %2352 = vmatprep.subr.bf16.mxu0 0
        %2353 = vmatpush1.bf16.xpose.msra.mxu0 0
        %2354 = vmatprep.subr.bf16.mxu0 0
        %2355 = vmatpush1.bf16.xpose.msra.mxu0 0
        %2356 = vmatprep.subr.bf16.mxu0 0
        %2357 = vmatpush1.bf16.xpose.msra.mxu0 0
        %2358 = vmatprep.subr.bf16.mxu0 0
        %2359 = vmatpush1.bf16.xpose.msra.mxu0 0
        %2360 = vmatprep.subr.bf16.mxu0 0
        %2361 = vmatpush1.bf16.xpose.msra.mxu0 0
        %2362 = vmatprep.subr.bf16.mxu0 0
        %2363 = vmatpush1.bf16.xpose.msra.mxu0 0
        %2364 = vmatprep.subr.bf16.mxu0 0
        %2365 = vmatpush1.bf16.xpose.msra.mxu0 0
        %2366 = vmatprep.subr.bf16.mxu0 0
        %2367 = vmatpush1.bf16.xpose.msra.mxu0 0
        %2368 = vmatprep.subr.bf16.mxu0 0
        %2369 = vmatpush1.bf16.xpose.msra.mxu0 0
        %2370 = vmatprep.mubr.bf16.mxu0 0
        %2371 = vmatmul.mubr.bf16.gmra.mrb[0].mxu0 %v2333
        %v2372 = vpop.f32.mrb[0].mxu0
        %v2373 = vadd.f32 0.0, %v2372
        %v2374 = vpop.f32.mrb[0].mxu0
        %v2375 = vpop.f32.mrb[0].mxu0
        %v2376 = vpop.f32.mrb[0].mxu0
        %2377 = vdwg.mxu0
        %2379 = vrot.lane.b32.xlu0 %v2326, 96
        %v2380 = vpop.permute.xlu0 %2379
        %v2382 = vsel %vm1011, %v2326, 0
        %v2385 = vsel %vm1011, %v2380, 0
        %2387 = vmatprep.subr.bf16.mxu0 0
        %2388 = vmatpush1.bf16.xpose.msra.mxu0 %v2385
        %2389 = vmatprep.subr.bf16.mxu0 0
        %2390 = vmatpush1.bf16.xpose.msra.mxu0 0
        %2391 = vmatprep.subr.bf16.mxu0 0
        %2392 = vmatpush1.bf16.xpose.msra.mxu0 0
        %2393 = vmatprep.subr.bf16.mxu0 0
        %2394 = vmatpush1.bf16.xpose.msra.mxu0 0
        %2395 = vmatprep.subr.bf16.mxu0 0
        %2396 = vmatpush1.bf16.xpose.msra.mxu0 0
        %2397 = vmatprep.subr.bf16.mxu0 0
        %2398 = vmatpush1.bf16.xpose.msra.mxu0 0
        %2399 = vmatprep.subr.bf16.mxu0 0
        %2400 = vmatpush1.bf16.xpose.msra.mxu0 0
        %2401 = vmatprep.subr.bf16.mxu0 0
        %2402 = vmatpush1.bf16.xpose.msra.mxu0 0
        %2403 = vmatprep.subr.bf16.mxu0 0
        %2404 = vmatpush1.bf16.xpose.msra.mxu0 0
        %2405 = vmatprep.subr.bf16.mxu0 0
        %2406 = vmatpush1.bf16.xpose.msra.mxu0 0
        %2407 = vmatprep.subr.bf16.mxu0 0
        %2408 = vmatpush1.bf16.xpose.msra.mxu0 0
        %2409 = vmatprep.subr.bf16.mxu0 0
        %2410 = vmatpush1.bf16.xpose.msra.mxu0 0
        %2411 = vmatprep.subr.bf16.mxu0 0
        %2412 = vmatpush1.bf16.xpose.msra.mxu0 0
        %2413 = vmatprep.subr.bf16.mxu0 0
        %2414 = vmatpush1.bf16.xpose.msra.mxu0 0
        %2415 = vmatprep.subr.bf16.mxu0 0
        %2416 = vmatpush1.bf16.xpose.msra.mxu0 0
        %2417 = vmatprep.subr.bf16.mxu0 0
        %2418 = vmatpush1.bf16.xpose.msra.mxu0 0
        %2419 = vmatprep.mubr.bf16.mxu0 0
        %2420 = vmatmul.mubr.bf16.gmra.mrb[0].mxu0 %v2382
        %v2421 = vpop.f32.mrb[0].mxu0
        %v2422 = vadd.f32 0.0, %v2421
        %v2423 = vpop.f32.mrb[0].mxu0
        %v2424 = vpop.f32.mrb[0].mxu0
        %v2425 = vpop.f32.mrb[0].mxu0
        %2426 = vdwg.mxu0
        %2428 = vrot.lane.b32.xlu0 %v2327, 96
        %v2429 = vpop.permute.xlu0 %2428
        %v2431 = vsel %vm1011, %v2327, 0
        %v2434 = vsel %vm1011, %v2429, 0
        %2436 = vmatprep.subr.bf16.mxu0 0
        %2437 = vmatpush1.bf16.xpose.msra.mxu0 %v2434
        %2438 = vmatprep.subr.bf16.mxu0 0
        %2439 = vmatpush1.bf16.xpose.msra.mxu0 0
        %2440 = vmatprep.subr.bf16.mxu0 0
        %2441 = vmatpush1.bf16.xpose.msra.mxu0 0
        %2442 = vmatprep.subr.bf16.mxu0 0
        %2443 = vmatpush1.bf16.xpose.msra.mxu0 0
        %2444 = vmatprep.subr.bf16.mxu0 0
        %2445 = vmatpush1.bf16.xpose.msra.mxu0 0
        %2446 = vmatprep.subr.bf16.mxu0 0
        %2447 = vmatpush1.bf16.xpose.msra.mxu0 0
        %2448 = vmatprep.subr.bf16.mxu0 0
        %2449 = vmatpush1.bf16.xpose.msra.mxu0 0
        %2450 = vmatprep.subr.bf16.mxu0 0
        %2451 = vmatpush1.bf16.xpose.msra.mxu0 0
        %2452 = vmatprep.subr.bf16.mxu0 0
        %2453 = vmatpush1.bf16.xpose.msra.mxu0 0
        %2454 = vmatprep.subr.bf16.mxu0 0
        %2455 = vmatpush1.bf16.xpose.msra.mxu0 0
        %2456 = vmatprep.subr.bf16.mxu0 0
        %2457 = vmatpush1.bf16.xpose.msra.mxu0 0
        %2458 = vmatprep.subr.bf16.mxu0 0
        %2459 = vmatpush1.bf16.xpose.msra.mxu0 0
        %2460 = vmatprep.subr.bf16.mxu0 0
        %2461 = vmatpush1.bf16.xpose.msra.mxu0 0
        %2462 = vmatprep.subr.bf16.mxu0 0
        %2463 = vmatpush1.bf16.xpose.msra.mxu0 0
        %2464 = vmatprep.subr.bf16.mxu0 0
        %2465 = vmatpush1.bf16.xpose.msra.mxu0 0
        %2466 = vmatprep.subr.bf16.mxu0 0
        %2467 = vmatpush1.bf16.xpose.msra.mxu0 0
        %2468 = vmatprep.mubr.bf16.mxu0 0
        %2469 = vmatmul.mubr.bf16.gmra.mrb[0].mxu0 %v2431
        %v2470 = vpop.f32.mrb[0].mxu0
        %v2471 = vadd.f32 0.0, %v2470
        %v2472 = vpop.f32.mrb[0].mxu0
        %v2473 = vpop.f32.mrb[0].mxu0
        %v2474 = vpop.f32.mrb[0].mxu0
        %2475 = vdwg.mxu0
        %2477 = vrot.lane.b32.xlu0 %v2328, 96
        %v2478 = vpop.permute.xlu0 %2477
        %v2480 = vsel %vm1011, %v2328, 0
        %v2483 = vsel %vm1011, %v2478, 0
        %2485 = vmatprep.subr.bf16.mxu0 0
        %2486 = vmatpush1.bf16.xpose.msra.mxu0 %v2483
        %2487 = vmatprep.subr.bf16.mxu0 0
        %2488 = vmatpush1.bf16.xpose.msra.mxu0 0
        %2489 = vmatprep.subr.bf16.mxu0 0
        %2490 = vmatpush1.bf16.xpose.msra.mxu0 0
        %2491 = vmatprep.subr.bf16.mxu0 0
        %2492 = vmatpush1.bf16.xpose.msra.mxu0 0
        %2493 = vmatprep.subr.bf16.mxu0 0
        %2494 = vmatpush1.bf16.xpose.msra.mxu0 0
        %2495 = vmatprep.subr.bf16.mxu0 0
        %2496 = vmatpush1.bf16.xpose.msra.mxu0 0
        %2497 = vmatprep.subr.bf16.mxu0 0
        %2498 = vmatpush1.bf16.xpose.msra.mxu0 0
        %2499 = vmatprep.subr.bf16.mxu0 0
        %2500 = vmatpush1.bf16.xpose.msra.mxu0 0
        %2501 = vmatprep.subr.bf16.mxu0 0
        %2502 = vmatpush1.bf16.xpose.msra.mxu0 0
        %2503 = vmatprep.subr.bf16.mxu0 0
        %2504 = vmatpush1.bf16.xpose.msra.mxu0 0
        %2505 = vmatprep.subr.bf16.mxu0 0
        %2506 = vmatpush1.bf16.xpose.msra.mxu0 0
        %2507 = vmatprep.subr.bf16.mxu0 0
        %2508 = vmatpush1.bf16.xpose.msra.mxu0 0
        %2509 = vmatprep.subr.bf16.mxu0 0
        %2510 = vmatpush1.bf16.xpose.msra.mxu0 0
        %2511 = vmatprep.subr.bf16.mxu0 0
        %2512 = vmatpush1.bf16.xpose.msra.mxu0 0
        %2513 = vmatprep.subr.bf16.mxu0 0
        %2514 = vmatpush1.bf16.xpose.msra.mxu0 0
        %2515 = vmatprep.subr.bf16.mxu0 0
        %2516 = vmatpush1.bf16.xpose.msra.mxu0 0
        %2517 = vmatprep.mubr.bf16.mxu0 0
        %2518 = vmatmul.mubr.bf16.gmra.mrb[0].mxu0 %v2480
        %v2519 = vpop.f32.mrb[0].mxu0
        %v2520 = vadd.f32 0.0, %v2519
        %v2521 = vpop.f32.mrb[0].mxu0
        %v2522 = vpop.f32.mrb[0].mxu0
        %v2523 = vpop.f32.mrb[0].mxu0
        %2524 = vdwg.mxu0
        %v2525 = vmul.f32 %v2373, 0.35355338
        %v2526 = vmul.f32 %v2422, 0.35355338
        %v2527 = vmul.f32 %v2471, 0.35355338
        %v2528 = vmul.f32 %v2520, 0.35355338
        %v2529 = vadd.f32 %v2525, %v1212
        %v2530 = vadd.f32 %v2526, %v1212
        %v2531 = vadd.f32 %v2527, %v1212
        %v2532 = vadd.f32 %v2528, %v1212
        %v2533 = vsel %vm1011, %v2529, -inf
        %2534 = vmax.xlane.f32.xlu0 %v2533
        %v2535 = vpop.xlane.xlu0 %2534
        %v2536 = vsel %vm1011, %v2530, -inf
        %2537 = vmax.xlane.f32.xlu0 %v2536
        %v2538 = vpop.xlane.xlu0 %2537
        %v2539 = vsel %vm1011, %v2531, -inf
        %2540 = vmax.xlane.f32.xlu0 %v2539
        %v2541 = vpop.xlane.xlu0 %2540
        %v2542 = vsel %vm1011, %v2532, -inf
        %2543 = vmax.xlane.f32.xlu0 %v2542
        %v2544 = vpop.xlane.xlu0 %2543
        %v2545 = vsub.f32 %v2529, %v2535
        %v2546 = vsub.f32 %v2530, %v2538
        %v2547 = vsub.f32 %v2531, %v2541
        %v2548 = vsub.f32 %v2532, %v2544
        %v2549 = vmul.f32 %v2545, 1.442695
        %v2550 = vpow.pop %v2549
        %v2551 = vmul.f32 %v2546, 1.442695
        %v2552 = vpow.pop %v2551
        %v2553 = vmul.f32 %v2547, 1.442695
        %v2554 = vpow.pop %v2553
        %v2555 = vmul.f32 %v2548, 1.442695
        %v2556 = vpow.pop %v2555
        %v2557 = vsel %vm1011, %v2550, 0.0
        %2558 = vadd.xlane.f32.xlu0 %v2557
        %v2559 = vpop.xlane.xlu0 %2558
        %v2560 = vsel %vm1011, %v2552, 0.0
        %2561 = vadd.xlane.f32.xlu0 %v2560
        %v2562 = vpop.xlane.xlu0 %2561
        %v2563 = vsel %vm1011, %v2554, 0.0
        %2564 = vadd.xlane.f32.xlu0 %v2563
        %v2565 = vpop.xlane.xlu0 %2564
        %v2566 = vsel %vm1011, %v2556, 0.0
        %2567 = vadd.xlane.f32.xlu0 %v2566
        %v2568 = vpop.xlane.xlu0 %2567
        %v2569 = vrcp.pop %v2559
        %v2570 = vmul.f32 %v2550, %v2569
        %v2571 = vrcp.pop %v2562
        %v2572 = vmul.f32 %v2552, %v2571
        %v2573 = vrcp.pop %v2565
        %v2574 = vmul.f32 %v2554, %v2573
        %v2575 = vrcp.pop %v2568
        %v2576 = vmul.f32 %v2556, %v2575
        %v2577 = vpack.c.bf16 %v2570, %v2570
        %v2578 = vpack.c.bf16 %v2572, %v2572
        %v2579 = vpack.c.bf16 %v2574, %v2574
        %v2580 = vpack.c.bf16 %v2576, %v2576
        %2581 = vrot.lane.b32.xlu0 %v2325, 64
        %v2582 = vpop.permute.xlu0 %2581
        %v2584 = vsel %vm1011, %v2577, 0
        %v2587 = vsel %vm1270, %v2582, 0
        %2589 = vmatprep.subr.bf16.mxu0 0
        %2590 = vmatpush1.bf16.msra.mxu0 %v2587
        %2591 = vmatprep.subr.bf16.mxu0 0
        %2592 = vmatpush1.bf16.msra.mxu0 0
        %2593 = vmatprep.subr.bf16.mxu0 0
        %2594 = vmatpush1.bf16.msra.mxu0 0
        %2595 = vmatprep.subr.bf16.mxu0 0
        %2596 = vmatpush1.bf16.msra.mxu0 0
        %2597 = vmatprep.subr.bf16.mxu0 0
        %2598 = vmatpush1.bf16.msra.mxu0 0
        %2599 = vmatprep.subr.bf16.mxu0 0
        %2600 = vmatpush1.bf16.msra.mxu0 0
        %2601 = vmatprep.subr.bf16.mxu0 0
        %2602 = vmatpush1.bf16.msra.mxu0 0
        %2603 = vmatprep.subr.bf16.mxu0 0
        %2604 = vmatpush1.bf16.msra.mxu0 0
        %2605 = vmatprep.subr.bf16.mxu0 0
        %2606 = vmatpush1.bf16.msra.mxu0 0
        %2607 = vmatprep.subr.bf16.mxu0 0
        %2608 = vmatpush1.bf16.msra.mxu0 0
        %2609 = vmatprep.subr.bf16.mxu0 0
        %2610 = vmatpush1.bf16.msra.mxu0 0
        %2611 = vmatprep.subr.bf16.mxu0 0
        %2612 = vmatpush1.bf16.msra.mxu0 0
        %2613 = vmatprep.subr.bf16.mxu0 0
        %2614 = vmatpush1.bf16.msra.mxu0 0
        %2615 = vmatprep.subr.bf16.mxu0 0
        %2616 = vmatpush1.bf16.msra.mxu0 0
        %2617 = vmatprep.subr.bf16.mxu0 0
        %2618 = vmatpush1.bf16.msra.mxu0 0
        %2619 = vmatprep.subr.bf16.mxu0 0
        %2620 = vmatpush1.bf16.msra.mxu0 0
        %2621 = vmatprep.mubr.bf16.mxu0 0
        %2622 = vmatmul.mubr.bf16.gmra.mrb[0].mxu0 %v2584
        %v2623 = vpop.f32.mrb[0].mxu0
        %v2624 = vadd.f32 0.0, %v2623
        %v2625 = vpop.f32.mrb[0].mxu0
        %v2626 = vpop.f32.mrb[0].mxu0
        %v2627 = vpop.f32.mrb[0].mxu0
        %2628 = vdwg.mxu0
        %2629 = vrot.lane.b32.xlu0 %v2326, 64
        %v2630 = vpop.permute.xlu0 %2629
        %v2632 = vsel %vm1011, %v2578, 0
        %v2635 = vsel %vm1270, %v2630, 0
        %2637 = vmatprep.subr.bf16.mxu0 0
        %2638 = vmatpush1.bf16.msra.mxu0 %v2635
        %2639 = vmatprep.subr.bf16.mxu0 0
        %2640 = vmatpush1.bf16.msra.mxu0 0
        %2641 = vmatprep.subr.bf16.mxu0 0
        %2642 = vmatpush1.bf16.msra.mxu0 0
        %2643 = vmatprep.subr.bf16.mxu0 0
        %2644 = vmatpush1.bf16.msra.mxu0 0
        %2645 = vmatprep.subr.bf16.mxu0 0
        %2646 = vmatpush1.bf16.msra.mxu0 0
        %2647 = vmatprep.subr.bf16.mxu0 0
        %2648 = vmatpush1.bf16.msra.mxu0 0
        %2649 = vmatprep.subr.bf16.mxu0 0
        %2650 = vmatpush1.bf16.msra.mxu0 0
        %2651 = vmatprep.subr.bf16.mxu0 0
        %2652 = vmatpush1.bf16.msra.mxu0 0
        %2653 = vmatprep.subr.bf16.mxu0 0
        %2654 = vmatpush1.bf16.msra.mxu0 0
        %2655 = vmatprep.subr.bf16.mxu0 0
        %2656 = vmatpush1.bf16.msra.mxu0 0
        %2657 = vmatprep.subr.bf16.mxu0 0
        %2658 = vmatpush1.bf16.msra.mxu0 0
        %2659 = vmatprep.subr.bf16.mxu0 0
        %2660 = vmatpush1.bf16.msra.mxu0 0
        %2661 = vmatprep.subr.bf16.mxu0 0
        %2662 = vmatpush1.bf16.msra.mxu0 0
        %2663 = vmatprep.subr.bf16.mxu0 0
        %2664 = vmatpush1.bf16.msra.mxu0 0
        %2665 = vmatprep.subr.bf16.mxu0 0
        %2666 = vmatpush1.bf16.msra.mxu0 0
        %2667 = vmatprep.subr.bf16.mxu0 0
        %2668 = vmatpush1.bf16.msra.mxu0 0
        %2669 = vmatprep.mubr.bf16.mxu0 0
        %2670 = vmatmul.mubr.bf16.gmra.mrb[0].mxu0 %v2632
        %v2671 = vpop.f32.mrb[0].mxu0
        %v2672 = vadd.f32 0.0, %v2671
        %v2673 = vpop.f32.mrb[0].mxu0
        %v2674 = vpop.f32.mrb[0].mxu0
        %v2675 = vpop.f32.mrb[0].mxu0
        %2676 = vdwg.mxu0
        %2677 = vrot.lane.b32.xlu0 %v2327, 64
        %v2678 = vpop.permute.xlu0 %2677
        %v2680 = vsel %vm1011, %v2579, 0
        %v2683 = vsel %vm1270, %v2678, 0
        %2685 = vmatprep.subr.bf16.mxu0 0
        %2686 = vmatpush1.bf16.msra.mxu0 %v2683
        %2687 = vmatprep.subr.bf16.mxu0 0
        %2688 = vmatpush1.bf16.msra.mxu0 0
        %2689 = vmatprep.subr.bf16.mxu0 0
        %2690 = vmatpush1.bf16.msra.mxu0 0
        %2691 = vmatprep.subr.bf16.mxu0 0
        %2692 = vmatpush1.bf16.msra.mxu0 0
        %2693 = vmatprep.subr.bf16.mxu0 0
        %2694 = vmatpush1.bf16.msra.mxu0 0
        %2695 = vmatprep.subr.bf16.mxu0 0
        %2696 = vmatpush1.bf16.msra.mxu0 0
        %2697 = vmatprep.subr.bf16.mxu0 0
        %2698 = vmatpush1.bf16.msra.mxu0 0
        %2699 = vmatprep.subr.bf16.mxu0 0
        %2700 = vmatpush1.bf16.msra.mxu0 0
        %2701 = vmatprep.subr.bf16.mxu0 0
        %2702 = vmatpush1.bf16.msra.mxu0 0
        %2703 = vmatprep.subr.bf16.mxu0 0
        %2704 = vmatpush1.bf16.msra.mxu0 0
        %2705 = vmatprep.subr.bf16.mxu0 0
        %2706 = vmatpush1.bf16.msra.mxu0 0
        %2707 = vmatprep.subr.bf16.mxu0 0
        %2708 = vmatpush1.bf16.msra.mxu0 0
        %2709 = vmatprep.subr.bf16.mxu0 0
        %2710 = vmatpush1.bf16.msra.mxu0 0
        %2711 = vmatprep.subr.bf16.mxu0 0
        %2712 = vmatpush1.bf16.msra.mxu0 0
        %2713 = vmatprep.subr.bf16.mxu0 0
        %2714 = vmatpush1.bf16.msra.mxu0 0
        %2715 = vmatprep.subr.bf16.mxu0 0
        %2716 = vmatpush1.bf16.msra.mxu0 0
        %2717 = vmatprep.mubr.bf16.mxu0 0
        %2718 = vmatmul.mubr.bf16.gmra.mrb[0].mxu0 %v2680
        %v2719 = vpop.f32.mrb[0].mxu0
        %v2720 = vadd.f32 0.0, %v2719
        %v2721 = vpop.f32.mrb[0].mxu0
        %v2722 = vpop.f32.mrb[0].mxu0
        %v2723 = vpop.f32.mrb[0].mxu0
        %2724 = vdwg.mxu0
        %2725 = vrot.lane.b32.xlu0 %v2328, 64
        %v2726 = vpop.permute.xlu0 %2725
        %v2728 = vsel %vm1011, %v2580, 0
        %v2731 = vsel %vm1270, %v2726, 0
        %2733 = vmatprep.subr.bf16.mxu0 0
        %2734 = vmatpush1.bf16.msra.mxu0 %v2731
        %2735 = vmatprep.subr.bf16.mxu0 0
        %2736 = vmatpush1.bf16.msra.mxu0 0
        %2737 = vmatprep.subr.bf16.mxu0 0
        %2738 = vmatpush1.bf16.msra.mxu0 0
        %2739 = vmatprep.subr.bf16.mxu0 0
        %2740 = vmatpush1.bf16.msra.mxu0 0
        %2741 = vmatprep.subr.bf16.mxu0 0
        %2742 = vmatpush1.bf16.msra.mxu0 0
        %2743 = vmatprep.subr.bf16.mxu0 0
        %2744 = vmatpush1.bf16.msra.mxu0 0
        %2745 = vmatprep.subr.bf16.mxu0 0
        %2746 = vmatpush1.bf16.msra.mxu0 0
        %2747 = vmatprep.subr.bf16.mxu0 0
        %2748 = vmatpush1.bf16.msra.mxu0 0
        %2749 = vmatprep.subr.bf16.mxu0 0
        %2750 = vmatpush1.bf16.msra.mxu0 0
        %2751 = vmatprep.subr.bf16.mxu0 0
        %2752 = vmatpush1.bf16.msra.mxu0 0
        %2753 = vmatprep.subr.bf16.mxu0 0
        %2754 = vmatpush1.bf16.msra.mxu0 0
        %2755 = vmatprep.subr.bf16.mxu0 0
        %2756 = vmatpush1.bf16.msra.mxu0 0
        %2757 = vmatprep.subr.bf16.mxu0 0
        %2758 = vmatpush1.bf16.msra.mxu0 0
        %2759 = vmatprep.subr.bf16.mxu0 0
        %2760 = vmatpush1.bf16.msra.mxu0 0
        %2761 = vmatprep.subr.bf16.mxu0 0
        %2762 = vmatpush1.bf16.msra.mxu0 0
        %2763 = vmatprep.subr.bf16.mxu0 0
        %2764 = vmatpush1.bf16.msra.mxu0 0
        %2765 = vmatprep.mubr.bf16.mxu0 0
        %2766 = vmatmul.mubr.bf16.gmra.mrb[0].mxu0 %v2728
        %v2767 = vpop.f32.mrb[0].mxu0
        %v2768 = vadd.f32 0.0, %v2767
        %v2769 = vpop.f32.mrb[0].mxu0
        %v2770 = vpop.f32.mrb[0].mxu0
        %v2771 = vpop.f32.mrb[0].mxu0
        %2772 = vdwg.mxu0
        %2774 = vrot.lane.b32.xlu0 %v2672, 8
        %v2775 = vpop.permute.xlu0 %2774
        %2778 = vrot.lane.b32.xlu0 %v2720, 16
        %v2779 = vpop.permute.xlu0 %2778
        %2782 = vrot.lane.b32.xlu0 %v2768, 24
        %v2783 = vpop.permute.xlu0 %2782
        %v2785 = vsel %vm1011, %v2624, %v2775
        %v2786 = vsel %vm1471, %v2785, %v2779
        %v2787 = vsel %vm1473, %v2786, %v2783
        %2789 = vrot.lane.b32.xlu0 %v2312, 120
        %v2790 = vpop.permute.xlu0 %2789
        %2792 = vrot.lane.b32.xlu0 %v2312, 112
        %v2793 = vpop.permute.xlu0 %2792
        %2795 = vrot.lane.b32.xlu0 %v2312, 104
        %v2796 = vpop.permute.xlu0 %2795
        %v2798 = vpack.c.bf16 %v2312, %v2312
        %v2799 = vpack.c.bf16 %v2790, %v2790
        %v2800 = vpack.c.bf16 %v2793, %v2793
        %v2801 = vpack.c.bf16 %v2796, %v2796
        %2803 = vrot.lane.b32.xlu0 %v2798, 96
        %v2804 = vpop.permute.xlu0 %2803
        %v2806 = vsel %vm1011, %v2798, 0
        %v2809 = vsel %vm1011, %v2804, 0
        %2811 = vmatprep.subr.bf16.mxu0 0
        %2812 = vmatpush1.bf16.xpose.msra.mxu0 %v2809
        %2813 = vmatprep.subr.bf16.mxu0 0
        %2814 = vmatpush1.bf16.xpose.msra.mxu0 0
        %2815 = vmatprep.subr.bf16.mxu0 0
        %2816 = vmatpush1.bf16.xpose.msra.mxu0 0
        %2817 = vmatprep.subr.bf16.mxu0 0
        %2818 = vmatpush1.bf16.xpose.msra.mxu0 0
        %2819 = vmatprep.subr.bf16.mxu0 0
        %2820 = vmatpush1.bf16.xpose.msra.mxu0 0
        %2821 = vmatprep.subr.bf16.mxu0 0
        %2822 = vmatpush1.bf16.xpose.msra.mxu0 0
        %2823 = vmatprep.subr.bf16.mxu0 0
        %2824 = vmatpush1.bf16.xpose.msra.mxu0 0
        %2825 = vmatprep.subr.bf16.mxu0 0
        %2826 = vmatpush1.bf16.xpose.msra.mxu0 0
        %2827 = vmatprep.subr.bf16.mxu0 0
        %2828 = vmatpush1.bf16.xpose.msra.mxu0 0
        %2829 = vmatprep.subr.bf16.mxu0 0
        %2830 = vmatpush1.bf16.xpose.msra.mxu0 0
        %2831 = vmatprep.subr.bf16.mxu0 0
        %2832 = vmatpush1.bf16.xpose.msra.mxu0 0
        %2833 = vmatprep.subr.bf16.mxu0 0
        %2834 = vmatpush1.bf16.xpose.msra.mxu0 0
        %2835 = vmatprep.subr.bf16.mxu0 0
        %2836 = vmatpush1.bf16.xpose.msra.mxu0 0
        %2837 = vmatprep.subr.bf16.mxu0 0
        %2838 = vmatpush1.bf16.xpose.msra.mxu0 0
        %2839 = vmatprep.subr.bf16.mxu0 0
        %2840 = vmatpush1.bf16.xpose.msra.mxu0 0
        %2841 = vmatprep.subr.bf16.mxu0 0
        %2842 = vmatpush1.bf16.xpose.msra.mxu0 0
        %2843 = vmatprep.mubr.bf16.mxu0 0
        %2844 = vmatmul.mubr.bf16.gmra.mrb[0].mxu0 %v2806
        %v2845 = vpop.f32.mrb[0].mxu0
        %v2846 = vadd.f32 0.0, %v2845
        %v2847 = vpop.f32.mrb[0].mxu0
        %v2848 = vpop.f32.mrb[0].mxu0
        %v2849 = vpop.f32.mrb[0].mxu0
        %2850 = vdwg.mxu0
        %2852 = vrot.lane.b32.xlu0 %v2799, 96
        %v2853 = vpop.permute.xlu0 %2852
        %v2855 = vsel %vm1011, %v2799, 0
        %v2858 = vsel %vm1011, %v2853, 0
        %2860 = vmatprep.subr.bf16.mxu0 0
        %2861 = vmatpush1.bf16.xpose.msra.mxu0 %v2858
        %2862 = vmatprep.subr.bf16.mxu0 0
        %2863 = vmatpush1.bf16.xpose.msra.mxu0 0
        %2864 = vmatprep.subr.bf16.mxu0 0
        %2865 = vmatpush1.bf16.xpose.msra.mxu0 0
        %2866 = vmatprep.subr.bf16.mxu0 0
        %2867 = vmatpush1.bf16.xpose.msra.mxu0 0
        %2868 = vmatprep.subr.bf16.mxu0 0
        %2869 = vmatpush1.bf16.xpose.msra.mxu0 0
        %2870 = vmatprep.subr.bf16.mxu0 0
        %2871 = vmatpush1.bf16.xpose.msra.mxu0 0
        %2872 = vmatprep.subr.bf16.mxu0 0
        %2873 = vmatpush1.bf16.xpose.msra.mxu0 0
        %2874 = vmatprep.subr.bf16.mxu0 0
        %2875 = vmatpush1.bf16.xpose.msra.mxu0 0
        %2876 = vmatprep.subr.bf16.mxu0 0
        %2877 = vmatpush1.bf16.xpose.msra.mxu0 0
        %2878 = vmatprep.subr.bf16.mxu0 0
        %2879 = vmatpush1.bf16.xpose.msra.mxu0 0
        %2880 = vmatprep.subr.bf16.mxu0 0
        %2881 = vmatpush1.bf16.xpose.msra.mxu0 0
        %2882 = vmatprep.subr.bf16.mxu0 0
        %2883 = vmatpush1.bf16.xpose.msra.mxu0 0
        %2884 = vmatprep.subr.bf16.mxu0 0
        %2885 = vmatpush1.bf16.xpose.msra.mxu0 0
        %2886 = vmatprep.subr.bf16.mxu0 0
        %2887 = vmatpush1.bf16.xpose.msra.mxu0 0
        %2888 = vmatprep.subr.bf16.mxu0 0
        %2889 = vmatpush1.bf16.xpose.msra.mxu0 0
        %2890 = vmatprep.subr.bf16.mxu0 0
        %2891 = vmatpush1.bf16.xpose.msra.mxu0 0
        %2892 = vmatprep.mubr.bf16.mxu0 0
        %2893 = vmatmul.mubr.bf16.gmra.mrb[0].mxu0 %v2855
        %v2894 = vpop.f32.mrb[0].mxu0
        %v2895 = vadd.f32 0.0, %v2894
        %v2896 = vpop.f32.mrb[0].mxu0
        %v2897 = vpop.f32.mrb[0].mxu0
        %v2898 = vpop.f32.mrb[0].mxu0
        %2899 = vdwg.mxu0
        %2901 = vrot.lane.b32.xlu0 %v2800, 96
        %v2902 = vpop.permute.xlu0 %2901
        %v2904 = vsel %vm1011, %v2800, 0
        %v2907 = vsel %vm1011, %v2902, 0
        %2909 = vmatprep.subr.bf16.mxu0 0
        %2910 = vmatpush1.bf16.xpose.msra.mxu0 %v2907
        %2911 = vmatprep.subr.bf16.mxu0 0
        %2912 = vmatpush1.bf16.xpose.msra.mxu0 0
        %2913 = vmatprep.subr.bf16.mxu0 0
        %2914 = vmatpush1.bf16.xpose.msra.mxu0 0
        %2915 = vmatprep.subr.bf16.mxu0 0
        %2916 = vmatpush1.bf16.xpose.msra.mxu0 0
        %2917 = vmatprep.subr.bf16.mxu0 0
        %2918 = vmatpush1.bf16.xpose.msra.mxu0 0
        %2919 = vmatprep.subr.bf16.mxu0 0
        %2920 = vmatpush1.bf16.xpose.msra.mxu0 0
        %2921 = vmatprep.subr.bf16.mxu0 0
        %2922 = vmatpush1.bf16.xpose.msra.mxu0 0
        %2923 = vmatprep.subr.bf16.mxu0 0
        %2924 = vmatpush1.bf16.xpose.msra.mxu0 0
        %2925 = vmatprep.subr.bf16.mxu0 0
        %2926 = vmatpush1.bf16.xpose.msra.mxu0 0
        %2927 = vmatprep.subr.bf16.mxu0 0
        %2928 = vmatpush1.bf16.xpose.msra.mxu0 0
        %2929 = vmatprep.subr.bf16.mxu0 0
        %2930 = vmatpush1.bf16.xpose.msra.mxu0 0
        %2931 = vmatprep.subr.bf16.mxu0 0
        %2932 = vmatpush1.bf16.xpose.msra.mxu0 0
        %2933 = vmatprep.subr.bf16.mxu0 0
        %2934 = vmatpush1.bf16.xpose.msra.mxu0 0
        %2935 = vmatprep.subr.bf16.mxu0 0
        %2936 = vmatpush1.bf16.xpose.msra.mxu0 0
        %2937 = vmatprep.subr.bf16.mxu0 0
        %2938 = vmatpush1.bf16.xpose.msra.mxu0 0
        %2939 = vmatprep.subr.bf16.mxu0 0
        %2940 = vmatpush1.bf16.xpose.msra.mxu0 0
        %2941 = vmatprep.mubr.bf16.mxu0 0
        %2942 = vmatmul.mubr.bf16.gmra.mrb[0].mxu0 %v2904
        %v2943 = vpop.f32.mrb[0].mxu0
        %v2944 = vadd.f32 0.0, %v2943
        %v2945 = vpop.f32.mrb[0].mxu0
        %v2946 = vpop.f32.mrb[0].mxu0
        %v2947 = vpop.f32.mrb[0].mxu0
        %2948 = vdwg.mxu0
        %2950 = vrot.lane.b32.xlu0 %v2801, 96
        %v2951 = vpop.permute.xlu0 %2950
        %v2953 = vsel %vm1011, %v2801, 0
        %v2956 = vsel %vm1011, %v2951, 0
        %2958 = vmatprep.subr.bf16.mxu0 0
        %2959 = vmatpush1.bf16.xpose.msra.mxu0 %v2956
        %2960 = vmatprep.subr.bf16.mxu0 0
        %2961 = vmatpush1.bf16.xpose.msra.mxu0 0
        %2962 = vmatprep.subr.bf16.mxu0 0
        %2963 = vmatpush1.bf16.xpose.msra.mxu0 0
        %2964 = vmatprep.subr.bf16.mxu0 0
        %2965 = vmatpush1.bf16.xpose.msra.mxu0 0
        %2966 = vmatprep.subr.bf16.mxu0 0
        %2967 = vmatpush1.bf16.xpose.msra.mxu0 0
        %2968 = vmatprep.subr.bf16.mxu0 0
        %2969 = vmatpush1.bf16.xpose.msra.mxu0 0
        %2970 = vmatprep.subr.bf16.mxu0 0
        %2971 = vmatpush1.bf16.xpose.msra.mxu0 0
        %2972 = vmatprep.subr.bf16.mxu0 0
        %2973 = vmatpush1.bf16.xpose.msra.mxu0 0
        %2974 = vmatprep.subr.bf16.mxu0 0
        %2975 = vmatpush1.bf16.xpose.msra.mxu0 0
        %2976 = vmatprep.subr.bf16.mxu0 0
        %2977 = vmatpush1.bf16.xpose.msra.mxu0 0
        %2978 = vmatprep.subr.bf16.mxu0 0
        %2979 = vmatpush1.bf16.xpose.msra.mxu0 0
        %2980 = vmatprep.subr.bf16.mxu0 0
        %2981 = vmatpush1.bf16.xpose.msra.mxu0 0
        %2982 = vmatprep.subr.bf16.mxu0 0
        %2983 = vmatpush1.bf16.xpose.msra.mxu0 0
        %2984 = vmatprep.subr.bf16.mxu0 0
        %2985 = vmatpush1.bf16.xpose.msra.mxu0 0
        %2986 = vmatprep.subr.bf16.mxu0 0
        %2987 = vmatpush1.bf16.xpose.msra.mxu0 0
        %2988 = vmatprep.subr.bf16.mxu0 0
        %2989 = vmatpush1.bf16.xpose.msra.mxu0 0
        %2990 = vmatprep.mubr.bf16.mxu0 0
        %2991 = vmatmul.mubr.bf16.gmra.mrb[0].mxu0 %v2953
        %v2992 = vpop.f32.mrb[0].mxu0
        %v2993 = vadd.f32 0.0, %v2992
        %v2994 = vpop.f32.mrb[0].mxu0
        %v2995 = vpop.f32.mrb[0].mxu0
        %v2996 = vpop.f32.mrb[0].mxu0
        %2997 = vdwg.mxu0
        %v2998 = vmul.f32 %v2846, 0.35355338
        %v2999 = vmul.f32 %v2895, 0.35355338
        %v3000 = vmul.f32 %v2944, 0.35355338
        %v3001 = vmul.f32 %v2993, 0.35355338
        %v3002 = vadd.f32 %v2998, %v1692
        %v3003 = vadd.f32 %v2999, %v1692
        %v3004 = vadd.f32 %v3000, %v1692
        %v3005 = vadd.f32 %v3001, %v1692
        %v3006 = vsel %vm1011, %v3002, -inf
        %3007 = vmax.xlane.f32.xlu0 %v3006
        %v3008 = vpop.xlane.xlu0 %3007
        %v3009 = vsel %vm1011, %v3003, -inf
        %3010 = vmax.xlane.f32.xlu0 %v3009
        %v3011 = vpop.xlane.xlu0 %3010
        %v3012 = vsel %vm1011, %v3004, -inf
        %3013 = vmax.xlane.f32.xlu0 %v3012
        %v3014 = vpop.xlane.xlu0 %3013
        %v3015 = vsel %vm1011, %v3005, -inf
        %3016 = vmax.xlane.f32.xlu0 %v3015
        %v3017 = vpop.xlane.xlu0 %3016
        %v3018 = vsub.f32 %v3002, %v3008
        %v3019 = vsub.f32 %v3003, %v3011
        %v3020 = vsub.f32 %v3004, %v3014
        %v3021 = vsub.f32 %v3005, %v3017
        %v3022 = vmul.f32 %v3018, 1.442695
        %v3023 = vpow.pop %v3022
        %v3024 = vmul.f32 %v3019, 1.442695
        %v3025 = vpow.pop %v3024
        %v3026 = vmul.f32 %v3020, 1.442695
        %v3027 = vpow.pop %v3026
        %v3028 = vmul.f32 %v3021, 1.442695
        %v3029 = vpow.pop %v3028
        %v3030 = vsel %vm1011, %v3023, 0.0
        %3031 = vadd.xlane.f32.xlu0 %v3030
        %v3032 = vpop.xlane.xlu0 %3031
        %v3033 = vsel %vm1011, %v3025, 0.0
        %3034 = vadd.xlane.f32.xlu0 %v3033
        %v3035 = vpop.xlane.xlu0 %3034
        %v3036 = vsel %vm1011, %v3027, 0.0
        %3037 = vadd.xlane.f32.xlu0 %v3036
        %v3038 = vpop.xlane.xlu0 %3037
        %v3039 = vsel %vm1011, %v3029, 0.0
        %3040 = vadd.xlane.f32.xlu0 %v3039
        %v3041 = vpop.xlane.xlu0 %3040
        %v3042 = vrcp.pop %v3032
        %v3043 = vmul.f32 %v3023, %v3042
        %v3044 = vrcp.pop %v3035
        %v3045 = vmul.f32 %v3025, %v3044
        %v3046 = vrcp.pop %v3038
        %v3047 = vmul.f32 %v3027, %v3046
        %v3048 = vrcp.pop %v3041
        %v3049 = vmul.f32 %v3029, %v3048
        %v3050 = vpack.c.bf16 %v3043, %v3043
        %v3051 = vpack.c.bf16 %v3045, %v3045
        %v3052 = vpack.c.bf16 %v3047, %v3047
        %v3053 = vpack.c.bf16 %v3049, %v3049
        %3054 = vrot.lane.b32.xlu0 %v2798, 64
        %v3055 = vpop.permute.xlu0 %3054
        %v3057 = vsel %vm1011, %v3050, 0
        %v3060 = vsel %vm1270, %v3055, 0
        %3062 = vmatprep.subr.bf16.mxu0 0
        %3063 = vmatpush1.bf16.msra.mxu0 %v3060
        %3064 = vmatprep.subr.bf16.mxu0 0
        %3065 = vmatpush1.bf16.msra.mxu0 0
        %3066 = vmatprep.subr.bf16.mxu0 0
        %3067 = vmatpush1.bf16.msra.mxu0 0
        %3068 = vmatprep.subr.bf16.mxu0 0
        %3069 = vmatpush1.bf16.msra.mxu0 0
        %3070 = vmatprep.subr.bf16.mxu0 0
        %3071 = vmatpush1.bf16.msra.mxu0 0
        %3072 = vmatprep.subr.bf16.mxu0 0
        %3073 = vmatpush1.bf16.msra.mxu0 0
        %3074 = vmatprep.subr.bf16.mxu0 0
        %3075 = vmatpush1.bf16.msra.mxu0 0
        %3076 = vmatprep.subr.bf16.mxu0 0
        %3077 = vmatpush1.bf16.msra.mxu0 0
        %3078 = vmatprep.subr.bf16.mxu0 0
        %3079 = vmatpush1.bf16.msra.mxu0 0
        %3080 = vmatprep.subr.bf16.mxu0 0
        %3081 = vmatpush1.bf16.msra.mxu0 0
        %3082 = vmatprep.subr.bf16.mxu0 0
        %3083 = vmatpush1.bf16.msra.mxu0 0
        %3084 = vmatprep.subr.bf16.mxu0 0
        %3085 = vmatpush1.bf16.msra.mxu0 0
        %3086 = vmatprep.subr.bf16.mxu0 0
        %3087 = vmatpush1.bf16.msra.mxu0 0
        %3088 = vmatprep.subr.bf16.mxu0 0
        %3089 = vmatpush1.bf16.msra.mxu0 0
        %3090 = vmatprep.subr.bf16.mxu0 0
        %3091 = vmatpush1.bf16.msra.mxu0 0
        %3092 = vmatprep.subr.bf16.mxu0 0
        %3093 = vmatpush1.bf16.msra.mxu0 0
        %3094 = vmatprep.mubr.bf16.mxu0 0
        %3095 = vmatmul.mubr.bf16.gmra.mrb[0].mxu0 %v3057
        %v3096 = vpop.f32.mrb[0].mxu0
        %v3097 = vadd.f32 0.0, %v3096
        %v3098 = vpop.f32.mrb[0].mxu0
        %v3099 = vpop.f32.mrb[0].mxu0
        %v3100 = vpop.f32.mrb[0].mxu0
        %3101 = vdwg.mxu0
        %3102 = vrot.lane.b32.xlu0 %v2799, 64
        %v3103 = vpop.permute.xlu0 %3102
        %v3105 = vsel %vm1011, %v3051, 0
        %v3108 = vsel %vm1270, %v3103, 0
        %3110 = vmatprep.subr.bf16.mxu0 0
        %3111 = vmatpush1.bf16.msra.mxu0 %v3108
        %3112 = vmatprep.subr.bf16.mxu0 0
        %3113 = vmatpush1.bf16.msra.mxu0 0
        %3114 = vmatprep.subr.bf16.mxu0 0
        %3115 = vmatpush1.bf16.msra.mxu0 0
        %3116 = vmatprep.subr.bf16.mxu0 0
        %3117 = vmatpush1.bf16.msra.mxu0 0
        %3118 = vmatprep.subr.bf16.mxu0 0
        %3119 = vmatpush1.bf16.msra.mxu0 0
        %3120 = vmatprep.subr.bf16.mxu0 0
        %3121 = vmatpush1.bf16.msra.mxu0 0
        %3122 = vmatprep.subr.bf16.mxu0 0
        %3123 = vmatpush1.bf16.msra.mxu0 0
        %3124 = vmatprep.subr.bf16.mxu0 0
        %3125 = vmatpush1.bf16.msra.mxu0 0
        %3126 = vmatprep.subr.bf16.mxu0 0
        %3127 = vmatpush1.bf16.msra.mxu0 0
        %3128 = vmatprep.subr.bf16.mxu0 0
        %3129 = vmatpush1.bf16.msra.mxu0 0
        %3130 = vmatprep.subr.bf16.mxu0 0
        %3131 = vmatpush1.bf16.msra.mxu0 0
        %3132 = vmatprep.subr.bf16.mxu0 0
        %3133 = vmatpush1.bf16.msra.mxu0 0
        %3134 = vmatprep.subr.bf16.mxu0 0
        %3135 = vmatpush1.bf16.msra.mxu0 0
        %3136 = vmatprep.subr.bf16.mxu0 0
        %3137 = vmatpush1.bf16.msra.mxu0 0
        %3138 = vmatprep.subr.bf16.mxu0 0
        %3139 = vmatpush1.bf16.msra.mxu0 0
        %3140 = vmatprep.subr.bf16.mxu0 0
        %3141 = vmatpush1.bf16.msra.mxu0 0
        %3142 = vmatprep.mubr.bf16.mxu0 0
        %3143 = vmatmul.mubr.bf16.gmra.mrb[0].mxu0 %v3105
        %v3144 = vpop.f32.mrb[0].mxu0
        %v3145 = vadd.f32 0.0, %v3144
        %v3146 = vpop.f32.mrb[0].mxu0
        %v3147 = vpop.f32.mrb[0].mxu0
        %v3148 = vpop.f32.mrb[0].mxu0
        %3149 = vdwg.mxu0
        %3150 = vrot.lane.b32.xlu0 %v2800, 64
        %v3151 = vpop.permute.xlu0 %3150
        %v3153 = vsel %vm1011, %v3052, 0
        %v3156 = vsel %vm1270, %v3151, 0
        %3158 = vmatprep.subr.bf16.mxu0 0
        %3159 = vmatpush1.bf16.msra.mxu0 %v3156
        %3160 = vmatprep.subr.bf16.mxu0 0
        %3161 = vmatpush1.bf16.msra.mxu0 0
        %3162 = vmatprep.subr.bf16.mxu0 0
        %3163 = vmatpush1.bf16.msra.mxu0 0
        %3164 = vmatprep.subr.bf16.mxu0 0
        %3165 = vmatpush1.bf16.msra.mxu0 0
        %3166 = vmatprep.subr.bf16.mxu0 0
        %3167 = vmatpush1.bf16.msra.mxu0 0
        %3168 = vmatprep.subr.bf16.mxu0 0
        %3169 = vmatpush1.bf16.msra.mxu0 0
        %3170 = vmatprep.subr.bf16.mxu0 0
        %3171 = vmatpush1.bf16.msra.mxu0 0
        %3172 = vmatprep.subr.bf16.mxu0 0
        %3173 = vmatpush1.bf16.msra.mxu0 0
        %3174 = vmatprep.subr.bf16.mxu0 0
        %3175 = vmatpush1.bf16.msra.mxu0 0
        %3176 = vmatprep.subr.bf16.mxu0 0
        %3177 = vmatpush1.bf16.msra.mxu0 0
        %3178 = vmatprep.subr.bf16.mxu0 0
        %3179 = vmatpush1.bf16.msra.mxu0 0
        %3180 = vmatprep.subr.bf16.mxu0 0
        %3181 = vmatpush1.bf16.msra.mxu0 0
        %3182 = vmatprep.subr.bf16.mxu0 0
        %3183 = vmatpush1.bf16.msra.mxu0 0
        %3184 = vmatprep.subr.bf16.mxu0 0
        %3185 = vmatpush1.bf16.msra.mxu0 0
        %3186 = vmatprep.subr.bf16.mxu0 0
        %3187 = vmatpush1.bf16.msra.mxu0 0
        %3188 = vmatprep.subr.bf16.mxu0 0
        %3189 = vmatpush1.bf16.msra.mxu0 0
        %3190 = vmatprep.mubr.bf16.mxu0 0
        %3191 = vmatmul.mubr.bf16.gmra.mrb[0].mxu0 %v3153
        %v3192 = vpop.f32.mrb[0].mxu0
        %v3193 = vadd.f32 0.0, %v3192
        %v3194 = vpop.f32.mrb[0].mxu0
        %v3195 = vpop.f32.mrb[0].mxu0
        %v3196 = vpop.f32.mrb[0].mxu0
        %3197 = vdwg.mxu0
        %3198 = vrot.lane.b32.xlu0 %v2801, 64
        %v3199 = vpop.permute.xlu0 %3198
        %v3201 = vsel %vm1011, %v3053, 0
        %v3204 = vsel %vm1270, %v3199, 0
        %3206 = vmatprep.subr.bf16.mxu0 0
        %3207 = vmatpush1.bf16.msra.mxu0 %v3204
        %3208 = vmatprep.subr.bf16.mxu0 0
        %3209 = vmatpush1.bf16.msra.mxu0 0
        %3210 = vmatprep.subr.bf16.mxu0 0
        %3211 = vmatpush1.bf16.msra.mxu0 0
        %3212 = vmatprep.subr.bf16.mxu0 0
        %3213 = vmatpush1.bf16.msra.mxu0 0
        %3214 = vmatprep.subr.bf16.mxu0 0
        %3215 = vmatpush1.bf16.msra.mxu0 0
        %3216 = vmatprep.subr.bf16.mxu0 0
        %3217 = vmatpush1.bf16.msra.mxu0 0
        %3218 = vmatprep.subr.bf16.mxu0 0
        %3219 = vmatpush1.bf16.msra.mxu0 0
        %3220 = vmatprep.subr.bf16.mxu0 0
        %3221 = vmatpush1.bf16.msra.mxu0 0
        %3222 = vmatprep.subr.bf16.mxu0 0
        %3223 = vmatpush1.bf16.msra.mxu0 0
        %3224 = vmatprep.subr.bf16.mxu0 0
        %3225 = vmatpush1.bf16.msra.mxu0 0
        %3226 = vmatprep.subr.bf16.mxu0 0
        %3227 = vmatpush1.bf16.msra.mxu0 0
        %3228 = vmatprep.subr.bf16.mxu0 0
        %3229 = vmatpush1.bf16.msra.mxu0 0
        %3230 = vmatprep.subr.bf16.mxu0 0
        %3231 = vmatpush1.bf16.msra.mxu0 0
        %3232 = vmatprep.subr.bf16.mxu0 0
        %3233 = vmatpush1.bf16.msra.mxu0 0
        %3234 = vmatprep.subr.bf16.mxu0 0
        %3235 = vmatpush1.bf16.msra.mxu0 0
        %3236 = vmatprep.subr.bf16.mxu0 0
        %3237 = vmatpush1.bf16.msra.mxu0 0
        %3238 = vmatprep.mubr.bf16.mxu0 0
        %3239 = vmatmul.mubr.bf16.gmra.mrb[0].mxu0 %v3201
        %v3240 = vpop.f32.mrb[0].mxu0
        %v3241 = vadd.f32 0.0, %v3240
        %v3242 = vpop.f32.mrb[0].mxu0
        %v3243 = vpop.f32.mrb[0].mxu0
        %v3244 = vpop.f32.mrb[0].mxu0
        %3245 = vdwg.mxu0
        %3247 = vrot.lane.b32.xlu0 %v3145, 8
        %v3248 = vpop.permute.xlu0 %3247
        %3251 = vrot.lane.b32.xlu0 %v3193, 16
        %v3252 = vpop.permute.xlu0 %3251
        %3255 = vrot.lane.b32.xlu0 %v3241, 24
        %v3256 = vpop.permute.xlu0 %3255
        %v3258 = vsel %vm1011, %v3097, %v3248
        %v3259 = vsel %vm1471, %v3258, %v3252
        %v3260 = vsel %vm1473, %v3259, %v3256
        %s3261 = scalar_lea.vmem %s7, 16
        %v3262 = vld [vmem:[%s3261] sm:$0xf]
        %v3263 = vld [vmem:[%s3261 + $0x4] sm:$0xf]
        %v3264 = vld [vmem:[%s3261 + $0x8] sm:$0xf]
        %v3265 = vld [vmem:[%s3261 + $0xc] sm:$0xf]
        %v3266 = vpack.c.bf16 %v3260, %v2787
        %v3267 = vlaneseq
        %v3268 = vshrl.u32 %v3267, 7
        %v3269 = vsub.s32 1, %v3268
        %v3270 = vrot.slane %v2248, %v3269
        %v3275 = vunpack.c.l.b16 %v3262
        %v3276 = vunpack.c.l.b16 %v3263
        %v3277 = vunpack.c.l.b16 %v3264
        %v3278 = vunpack.c.l.b16 %v3265
        %v3279 = vpack.c.b16 %v3276, %v3275
        %v3280 = vpack.c.b16 %v3278, %v3277
        %v3284 = vsel %vm810, %v3266, 0
        %3286 = vmatprep.subr.bf16.mxu0 0
        %3287 = vmatpush1.bf16.msra.mxu0 %v3279
        %3288 = vmatprep.subr.bf16.mxu0 0
        %3289 = vmatpush1.bf16.msra.mxu0 %v3280
        %3290 = vmatprep.subr.bf16.mxu0 0
        %3291 = vmatpush1.bf16.msra.mxu0 0
        %3292 = vmatprep.subr.bf16.mxu0 0
        %3293 = vmatpush1.bf16.msra.mxu0 0
        %3294 = vmatprep.subr.bf16.mxu0 0
        %3295 = vmatpush1.bf16.msra.mxu0 0
        %3296 = vmatprep.subr.bf16.mxu0 0
        %3297 = vmatpush1.bf16.msra.mxu0 0
        %3298 = vmatprep.subr.bf16.mxu0 0
        %3299 = vmatpush1.bf16.msra.mxu0 0
        %3300 = vmatprep.subr.bf16.mxu0 0
        %3301 = vmatpush1.bf16.msra.mxu0 0
        %3302 = vmatprep.subr.bf16.mxu0 0
        %3303 = vmatpush1.bf16.msra.mxu0 0
        %3304 = vmatprep.subr.bf16.mxu0 0
        %3305 = vmatpush1.bf16.msra.mxu0 0
        %3306 = vmatprep.subr.bf16.mxu0 0
        %3307 = vmatpush1.bf16.msra.mxu0 0
        %3308 = vmatprep.subr.bf16.mxu0 0
        %3309 = vmatpush1.bf16.msra.mxu0 0
        %3310 = vmatprep.subr.bf16.mxu0 0
        %3311 = vmatpush1.bf16.msra.mxu0 0
        %3312 = vmatprep.subr.bf16.mxu0 0
        %3313 = vmatpush1.bf16.msra.mxu0 0
        %3314 = vmatprep.subr.bf16.mxu0 0
        %3315 = vmatpush1.bf16.msra.mxu0 0
        %3316 = vmatprep.subr.bf16.mxu0 0
        %3317 = vmatpush1.bf16.msra.mxu0 0
        %3318 = vmatprep.mubr.bf16.mxu0 0
        %3319 = vmatmul.mubr.bf16.gmra.mrb[0].mxu0 %v3284
        %v3320 = vpop.f32.mrb[0].mxu0
        %v3321 = vadd.f32 %v3270, %v3320
        %v3322 = vpop.f32.mrb[0].mxu0
        %v3323 = vpop.f32.mrb[0].mxu0
        %v3324 = vadd.f32 %v3270, %v3323
        %v3325 = vpop.f32.mrb[0].mxu0
        %3326 = vdwg.mxu0
        %v3327 = vadd.f32 %v2245, %v3321
        %v3328 = vadd.f32 %v2246, %v3324
        %v3329 = vsel %vm810, %v3327, 0.0
        %3330 = vadd.xlane.f32.xlu0 %v3329
        %v3331 = vpop.xlane.xlu0 %3330
        %v3332 = vsel %vm810, %v3328, 0.0
        %3333 = vadd.xlane.f32.xlu0 %v3332
        %v3334 = vpop.xlane.xlu0 %3333
        %v3335 = vmul.f32 %v3331, %v2025
        %v3336 = vmul.f32 %v3334, %v2025
        %v3337 = vsub.f32 %v3327, %v3335
        %v3338 = vsub.f32 %v3328, %v3336
        %v3339 = vmul.f32 %v3337, %v3337
        %v3340 = vmul.f32 %v3338, %v3338
        %v3341 = vsel %vm810, %v3339, 0.0
        %3342 = vadd.xlane.f32.xlu0 %v3341
        %v3343 = vpop.xlane.xlu0 %3342
        %v3344 = vsel %vm810, %v3340, 0.0
        %3345 = vadd.xlane.f32.xlu0 %v3344
        %v3346 = vpop.xlane.xlu0 %3345
        %v3347 = vmul.f32 %v3343, %v2025
        %v3348 = vmul.f32 %v3346, %v2025
        %v3349 = vadd.f32 %v3347, 1e-05
        %v3350 = vadd.f32 %v3348, 1e-05
        %v3351 = vrsqrt.pop %v3349
        %v3352 = vrsqrt.pop %v3350
        %v3353 = vmul.f32 %v3337, %v3351
        %v3354 = vmul.f32 %v3338, %v3352
        %v3355 = vlaneseq
        %v3356 = vshrl.u32 %v3355, 7
        %v3357 = vsub.s32 2, %v3356
        %v3358 = vrot.slane %v2248, %v3357
        %v3359 = vmul.f32 %v3353, %v3358
        %v3360 = vmul.f32 %v3354, %v3358
        %v3361 = vlaneseq
        %v3362 = vshrl.u32 %v3361, 7
        %v3363 = vsub.s32 3, %v3362
        %v3364 = vrot.slane %v2248, %v3363
        %v3365 = vadd.f32 %v3359, %v3364
        %v3366 = vadd.f32 %v3360, %v3364
        %s3367 = scalar_lea.vmem %s8, 16
        %v3368 = vld [vmem:[%s3367] sm:$0xf]
        %v3369 = vld [vmem:[%s3367 + $0x4] sm:$0xf]
        %v3370 = vld [vmem:[%s3367 + $0x8] sm:$0xf]
        %v3371 = vld [vmem:[%s3367 + $0xc] sm:$0xf]
        %v3372 = vpack.c.bf16 %v3366, %v3365
        %v3373 = vlaneseq
        %v3374 = vshrl.u32 %v3373, 7
        %v3375 = vsub.s32 4, %v3374
        %v3376 = vrot.slane %v2248, %v3375
        %v3381 = vunpack.c.l.b16 %v3368
        %v3382 = vunpack.c.l.b16 %v3369
        %v3383 = vunpack.c.l.b16 %v3370
        %v3384 = vunpack.c.l.b16 %v3371
        %v3385 = vpack.c.b16 %v3382, %v3381
        %v3386 = vpack.c.b16 %v3384, %v3383
        %v3390 = vsel %vm810, %v3372, 0
        %3392 = vmatprep.subr.bf16.mxu0 0
        %3393 = vmatpush1.bf16.msra.mxu0 %v3385
        %3394 = vmatprep.subr.bf16.mxu0 0
        %3395 = vmatpush1.bf16.msra.mxu0 %v3386
        %3396 = vmatprep.subr.bf16.mxu0 0
        %3397 = vmatpush1.bf16.msra.mxu0 0
        %3398 = vmatprep.subr.bf16.mxu0 0
        %3399 = vmatpush1.bf16.msra.mxu0 0
        %3400 = vmatprep.subr.bf16.mxu0 0
        %3401 = vmatpush1.bf16.msra.mxu0 0
        %3402 = vmatprep.subr.bf16.mxu0 0
        %3403 = vmatpush1.bf16.msra.mxu0 0
        %3404 = vmatprep.subr.bf16.mxu0 0
        %3405 = vmatpush1.bf16.msra.mxu0 0
        %3406 = vmatprep.subr.bf16.mxu0 0
        %3407 = vmatpush1.bf16.msra.mxu0 0
        %3408 = vmatprep.subr.bf16.mxu0 0
        %3409 = vmatpush1.bf16.msra.mxu0 0
        %3410 = vmatprep.subr.bf16.mxu0 0
        %3411 = vmatpush1.bf16.msra.mxu0 0
        %3412 = vmatprep.subr.bf16.mxu0 0
        %3413 = vmatpush1.bf16.msra.mxu0 0
        %3414 = vmatprep.subr.bf16.mxu0 0
        %3415 = vmatpush1.bf16.msra.mxu0 0
        %3416 = vmatprep.subr.bf16.mxu0 0
        %3417 = vmatpush1.bf16.msra.mxu0 0
        %3418 = vmatprep.subr.bf16.mxu0 0
        %3419 = vmatpush1.bf16.msra.mxu0 0
        %3420 = vmatprep.subr.bf16.mxu0 0
        %3421 = vmatpush1.bf16.msra.mxu0 0
        %3422 = vmatprep.subr.bf16.mxu0 0
        %3423 = vmatpush1.bf16.msra.mxu0 0
        %3424 = vmatprep.mubr.bf16.mxu0 0
        %3425 = vmatmul.mubr.bf16.gmra.mrb[0].mxu0 %v3390
        %v3426 = vpop.f32.mrb[0].mxu0
        %v3427 = vadd.f32 %v3376, %v3426
        %v3428 = vpop.f32.mrb[0].mxu0
        %v3429 = vpop.f32.mrb[0].mxu0
        %v3430 = vadd.f32 %v3376, %v3429
        %v3431 = vpop.f32.mrb[0].mxu0
        %3432 = vdwg.mxu0
        %v3433 = vmax.f32 %v3427, 0.0
        %v3434 = vmax.f32 %v3430, 0.0
        %s3435 = scalar_lea.vmem %s9, 32
        %v3436 = vld [vmem:[%s3435] sm:$0xf]
        %v3437 = vld [vmem:[%s3435 + $0x4] sm:$0xf]
        %v3438 = vld [vmem:[%s3435 + $0x8] sm:$0xf]
        %v3439 = vld [vmem:[%s3435 + $0xc] sm:$0xf]
        %v3440 = vld [vmem:[%s3435 + $0x10] sm:$0xf]
        %v3441 = vld [vmem:[%s3435 + $0x14] sm:$0xf]
        %v3442 = vld [vmem:[%s3435 + $0x18] sm:$0xf]
        %v3443 = vld [vmem:[%s3435 + $0x1c] sm:$0xf]
        %v3444 = vpack.c.bf16 %v3434, %v3433
        %v3445 = vlaneseq
        %v3446 = vshrl.u32 %v3445, 7
        %v3447 = vsub.s32 5, %v3446
        %v3448 = vrot.slane %v2248, %v3447
        %v3457 = vunpack.c.l.b16 %v3436
        %v3458 = vunpack.c.l.b16 %v3437
        %v3459 = vunpack.c.l.b16 %v3438
        %v3460 = vunpack.c.l.b16 %v3439
        %v3461 = vunpack.c.l.b16 %v3440
        %v3462 = vunpack.c.l.b16 %v3441
        %v3463 = vunpack.c.l.b16 %v3442
        %v3464 = vunpack.c.l.b16 %v3443
        %v3465 = vpack.c.b16 %v3458, %v3457
        %v3466 = vpack.c.b16 %v3460, %v3459
        %v3467 = vpack.c.b16 %v3462, %v3461
        %v3468 = vpack.c.b16 %v3464, %v3463
        %v3474 = vsel %vm2162, %v3444, 0
        %3476 = vmatprep.subr.bf16.mxu0 0
        %3477 = vmatpush1.bf16.msra.mxu0 %v3465
        %3478 = vmatprep.subr.bf16.mxu0 0
        %3479 = vmatpush1.bf16.msra.mxu0 %v3466
        %3480 = vmatprep.subr.bf16.mxu0 0
        %3481 = vmatpush1.bf16.msra.mxu0 %v3467
        %3482 = vmatprep.subr.bf16.mxu0 0
        %3483 = vmatpush1.bf16.msra.mxu0 %v3468
        %3484 = vmatprep.subr.bf16.mxu0 0
        %3485 = vmatpush1.bf16.msra.mxu0 0
        %3486 = vmatprep.subr.bf16.mxu0 0
        %3487 = vmatpush1.bf16.msra.mxu0 0
        %3488 = vmatprep.subr.bf16.mxu0 0
        %3489 = vmatpush1.bf16.msra.mxu0 0
        %3490 = vmatprep.subr.bf16.mxu0 0
        %3491 = vmatpush1.bf16.msra.mxu0 0
        %3492 = vmatprep.subr.bf16.mxu0 0
        %3493 = vmatpush1.bf16.msra.mxu0 0
        %3494 = vmatprep.subr.bf16.mxu0 0
        %3495 = vmatpush1.bf16.msra.mxu0 0
        %3496 = vmatprep.subr.bf16.mxu0 0
        %3497 = vmatpush1.bf16.msra.mxu0 0
        %3498 = vmatprep.subr.bf16.mxu0 0
        %3499 = vmatpush1.bf16.msra.mxu0 0
        %3500 = vmatprep.subr.bf16.mxu0 0
        %3501 = vmatpush1.bf16.msra.mxu0 0
        %3502 = vmatprep.subr.bf16.mxu0 0
        %3503 = vmatpush1.bf16.msra.mxu0 0
        %3504 = vmatprep.subr.bf16.mxu0 0
        %3505 = vmatpush1.bf16.msra.mxu0 0
        %3506 = vmatprep.subr.bf16.mxu0 0
        %3507 = vmatpush1.bf16.msra.mxu0 0
        %3508 = vmatprep.mubr.bf16.mxu0 0
        %3509 = vmatmul.mubr.bf16.gmra.mrb[0].mxu0 %v3474
        %v3510 = vpop.f32.mrb[0].mxu0
        %v3511 = vadd.f32 %v3448, %v3510
        %v3512 = vpop.f32.mrb[0].mxu0
        %v3513 = vpop.f32.mrb[0].mxu0
        %v3514 = vadd.f32 %v3448, %v3513
        %v3515 = vpop.f32.mrb[0].mxu0
        %3516 = vdwg.mxu0
        %v3517 = vadd.f32 %v3365, %v3511
        %v3518 = vadd.f32 %v3366, %v3514
        %v3519 = vsel %vm810, %v3517, 0.0
        %3520 = vadd.xlane.f32.xlu0 %v3519
        %v3521 = vpop.xlane.xlu0 %3520
        %v3522 = vsel %vm810, %v3518, 0.0
        %3523 = vadd.xlane.f32.xlu0 %v3522
        %v3524 = vpop.xlane.xlu0 %3523
        %v3525 = vmul.f32 %v3521, %v2025
        %v3526 = vmul.f32 %v3524, %v2025
        %v3527 = vsub.f32 %v3517, %v3525
        %v3528 = vsub.f32 %v3518, %v3526
        %v3529 = vmul.f32 %v3527, %v3527
        %v3530 = vmul.f32 %v3528, %v3528
        %v3531 = vsel %vm810, %v3529, 0.0
        %3532 = vadd.xlane.f32.xlu0 %v3531
        %v3533 = vpop.xlane.xlu0 %3532
        %v3534 = vsel %vm810, %v3530, 0.0
        %3535 = vadd.xlane.f32.xlu0 %v3534
        %v3536 = vpop.xlane.xlu0 %3535
        %v3537 = vmul.f32 %v3533, %v2025
        %v3538 = vmul.f32 %v3536, %v2025
        %v3539 = vadd.f32 %v3537, 1e-05
        %v3540 = vadd.f32 %v3538, 1e-05
        %v3541 = vrsqrt.pop %v3539
        %v3542 = vrsqrt.pop %v3540
        %v3543 = vmul.f32 %v3527, %v3541
        %v3544 = vmul.f32 %v3528, %v3542
        %v3545 = vlaneseq
        %v3546 = vshrl.u32 %v3545, 7
        %v3547 = vsub.s32 6, %v3546
        %v3548 = vrot.slane %v2248, %v3547
        %v3549 = vmul.f32 %v3543, %v3548
        %v3550 = vmul.f32 %v3544, %v3548
        %v3551 = vlaneseq
        %v3552 = vshrl.u32 %v3551, 7
        %v3553 = vsub.s32 7, %v3552
        %v3554 = vrot.slane %v2248, %v3553
        %v3555 = vadd.f32 %v3549, %v3554
        %v3556 = vadd.f32 %v3550, %v3554
        %v3557 = vld [vmem:[%s18] sm:$0xff]
        %v3558 = vld [vmem:[%s18 + $0x8] sm:$0x1f]
        %v3559 = vld [vmem:[%s11] sm:$0xf]
        %v3560 = vld [vmem:[%s11 + $0x4] sm:$0xf]
        %v3561 = vld [vmem:[%s11 + $0x8] sm:$0xf]
        %v3562 = vld [vmem:[%s11 + $0xc] sm:$0xf]
        %v3563 = vpack.c.bf16 %v925, %v922
        %v3564 = vlaneseq
        %v3565 = vshrl.u32 %v3564, 7
        %v3566 = vsub.s32 0, %v3565
        %v3567 = vrot.slane %v3557, %v3566
        %v3572 = vunpack.c.l.b16 %v3559
        %v3573 = vunpack.c.l.b16 %v3560
        %v3574 = vunpack.c.l.b16 %v3561
        %v3575 = vunpack.c.l.b16 %v3562
        %v3576 = vpack.c.b16 %v3573, %v3572
        %v3577 = vpack.c.b16 %v3575, %v3574
        %v3581 = vsel %vm810, %v3563, 0
        %3583 = vmatprep.subr.bf16.mxu0 0
        %3584 = vmatpush1.bf16.msra.mxu0 %v3576
        %3585 = vmatprep.subr.bf16.mxu0 0
        %3586 = vmatpush1.bf16.msra.mxu0 %v3577
        %3587 = vmatprep.subr.bf16.mxu0 0
        %3588 = vmatpush1.bf16.msra.mxu0 0
        %3589 = vmatprep.subr.bf16.mxu0 0
        %3590 = vmatpush1.bf16.msra.mxu0 0
        %3591 = vmatprep.subr.bf16.mxu0 0
        %3592 = vmatpush1.bf16.msra.mxu0 0
        %3593 = vmatprep.subr.bf16.mxu0 0
        %3594 = vmatpush1.bf16.msra.mxu0 0
        %3595 = vmatprep.subr.bf16.mxu0 0
        %3596 = vmatpush1.bf16.msra.mxu0 0
        %3597 = vmatprep.subr.bf16.mxu0 0
        %3598 = vmatpush1.bf16.msra.mxu0 0
        %3599 = vmatprep.subr.bf16.mxu0 0
        %3600 = vmatpush1.bf16.msra.mxu0 0
        %3601 = vmatprep.subr.bf16.mxu0 0
        %3602 = vmatpush1.bf16.msra.mxu0 0
        %3603 = vmatprep.subr.bf16.mxu0 0
        %3604 = vmatpush1.bf16.msra.mxu0 0
        %3605 = vmatprep.subr.bf16.mxu0 0
        %3606 = vmatpush1.bf16.msra.mxu0 0
        %3607 = vmatprep.subr.bf16.mxu0 0
        %3608 = vmatpush1.bf16.msra.mxu0 0
        %3609 = vmatprep.subr.bf16.mxu0 0
        %3610 = vmatpush1.bf16.msra.mxu0 0
        %3611 = vmatprep.subr.bf16.mxu0 0
        %3612 = vmatpush1.bf16.msra.mxu0 0
        %3613 = vmatprep.subr.bf16.mxu0 0
        %3614 = vmatpush1.bf16.msra.mxu0 0
        %3615 = vmatprep.mubr.bf16.mxu0 0
        %3616 = vmatmul.mubr.bf16.gmra.mrb[0].mxu0 %v3581
        %v3617 = vpop.f32.mrb[0].mxu0
        %v3618 = vadd.f32 %v3567, %v3617
        %v3619 = vpop.f32.mrb[0].mxu0
        %v3620 = vpop.f32.mrb[0].mxu0
        %v3621 = vadd.f32 %v3567, %v3620
        %v3622 = vpop.f32.mrb[0].mxu0
        %3623 = vdwg.mxu0
        %3625 = vrot.lane.b32.xlu0 %v3618, 120
        %v3626 = vpop.permute.xlu0 %3625
        %3628 = vrot.lane.b32.xlu0 %v3618, 112
        %v3629 = vpop.permute.xlu0 %3628
        %3631 = vrot.lane.b32.xlu0 %v3618, 104
        %v3632 = vpop.permute.xlu0 %3631
        %v3634 = vpack.c.bf16 %v3618, %v3618
        %v3635 = vpack.c.bf16 %v3626, %v3626
        %v3636 = vpack.c.bf16 %v3629, %v3629
        %v3637 = vpack.c.bf16 %v3632, %v3632
        %3639 = vrot.lane.b32.xlu0 %v3634, 96
        %v3640 = vpop.permute.xlu0 %3639
        %v3642 = vsel %vm1011, %v3634, 0
        %v3645 = vsel %vm1011, %v3640, 0
        %3647 = vmatprep.subr.bf16.mxu0 0
        %3648 = vmatpush1.bf16.xpose.msra.mxu0 %v3645
        %3649 = vmatprep.subr.bf16.mxu0 0
        %3650 = vmatpush1.bf16.xpose.msra.mxu0 0
        %3651 = vmatprep.subr.bf16.mxu0 0
        %3652 = vmatpush1.bf16.xpose.msra.mxu0 0
        %3653 = vmatprep.subr.bf16.mxu0 0
        %3654 = vmatpush1.bf16.xpose.msra.mxu0 0
        %3655 = vmatprep.subr.bf16.mxu0 0
        %3656 = vmatpush1.bf16.xpose.msra.mxu0 0
        %3657 = vmatprep.subr.bf16.mxu0 0
        %3658 = vmatpush1.bf16.xpose.msra.mxu0 0
        %3659 = vmatprep.subr.bf16.mxu0 0
        %3660 = vmatpush1.bf16.xpose.msra.mxu0 0
        %3661 = vmatprep.subr.bf16.mxu0 0
        %3662 = vmatpush1.bf16.xpose.msra.mxu0 0
        %3663 = vmatprep.subr.bf16.mxu0 0
        %3664 = vmatpush1.bf16.xpose.msra.mxu0 0
        %3665 = vmatprep.subr.bf16.mxu0 0
        %3666 = vmatpush1.bf16.xpose.msra.mxu0 0
        %3667 = vmatprep.subr.bf16.mxu0 0
        %3668 = vmatpush1.bf16.xpose.msra.mxu0 0
        %3669 = vmatprep.subr.bf16.mxu0 0
        %3670 = vmatpush1.bf16.xpose.msra.mxu0 0
        %3671 = vmatprep.subr.bf16.mxu0 0
        %3672 = vmatpush1.bf16.xpose.msra.mxu0 0
        %3673 = vmatprep.subr.bf16.mxu0 0
        %3674 = vmatpush1.bf16.xpose.msra.mxu0 0
        %3675 = vmatprep.subr.bf16.mxu0 0
        %3676 = vmatpush1.bf16.xpose.msra.mxu0 0
        %3677 = vmatprep.subr.bf16.mxu0 0
        %3678 = vmatpush1.bf16.xpose.msra.mxu0 0
        %3679 = vmatprep.mubr.bf16.mxu0 0
        %3680 = vmatmul.mubr.bf16.gmra.mrb[0].mxu0 %v3642
        %v3681 = vpop.f32.mrb[0].mxu0
        %v3682 = vadd.f32 0.0, %v3681
        %v3683 = vpop.f32.mrb[0].mxu0
        %v3684 = vpop.f32.mrb[0].mxu0
        %v3685 = vpop.f32.mrb[0].mxu0
        %3686 = vdwg.mxu0
        %3688 = vrot.lane.b32.xlu0 %v3635, 96
        %v3689 = vpop.permute.xlu0 %3688
        %v3691 = vsel %vm1011, %v3635, 0
        %v3694 = vsel %vm1011, %v3689, 0
        %3696 = vmatprep.subr.bf16.mxu0 0
        %3697 = vmatpush1.bf16.xpose.msra.mxu0 %v3694
        %3698 = vmatprep.subr.bf16.mxu0 0
        %3699 = vmatpush1.bf16.xpose.msra.mxu0 0
        %3700 = vmatprep.subr.bf16.mxu0 0
        %3701 = vmatpush1.bf16.xpose.msra.mxu0 0
        %3702 = vmatprep.subr.bf16.mxu0 0
        %3703 = vmatpush1.bf16.xpose.msra.mxu0 0
        %3704 = vmatprep.subr.bf16.mxu0 0
        %3705 = vmatpush1.bf16.xpose.msra.mxu0 0
        %3706 = vmatprep.subr.bf16.mxu0 0
        %3707 = vmatpush1.bf16.xpose.msra.mxu0 0
        %3708 = vmatprep.subr.bf16.mxu0 0
        %3709 = vmatpush1.bf16.xpose.msra.mxu0 0
        %3710 = vmatprep.subr.bf16.mxu0 0
        %3711 = vmatpush1.bf16.xpose.msra.mxu0 0
        %3712 = vmatprep.subr.bf16.mxu0 0
        %3713 = vmatpush1.bf16.xpose.msra.mxu0 0
        %3714 = vmatprep.subr.bf16.mxu0 0
        %3715 = vmatpush1.bf16.xpose.msra.mxu0 0
        %3716 = vmatprep.subr.bf16.mxu0 0
        %3717 = vmatpush1.bf16.xpose.msra.mxu0 0
        %3718 = vmatprep.subr.bf16.mxu0 0
        %3719 = vmatpush1.bf16.xpose.msra.mxu0 0
        %3720 = vmatprep.subr.bf16.mxu0 0
        %3721 = vmatpush1.bf16.xpose.msra.mxu0 0
        %3722 = vmatprep.subr.bf16.mxu0 0
        %3723 = vmatpush1.bf16.xpose.msra.mxu0 0
        %3724 = vmatprep.subr.bf16.mxu0 0
        %3725 = vmatpush1.bf16.xpose.msra.mxu0 0
        %3726 = vmatprep.subr.bf16.mxu0 0
        %3727 = vmatpush1.bf16.xpose.msra.mxu0 0
        %3728 = vmatprep.mubr.bf16.mxu0 0
        %3729 = vmatmul.mubr.bf16.gmra.mrb[0].mxu0 %v3691
        %v3730 = vpop.f32.mrb[0].mxu0
        %v3731 = vadd.f32 0.0, %v3730
        %v3732 = vpop.f32.mrb[0].mxu0
        %v3733 = vpop.f32.mrb[0].mxu0
        %v3734 = vpop.f32.mrb[0].mxu0
        %3735 = vdwg.mxu0
        %3737 = vrot.lane.b32.xlu0 %v3636, 96
        %v3738 = vpop.permute.xlu0 %3737
        %v3740 = vsel %vm1011, %v3636, 0
        %v3743 = vsel %vm1011, %v3738, 0
        %3745 = vmatprep.subr.bf16.mxu0 0
        %3746 = vmatpush1.bf16.xpose.msra.mxu0 %v3743
        %3747 = vmatprep.subr.bf16.mxu0 0
        %3748 = vmatpush1.bf16.xpose.msra.mxu0 0
        %3749 = vmatprep.subr.bf16.mxu0 0
        %3750 = vmatpush1.bf16.xpose.msra.mxu0 0
        %3751 = vmatprep.subr.bf16.mxu0 0
        %3752 = vmatpush1.bf16.xpose.msra.mxu0 0
        %3753 = vmatprep.subr.bf16.mxu0 0
        %3754 = vmatpush1.bf16.xpose.msra.mxu0 0
        %3755 = vmatprep.subr.bf16.mxu0 0
        %3756 = vmatpush1.bf16.xpose.msra.mxu0 0
        %3757 = vmatprep.subr.bf16.mxu0 0
        %3758 = vmatpush1.bf16.xpose.msra.mxu0 0
        %3759 = vmatprep.subr.bf16.mxu0 0
        %3760 = vmatpush1.bf16.xpose.msra.mxu0 0
        %3761 = vmatprep.subr.bf16.mxu0 0
        %3762 = vmatpush1.bf16.xpose.msra.mxu0 0
        %3763 = vmatprep.subr.bf16.mxu0 0
        %3764 = vmatpush1.bf16.xpose.msra.mxu0 0
        %3765 = vmatprep.subr.bf16.mxu0 0
        %3766 = vmatpush1.bf16.xpose.msra.mxu0 0
        %3767 = vmatprep.subr.bf16.mxu0 0
        %3768 = vmatpush1.bf16.xpose.msra.mxu0 0
        %3769 = vmatprep.subr.bf16.mxu0 0
        %3770 = vmatpush1.bf16.xpose.msra.mxu0 0
        %3771 = vmatprep.subr.bf16.mxu0 0
        %3772 = vmatpush1.bf16.xpose.msra.mxu0 0
        %3773 = vmatprep.subr.bf16.mxu0 0
        %3774 = vmatpush1.bf16.xpose.msra.mxu0 0
        %3775 = vmatprep.subr.bf16.mxu0 0
        %3776 = vmatpush1.bf16.xpose.msra.mxu0 0
        %3777 = vmatprep.mubr.bf16.mxu0 0
        %3778 = vmatmul.mubr.bf16.gmra.mrb[0].mxu0 %v3740
        %v3779 = vpop.f32.mrb[0].mxu0
        %v3780 = vadd.f32 0.0, %v3779
        %v3781 = vpop.f32.mrb[0].mxu0
        %v3782 = vpop.f32.mrb[0].mxu0
        %v3783 = vpop.f32.mrb[0].mxu0
        %3784 = vdwg.mxu0
        %3786 = vrot.lane.b32.xlu0 %v3637, 96
        %v3787 = vpop.permute.xlu0 %3786
        %v3789 = vsel %vm1011, %v3637, 0
        %v3792 = vsel %vm1011, %v3787, 0
        %3794 = vmatprep.subr.bf16.mxu0 0
        %3795 = vmatpush1.bf16.xpose.msra.mxu0 %v3792
        %3796 = vmatprep.subr.bf16.mxu0 0
        %3797 = vmatpush1.bf16.xpose.msra.mxu0 0
        %3798 = vmatprep.subr.bf16.mxu0 0
        %3799 = vmatpush1.bf16.xpose.msra.mxu0 0
        %3800 = vmatprep.subr.bf16.mxu0 0
        %3801 = vmatpush1.bf16.xpose.msra.mxu0 0
        %3802 = vmatprep.subr.bf16.mxu0 0
        %3803 = vmatpush1.bf16.xpose.msra.mxu0 0
        %3804 = vmatprep.subr.bf16.mxu0 0
        %3805 = vmatpush1.bf16.xpose.msra.mxu0 0
        %3806 = vmatprep.subr.bf16.mxu0 0
        %3807 = vmatpush1.bf16.xpose.msra.mxu0 0
        %3808 = vmatprep.subr.bf16.mxu0 0
        %3809 = vmatpush1.bf16.xpose.msra.mxu0 0
        %3810 = vmatprep.subr.bf16.mxu0 0
        %3811 = vmatpush1.bf16.xpose.msra.mxu0 0
        %3812 = vmatprep.subr.bf16.mxu0 0
        %3813 = vmatpush1.bf16.xpose.msra.mxu0 0
        %3814 = vmatprep.subr.bf16.mxu0 0
        %3815 = vmatpush1.bf16.xpose.msra.mxu0 0
        %3816 = vmatprep.subr.bf16.mxu0 0
        %3817 = vmatpush1.bf16.xpose.msra.mxu0 0
        %3818 = vmatprep.subr.bf16.mxu0 0
        %3819 = vmatpush1.bf16.xpose.msra.mxu0 0
        %3820 = vmatprep.subr.bf16.mxu0 0
        %3821 = vmatpush1.bf16.xpose.msra.mxu0 0
        %3822 = vmatprep.subr.bf16.mxu0 0
        %3823 = vmatpush1.bf16.xpose.msra.mxu0 0
        %3824 = vmatprep.subr.bf16.mxu0 0
        %3825 = vmatpush1.bf16.xpose.msra.mxu0 0
        %3826 = vmatprep.mubr.bf16.mxu0 0
        %3827 = vmatmul.mubr.bf16.gmra.mrb[0].mxu0 %v3789
        %v3828 = vpop.f32.mrb[0].mxu0
        %v3829 = vadd.f32 0.0, %v3828
        %v3830 = vpop.f32.mrb[0].mxu0
        %v3831 = vpop.f32.mrb[0].mxu0
        %v3832 = vpop.f32.mrb[0].mxu0
        %3833 = vdwg.mxu0
        %v3834 = vmul.f32 %v3682, 0.35355338
        %v3835 = vmul.f32 %v3731, 0.35355338
        %v3836 = vmul.f32 %v3780, 0.35355338
        %v3837 = vmul.f32 %v3829, 0.35355338
        %v3838 = vadd.f32 %v3834, %v769
        %v3839 = vadd.f32 %v3835, %v769
        %v3840 = vadd.f32 %v3836, %v769
        %v3841 = vadd.f32 %v3837, %v769
        %v3842 = vsel %vm1011, %v3838, -inf
        %3843 = vmax.xlane.f32.xlu0 %v3842
        %v3844 = vpop.xlane.xlu0 %3843
        %v3845 = vsel %vm1011, %v3839, -inf
        %3846 = vmax.xlane.f32.xlu0 %v3845
        %v3847 = vpop.xlane.xlu0 %3846
        %v3848 = vsel %vm1011, %v3840, -inf
        %3849 = vmax.xlane.f32.xlu0 %v3848
        %v3850 = vpop.xlane.xlu0 %3849
        %v3851 = vsel %vm1011, %v3841, -inf
        %3852 = vmax.xlane.f32.xlu0 %v3851
        %v3853 = vpop.xlane.xlu0 %3852
        %v3854 = vsub.f32 %v3838, %v3844
        %v3855 = vsub.f32 %v3839, %v3847
        %v3856 = vsub.f32 %v3840, %v3850
        %v3857 = vsub.f32 %v3841, %v3853
        %v3858 = vmul.f32 %v3854, 1.442695
        %v3859 = vpow.pop %v3858
        %v3860 = vmul.f32 %v3855, 1.442695
        %v3861 = vpow.pop %v3860
        %v3862 = vmul.f32 %v3856, 1.442695
        %v3863 = vpow.pop %v3862
        %v3864 = vmul.f32 %v3857, 1.442695
        %v3865 = vpow.pop %v3864
        %v3866 = vsel %vm1011, %v3859, 0.0
        %3867 = vadd.xlane.f32.xlu0 %v3866
        %v3868 = vpop.xlane.xlu0 %3867
        %v3869 = vsel %vm1011, %v3861, 0.0
        %3870 = vadd.xlane.f32.xlu0 %v3869
        %v3871 = vpop.xlane.xlu0 %3870
        %v3872 = vsel %vm1011, %v3863, 0.0
        %3873 = vadd.xlane.f32.xlu0 %v3872
        %v3874 = vpop.xlane.xlu0 %3873
        %v3875 = vsel %vm1011, %v3865, 0.0
        %3876 = vadd.xlane.f32.xlu0 %v3875
        %v3877 = vpop.xlane.xlu0 %3876
        %v3878 = vrcp.pop %v3868
        %v3879 = vmul.f32 %v3859, %v3878
        %v3880 = vrcp.pop %v3871
        %v3881 = vmul.f32 %v3861, %v3880
        %v3882 = vrcp.pop %v3874
        %v3883 = vmul.f32 %v3863, %v3882
        %v3884 = vrcp.pop %v3877
        %v3885 = vmul.f32 %v3865, %v3884
        %v3886 = vpack.c.bf16 %v3879, %v3879
        %v3887 = vpack.c.bf16 %v3881, %v3881
        %v3888 = vpack.c.bf16 %v3883, %v3883
        %v3889 = vpack.c.bf16 %v3885, %v3885
        %3890 = vrot.lane.b32.xlu0 %v3634, 64
        %v3891 = vpop.permute.xlu0 %3890
        %v3893 = vsel %vm1011, %v3886, 0
        %v3896 = vsel %vm1270, %v3891, 0
        %3898 = vmatprep.subr.bf16.mxu0 0
        %3899 = vmatpush1.bf16.msra.mxu0 %v3896
        %3900 = vmatprep.subr.bf16.mxu0 0
        %3901 = vmatpush1.bf16.msra.mxu0 0
        %3902 = vmatprep.subr.bf16.mxu0 0
        %3903 = vmatpush1.bf16.msra.mxu0 0
        %3904 = vmatprep.subr.bf16.mxu0 0
        %3905 = vmatpush1.bf16.msra.mxu0 0
        %3906 = vmatprep.subr.bf16.mxu0 0
        %3907 = vmatpush1.bf16.msra.mxu0 0
        %3908 = vmatprep.subr.bf16.mxu0 0
        %3909 = vmatpush1.bf16.msra.mxu0 0
        %3910 = vmatprep.subr.bf16.mxu0 0
        %3911 = vmatpush1.bf16.msra.mxu0 0
        %3912 = vmatprep.subr.bf16.mxu0 0
        %3913 = vmatpush1.bf16.msra.mxu0 0
        %3914 = vmatprep.subr.bf16.mxu0 0
        %3915 = vmatpush1.bf16.msra.mxu0 0
        %3916 = vmatprep.subr.bf16.mxu0 0
        %3917 = vmatpush1.bf16.msra.mxu0 0
        %3918 = vmatprep.subr.bf16.mxu0 0
        %3919 = vmatpush1.bf16.msra.mxu0 0
        %3920 = vmatprep.subr.bf16.mxu0 0
        %3921 = vmatpush1.bf16.msra.mxu0 0
        %3922 = vmatprep.subr.bf16.mxu0 0
        %3923 = vmatpush1.bf16.msra.mxu0 0
        %3924 = vmatprep.subr.bf16.mxu0 0
        %3925 = vmatpush1.bf16.msra.mxu0 0
        %3926 = vmatprep.subr.bf16.mxu0 0
        %3927 = vmatpush1.bf16.msra.mxu0 0
        %3928 = vmatprep.subr.bf16.mxu0 0
        %3929 = vmatpush1.bf16.msra.mxu0 0
        %3930 = vmatprep.mubr.bf16.mxu0 0
        %3931 = vmatmul.mubr.bf16.gmra.mrb[0].mxu0 %v3893
        %v3932 = vpop.f32.mrb[0].mxu0
        %v3933 = vadd.f32 0.0, %v3932
        %v3934 = vpop.f32.mrb[0].mxu0
        %v3935 = vpop.f32.mrb[0].mxu0
        %v3936 = vpop.f32.mrb[0].mxu0
        %3937 = vdwg.mxu0
        %3938 = vrot.lane.b32.xlu0 %v3635, 64
        %v3939 = vpop.permute.xlu0 %3938
        %v3941 = vsel %vm1011, %v3887, 0
        %v3944 = vsel %vm1270, %v3939, 0
        %3946 = vmatprep.subr.bf16.mxu0 0
        %3947 = vmatpush1.bf16.msra.mxu0 %v3944
        %3948 = vmatprep.subr.bf16.mxu0 0
        %3949 = vmatpush1.bf16.msra.mxu0 0
        %3950 = vmatprep.subr.bf16.mxu0 0
        %3951 = vmatpush1.bf16.msra.mxu0 0
        %3952 = vmatprep.subr.bf16.mxu0 0
        %3953 = vmatpush1.bf16.msra.mxu0 0
        %3954 = vmatprep.subr.bf16.mxu0 0
        %3955 = vmatpush1.bf16.msra.mxu0 0
        %3956 = vmatprep.subr.bf16.mxu0 0
        %3957 = vmatpush1.bf16.msra.mxu0 0
        %3958 = vmatprep.subr.bf16.mxu0 0
        %3959 = vmatpush1.bf16.msra.mxu0 0
        %3960 = vmatprep.subr.bf16.mxu0 0
        %3961 = vmatpush1.bf16.msra.mxu0 0
        %3962 = vmatprep.subr.bf16.mxu0 0
        %3963 = vmatpush1.bf16.msra.mxu0 0
        %3964 = vmatprep.subr.bf16.mxu0 0
        %3965 = vmatpush1.bf16.msra.mxu0 0
        %3966 = vmatprep.subr.bf16.mxu0 0
        %3967 = vmatpush1.bf16.msra.mxu0 0
        %3968 = vmatprep.subr.bf16.mxu0 0
        %3969 = vmatpush1.bf16.msra.mxu0 0
        %3970 = vmatprep.subr.bf16.mxu0 0
        %3971 = vmatpush1.bf16.msra.mxu0 0
        %3972 = vmatprep.subr.bf16.mxu0 0
        %3973 = vmatpush1.bf16.msra.mxu0 0
        %3974 = vmatprep.subr.bf16.mxu0 0
        %3975 = vmatpush1.bf16.msra.mxu0 0
        %3976 = vmatprep.subr.bf16.mxu0 0
        %3977 = vmatpush1.bf16.msra.mxu0 0
        %3978 = vmatprep.mubr.bf16.mxu0 0
        %3979 = vmatmul.mubr.bf16.gmra.mrb[0].mxu0 %v3941
        %v3980 = vpop.f32.mrb[0].mxu0
        %v3981 = vadd.f32 0.0, %v3980
        %v3982 = vpop.f32.mrb[0].mxu0
        %v3983 = vpop.f32.mrb[0].mxu0
        %v3984 = vpop.f32.mrb[0].mxu0
        %3985 = vdwg.mxu0
        %3986 = vrot.lane.b32.xlu0 %v3636, 64
        %v3987 = vpop.permute.xlu0 %3986
        %v3989 = vsel %vm1011, %v3888, 0
        %v3992 = vsel %vm1270, %v3987, 0
        %3994 = vmatprep.subr.bf16.mxu0 0
        %3995 = vmatpush1.bf16.msra.mxu0 %v3992
        %3996 = vmatprep.subr.bf16.mxu0 0
        %3997 = vmatpush1.bf16.msra.mxu0 0
        %3998 = vmatprep.subr.bf16.mxu0 0
        %3999 = vmatpush1.bf16.msra.mxu0 0
        %4000 = vmatprep.subr.bf16.mxu0 0
        %4001 = vmatpush1.bf16.msra.mxu0 0
        %4002 = vmatprep.subr.bf16.mxu0 0
        %4003 = vmatpush1.bf16.msra.mxu0 0
        %4004 = vmatprep.subr.bf16.mxu0 0
        %4005 = vmatpush1.bf16.msra.mxu0 0
        %4006 = vmatprep.subr.bf16.mxu0 0
        %4007 = vmatpush1.bf16.msra.mxu0 0
        %4008 = vmatprep.subr.bf16.mxu0 0
        %4009 = vmatpush1.bf16.msra.mxu0 0
        %4010 = vmatprep.subr.bf16.mxu0 0
        %4011 = vmatpush1.bf16.msra.mxu0 0
        %4012 = vmatprep.subr.bf16.mxu0 0
        %4013 = vmatpush1.bf16.msra.mxu0 0
        %4014 = vmatprep.subr.bf16.mxu0 0
        %4015 = vmatpush1.bf16.msra.mxu0 0
        %4016 = vmatprep.subr.bf16.mxu0 0
        %4017 = vmatpush1.bf16.msra.mxu0 0
        %4018 = vmatprep.subr.bf16.mxu0 0
        %4019 = vmatpush1.bf16.msra.mxu0 0
        %4020 = vmatprep.subr.bf16.mxu0 0
        %4021 = vmatpush1.bf16.msra.mxu0 0
        %4022 = vmatprep.subr.bf16.mxu0 0
        %4023 = vmatpush1.bf16.msra.mxu0 0
        %4024 = vmatprep.subr.bf16.mxu0 0
        %4025 = vmatpush1.bf16.msra.mxu0 0
        %4026 = vmatprep.mubr.bf16.mxu0 0
        %4027 = vmatmul.mubr.bf16.gmra.mrb[0].mxu0 %v3989
        %v4028 = vpop.f32.mrb[0].mxu0
        %v4029 = vadd.f32 0.0, %v4028
        %v4030 = vpop.f32.mrb[0].mxu0
        %v4031 = vpop.f32.mrb[0].mxu0
        %v4032 = vpop.f32.mrb[0].mxu0
        %4033 = vdwg.mxu0
        %4034 = vrot.lane.b32.xlu0 %v3637, 64
        %v4035 = vpop.permute.xlu0 %4034
        %v4037 = vsel %vm1011, %v3889, 0
        %v4040 = vsel %vm1270, %v4035, 0
        %4042 = vmatprep.subr.bf16.mxu0 0
        %4043 = vmatpush1.bf16.msra.mxu0 %v4040
        %4044 = vmatprep.subr.bf16.mxu0 0
        %4045 = vmatpush1.bf16.msra.mxu0 0
        %4046 = vmatprep.subr.bf16.mxu0 0
        %4047 = vmatpush1.bf16.msra.mxu0 0
        %4048 = vmatprep.subr.bf16.mxu0 0
        %4049 = vmatpush1.bf16.msra.mxu0 0
        %4050 = vmatprep.subr.bf16.mxu0 0
        %4051 = vmatpush1.bf16.msra.mxu0 0
        %4052 = vmatprep.subr.bf16.mxu0 0
        %4053 = vmatpush1.bf16.msra.mxu0 0
        %4054 = vmatprep.subr.bf16.mxu0 0
        %4055 = vmatpush1.bf16.msra.mxu0 0
        %4056 = vmatprep.subr.bf16.mxu0 0
        %4057 = vmatpush1.bf16.msra.mxu0 0
        %4058 = vmatprep.subr.bf16.mxu0 0
        %4059 = vmatpush1.bf16.msra.mxu0 0
        %4060 = vmatprep.subr.bf16.mxu0 0
        %4061 = vmatpush1.bf16.msra.mxu0 0
        %4062 = vmatprep.subr.bf16.mxu0 0
        %4063 = vmatpush1.bf16.msra.mxu0 0
        %4064 = vmatprep.subr.bf16.mxu0 0
        %4065 = vmatpush1.bf16.msra.mxu0 0
        %4066 = vmatprep.subr.bf16.mxu0 0
        %4067 = vmatpush1.bf16.msra.mxu0 0
        %4068 = vmatprep.subr.bf16.mxu0 0
        %4069 = vmatpush1.bf16.msra.mxu0 0
        %4070 = vmatprep.subr.bf16.mxu0 0
        %4071 = vmatpush1.bf16.msra.mxu0 0
        %4072 = vmatprep.subr.bf16.mxu0 0
        %4073 = vmatpush1.bf16.msra.mxu0 0
        %4074 = vmatprep.mubr.bf16.mxu0 0
        %4075 = vmatmul.mubr.bf16.gmra.mrb[0].mxu0 %v4037
        %v4076 = vpop.f32.mrb[0].mxu0
        %v4077 = vadd.f32 0.0, %v4076
        %v4078 = vpop.f32.mrb[0].mxu0
        %v4079 = vpop.f32.mrb[0].mxu0
        %v4080 = vpop.f32.mrb[0].mxu0
        %4081 = vdwg.mxu0
        %4083 = vrot.lane.b32.xlu0 %v3981, 8
        %v4084 = vpop.permute.xlu0 %4083
        %4087 = vrot.lane.b32.xlu0 %v4029, 16
        %v4088 = vpop.permute.xlu0 %4087
        %4091 = vrot.lane.b32.xlu0 %v4077, 24
        %v4092 = vpop.permute.xlu0 %4091
        %v4094 = vsel %vm1011, %v3933, %v4084
        %v4095 = vsel %vm1471, %v4094, %v4088
        %v4096 = vsel %vm1473, %v4095, %v4092
        %4098 = vrot.lane.b32.xlu0 %v3621, 120
        %v4099 = vpop.permute.xlu0 %4098
        %4101 = vrot.lane.b32.xlu0 %v3621, 112
        %v4102 = vpop.permute.xlu0 %4101
        %4104 = vrot.lane.b32.xlu0 %v3621, 104
        %v4105 = vpop.permute.xlu0 %4104
        %v4107 = vpack.c.bf16 %v3621, %v3621
        %v4108 = vpack.c.bf16 %v4099, %v4099
        %v4109 = vpack.c.bf16 %v4102, %v4102
        %v4110 = vpack.c.bf16 %v4105, %v4105
        %4112 = vrot.lane.b32.xlu0 %v4107, 96
        %v4113 = vpop.permute.xlu0 %4112
        %v4115 = vsel %vm1011, %v4107, 0
        %v4118 = vsel %vm1011, %v4113, 0
        %4120 = vmatprep.subr.bf16.mxu0 0
        %4121 = vmatpush1.bf16.xpose.msra.mxu0 %v4118
        %4122 = vmatprep.subr.bf16.mxu0 0
        %4123 = vmatpush1.bf16.xpose.msra.mxu0 0
        %4124 = vmatprep.subr.bf16.mxu0 0
        %4125 = vmatpush1.bf16.xpose.msra.mxu0 0
        %4126 = vmatprep.subr.bf16.mxu0 0
        %4127 = vmatpush1.bf16.xpose.msra.mxu0 0
        %4128 = vmatprep.subr.bf16.mxu0 0
        %4129 = vmatpush1.bf16.xpose.msra.mxu0 0
        %4130 = vmatprep.subr.bf16.mxu0 0
        %4131 = vmatpush1.bf16.xpose.msra.mxu0 0
        %4132 = vmatprep.subr.bf16.mxu0 0
        %4133 = vmatpush1.bf16.xpose.msra.mxu0 0
        %4134 = vmatprep.subr.bf16.mxu0 0
        %4135 = vmatpush1.bf16.xpose.msra.mxu0 0
        %4136 = vmatprep.subr.bf16.mxu0 0
        %4137 = vmatpush1.bf16.xpose.msra.mxu0 0
        %4138 = vmatprep.subr.bf16.mxu0 0
        %4139 = vmatpush1.bf16.xpose.msra.mxu0 0
        %4140 = vmatprep.subr.bf16.mxu0 0
        %4141 = vmatpush1.bf16.xpose.msra.mxu0 0
        %4142 = vmatprep.subr.bf16.mxu0 0
        %4143 = vmatpush1.bf16.xpose.msra.mxu0 0
        %4144 = vmatprep.subr.bf16.mxu0 0
        %4145 = vmatpush1.bf16.xpose.msra.mxu0 0
        %4146 = vmatprep.subr.bf16.mxu0 0
        %4147 = vmatpush1.bf16.xpose.msra.mxu0 0
        %4148 = vmatprep.subr.bf16.mxu0 0
        %4149 = vmatpush1.bf16.xpose.msra.mxu0 0
        %4150 = vmatprep.subr.bf16.mxu0 0
        %4151 = vmatpush1.bf16.xpose.msra.mxu0 0
        %4152 = vmatprep.mubr.bf16.mxu0 0
        %4153 = vmatmul.mubr.bf16.gmra.mrb[0].mxu0 %v4115
        %v4154 = vpop.f32.mrb[0].mxu0
        %v4155 = vadd.f32 0.0, %v4154
        %v4156 = vpop.f32.mrb[0].mxu0
        %v4157 = vpop.f32.mrb[0].mxu0
        %v4158 = vpop.f32.mrb[0].mxu0
        %4159 = vdwg.mxu0
        %4161 = vrot.lane.b32.xlu0 %v4108, 96
        %v4162 = vpop.permute.xlu0 %4161
        %v4164 = vsel %vm1011, %v4108, 0
        %v4167 = vsel %vm1011, %v4162, 0
        %4169 = vmatprep.subr.bf16.mxu0 0
        %4170 = vmatpush1.bf16.xpose.msra.mxu0 %v4167
        %4171 = vmatprep.subr.bf16.mxu0 0
        %4172 = vmatpush1.bf16.xpose.msra.mxu0 0
        %4173 = vmatprep.subr.bf16.mxu0 0
        %4174 = vmatpush1.bf16.xpose.msra.mxu0 0
        %4175 = vmatprep.subr.bf16.mxu0 0
        %4176 = vmatpush1.bf16.xpose.msra.mxu0 0
        %4177 = vmatprep.subr.bf16.mxu0 0
        %4178 = vmatpush1.bf16.xpose.msra.mxu0 0
        %4179 = vmatprep.subr.bf16.mxu0 0
        %4180 = vmatpush1.bf16.xpose.msra.mxu0 0
        %4181 = vmatprep.subr.bf16.mxu0 0
        %4182 = vmatpush1.bf16.xpose.msra.mxu0 0
        %4183 = vmatprep.subr.bf16.mxu0 0
        %4184 = vmatpush1.bf16.xpose.msra.mxu0 0
        %4185 = vmatprep.subr.bf16.mxu0 0
        %4186 = vmatpush1.bf16.xpose.msra.mxu0 0
        %4187 = vmatprep.subr.bf16.mxu0 0
        %4188 = vmatpush1.bf16.xpose.msra.mxu0 0
        %4189 = vmatprep.subr.bf16.mxu0 0
        %4190 = vmatpush1.bf16.xpose.msra.mxu0 0
        %4191 = vmatprep.subr.bf16.mxu0 0
        %4192 = vmatpush1.bf16.xpose.msra.mxu0 0
        %4193 = vmatprep.subr.bf16.mxu0 0
        %4194 = vmatpush1.bf16.xpose.msra.mxu0 0
        %4195 = vmatprep.subr.bf16.mxu0 0
        %4196 = vmatpush1.bf16.xpose.msra.mxu0 0
        %4197 = vmatprep.subr.bf16.mxu0 0
        %4198 = vmatpush1.bf16.xpose.msra.mxu0 0
        %4199 = vmatprep.subr.bf16.mxu0 0
        %4200 = vmatpush1.bf16.xpose.msra.mxu0 0
        %4201 = vmatprep.mubr.bf16.mxu0 0
        %4202 = vmatmul.mubr.bf16.gmra.mrb[0].mxu0 %v4164
        %v4203 = vpop.f32.mrb[0].mxu0
        %v4204 = vadd.f32 0.0, %v4203
        %v4205 = vpop.f32.mrb[0].mxu0
        %v4206 = vpop.f32.mrb[0].mxu0
        %v4207 = vpop.f32.mrb[0].mxu0
        %4208 = vdwg.mxu0
        %4210 = vrot.lane.b32.xlu0 %v4109, 96
        %v4211 = vpop.permute.xlu0 %4210
        %v4213 = vsel %vm1011, %v4109, 0
        %v4216 = vsel %vm1011, %v4211, 0
        %4218 = vmatprep.subr.bf16.mxu0 0
        %4219 = vmatpush1.bf16.xpose.msra.mxu0 %v4216
        %4220 = vmatprep.subr.bf16.mxu0 0
        %4221 = vmatpush1.bf16.xpose.msra.mxu0 0
        %4222 = vmatprep.subr.bf16.mxu0 0
        %4223 = vmatpush1.bf16.xpose.msra.mxu0 0
        %4224 = vmatprep.subr.bf16.mxu0 0
        %4225 = vmatpush1.bf16.xpose.msra.mxu0 0
        %4226 = vmatprep.subr.bf16.mxu0 0
        %4227 = vmatpush1.bf16.xpose.msra.mxu0 0
        %4228 = vmatprep.subr.bf16.mxu0 0
        %4229 = vmatpush1.bf16.xpose.msra.mxu0 0
        %4230 = vmatprep.subr.bf16.mxu0 0
        %4231 = vmatpush1.bf16.xpose.msra.mxu0 0
        %4232 = vmatprep.subr.bf16.mxu0 0
        %4233 = vmatpush1.bf16.xpose.msra.mxu0 0
        %4234 = vmatprep.subr.bf16.mxu0 0
        %4235 = vmatpush1.bf16.xpose.msra.mxu0 0
        %4236 = vmatprep.subr.bf16.mxu0 0
        %4237 = vmatpush1.bf16.xpose.msra.mxu0 0
        %4238 = vmatprep.subr.bf16.mxu0 0
        %4239 = vmatpush1.bf16.xpose.msra.mxu0 0
        %4240 = vmatprep.subr.bf16.mxu0 0
        %4241 = vmatpush1.bf16.xpose.msra.mxu0 0
        %4242 = vmatprep.subr.bf16.mxu0 0
        %4243 = vmatpush1.bf16.xpose.msra.mxu0 0
        %4244 = vmatprep.subr.bf16.mxu0 0
        %4245 = vmatpush1.bf16.xpose.msra.mxu0 0
        %4246 = vmatprep.subr.bf16.mxu0 0
        %4247 = vmatpush1.bf16.xpose.msra.mxu0 0
        %4248 = vmatprep.subr.bf16.mxu0 0
        %4249 = vmatpush1.bf16.xpose.msra.mxu0 0
        %4250 = vmatprep.mubr.bf16.mxu0 0
        %4251 = vmatmul.mubr.bf16.gmra.mrb[0].mxu0 %v4213
        %v4252 = vpop.f32.mrb[0].mxu0
        %v4253 = vadd.f32 0.0, %v4252
        %v4254 = vpop.f32.mrb[0].mxu0
        %v4255 = vpop.f32.mrb[0].mxu0
        %v4256 = vpop.f32.mrb[0].mxu0
        %4257 = vdwg.mxu0
        %4259 = vrot.lane.b32.xlu0 %v4110, 96
        %v4260 = vpop.permute.xlu0 %4259
        %v4262 = vsel %vm1011, %v4110, 0
        %v4265 = vsel %vm1011, %v4260, 0
        %4267 = vmatprep.subr.bf16.mxu0 0
        %4268 = vmatpush1.bf16.xpose.msra.mxu0 %v4265
        %4269 = vmatprep.subr.bf16.mxu0 0
        %4270 = vmatpush1.bf16.xpose.msra.mxu0 0
        %4271 = vmatprep.subr.bf16.mxu0 0
        %4272 = vmatpush1.bf16.xpose.msra.mxu0 0
        %4273 = vmatprep.subr.bf16.mxu0 0
        %4274 = vmatpush1.bf16.xpose.msra.mxu0 0
        %4275 = vmatprep.subr.bf16.mxu0 0
        %4276 = vmatpush1.bf16.xpose.msra.mxu0 0
        %4277 = vmatprep.subr.bf16.mxu0 0
        %4278 = vmatpush1.bf16.xpose.msra.mxu0 0
        %4279 = vmatprep.subr.bf16.mxu0 0
        %4280 = vmatpush1.bf16.xpose.msra.mxu0 0
        %4281 = vmatprep.subr.bf16.mxu0 0
        %4282 = vmatpush1.bf16.xpose.msra.mxu0 0
        %4283 = vmatprep.subr.bf16.mxu0 0
        %4284 = vmatpush1.bf16.xpose.msra.mxu0 0
        %4285 = vmatprep.subr.bf16.mxu0 0
        %4286 = vmatpush1.bf16.xpose.msra.mxu0 0
        %4287 = vmatprep.subr.bf16.mxu0 0
        %4288 = vmatpush1.bf16.xpose.msra.mxu0 0
        %4289 = vmatprep.subr.bf16.mxu0 0
        %4290 = vmatpush1.bf16.xpose.msra.mxu0 0
        %4291 = vmatprep.subr.bf16.mxu0 0
        %4292 = vmatpush1.bf16.xpose.msra.mxu0 0
        %4293 = vmatprep.subr.bf16.mxu0 0
        %4294 = vmatpush1.bf16.xpose.msra.mxu0 0
        %4295 = vmatprep.subr.bf16.mxu0 0
        %4296 = vmatpush1.bf16.xpose.msra.mxu0 0
        %4297 = vmatprep.subr.bf16.mxu0 0
        %4298 = vmatpush1.bf16.xpose.msra.mxu0 0
        %4299 = vmatprep.mubr.bf16.mxu0 0
        %4300 = vmatmul.mubr.bf16.gmra.mrb[0].mxu0 %v4262
        %v4301 = vpop.f32.mrb[0].mxu0
        %v4302 = vadd.f32 0.0, %v4301
        %v4303 = vpop.f32.mrb[0].mxu0
        %v4304 = vpop.f32.mrb[0].mxu0
        %v4305 = vpop.f32.mrb[0].mxu0
        %4306 = vdwg.mxu0
        %v4307 = vmul.f32 %v4155, 0.35355338
        %v4308 = vmul.f32 %v4204, 0.35355338
        %v4309 = vmul.f32 %v4253, 0.35355338
        %v4310 = vmul.f32 %v4302, 0.35355338
        %v4311 = vadd.f32 %v4307, %v777
        %v4312 = vadd.f32 %v4308, %v777
        %v4313 = vadd.f32 %v4309, %v777
        %v4314 = vadd.f32 %v4310, %v777
        %v4315 = vsel %vm1011, %v4311, -inf
        %4316 = vmax.xlane.f32.xlu0 %v4315
        %v4317 = vpop.xlane.xlu0 %4316
        %v4318 = vsel %vm1011, %v4312, -inf
        %4319 = vmax.xlane.f32.xlu0 %v4318
        %v4320 = vpop.xlane.xlu0 %4319
        %v4321 = vsel %vm1011, %v4313, -inf
        %4322 = vmax.xlane.f32.xlu0 %v4321
        %v4323 = vpop.xlane.xlu0 %4322
        %v4324 = vsel %vm1011, %v4314, -inf
        %4325 = vmax.xlane.f32.xlu0 %v4324
        %v4326 = vpop.xlane.xlu0 %4325
        %v4327 = vsub.f32 %v4311, %v4317
        %v4328 = vsub.f32 %v4312, %v4320
        %v4329 = vsub.f32 %v4313, %v4323
        %v4330 = vsub.f32 %v4314, %v4326
        %v4331 = vmul.f32 %v4327, 1.442695
        %v4332 = vpow.pop %v4331
        %v4333 = vmul.f32 %v4328, 1.442695
        %v4334 = vpow.pop %v4333
        %v4335 = vmul.f32 %v4329, 1.442695
        %v4336 = vpow.pop %v4335
        %v4337 = vmul.f32 %v4330, 1.442695
        %v4338 = vpow.pop %v4337
        %v4339 = vsel %vm1011, %v4332, 0.0
        %4340 = vadd.xlane.f32.xlu0 %v4339
        %v4341 = vpop.xlane.xlu0 %4340
        %v4342 = vsel %vm1011, %v4334, 0.0
        %4343 = vadd.xlane.f32.xlu0 %v4342
        %v4344 = vpop.xlane.xlu0 %4343
        %v4345 = vsel %vm1011, %v4336, 0.0
        %4346 = vadd.xlane.f32.xlu0 %v4345
        %v4347 = vpop.xlane.xlu0 %4346
        %v4348 = vsel %vm1011, %v4338, 0.0
        %4349 = vadd.xlane.f32.xlu0 %v4348
        %v4350 = vpop.xlane.xlu0 %4349
        %v4351 = vrcp.pop %v4341
        %v4352 = vmul.f32 %v4332, %v4351
        %v4353 = vrcp.pop %v4344
        %v4354 = vmul.f32 %v4334, %v4353
        %v4355 = vrcp.pop %v4347
        %v4356 = vmul.f32 %v4336, %v4355
        %v4357 = vrcp.pop %v4350
        %v4358 = vmul.f32 %v4338, %v4357
        %v4359 = vpack.c.bf16 %v4352, %v4352
        %v4360 = vpack.c.bf16 %v4354, %v4354
        %v4361 = vpack.c.bf16 %v4356, %v4356
        %v4362 = vpack.c.bf16 %v4358, %v4358
        %4363 = vrot.lane.b32.xlu0 %v4107, 64
        %v4364 = vpop.permute.xlu0 %4363
        %v4366 = vsel %vm1011, %v4359, 0
        %v4369 = vsel %vm1270, %v4364, 0
        %4371 = vmatprep.subr.bf16.mxu0 0
        %4372 = vmatpush1.bf16.msra.mxu0 %v4369
        %4373 = vmatprep.subr.bf16.mxu0 0
        %4374 = vmatpush1.bf16.msra.mxu0 0
        %4375 = vmatprep.subr.bf16.mxu0 0
        %4376 = vmatpush1.bf16.msra.mxu0 0
        %4377 = vmatprep.subr.bf16.mxu0 0
        %4378 = vmatpush1.bf16.msra.mxu0 0
        %4379 = vmatprep.subr.bf16.mxu0 0
        %4380 = vmatpush1.bf16.msra.mxu0 0
        %4381 = vmatprep.subr.bf16.mxu0 0
        %4382 = vmatpush1.bf16.msra.mxu0 0
        %4383 = vmatprep.subr.bf16.mxu0 0
        %4384 = vmatpush1.bf16.msra.mxu0 0
        %4385 = vmatprep.subr.bf16.mxu0 0
        %4386 = vmatpush1.bf16.msra.mxu0 0
        %4387 = vmatprep.subr.bf16.mxu0 0
        %4388 = vmatpush1.bf16.msra.mxu0 0
        %4389 = vmatprep.subr.bf16.mxu0 0
        %4390 = vmatpush1.bf16.msra.mxu0 0
        %4391 = vmatprep.subr.bf16.mxu0 0
        %4392 = vmatpush1.bf16.msra.mxu0 0
        %4393 = vmatprep.subr.bf16.mxu0 0
        %4394 = vmatpush1.bf16.msra.mxu0 0
        %4395 = vmatprep.subr.bf16.mxu0 0
        %4396 = vmatpush1.bf16.msra.mxu0 0
        %4397 = vmatprep.subr.bf16.mxu0 0
        %4398 = vmatpush1.bf16.msra.mxu0 0
        %4399 = vmatprep.subr.bf16.mxu0 0
        %4400 = vmatpush1.bf16.msra.mxu0 0
        %4401 = vmatprep.subr.bf16.mxu0 0
        %4402 = vmatpush1.bf16.msra.mxu0 0
        %4403 = vmatprep.mubr.bf16.mxu0 0
        %4404 = vmatmul.mubr.bf16.gmra.mrb[0].mxu0 %v4366
        %v4405 = vpop.f32.mrb[0].mxu0
        %v4406 = vadd.f32 0.0, %v4405
        %v4407 = vpop.f32.mrb[0].mxu0
        %v4408 = vpop.f32.mrb[0].mxu0
        %v4409 = vpop.f32.mrb[0].mxu0
        %4410 = vdwg.mxu0
        %4411 = vrot.lane.b32.xlu0 %v4108, 64
        %v4412 = vpop.permute.xlu0 %4411
        %v4414 = vsel %vm1011, %v4360, 0
        %v4417 = vsel %vm1270, %v4412, 0
        %4419 = vmatprep.subr.bf16.mxu0 0
        %4420 = vmatpush1.bf16.msra.mxu0 %v4417
        %4421 = vmatprep.subr.bf16.mxu0 0
        %4422 = vmatpush1.bf16.msra.mxu0 0
        %4423 = vmatprep.subr.bf16.mxu0 0
        %4424 = vmatpush1.bf16.msra.mxu0 0
        %4425 = vmatprep.subr.bf16.mxu0 0
        %4426 = vmatpush1.bf16.msra.mxu0 0
        %4427 = vmatprep.subr.bf16.mxu0 0
        %4428 = vmatpush1.bf16.msra.mxu0 0
        %4429 = vmatprep.subr.bf16.mxu0 0
        %4430 = vmatpush1.bf16.msra.mxu0 0
        %4431 = vmatprep.subr.bf16.mxu0 0
        %4432 = vmatpush1.bf16.msra.mxu0 0
        %4433 = vmatprep.subr.bf16.mxu0 0
        %4434 = vmatpush1.bf16.msra.mxu0 0
        %4435 = vmatprep.subr.bf16.mxu0 0
        %4436 = vmatpush1.bf16.msra.mxu0 0
        %4437 = vmatprep.subr.bf16.mxu0 0
        %4438 = vmatpush1.bf16.msra.mxu0 0
        %4439 = vmatprep.subr.bf16.mxu0 0
        %4440 = vmatpush1.bf16.msra.mxu0 0
        %4441 = vmatprep.subr.bf16.mxu0 0
        %4442 = vmatpush1.bf16.msra.mxu0 0
        %4443 = vmatprep.subr.bf16.mxu0 0
        %4444 = vmatpush1.bf16.msra.mxu0 0
        %4445 = vmatprep.subr.bf16.mxu0 0
        %4446 = vmatpush1.bf16.msra.mxu0 0
        %4447 = vmatprep.subr.bf16.mxu0 0
        %4448 = vmatpush1.bf16.msra.mxu0 0
        %4449 = vmatprep.subr.bf16.mxu0 0
        %4450 = vmatpush1.bf16.msra.mxu0 0
        %4451 = vmatprep.mubr.bf16.mxu0 0
        %4452 = vmatmul.mubr.bf16.gmra.mrb[0].mxu0 %v4414
        %v4453 = vpop.f32.mrb[0].mxu0
        %v4454 = vadd.f32 0.0, %v4453
        %v4455 = vpop.f32.mrb[0].mxu0
        %v4456 = vpop.f32.mrb[0].mxu0
        %v4457 = vpop.f32.mrb[0].mxu0
        %4458 = vdwg.mxu0
        %4459 = vrot.lane.b32.xlu0 %v4109, 64
        %v4460 = vpop.permute.xlu0 %4459
        %v4462 = vsel %vm1011, %v4361, 0
        %v4465 = vsel %vm1270, %v4460, 0
        %4467 = vmatprep.subr.bf16.mxu0 0
        %4468 = vmatpush1.bf16.msra.mxu0 %v4465
        %4469 = vmatprep.subr.bf16.mxu0 0
        %4470 = vmatpush1.bf16.msra.mxu0 0
        %4471 = vmatprep.subr.bf16.mxu0 0
        %4472 = vmatpush1.bf16.msra.mxu0 0
        %4473 = vmatprep.subr.bf16.mxu0 0
        %4474 = vmatpush1.bf16.msra.mxu0 0
        %4475 = vmatprep.subr.bf16.mxu0 0
        %4476 = vmatpush1.bf16.msra.mxu0 0
        %4477 = vmatprep.subr.bf16.mxu0 0
        %4478 = vmatpush1.bf16.msra.mxu0 0
        %4479 = vmatprep.subr.bf16.mxu0 0
        %4480 = vmatpush1.bf16.msra.mxu0 0
        %4481 = vmatprep.subr.bf16.mxu0 0
        %4482 = vmatpush1.bf16.msra.mxu0 0
        %4483 = vmatprep.subr.bf16.mxu0 0
        %4484 = vmatpush1.bf16.msra.mxu0 0
        %4485 = vmatprep.subr.bf16.mxu0 0
        %4486 = vmatpush1.bf16.msra.mxu0 0
        %4487 = vmatprep.subr.bf16.mxu0 0
        %4488 = vmatpush1.bf16.msra.mxu0 0
        %4489 = vmatprep.subr.bf16.mxu0 0
        %4490 = vmatpush1.bf16.msra.mxu0 0
        %4491 = vmatprep.subr.bf16.mxu0 0
        %4492 = vmatpush1.bf16.msra.mxu0 0
        %4493 = vmatprep.subr.bf16.mxu0 0
        %4494 = vmatpush1.bf16.msra.mxu0 0
        %4495 = vmatprep.subr.bf16.mxu0 0
        %4496 = vmatpush1.bf16.msra.mxu0 0
        %4497 = vmatprep.subr.bf16.mxu0 0
        %4498 = vmatpush1.bf16.msra.mxu0 0
        %4499 = vmatprep.mubr.bf16.mxu0 0
        %4500 = vmatmul.mubr.bf16.gmra.mrb[0].mxu0 %v4462
        %v4501 = vpop.f32.mrb[0].mxu0
        %v4502 = vadd.f32 0.0, %v4501
        %v4503 = vpop.f32.mrb[0].mxu0
        %v4504 = vpop.f32.mrb[0].mxu0
        %v4505 = vpop.f32.mrb[0].mxu0
        %4506 = vdwg.mxu0
        %4507 = vrot.lane.b32.xlu0 %v4110, 64
        %v4508 = vpop.permute.xlu0 %4507
        %v4510 = vsel %vm1011, %v4362, 0
        %v4513 = vsel %vm1270, %v4508, 0
        %4515 = vmatprep.subr.bf16.mxu0 0
        %4516 = vmatpush1.bf16.msra.mxu0 %v4513
        %4517 = vmatprep.subr.bf16.mxu0 0
        %4518 = vmatpush1.bf16.msra.mxu0 0
        %4519 = vmatprep.subr.bf16.mxu0 0
        %4520 = vmatpush1.bf16.msra.mxu0 0
        %4521 = vmatprep.subr.bf16.mxu0 0
        %4522 = vmatpush1.bf16.msra.mxu0 0
        %4523 = vmatprep.subr.bf16.mxu0 0
        %4524 = vmatpush1.bf16.msra.mxu0 0
        %4525 = vmatprep.subr.bf16.mxu0 0
        %4526 = vmatpush1.bf16.msra.mxu0 0
        %4527 = vmatprep.subr.bf16.mxu0 0
        %4528 = vmatpush1.bf16.msra.mxu0 0
        %4529 = vmatprep.subr.bf16.mxu0 0
        %4530 = vmatpush1.bf16.msra.mxu0 0
        %4531 = vmatprep.subr.bf16.mxu0 0
        %4532 = vmatpush1.bf16.msra.mxu0 0
        %4533 = vmatprep.subr.bf16.mxu0 0
        %4534 = vmatpush1.bf16.msra.mxu0 0
        %4535 = vmatprep.subr.bf16.mxu0 0
        %4536 = vmatpush1.bf16.msra.mxu0 0
        %4537 = vmatprep.subr.bf16.mxu0 0
        %4538 = vmatpush1.bf16.msra.mxu0 0
        %4539 = vmatprep.subr.bf16.mxu0 0
        %4540 = vmatpush1.bf16.msra.mxu0 0
        %4541 = vmatprep.subr.bf16.mxu0 0
        %4542 = vmatpush1.bf16.msra.mxu0 0
        %4543 = vmatprep.subr.bf16.mxu0 0
        %4544 = vmatpush1.bf16.msra.mxu0 0
        %4545 = vmatprep.subr.bf16.mxu0 0
        %4546 = vmatpush1.bf16.msra.mxu0 0
        %4547 = vmatprep.mubr.bf16.mxu0 0
        %4548 = vmatmul.mubr.bf16.gmra.mrb[0].mxu0 %v4510
        %v4549 = vpop.f32.mrb[0].mxu0
        %v4550 = vadd.f32 0.0, %v4549
        %v4551 = vpop.f32.mrb[0].mxu0
        %v4552 = vpop.f32.mrb[0].mxu0
        %v4553 = vpop.f32.mrb[0].mxu0
        %4554 = vdwg.mxu0
        %4556 = vrot.lane.b32.xlu0 %v4454, 8
        %v4557 = vpop.permute.xlu0 %4556
        %4560 = vrot.lane.b32.xlu0 %v4502, 16
        %v4561 = vpop.permute.xlu0 %4560
        %4564 = vrot.lane.b32.xlu0 %v4550, 24
        %v4565 = vpop.permute.xlu0 %4564
        %v4567 = vsel %vm1011, %v4406, %v4557
        %v4568 = vsel %vm1471, %v4567, %v4561
        %v4569 = vsel %vm1473, %v4568, %v4565
        %v4570 = vld [vmem:[%s12] sm:$0xf]
        %v4571 = vld [vmem:[%s12 + $0x4] sm:$0xf]
        %v4572 = vld [vmem:[%s12 + $0x8] sm:$0xf]
        %v4573 = vld [vmem:[%s12 + $0xc] sm:$0xf]
        %v4574 = vpack.c.bf16 %v4569, %v4096
        %v4575 = vlaneseq
        %v4576 = vshrl.u32 %v4575, 7
        %v4577 = vsub.s32 1, %v4576
        %v4578 = vrot.slane %v3557, %v4577
        %v4583 = vunpack.c.l.b16 %v4570
        %v4584 = vunpack.c.l.b16 %v4571
        %v4585 = vunpack.c.l.b16 %v4572
        %v4586 = vunpack.c.l.b16 %v4573
        %v4587 = vpack.c.b16 %v4584, %v4583
        %v4588 = vpack.c.b16 %v4586, %v4585
        %v4592 = vsel %vm810, %v4574, 0
        %4594 = vmatprep.subr.bf16.mxu0 0
        %4595 = vmatpush1.bf16.msra.mxu0 %v4587
        %4596 = vmatprep.subr.bf16.mxu0 0
        %4597 = vmatpush1.bf16.msra.mxu0 %v4588
        %4598 = vmatprep.subr.bf16.mxu0 0
        %4599 = vmatpush1.bf16.msra.mxu0 0
        %4600 = vmatprep.subr.bf16.mxu0 0
        %4601 = vmatpush1.bf16.msra.mxu0 0
        %4602 = vmatprep.subr.bf16.mxu0 0
        %4603 = vmatpush1.bf16.msra.mxu0 0
        %4604 = vmatprep.subr.bf16.mxu0 0
        %4605 = vmatpush1.bf16.msra.mxu0 0
        %4606 = vmatprep.subr.bf16.mxu0 0
        %4607 = vmatpush1.bf16.msra.mxu0 0
        %4608 = vmatprep.subr.bf16.mxu0 0
        %4609 = vmatpush1.bf16.msra.mxu0 0
        %4610 = vmatprep.subr.bf16.mxu0 0
        %4611 = vmatpush1.bf16.msra.mxu0 0
        %4612 = vmatprep.subr.bf16.mxu0 0
        %4613 = vmatpush1.bf16.msra.mxu0 0
        %4614 = vmatprep.subr.bf16.mxu0 0
        %4615 = vmatpush1.bf16.msra.mxu0 0
        %4616 = vmatprep.subr.bf16.mxu0 0
        %4617 = vmatpush1.bf16.msra.mxu0 0
        %4618 = vmatprep.subr.bf16.mxu0 0
        %4619 = vmatpush1.bf16.msra.mxu0 0
        %4620 = vmatprep.subr.bf16.mxu0 0
        %4621 = vmatpush1.bf16.msra.mxu0 0
        %4622 = vmatprep.subr.bf16.mxu0 0
        %4623 = vmatpush1.bf16.msra.mxu0 0
        %4624 = vmatprep.subr.bf16.mxu0 0
        %4625 = vmatpush1.bf16.msra.mxu0 0
        %4626 = vmatprep.mubr.bf16.mxu0 0
        %4627 = vmatmul.mubr.bf16.gmra.mrb[0].mxu0 %v4592
        %v4628 = vpop.f32.mrb[0].mxu0
        %v4629 = vadd.f32 %v4578, %v4628
        %v4630 = vpop.f32.mrb[0].mxu0
        %v4631 = vpop.f32.mrb[0].mxu0
        %v4632 = vadd.f32 %v4578, %v4631
        %v4633 = vpop.f32.mrb[0].mxu0
        %4634 = vdwg.mxu0
        %v4635 = vadd.f32 %v922, %v4629
        %v4636 = vadd.f32 %v925, %v4632
        %v4637 = vsel %vm810, %v4635, 0.0
        %4638 = vadd.xlane.f32.xlu0 %v4637
        %v4639 = vpop.xlane.xlu0 %4638
        %v4640 = vsel %vm810, %v4636, 0.0
        %4641 = vadd.xlane.f32.xlu0 %v4640
        %v4642 = vpop.xlane.xlu0 %4641
        %v4643 = vmul.f32 %v4639, %v2025
        %v4644 = vmul.f32 %v4642, %v2025
        %v4645 = vsub.f32 %v4635, %v4643
        %v4646 = vsub.f32 %v4636, %v4644
        %v4647 = vmul.f32 %v4645, %v4645
        %v4648 = vmul.f32 %v4646, %v4646
        %v4649 = vsel %vm810, %v4647, 0.0
        %4650 = vadd.xlane.f32.xlu0 %v4649
        %v4651 = vpop.xlane.xlu0 %4650
        %v4652 = vsel %vm810, %v4648, 0.0
        %4653 = vadd.xlane.f32.xlu0 %v4652
        %v4654 = vpop.xlane.xlu0 %4653
        %v4655 = vmul.f32 %v4651, %v2025
        %v4656 = vmul.f32 %v4654, %v2025
        %v4657 = vadd.f32 %v4655, 1e-05
        %v4658 = vadd.f32 %v4656, 1e-05
        %v4659 = vrsqrt.pop %v4657
        %v4660 = vrsqrt.pop %v4658
        %v4661 = vmul.f32 %v4645, %v4659
        %v4662 = vmul.f32 %v4646, %v4660
        %v4663 = vlaneseq
        %v4664 = vshrl.u32 %v4663, 7
        %v4665 = vsub.s32 2, %v4664
        %v4666 = vrot.slane %v3557, %v4665
        %v4667 = vmul.f32 %v4661, %v4666
        %v4668 = vmul.f32 %v4662, %v4666
        %v4669 = vlaneseq
        %v4670 = vshrl.u32 %v4669, 7
        %v4671 = vsub.s32 3, %v4670
        %v4672 = vrot.slane %v3557, %v4671
        %v4673 = vadd.f32 %v4667, %v4672
        %v4674 = vadd.f32 %v4668, %v4672
        %v4675 = vld [vmem:[%s13] sm:$0xf]
        %v4676 = vld [vmem:[%s13 + $0x4] sm:$0xf]
        %v4677 = vld [vmem:[%s13 + $0x8] sm:$0xf]
        %v4678 = vld [vmem:[%s13 + $0xc] sm:$0xf]
        %v4679 = vpack.c.bf16 %v4674, %v4673
        %v4680 = vlaneseq
        %v4681 = vshrl.u32 %v4680, 7
        %v4682 = vsub.s32 4, %v4681
        %v4683 = vrot.slane %v3557, %v4682
        %v4688 = vunpack.c.l.b16 %v4675
        %v4689 = vunpack.c.l.b16 %v4676
        %v4690 = vunpack.c.l.b16 %v4677
        %v4691 = vunpack.c.l.b16 %v4678
        %v4692 = vpack.c.b16 %v4689, %v4688
        %v4693 = vpack.c.b16 %v4691, %v4690
        %v4697 = vsel %vm810, %v4679, 0
        %4699 = vmatprep.subr.bf16.mxu0 0
        %4700 = vmatpush1.bf16.msra.mxu0 %v4692
        %4701 = vmatprep.subr.bf16.mxu0 0
        %4702 = vmatpush1.bf16.msra.mxu0 %v4693
        %4703 = vmatprep.subr.bf16.mxu0 0
        %4704 = vmatpush1.bf16.msra.mxu0 0
        %4705 = vmatprep.subr.bf16.mxu0 0
        %4706 = vmatpush1.bf16.msra.mxu0 0
        %4707 = vmatprep.subr.bf16.mxu0 0
        %4708 = vmatpush1.bf16.msra.mxu0 0
        %4709 = vmatprep.subr.bf16.mxu0 0
        %4710 = vmatpush1.bf16.msra.mxu0 0
        %4711 = vmatprep.subr.bf16.mxu0 0
        %4712 = vmatpush1.bf16.msra.mxu0 0
        %4713 = vmatprep.subr.bf16.mxu0 0
        %4714 = vmatpush1.bf16.msra.mxu0 0
        %4715 = vmatprep.subr.bf16.mxu0 0
        %4716 = vmatpush1.bf16.msra.mxu0 0
        %4717 = vmatprep.subr.bf16.mxu0 0
        %4718 = vmatpush1.bf16.msra.mxu0 0
        %4719 = vmatprep.subr.bf16.mxu0 0
        %4720 = vmatpush1.bf16.msra.mxu0 0
        %4721 = vmatprep.subr.bf16.mxu0 0
        %4722 = vmatpush1.bf16.msra.mxu0 0
        %4723 = vmatprep.subr.bf16.mxu0 0
        %4724 = vmatpush1.bf16.msra.mxu0 0
        %4725 = vmatprep.subr.bf16.mxu0 0
        %4726 = vmatpush1.bf16.msra.mxu0 0
        %4727 = vmatprep.subr.bf16.mxu0 0
        %4728 = vmatpush1.bf16.msra.mxu0 0
        %4729 = vmatprep.subr.bf16.mxu0 0
        %4730 = vmatpush1.bf16.msra.mxu0 0
        %4731 = vmatprep.mubr.bf16.mxu0 0
        %4732 = vmatmul.mubr.bf16.gmra.mrb[0].mxu0 %v4697
        %v4733 = vpop.f32.mrb[0].mxu0
        %v4734 = vadd.f32 %v4683, %v4733
        %v4735 = vpop.f32.mrb[0].mxu0
        %v4736 = vpop.f32.mrb[0].mxu0
        %v4737 = vadd.f32 %v4683, %v4736
        %v4738 = vpop.f32.mrb[0].mxu0
        %4739 = vdwg.mxu0
        %v4740 = vld [vmem:[%s14] sm:$0xf]
        %v4741 = vld [vmem:[%s14 + $0x4] sm:$0xf]
        %v4742 = vld [vmem:[%s14 + $0x8] sm:$0xf]
        %v4743 = vld [vmem:[%s14 + $0xc] sm:$0xf]
        %v4744 = vpack.c.bf16 %v3556, %v3555
        %v4745 = vlaneseq
        %v4746 = vshrl.u32 %v4745, 7
        %v4747 = vsub.s32 5, %v4746
        %v4748 = vrot.slane %v3557, %v4747
        %v4753 = vunpack.c.l.b16 %v4740
        %v4754 = vunpack.c.l.b16 %v4741
        %v4755 = vunpack.c.l.b16 %v4742
        %v4756 = vunpack.c.l.b16 %v4743
        %v4757 = vpack.c.b16 %v4754, %v4753
        %v4758 = vpack.c.b16 %v4756, %v4755
        %v4762 = vsel %vm810, %v4744, 0
        %4764 = vmatprep.subr.bf16.mxu0 0
        %4765 = vmatpush1.bf16.msra.mxu0 %v4757
        %4766 = vmatprep.subr.bf16.mxu0 0
        %4767 = vmatpush1.bf16.msra.mxu0 %v4758
        %4768 = vmatprep.subr.bf16.mxu0 0
        %4769 = vmatpush1.bf16.msra.mxu0 0
        %4770 = vmatprep.subr.bf16.mxu0 0
        %4771 = vmatpush1.bf16.msra.mxu0 0
        %4772 = vmatprep.subr.bf16.mxu0 0
        %4773 = vmatpush1.bf16.msra.mxu0 0
        %4774 = vmatprep.subr.bf16.mxu0 0
        %4775 = vmatpush1.bf16.msra.mxu0 0
        %4776 = vmatprep.subr.bf16.mxu0 0
        %4777 = vmatpush1.bf16.msra.mxu0 0
        %4778 = vmatprep.subr.bf16.mxu0 0
        %4779 = vmatpush1.bf16.msra.mxu0 0
        %4780 = vmatprep.subr.bf16.mxu0 0
        %4781 = vmatpush1.bf16.msra.mxu0 0
        %4782 = vmatprep.subr.bf16.mxu0 0
        %4783 = vmatpush1.bf16.msra.mxu0 0
        %4784 = vmatprep.subr.bf16.mxu0 0
        %4785 = vmatpush1.bf16.msra.mxu0 0
        %4786 = vmatprep.subr.bf16.mxu0 0
        %4787 = vmatpush1.bf16.msra.mxu0 0
        %4788 = vmatprep.subr.bf16.mxu0 0
        %4789 = vmatpush1.bf16.msra.mxu0 0
        %4790 = vmatprep.subr.bf16.mxu0 0
        %4791 = vmatpush1.bf16.msra.mxu0 0
        %4792 = vmatprep.subr.bf16.mxu0 0
        %4793 = vmatpush1.bf16.msra.mxu0 0
        %4794 = vmatprep.subr.bf16.mxu0 0
        %4795 = vmatpush1.bf16.msra.mxu0 0
        %4796 = vmatprep.mubr.bf16.mxu0 0
        %4797 = vmatmul.mubr.bf16.gmra.mrb[0].mxu0 %v4762
        %v4798 = vpop.f32.mrb[0].mxu0
        %v4799 = vadd.f32 %v4748, %v4798
        %v4800 = vpop.f32.mrb[0].mxu0
        %v4801 = vpop.f32.mrb[0].mxu0
        %v4802 = vadd.f32 %v4748, %v4801
        %v4803 = vpop.f32.mrb[0].mxu0
        %4804 = vdwg.mxu0
        %4806 = vrot.lane.b32.xlu0 %v4734, 120
        %v4807 = vpop.permute.xlu0 %4806
        %4809 = vrot.lane.b32.xlu0 %v4734, 112
        %v4810 = vpop.permute.xlu0 %4809
        %4812 = vrot.lane.b32.xlu0 %v4734, 104
        %v4813 = vpop.permute.xlu0 %4812
        %v4815 = vpack.c.bf16 %v4734, %v4734
        %v4816 = vpack.c.bf16 %v4807, %v4807
        %v4817 = vpack.c.bf16 %v4810, %v4810
        %v4818 = vpack.c.bf16 %v4813, %v4813
        %4820 = vrot.lane.b32.xlu0 %v4799, 120
        %v4821 = vpop.permute.xlu0 %4820
        %4823 = vrot.lane.b32.xlu0 %v4799, 112
        %v4824 = vpop.permute.xlu0 %4823
        %4826 = vrot.lane.b32.xlu0 %v4799, 104
        %v4827 = vpop.permute.xlu0 %4826
        %v4829 = vpack.c.bf16 %v4799, %v4799
        %v4830 = vpack.c.bf16 %v4821, %v4821
        %v4831 = vpack.c.bf16 %v4824, %v4824
        %v4832 = vpack.c.bf16 %v4827, %v4827
        %v4834 = vsel %vm1011, %v4815, 0
        %v4837 = vsel %vm1011, %v4829, 0
        %4839 = vmatprep.subr.bf16.mxu0 0
        %4840 = vmatpush1.bf16.xpose.msra.mxu0 %v4837
        %4841 = vmatprep.subr.bf16.mxu0 0
        %4842 = vmatpush1.bf16.xpose.msra.mxu0 0
        %4843 = vmatprep.subr.bf16.mxu0 0
        %4844 = vmatpush1.bf16.xpose.msra.mxu0 0
        %4845 = vmatprep.subr.bf16.mxu0 0
        %4846 = vmatpush1.bf16.xpose.msra.mxu0 0
        %4847 = vmatprep.subr.bf16.mxu0 0
        %4848 = vmatpush1.bf16.xpose.msra.mxu0 0
        %4849 = vmatprep.subr.bf16.mxu0 0
        %4850 = vmatpush1.bf16.xpose.msra.mxu0 0
        %4851 = vmatprep.subr.bf16.mxu0 0
        %4852 = vmatpush1.bf16.xpose.msra.mxu0 0
        %4853 = vmatprep.subr.bf16.mxu0 0
        %4854 = vmatpush1.bf16.xpose.msra.mxu0 0
        %4855 = vmatprep.subr.bf16.mxu0 0
        %4856 = vmatpush1.bf16.xpose.msra.mxu0 0
        %4857 = vmatprep.subr.bf16.mxu0 0
        %4858 = vmatpush1.bf16.xpose.msra.mxu0 0
        %4859 = vmatprep.subr.bf16.mxu0 0
        %4860 = vmatpush1.bf16.xpose.msra.mxu0 0
        %4861 = vmatprep.subr.bf16.mxu0 0
        %4862 = vmatpush1.bf16.xpose.msra.mxu0 0
        %4863 = vmatprep.subr.bf16.mxu0 0
        %4864 = vmatpush1.bf16.xpose.msra.mxu0 0
        %4865 = vmatprep.subr.bf16.mxu0 0
        %4866 = vmatpush1.bf16.xpose.msra.mxu0 0
        %4867 = vmatprep.subr.bf16.mxu0 0
        %4868 = vmatpush1.bf16.xpose.msra.mxu0 0
        %4869 = vmatprep.subr.bf16.mxu0 0
        %4870 = vmatpush1.bf16.xpose.msra.mxu0 0
        %4871 = vmatprep.mubr.bf16.mxu0 0
        %4872 = vmatmul.mubr.bf16.gmra.mrb[0].mxu0 %v4834
        %v4873 = vpop.f32.mrb[0].mxu0
        %v4874 = vadd.f32 0.0, %v4873
        %v4875 = vpop.f32.mrb[0].mxu0
        %v4876 = vpop.f32.mrb[0].mxu0
        %v4877 = vpop.f32.mrb[0].mxu0
        %4878 = vdwg.mxu0
        %v4880 = vsel %vm1011, %v4816, 0
        %v4883 = vsel %vm1011, %v4830, 0
        %4885 = vmatprep.subr.bf16.mxu0 0
        %4886 = vmatpush1.bf16.xpose.msra.mxu0 %v4883
        %4887 = vmatprep.subr.bf16.mxu0 0
        %4888 = vmatpush1.bf16.xpose.msra.mxu0 0
        %4889 = vmatprep.subr.bf16.mxu0 0
        %4890 = vmatpush1.bf16.xpose.msra.mxu0 0
        %4891 = vmatprep.subr.bf16.mxu0 0
        %4892 = vmatpush1.bf16.xpose.msra.mxu0 0
        %4893 = vmatprep.subr.bf16.mxu0 0
        %4894 = vmatpush1.bf16.xpose.msra.mxu0 0
        %4895 = vmatprep.subr.bf16.mxu0 0
        %4896 = vmatpush1.bf16.xpose.msra.mxu0 0
        %4897 = vmatprep.subr.bf16.mxu0 0
        %4898 = vmatpush1.bf16.xpose.msra.mxu0 0
        %4899 = vmatprep.subr.bf16.mxu0 0
        %4900 = vmatpush1.bf16.xpose.msra.mxu0 0
        %4901 = vmatprep.subr.bf16.mxu0 0
        %4902 = vmatpush1.bf16.xpose.msra.mxu0 0
        %4903 = vmatprep.subr.bf16.mxu0 0
        %4904 = vmatpush1.bf16.xpose.msra.mxu0 0
        %4905 = vmatprep.subr.bf16.mxu0 0
        %4906 = vmatpush1.bf16.xpose.msra.mxu0 0
        %4907 = vmatprep.subr.bf16.mxu0 0
        %4908 = vmatpush1.bf16.xpose.msra.mxu0 0
        %4909 = vmatprep.subr.bf16.mxu0 0
        %4910 = vmatpush1.bf16.xpose.msra.mxu0 0
        %4911 = vmatprep.subr.bf16.mxu0 0
        %4912 = vmatpush1.bf16.xpose.msra.mxu0 0
        %4913 = vmatprep.subr.bf16.mxu0 0
        %4914 = vmatpush1.bf16.xpose.msra.mxu0 0
        %4915 = vmatprep.subr.bf16.mxu0 0
        %4916 = vmatpush1.bf16.xpose.msra.mxu0 0
        %4917 = vmatprep.mubr.bf16.mxu0 0
        %4918 = vmatmul.mubr.bf16.gmra.mrb[0].mxu0 %v4880
        %v4919 = vpop.f32.mrb[0].mxu0
        %v4920 = vadd.f32 0.0, %v4919
        %v4921 = vpop.f32.mrb[0].mxu0
        %v4922 = vpop.f32.mrb[0].mxu0
        %v4923 = vpop.f32.mrb[0].mxu0
        %4924 = vdwg.mxu0
        %v4926 = vsel %vm1011, %v4817, 0
        %v4929 = vsel %vm1011, %v4831, 0
        %4931 = vmatprep.subr.bf16.mxu0 0
        %4932 = vmatpush1.bf16.xpose.msra.mxu0 %v4929
        %4933 = vmatprep.subr.bf16.mxu0 0
        %4934 = vmatpush1.bf16.xpose.msra.mxu0 0
        %4935 = vmatprep.subr.bf16.mxu0 0
        %4936 = vmatpush1.bf16.xpose.msra.mxu0 0
        %4937 = vmatprep.subr.bf16.mxu0 0
        %4938 = vmatpush1.bf16.xpose.msra.mxu0 0
        %4939 = vmatprep.subr.bf16.mxu0 0
        %4940 = vmatpush1.bf16.xpose.msra.mxu0 0
        %4941 = vmatprep.subr.bf16.mxu0 0
        %4942 = vmatpush1.bf16.xpose.msra.mxu0 0
        %4943 = vmatprep.subr.bf16.mxu0 0
        %4944 = vmatpush1.bf16.xpose.msra.mxu0 0
        %4945 = vmatprep.subr.bf16.mxu0 0
        %4946 = vmatpush1.bf16.xpose.msra.mxu0 0
        %4947 = vmatprep.subr.bf16.mxu0 0
        %4948 = vmatpush1.bf16.xpose.msra.mxu0 0
        %4949 = vmatprep.subr.bf16.mxu0 0
        %4950 = vmatpush1.bf16.xpose.msra.mxu0 0
        %4951 = vmatprep.subr.bf16.mxu0 0
        %4952 = vmatpush1.bf16.xpose.msra.mxu0 0
        %4953 = vmatprep.subr.bf16.mxu0 0
        %4954 = vmatpush1.bf16.xpose.msra.mxu0 0
        %4955 = vmatprep.subr.bf16.mxu0 0
        %4956 = vmatpush1.bf16.xpose.msra.mxu0 0
        %4957 = vmatprep.subr.bf16.mxu0 0
        %4958 = vmatpush1.bf16.xpose.msra.mxu0 0
        %4959 = vmatprep.subr.bf16.mxu0 0
        %4960 = vmatpush1.bf16.xpose.msra.mxu0 0
        %4961 = vmatprep.subr.bf16.mxu0 0
        %4962 = vmatpush1.bf16.xpose.msra.mxu0 0
        %4963 = vmatprep.mubr.bf16.mxu0 0
        %4964 = vmatmul.mubr.bf16.gmra.mrb[0].mxu0 %v4926
        %v4965 = vpop.f32.mrb[0].mxu0
        %v4966 = vadd.f32 0.0, %v4965
        %v4967 = vpop.f32.mrb[0].mxu0
        %v4968 = vpop.f32.mrb[0].mxu0
        %v4969 = vpop.f32.mrb[0].mxu0
        %4970 = vdwg.mxu0
        %v4972 = vsel %vm1011, %v4818, 0
        %v4975 = vsel %vm1011, %v4832, 0
        %4977 = vmatprep.subr.bf16.mxu0 0
        %4978 = vmatpush1.bf16.xpose.msra.mxu0 %v4975
        %4979 = vmatprep.subr.bf16.mxu0 0
        %4980 = vmatpush1.bf16.xpose.msra.mxu0 0
        %4981 = vmatprep.subr.bf16.mxu0 0
        %4982 = vmatpush1.bf16.xpose.msra.mxu0 0
        %4983 = vmatprep.subr.bf16.mxu0 0
        %4984 = vmatpush1.bf16.xpose.msra.mxu0 0
        %4985 = vmatprep.subr.bf16.mxu0 0
        %4986 = vmatpush1.bf16.xpose.msra.mxu0 0
        %4987 = vmatprep.subr.bf16.mxu0 0
        %4988 = vmatpush1.bf16.xpose.msra.mxu0 0
        %4989 = vmatprep.subr.bf16.mxu0 0
        %4990 = vmatpush1.bf16.xpose.msra.mxu0 0
        %4991 = vmatprep.subr.bf16.mxu0 0
        %4992 = vmatpush1.bf16.xpose.msra.mxu0 0
        %4993 = vmatprep.subr.bf16.mxu0 0
        %4994 = vmatpush1.bf16.xpose.msra.mxu0 0
        %4995 = vmatprep.subr.bf16.mxu0 0
        %4996 = vmatpush1.bf16.xpose.msra.mxu0 0
        %4997 = vmatprep.subr.bf16.mxu0 0
        %4998 = vmatpush1.bf16.xpose.msra.mxu0 0
        %4999 = vmatprep.subr.bf16.mxu0 0
        %5000 = vmatpush1.bf16.xpose.msra.mxu0 0
        %5001 = vmatprep.subr.bf16.mxu0 0
        %5002 = vmatpush1.bf16.xpose.msra.mxu0 0
        %5003 = vmatprep.subr.bf16.mxu0 0
        %5004 = vmatpush1.bf16.xpose.msra.mxu0 0
        %5005 = vmatprep.subr.bf16.mxu0 0
        %5006 = vmatpush1.bf16.xpose.msra.mxu0 0
        %5007 = vmatprep.subr.bf16.mxu0 0
        %5008 = vmatpush1.bf16.xpose.msra.mxu0 0
        %5009 = vmatprep.mubr.bf16.mxu0 0
        %5010 = vmatmul.mubr.bf16.gmra.mrb[0].mxu0 %v4972
        %v5011 = vpop.f32.mrb[0].mxu0
        %v5012 = vadd.f32 0.0, %v5011
        %v5013 = vpop.f32.mrb[0].mxu0
        %v5014 = vpop.f32.mrb[0].mxu0
        %v5015 = vpop.f32.mrb[0].mxu0
        %5016 = vdwg.mxu0
        %v5017 = vmul.f32 %v4874, 0.35355338
        %v5018 = vmul.f32 %v4920, 0.35355338
        %v5019 = vmul.f32 %v4966, 0.35355338
        %v5020 = vmul.f32 %v5012, 0.35355338
        %v5021 = vadd.f32 %v5017, %v1212
        %v5022 = vadd.f32 %v5018, %v1212
        %v5023 = vadd.f32 %v5019, %v1212
        %v5024 = vadd.f32 %v5020, %v1212
        %v5025 = vsel %vm1011, %v5021, -inf
        %5026 = vmax.xlane.f32.xlu0 %v5025
        %v5027 = vpop.xlane.xlu0 %5026
        %v5028 = vsel %vm1011, %v5022, -inf
        %5029 = vmax.xlane.f32.xlu0 %v5028
        %v5030 = vpop.xlane.xlu0 %5029
        %v5031 = vsel %vm1011, %v5023, -inf
        %5032 = vmax.xlane.f32.xlu0 %v5031
        %v5033 = vpop.xlane.xlu0 %5032
        %v5034 = vsel %vm1011, %v5024, -inf
        %5035 = vmax.xlane.f32.xlu0 %v5034
        %v5036 = vpop.xlane.xlu0 %5035
        %v5037 = vsub.f32 %v5021, %v5027
        %v5038 = vsub.f32 %v5022, %v5030
        %v5039 = vsub.f32 %v5023, %v5033
        %v5040 = vsub.f32 %v5024, %v5036
        %v5041 = vmul.f32 %v5037, 1.442695
        %v5042 = vpow.pop %v5041
        %v5043 = vmul.f32 %v5038, 1.442695
        %v5044 = vpow.pop %v5043
        %v5045 = vmul.f32 %v5039, 1.442695
        %v5046 = vpow.pop %v5045
        %v5047 = vmul.f32 %v5040, 1.442695
        %v5048 = vpow.pop %v5047
        %v5049 = vsel %vm1011, %v5042, 0.0
        %5050 = vadd.xlane.f32.xlu0 %v5049
        %v5051 = vpop.xlane.xlu0 %5050
        %v5052 = vsel %vm1011, %v5044, 0.0
        %5053 = vadd.xlane.f32.xlu0 %v5052
        %v5054 = vpop.xlane.xlu0 %5053
        %v5055 = vsel %vm1011, %v5046, 0.0
        %5056 = vadd.xlane.f32.xlu0 %v5055
        %v5057 = vpop.xlane.xlu0 %5056
        %v5058 = vsel %vm1011, %v5048, 0.0
        %5059 = vadd.xlane.f32.xlu0 %v5058
        %v5060 = vpop.xlane.xlu0 %5059
        %v5061 = vrcp.pop %v5051
        %v5062 = vmul.f32 %v5042, %v5061
        %v5063 = vrcp.pop %v5054
        %v5064 = vmul.f32 %v5044, %v5063
        %v5065 = vrcp.pop %v5057
        %v5066 = vmul.f32 %v5046, %v5065
        %v5067 = vrcp.pop %v5060
        %v5068 = vmul.f32 %v5048, %v5067
        %v5069 = vpack.c.bf16 %v5062, %v5062
        %v5070 = vpack.c.bf16 %v5064, %v5064
        %v5071 = vpack.c.bf16 %v5066, %v5066
        %v5072 = vpack.c.bf16 %v5068, %v5068
        %5074 = vrot.lane.b32.xlu0 %v4829, 96
        %v5075 = vpop.permute.xlu0 %5074
        %v5077 = vsel %vm1011, %v5069, 0
        %v5080 = vsel %vm1270, %v5075, 0
        %5082 = vmatprep.subr.bf16.mxu0 0
        %5083 = vmatpush1.bf16.msra.mxu0 %v5080
        %5084 = vmatprep.subr.bf16.mxu0 0
        %5085 = vmatpush1.bf16.msra.mxu0 0
        %5086 = vmatprep.subr.bf16.mxu0 0
        %5087 = vmatpush1.bf16.msra.mxu0 0
        %5088 = vmatprep.subr.bf16.mxu0 0
        %5089 = vmatpush1.bf16.msra.mxu0 0
        %5090 = vmatprep.subr.bf16.mxu0 0
        %5091 = vmatpush1.bf16.msra.mxu0 0
        %5092 = vmatprep.subr.bf16.mxu0 0
        %5093 = vmatpush1.bf16.msra.mxu0 0
        %5094 = vmatprep.subr.bf16.mxu0 0
        %5095 = vmatpush1.bf16.msra.mxu0 0
        %5096 = vmatprep.subr.bf16.mxu0 0
        %5097 = vmatpush1.bf16.msra.mxu0 0
        %5098 = vmatprep.subr.bf16.mxu0 0
        %5099 = vmatpush1.bf16.msra.mxu0 0
        %5100 = vmatprep.subr.bf16.mxu0 0
        %5101 = vmatpush1.bf16.msra.mxu0 0
        %5102 = vmatprep.subr.bf16.mxu0 0
        %5103 = vmatpush1.bf16.msra.mxu0 0
        %5104 = vmatprep.subr.bf16.mxu0 0
        %5105 = vmatpush1.bf16.msra.mxu0 0
        %5106 = vmatprep.subr.bf16.mxu0 0
        %5107 = vmatpush1.bf16.msra.mxu0 0
        %5108 = vmatprep.subr.bf16.mxu0 0
        %5109 = vmatpush1.bf16.msra.mxu0 0
        %5110 = vmatprep.subr.bf16.mxu0 0
        %5111 = vmatpush1.bf16.msra.mxu0 0
        %5112 = vmatprep.subr.bf16.mxu0 0
        %5113 = vmatpush1.bf16.msra.mxu0 0
        %5114 = vmatprep.mubr.bf16.mxu0 0
        %5115 = vmatmul.mubr.bf16.gmra.mrb[0].mxu0 %v5077
        %v5116 = vpop.f32.mrb[0].mxu0
        %v5117 = vadd.f32 0.0, %v5116
        %v5118 = vpop.f32.mrb[0].mxu0
        %v5119 = vpop.f32.mrb[0].mxu0
        %v5120 = vpop.f32.mrb[0].mxu0
        %5121 = vdwg.mxu0
        %5123 = vrot.lane.b32.xlu0 %v4830, 96
        %v5124 = vpop.permute.xlu0 %5123
        %v5126 = vsel %vm1011, %v5070, 0
        %v5129 = vsel %vm1270, %v5124, 0
        %5131 = vmatprep.subr.bf16.mxu0 0
        %5132 = vmatpush1.bf16.msra.mxu0 %v5129
        %5133 = vmatprep.subr.bf16.mxu0 0
        %5134 = vmatpush1.bf16.msra.mxu0 0
        %5135 = vmatprep.subr.bf16.mxu0 0
        %5136 = vmatpush1.bf16.msra.mxu0 0
        %5137 = vmatprep.subr.bf16.mxu0 0
        %5138 = vmatpush1.bf16.msra.mxu0 0
        %5139 = vmatprep.subr.bf16.mxu0 0
        %5140 = vmatpush1.bf16.msra.mxu0 0
        %5141 = vmatprep.subr.bf16.mxu0 0
        %5142 = vmatpush1.bf16.msra.mxu0 0
        %5143 = vmatprep.subr.bf16.mxu0 0
        %5144 = vmatpush1.bf16.msra.mxu0 0
        %5145 = vmatprep.subr.bf16.mxu0 0
        %5146 = vmatpush1.bf16.msra.mxu0 0
        %5147 = vmatprep.subr.bf16.mxu0 0
        %5148 = vmatpush1.bf16.msra.mxu0 0
        %5149 = vmatprep.subr.bf16.mxu0 0
        %5150 = vmatpush1.bf16.msra.mxu0 0
        %5151 = vmatprep.subr.bf16.mxu0 0
        %5152 = vmatpush1.bf16.msra.mxu0 0
        %5153 = vmatprep.subr.bf16.mxu0 0
        %5154 = vmatpush1.bf16.msra.mxu0 0
        %5155 = vmatprep.subr.bf16.mxu0 0
        %5156 = vmatpush1.bf16.msra.mxu0 0
        %5157 = vmatprep.subr.bf16.mxu0 0
        %5158 = vmatpush1.bf16.msra.mxu0 0
        %5159 = vmatprep.subr.bf16.mxu0 0
        %5160 = vmatpush1.bf16.msra.mxu0 0
        %5161 = vmatprep.subr.bf16.mxu0 0
        %5162 = vmatpush1.bf16.msra.mxu0 0
        %5163 = vmatprep.mubr.bf16.mxu0 0
        %5164 = vmatmul.mubr.bf16.gmra.mrb[0].mxu0 %v5126
        %v5165 = vpop.f32.mrb[0].mxu0
        %v5166 = vadd.f32 0.0, %v5165
        %v5167 = vpop.f32.mrb[0].mxu0
        %v5168 = vpop.f32.mrb[0].mxu0
        %v5169 = vpop.f32.mrb[0].mxu0
        %5170 = vdwg.mxu0
        %5172 = vrot.lane.b32.xlu0 %v4831, 96
        %v5173 = vpop.permute.xlu0 %5172
        %v5175 = vsel %vm1011, %v5071, 0
        %v5178 = vsel %vm1270, %v5173, 0
        %5180 = vmatprep.subr.bf16.mxu0 0
        %5181 = vmatpush1.bf16.msra.mxu0 %v5178
        %5182 = vmatprep.subr.bf16.mxu0 0
        %5183 = vmatpush1.bf16.msra.mxu0 0
        %5184 = vmatprep.subr.bf16.mxu0 0
        %5185 = vmatpush1.bf16.msra.mxu0 0
        %5186 = vmatprep.subr.bf16.mxu0 0
        %5187 = vmatpush1.bf16.msra.mxu0 0
        %5188 = vmatprep.subr.bf16.mxu0 0
        %5189 = vmatpush1.bf16.msra.mxu0 0
        %5190 = vmatprep.subr.bf16.mxu0 0
        %5191 = vmatpush1.bf16.msra.mxu0 0
        %5192 = vmatprep.subr.bf16.mxu0 0
        %5193 = vmatpush1.bf16.msra.mxu0 0
        %5194 = vmatprep.subr.bf16.mxu0 0
        %5195 = vmatpush1.bf16.msra.mxu0 0
        %5196 = vmatprep.subr.bf16.mxu0 0
        %5197 = vmatpush1.bf16.msra.mxu0 0
        %5198 = vmatprep.subr.bf16.mxu0 0
        %5199 = vmatpush1.bf16.msra.mxu0 0
        %5200 = vmatprep.subr.bf16.mxu0 0
        %5201 = vmatpush1.bf16.msra.mxu0 0
        %5202 = vmatprep.subr.bf16.mxu0 0
        %5203 = vmatpush1.bf16.msra.mxu0 0
        %5204 = vmatprep.subr.bf16.mxu0 0
        %5205 = vmatpush1.bf16.msra.mxu0 0
        %5206 = vmatprep.subr.bf16.mxu0 0
        %5207 = vmatpush1.bf16.msra.mxu0 0
        %5208 = vmatprep.subr.bf16.mxu0 0
        %5209 = vmatpush1.bf16.msra.mxu0 0
        %5210 = vmatprep.subr.bf16.mxu0 0
        %5211 = vmatpush1.bf16.msra.mxu0 0
        %5212 = vmatprep.mubr.bf16.mxu0 0
        %5213 = vmatmul.mubr.bf16.gmra.mrb[0].mxu0 %v5175
        %v5214 = vpop.f32.mrb[0].mxu0
        %v5215 = vadd.f32 0.0, %v5214
        %v5216 = vpop.f32.mrb[0].mxu0
        %v5217 = vpop.f32.mrb[0].mxu0
        %v5218 = vpop.f32.mrb[0].mxu0
        %5219 = vdwg.mxu0
        %5221 = vrot.lane.b32.xlu0 %v4832, 96
        %v5222 = vpop.permute.xlu0 %5221
        %v5224 = vsel %vm1011, %v5072, 0
        %v5227 = vsel %vm1270, %v5222, 0
        %5229 = vmatprep.subr.bf16.mxu0 0
        %5230 = vmatpush1.bf16.msra.mxu0 %v5227
        %5231 = vmatprep.subr.bf16.mxu0 0
        %5232 = vmatpush1.bf16.msra.mxu0 0
        %5233 = vmatprep.subr.bf16.mxu0 0
        %5234 = vmatpush1.bf16.msra.mxu0 0
        %5235 = vmatprep.subr.bf16.mxu0 0
        %5236 = vmatpush1.bf16.msra.mxu0 0
        %5237 = vmatprep.subr.bf16.mxu0 0
        %5238 = vmatpush1.bf16.msra.mxu0 0
        %5239 = vmatprep.subr.bf16.mxu0 0
        %5240 = vmatpush1.bf16.msra.mxu0 0
        %5241 = vmatprep.subr.bf16.mxu0 0
        %5242 = vmatpush1.bf16.msra.mxu0 0
        %5243 = vmatprep.subr.bf16.mxu0 0
        %5244 = vmatpush1.bf16.msra.mxu0 0
        %5245 = vmatprep.subr.bf16.mxu0 0
        %5246 = vmatpush1.bf16.msra.mxu0 0
        %5247 = vmatprep.subr.bf16.mxu0 0
        %5248 = vmatpush1.bf16.msra.mxu0 0
        %5249 = vmatprep.subr.bf16.mxu0 0
        %5250 = vmatpush1.bf16.msra.mxu0 0
        %5251 = vmatprep.subr.bf16.mxu0 0
        %5252 = vmatpush1.bf16.msra.mxu0 0
        %5253 = vmatprep.subr.bf16.mxu0 0
        %5254 = vmatpush1.bf16.msra.mxu0 0
        %5255 = vmatprep.subr.bf16.mxu0 0
        %5256 = vmatpush1.bf16.msra.mxu0 0
        %5257 = vmatprep.subr.bf16.mxu0 0
        %5258 = vmatpush1.bf16.msra.mxu0 0
        %5259 = vmatprep.subr.bf16.mxu0 0
        %5260 = vmatpush1.bf16.msra.mxu0 0
        %5261 = vmatprep.mubr.bf16.mxu0 0
        %5262 = vmatmul.mubr.bf16.gmra.mrb[0].mxu0 %v5224
        %v5263 = vpop.f32.mrb[0].mxu0
        %v5264 = vadd.f32 0.0, %v5263
        %v5265 = vpop.f32.mrb[0].mxu0
        %v5266 = vpop.f32.mrb[0].mxu0
        %v5267 = vpop.f32.mrb[0].mxu0
        %5268 = vdwg.mxu0
        %5270 = vrot.lane.b32.xlu0 %v5166, 8
        %v5271 = vpop.permute.xlu0 %5270
        %5274 = vrot.lane.b32.xlu0 %v5215, 16
        %v5275 = vpop.permute.xlu0 %5274
        %5278 = vrot.lane.b32.xlu0 %v5264, 24
        %v5279 = vpop.permute.xlu0 %5278
        %v5281 = vsel %vm1011, %v5117, %v5271
        %v5282 = vsel %vm1471, %v5281, %v5275
        %v5283 = vsel %vm1473, %v5282, %v5279
        %5285 = vrot.lane.b32.xlu0 %v4737, 120
        %v5286 = vpop.permute.xlu0 %5285
        %5288 = vrot.lane.b32.xlu0 %v4737, 112
        %v5289 = vpop.permute.xlu0 %5288
        %5291 = vrot.lane.b32.xlu0 %v4737, 104
        %v5292 = vpop.permute.xlu0 %5291
        %v5294 = vpack.c.bf16 %v4737, %v4737
        %v5295 = vpack.c.bf16 %v5286, %v5286
        %v5296 = vpack.c.bf16 %v5289, %v5289
        %v5297 = vpack.c.bf16 %v5292, %v5292
        %5299 = vrot.lane.b32.xlu0 %v4802, 120
        %v5300 = vpop.permute.xlu0 %5299
        %5302 = vrot.lane.b32.xlu0 %v4802, 112
        %v5303 = vpop.permute.xlu0 %5302
        %5305 = vrot.lane.b32.xlu0 %v4802, 104
        %v5306 = vpop.permute.xlu0 %5305
        %v5308 = vpack.c.bf16 %v4802, %v4802
        %v5309 = vpack.c.bf16 %v5300, %v5300
        %v5310 = vpack.c.bf16 %v5303, %v5303
        %v5311 = vpack.c.bf16 %v5306, %v5306
        %v5313 = vsel %vm1011, %v5294, 0
        %v5316 = vsel %vm1011, %v5308, 0
        %5318 = vmatprep.subr.bf16.mxu0 0
        %5319 = vmatpush1.bf16.xpose.msra.mxu0 %v5316
        %5320 = vmatprep.subr.bf16.mxu0 0
        %5321 = vmatpush1.bf16.xpose.msra.mxu0 0
        %5322 = vmatprep.subr.bf16.mxu0 0
        %5323 = vmatpush1.bf16.xpose.msra.mxu0 0
        %5324 = vmatprep.subr.bf16.mxu0 0
        %5325 = vmatpush1.bf16.xpose.msra.mxu0 0
        %5326 = vmatprep.subr.bf16.mxu0 0
        %5327 = vmatpush1.bf16.xpose.msra.mxu0 0
        %5328 = vmatprep.subr.bf16.mxu0 0
        %5329 = vmatpush1.bf16.xpose.msra.mxu0 0
        %5330 = vmatprep.subr.bf16.mxu0 0
        %5331 = vmatpush1.bf16.xpose.msra.mxu0 0
        %5332 = vmatprep.subr.bf16.mxu0 0
        %5333 = vmatpush1.bf16.xpose.msra.mxu0 0
        %5334 = vmatprep.subr.bf16.mxu0 0
        %5335 = vmatpush1.bf16.xpose.msra.mxu0 0
        %5336 = vmatprep.subr.bf16.mxu0 0
        %5337 = vmatpush1.bf16.xpose.msra.mxu0 0
        %5338 = vmatprep.subr.bf16.mxu0 0
        %5339 = vmatpush1.bf16.xpose.msra.mxu0 0
        %5340 = vmatprep.subr.bf16.mxu0 0
        %5341 = vmatpush1.bf16.xpose.msra.mxu0 0
        %5342 = vmatprep.subr.bf16.mxu0 0
        %5343 = vmatpush1.bf16.xpose.msra.mxu0 0
        %5344 = vmatprep.subr.bf16.mxu0 0
        %5345 = vmatpush1.bf16.xpose.msra.mxu0 0
        %5346 = vmatprep.subr.bf16.mxu0 0
        %5347 = vmatpush1.bf16.xpose.msra.mxu0 0
        %5348 = vmatprep.subr.bf16.mxu0 0
        %5349 = vmatpush1.bf16.xpose.msra.mxu0 0
        %5350 = vmatprep.mubr.bf16.mxu0 0
        %5351 = vmatmul.mubr.bf16.gmra.mrb[0].mxu0 %v5313
        %v5352 = vpop.f32.mrb[0].mxu0
        %v5353 = vadd.f32 0.0, %v5352
        %v5354 = vpop.f32.mrb[0].mxu0
        %v5355 = vpop.f32.mrb[0].mxu0
        %v5356 = vpop.f32.mrb[0].mxu0
        %5357 = vdwg.mxu0
        %v5359 = vsel %vm1011, %v5295, 0
        %v5362 = vsel %vm1011, %v5309, 0
        %5364 = vmatprep.subr.bf16.mxu0 0
        %5365 = vmatpush1.bf16.xpose.msra.mxu0 %v5362
        %5366 = vmatprep.subr.bf16.mxu0 0
        %5367 = vmatpush1.bf16.xpose.msra.mxu0 0
        %5368 = vmatprep.subr.bf16.mxu0 0
        %5369 = vmatpush1.bf16.xpose.msra.mxu0 0
        %5370 = vmatprep.subr.bf16.mxu0 0
        %5371 = vmatpush1.bf16.xpose.msra.mxu0 0
        %5372 = vmatprep.subr.bf16.mxu0 0
        %5373 = vmatpush1.bf16.xpose.msra.mxu0 0
        %5374 = vmatprep.subr.bf16.mxu0 0
        %5375 = vmatpush1.bf16.xpose.msra.mxu0 0
        %5376 = vmatprep.subr.bf16.mxu0 0
        %5377 = vmatpush1.bf16.xpose.msra.mxu0 0
        %5378 = vmatprep.subr.bf16.mxu0 0
        %5379 = vmatpush1.bf16.xpose.msra.mxu0 0
        %5380 = vmatprep.subr.bf16.mxu0 0
        %5381 = vmatpush1.bf16.xpose.msra.mxu0 0
        %5382 = vmatprep.subr.bf16.mxu0 0
        %5383 = vmatpush1.bf16.xpose.msra.mxu0 0
        %5384 = vmatprep.subr.bf16.mxu0 0
        %5385 = vmatpush1.bf16.xpose.msra.mxu0 0
        %5386 = vmatprep.subr.bf16.mxu0 0
        %5387 = vmatpush1.bf16.xpose.msra.mxu0 0
        %5388 = vmatprep.subr.bf16.mxu0 0
        %5389 = vmatpush1.bf16.xpose.msra.mxu0 0
        %5390 = vmatprep.subr.bf16.mxu0 0
        %5391 = vmatpush1.bf16.xpose.msra.mxu0 0
        %5392 = vmatprep.subr.bf16.mxu0 0
        %5393 = vmatpush1.bf16.xpose.msra.mxu0 0
        %5394 = vmatprep.subr.bf16.mxu0 0
        %5395 = vmatpush1.bf16.xpose.msra.mxu0 0
        %5396 = vmatprep.mubr.bf16.mxu0 0
        %5397 = vmatmul.mubr.bf16.gmra.mrb[0].mxu0 %v5359
        %v5398 = vpop.f32.mrb[0].mxu0
        %v5399 = vadd.f32 0.0, %v5398
        %v5400 = vpop.f32.mrb[0].mxu0
        %v5401 = vpop.f32.mrb[0].mxu0
        %v5402 = vpop.f32.mrb[0].mxu0
        %5403 = vdwg.mxu0
        %v5405 = vsel %vm1011, %v5296, 0
        %v5408 = vsel %vm1011, %v5310, 0
        %5410 = vmatprep.subr.bf16.mxu0 0
        %5411 = vmatpush1.bf16.xpose.msra.mxu0 %v5408
        %5412 = vmatprep.subr.bf16.mxu0 0
        %5413 = vmatpush1.bf16.xpose.msra.mxu0 0
        %5414 = vmatprep.subr.bf16.mxu0 0
        %5415 = vmatpush1.bf16.xpose.msra.mxu0 0
        %5416 = vmatprep.subr.bf16.mxu0 0
        %5417 = vmatpush1.bf16.xpose.msra.mxu0 0
        %5418 = vmatprep.subr.bf16.mxu0 0
        %5419 = vmatpush1.bf16.xpose.msra.mxu0 0
        %5420 = vmatprep.subr.bf16.mxu0 0
        %5421 = vmatpush1.bf16.xpose.msra.mxu0 0
        %5422 = vmatprep.subr.bf16.mxu0 0
        %5423 = vmatpush1.bf16.xpose.msra.mxu0 0
        %5424 = vmatprep.subr.bf16.mxu0 0
        %5425 = vmatpush1.bf16.xpose.msra.mxu0 0
        %5426 = vmatprep.subr.bf16.mxu0 0
        %5427 = vmatpush1.bf16.xpose.msra.mxu0 0
        %5428 = vmatprep.subr.bf16.mxu0 0
        %5429 = vmatpush1.bf16.xpose.msra.mxu0 0
        %5430 = vmatprep.subr.bf16.mxu0 0
        %5431 = vmatpush1.bf16.xpose.msra.mxu0 0
        %5432 = vmatprep.subr.bf16.mxu0 0
        %5433 = vmatpush1.bf16.xpose.msra.mxu0 0
        %5434 = vmatprep.subr.bf16.mxu0 0
        %5435 = vmatpush1.bf16.xpose.msra.mxu0 0
        %5436 = vmatprep.subr.bf16.mxu0 0
        %5437 = vmatpush1.bf16.xpose.msra.mxu0 0
        %5438 = vmatprep.subr.bf16.mxu0 0
        %5439 = vmatpush1.bf16.xpose.msra.mxu0 0
        %5440 = vmatprep.subr.bf16.mxu0 0
        %5441 = vmatpush1.bf16.xpose.msra.mxu0 0
        %5442 = vmatprep.mubr.bf16.mxu0 0
        %5443 = vmatmul.mubr.bf16.gmra.mrb[0].mxu0 %v5405
        %v5444 = vpop.f32.mrb[0].mxu0
        %v5445 = vadd.f32 0.0, %v5444
        %v5446 = vpop.f32.mrb[0].mxu0
        %v5447 = vpop.f32.mrb[0].mxu0
        %v5448 = vpop.f32.mrb[0].mxu0
        %5449 = vdwg.mxu0
        %v5451 = vsel %vm1011, %v5297, 0
        %v5454 = vsel %vm1011, %v5311, 0
        %5456 = vmatprep.subr.bf16.mxu0 0
        %5457 = vmatpush1.bf16.xpose.msra.mxu0 %v5454
        %5458 = vmatprep.subr.bf16.mxu0 0
        %5459 = vmatpush1.bf16.xpose.msra.mxu0 0
        %5460 = vmatprep.subr.bf16.mxu0 0
        %5461 = vmatpush1.bf16.xpose.msra.mxu0 0
        %5462 = vmatprep.subr.bf16.mxu0 0
        %5463 = vmatpush1.bf16.xpose.msra.mxu0 0
        %5464 = vmatprep.subr.bf16.mxu0 0
        %5465 = vmatpush1.bf16.xpose.msra.mxu0 0
        %5466 = vmatprep.subr.bf16.mxu0 0
        %5467 = vmatpush1.bf16.xpose.msra.mxu0 0
        %5468 = vmatprep.subr.bf16.mxu0 0
        %5469 = vmatpush1.bf16.xpose.msra.mxu0 0
        %5470 = vmatprep.subr.bf16.mxu0 0
        %5471 = vmatpush1.bf16.xpose.msra.mxu0 0
        %5472 = vmatprep.subr.bf16.mxu0 0
        %5473 = vmatpush1.bf16.xpose.msra.mxu0 0
        %5474 = vmatprep.subr.bf16.mxu0 0
        %5475 = vmatpush1.bf16.xpose.msra.mxu0 0
        %5476 = vmatprep.subr.bf16.mxu0 0
        %5477 = vmatpush1.bf16.xpose.msra.mxu0 0
        %5478 = vmatprep.subr.bf16.mxu0 0
        %5479 = vmatpush1.bf16.xpose.msra.mxu0 0
        %5480 = vmatprep.subr.bf16.mxu0 0
        %5481 = vmatpush1.bf16.xpose.msra.mxu0 0
        %5482 = vmatprep.subr.bf16.mxu0 0
        %5483 = vmatpush1.bf16.xpose.msra.mxu0 0
        %5484 = vmatprep.subr.bf16.mxu0 0
        %5485 = vmatpush1.bf16.xpose.msra.mxu0 0
        %5486 = vmatprep.subr.bf16.mxu0 0
        %5487 = vmatpush1.bf16.xpose.msra.mxu0 0
        %5488 = vmatprep.mubr.bf16.mxu0 0
        %5489 = vmatmul.mubr.bf16.gmra.mrb[0].mxu0 %v5451
        %v5490 = vpop.f32.mrb[0].mxu0
        %v5491 = vadd.f32 0.0, %v5490
        %v5492 = vpop.f32.mrb[0].mxu0
        %v5493 = vpop.f32.mrb[0].mxu0
        %v5494 = vpop.f32.mrb[0].mxu0
        %5495 = vdwg.mxu0
        %v5496 = vmul.f32 %v5353, 0.35355338
        %v5497 = vmul.f32 %v5399, 0.35355338
        %v5498 = vmul.f32 %v5445, 0.35355338
        %v5499 = vmul.f32 %v5491, 0.35355338
        %v5500 = vadd.f32 %v5496, %v1692
        %v5501 = vadd.f32 %v5497, %v1692
        %v5502 = vadd.f32 %v5498, %v1692
        %v5503 = vadd.f32 %v5499, %v1692
        %v5504 = vsel %vm1011, %v5500, -inf
        %5505 = vmax.xlane.f32.xlu0 %v5504
        %v5506 = vpop.xlane.xlu0 %5505
        %v5507 = vsel %vm1011, %v5501, -inf
        %5508 = vmax.xlane.f32.xlu0 %v5507
        %v5509 = vpop.xlane.xlu0 %5508
        %v5510 = vsel %vm1011, %v5502, -inf
        %5511 = vmax.xlane.f32.xlu0 %v5510
        %v5512 = vpop.xlane.xlu0 %5511
        %v5513 = vsel %vm1011, %v5503, -inf
        %5514 = vmax.xlane.f32.xlu0 %v5513
        %v5515 = vpop.xlane.xlu0 %5514
        %v5516 = vsub.f32 %v5500, %v5506
        %v5517 = vsub.f32 %v5501, %v5509
        %v5518 = vsub.f32 %v5502, %v5512
        %v5519 = vsub.f32 %v5503, %v5515
        %v5520 = vmul.f32 %v5516, 1.442695
        %v5521 = vpow.pop %v5520
        %v5522 = vmul.f32 %v5517, 1.442695
        %v5523 = vpow.pop %v5522
        %v5524 = vmul.f32 %v5518, 1.442695
        %v5525 = vpow.pop %v5524
        %v5526 = vmul.f32 %v5519, 1.442695
        %v5527 = vpow.pop %v5526
        %v5528 = vsel %vm1011, %v5521, 0.0
        %5529 = vadd.xlane.f32.xlu0 %v5528
        %v5530 = vpop.xlane.xlu0 %5529
        %v5531 = vsel %vm1011, %v5523, 0.0
        %5532 = vadd.xlane.f32.xlu0 %v5531
        %v5533 = vpop.xlane.xlu0 %5532
        %v5534 = vsel %vm1011, %v5525, 0.0
        %5535 = vadd.xlane.f32.xlu0 %v5534
        %v5536 = vpop.xlane.xlu0 %5535
        %v5537 = vsel %vm1011, %v5527, 0.0
        %5538 = vadd.xlane.f32.xlu0 %v5537
        %v5539 = vpop.xlane.xlu0 %5538
        %v5540 = vrcp.pop %v5530
        %v5541 = vmul.f32 %v5521, %v5540
        %v5542 = vrcp.pop %v5533
        %v5543 = vmul.f32 %v5523, %v5542
        %v5544 = vrcp.pop %v5536
        %v5545 = vmul.f32 %v5525, %v5544
        %v5546 = vrcp.pop %v5539
        %v5547 = vmul.f32 %v5527, %v5546
        %v5548 = vpack.c.bf16 %v5541, %v5541
        %v5549 = vpack.c.bf16 %v5543, %v5543
        %v5550 = vpack.c.bf16 %v5545, %v5545
        %v5551 = vpack.c.bf16 %v5547, %v5547
        %5553 = vrot.lane.b32.xlu0 %v5308, 96
        %v5554 = vpop.permute.xlu0 %5553
        %v5556 = vsel %vm1011, %v5548, 0
        %v5559 = vsel %vm1270, %v5554, 0
        %5561 = vmatprep.subr.bf16.mxu0 0
        %5562 = vmatpush1.bf16.msra.mxu0 %v5559
        %5563 = vmatprep.subr.bf16.mxu0 0
        %5564 = vmatpush1.bf16.msra.mxu0 0
        %5565 = vmatprep.subr.bf16.mxu0 0
        %5566 = vmatpush1.bf16.msra.mxu0 0
        %5567 = vmatprep.subr.bf16.mxu0 0
        %5568 = vmatpush1.bf16.msra.mxu0 0
        %5569 = vmatprep.subr.bf16.mxu0 0
        %5570 = vmatpush1.bf16.msra.mxu0 0
        %5571 = vmatprep.subr.bf16.mxu0 0
        %5572 = vmatpush1.bf16.msra.mxu0 0
        %5573 = vmatprep.subr.bf16.mxu0 0
        %5574 = vmatpush1.bf16.msra.mxu0 0
        %5575 = vmatprep.subr.bf16.mxu0 0
        %5576 = vmatpush1.bf16.msra.mxu0 0
        %5577 = vmatprep.subr.bf16.mxu0 0
        %5578 = vmatpush1.bf16.msra.mxu0 0
        %5579 = vmatprep.subr.bf16.mxu0 0
        %5580 = vmatpush1.bf16.msra.mxu0 0
        %5581 = vmatprep.subr.bf16.mxu0 0
        %5582 = vmatpush1.bf16.msra.mxu0 0
        %5583 = vmatprep.subr.bf16.mxu0 0
        %5584 = vmatpush1.bf16.msra.mxu0 0
        %5585 = vmatprep.subr.bf16.mxu0 0
        %5586 = vmatpush1.bf16.msra.mxu0 0
        %5587 = vmatprep.subr.bf16.mxu0 0
        %5588 = vmatpush1.bf16.msra.mxu0 0
        %5589 = vmatprep.subr.bf16.mxu0 0
        %5590 = vmatpush1.bf16.msra.mxu0 0
        %5591 = vmatprep.subr.bf16.mxu0 0
        %5592 = vmatpush1.bf16.msra.mxu0 0
        %5593 = vmatprep.mubr.bf16.mxu0 0
        %5594 = vmatmul.mubr.bf16.gmra.mrb[0].mxu0 %v5556
        %v5595 = vpop.f32.mrb[0].mxu0
        %v5596 = vadd.f32 0.0, %v5595
        %v5597 = vpop.f32.mrb[0].mxu0
        %v5598 = vpop.f32.mrb[0].mxu0
        %v5599 = vpop.f32.mrb[0].mxu0
        %5600 = vdwg.mxu0
        %5602 = vrot.lane.b32.xlu0 %v5309, 96
        %v5603 = vpop.permute.xlu0 %5602
        %v5605 = vsel %vm1011, %v5549, 0
        %v5608 = vsel %vm1270, %v5603, 0
        %5610 = vmatprep.subr.bf16.mxu0 0
        %5611 = vmatpush1.bf16.msra.mxu0 %v5608
        %5612 = vmatprep.subr.bf16.mxu0 0
        %5613 = vmatpush1.bf16.msra.mxu0 0
        %5614 = vmatprep.subr.bf16.mxu0 0
        %5615 = vmatpush1.bf16.msra.mxu0 0
        %5616 = vmatprep.subr.bf16.mxu0 0
        %5617 = vmatpush1.bf16.msra.mxu0 0
        %5618 = vmatprep.subr.bf16.mxu0 0
        %5619 = vmatpush1.bf16.msra.mxu0 0
        %5620 = vmatprep.subr.bf16.mxu0 0
        %5621 = vmatpush1.bf16.msra.mxu0 0
        %5622 = vmatprep.subr.bf16.mxu0 0
        %5623 = vmatpush1.bf16.msra.mxu0 0
        %5624 = vmatprep.subr.bf16.mxu0 0
        %5625 = vmatpush1.bf16.msra.mxu0 0
        %5626 = vmatprep.subr.bf16.mxu0 0
        %5627 = vmatpush1.bf16.msra.mxu0 0
        %5628 = vmatprep.subr.bf16.mxu0 0
        %5629 = vmatpush1.bf16.msra.mxu0 0
        %5630 = vmatprep.subr.bf16.mxu0 0
        %5631 = vmatpush1.bf16.msra.mxu0 0
        %5632 = vmatprep.subr.bf16.mxu0 0
        %5633 = vmatpush1.bf16.msra.mxu0 0
        %5634 = vmatprep.subr.bf16.mxu0 0
        %5635 = vmatpush1.bf16.msra.mxu0 0
        %5636 = vmatprep.subr.bf16.mxu0 0
        %5637 = vmatpush1.bf16.msra.mxu0 0
        %5638 = vmatprep.subr.bf16.mxu0 0
        %5639 = vmatpush1.bf16.msra.mxu0 0
        %5640 = vmatprep.subr.bf16.mxu0 0
        %5641 = vmatpush1.bf16.msra.mxu0 0
        %5642 = vmatprep.mubr.bf16.mxu0 0
        %5643 = vmatmul.mubr.bf16.gmra.mrb[0].mxu0 %v5605
        %v5644 = vpop.f32.mrb[0].mxu0
        %v5645 = vadd.f32 0.0, %v5644
        %v5646 = vpop.f32.mrb[0].mxu0
        %v5647 = vpop.f32.mrb[0].mxu0
        %v5648 = vpop.f32.mrb[0].mxu0
        %5649 = vdwg.mxu0
        %5651 = vrot.lane.b32.xlu0 %v5310, 96
        %v5652 = vpop.permute.xlu0 %5651
        %v5654 = vsel %vm1011, %v5550, 0
        %v5657 = vsel %vm1270, %v5652, 0
        %5659 = vmatprep.subr.bf16.mxu0 0
        %5660 = vmatpush1.bf16.msra.mxu0 %v5657
        %5661 = vmatprep.subr.bf16.mxu0 0
        %5662 = vmatpush1.bf16.msra.mxu0 0
        %5663 = vmatprep.subr.bf16.mxu0 0
        %5664 = vmatpush1.bf16.msra.mxu0 0
        %5665 = vmatprep.subr.bf16.mxu0 0
        %5666 = vmatpush1.bf16.msra.mxu0 0
        %5667 = vmatprep.subr.bf16.mxu0 0
        %5668 = vmatpush1.bf16.msra.mxu0 0
        %5669 = vmatprep.subr.bf16.mxu0 0
        %5670 = vmatpush1.bf16.msra.mxu0 0
        %5671 = vmatprep.subr.bf16.mxu0 0
        %5672 = vmatpush1.bf16.msra.mxu0 0
        %5673 = vmatprep.subr.bf16.mxu0 0
        %5674 = vmatpush1.bf16.msra.mxu0 0
        %5675 = vmatprep.subr.bf16.mxu0 0
        %5676 = vmatpush1.bf16.msra.mxu0 0
        %5677 = vmatprep.subr.bf16.mxu0 0
        %5678 = vmatpush1.bf16.msra.mxu0 0
        %5679 = vmatprep.subr.bf16.mxu0 0
        %5680 = vmatpush1.bf16.msra.mxu0 0
        %5681 = vmatprep.subr.bf16.mxu0 0
        %5682 = vmatpush1.bf16.msra.mxu0 0
        %5683 = vmatprep.subr.bf16.mxu0 0
        %5684 = vmatpush1.bf16.msra.mxu0 0
        %5685 = vmatprep.subr.bf16.mxu0 0
        %5686 = vmatpush1.bf16.msra.mxu0 0
        %5687 = vmatprep.subr.bf16.mxu0 0
        %5688 = vmatpush1.bf16.msra.mxu0 0
        %5689 = vmatprep.subr.bf16.mxu0 0
        %5690 = vmatpush1.bf16.msra.mxu0 0
        %5691 = vmatprep.mubr.bf16.mxu0 0
        %5692 = vmatmul.mubr.bf16.gmra.mrb[0].mxu0 %v5654
        %v5693 = vpop.f32.mrb[0].mxu0
        %v5694 = vadd.f32 0.0, %v5693
        %v5695 = vpop.f32.mrb[0].mxu0
        %v5696 = vpop.f32.mrb[0].mxu0
        %v5697 = vpop.f32.mrb[0].mxu0
        %5698 = vdwg.mxu0
        %5700 = vrot.lane.b32.xlu0 %v5311, 96
        %v5701 = vpop.permute.xlu0 %5700
        %v5703 = vsel %vm1011, %v5551, 0
        %v5706 = vsel %vm1270, %v5701, 0
        %5708 = vmatprep.subr.bf16.mxu0 0
        %5709 = vmatpush1.bf16.msra.mxu0 %v5706
        %5710 = vmatprep.subr.bf16.mxu0 0
        %5711 = vmatpush1.bf16.msra.mxu0 0
        %5712 = vmatprep.subr.bf16.mxu0 0
        %5713 = vmatpush1.bf16.msra.mxu0 0
        %5714 = vmatprep.subr.bf16.mxu0 0
        %5715 = vmatpush1.bf16.msra.mxu0 0
        %5716 = vmatprep.subr.bf16.mxu0 0
        %5717 = vmatpush1.bf16.msra.mxu0 0
        %5718 = vmatprep.subr.bf16.mxu0 0
        %5719 = vmatpush1.bf16.msra.mxu0 0
        %5720 = vmatprep.subr.bf16.mxu0 0
        %5721 = vmatpush1.bf16.msra.mxu0 0
        %5722 = vmatprep.subr.bf16.mxu0 0
        %5723 = vmatpush1.bf16.msra.mxu0 0
        %5724 = vmatprep.subr.bf16.mxu0 0
        %5725 = vmatpush1.bf16.msra.mxu0 0
        %5726 = vmatprep.subr.bf16.mxu0 0
        %5727 = vmatpush1.bf16.msra.mxu0 0
        %5728 = vmatprep.subr.bf16.mxu0 0
        %5729 = vmatpush1.bf16.msra.mxu0 0
        %5730 = vmatprep.subr.bf16.mxu0 0
        %5731 = vmatpush1.bf16.msra.mxu0 0
        %5732 = vmatprep.subr.bf16.mxu0 0
        %5733 = vmatpush1.bf16.msra.mxu0 0
        %5734 = vmatprep.subr.bf16.mxu0 0
        %5735 = vmatpush1.bf16.msra.mxu0 0
        %5736 = vmatprep.subr.bf16.mxu0 0
        %5737 = vmatpush1.bf16.msra.mxu0 0
        %5738 = vmatprep.subr.bf16.mxu0 0
        %5739 = vmatpush1.bf16.msra.mxu0 0
        %5740 = vmatprep.mubr.bf16.mxu0 0
        %5741 = vmatmul.mubr.bf16.gmra.mrb[0].mxu0 %v5703
        %v5742 = vpop.f32.mrb[0].mxu0
        %v5743 = vadd.f32 0.0, %v5742
        %v5744 = vpop.f32.mrb[0].mxu0
        %v5745 = vpop.f32.mrb[0].mxu0
        %v5746 = vpop.f32.mrb[0].mxu0
        %5747 = vdwg.mxu0
        %5749 = vrot.lane.b32.xlu0 %v5645, 8
        %v5750 = vpop.permute.xlu0 %5749
        %5753 = vrot.lane.b32.xlu0 %v5694, 16
        %v5754 = vpop.permute.xlu0 %5753
        %5757 = vrot.lane.b32.xlu0 %v5743, 24
        %v5758 = vpop.permute.xlu0 %5757
        %v5760 = vsel %vm1011, %v5596, %v5750
        %v5761 = vsel %vm1471, %v5760, %v5754
        %v5762 = vsel %vm1473, %v5761, %v5758
        %v5763 = vld [vmem:[%s15] sm:$0xf]
        %v5764 = vld [vmem:[%s15 + $0x4] sm:$0xf]
        %v5765 = vld [vmem:[%s15 + $0x8] sm:$0xf]
        %v5766 = vld [vmem:[%s15 + $0xc] sm:$0xf]
        %v5767 = vpack.c.bf16 %v5762, %v5283
        %v5768 = vlaneseq
        %v5769 = vshrl.u32 %v5768, 7
        %v5770 = vsub.s32 6, %v5769
        %v5771 = vrot.slane %v3557, %v5770
        %v5776 = vunpack.c.l.b16 %v5763
        %v5777 = vunpack.c.l.b16 %v5764
        %v5778 = vunpack.c.l.b16 %v5765
        %v5779 = vunpack.c.l.b16 %v5766
        %v5780 = vpack.c.b16 %v5777, %v5776
        %v5781 = vpack.c.b16 %v5779, %v5778
        %v5785 = vsel %vm810, %v5767, 0
        %5787 = vmatprep.subr.bf16.mxu0 0
        %5788 = vmatpush1.bf16.msra.mxu0 %v5780
        %5789 = vmatprep.subr.bf16.mxu0 0
        %5790 = vmatpush1.bf16.msra.mxu0 %v5781
        %5791 = vmatprep.subr.bf16.mxu0 0
        %5792 = vmatpush1.bf16.msra.mxu0 0
        %5793 = vmatprep.subr.bf16.mxu0 0
        %5794 = vmatpush1.bf16.msra.mxu0 0
        %5795 = vmatprep.subr.bf16.mxu0 0
        %5796 = vmatpush1.bf16.msra.mxu0 0
        %5797 = vmatprep.subr.bf16.mxu0 0
        %5798 = vmatpush1.bf16.msra.mxu0 0
        %5799 = vmatprep.subr.bf16.mxu0 0
        %5800 = vmatpush1.bf16.msra.mxu0 0
        %5801 = vmatprep.subr.bf16.mxu0 0
        %5802 = vmatpush1.bf16.msra.mxu0 0
        %5803 = vmatprep.subr.bf16.mxu0 0
        %5804 = vmatpush1.bf16.msra.mxu0 0
        %5805 = vmatprep.subr.bf16.mxu0 0
        %5806 = vmatpush1.bf16.msra.mxu0 0
        %5807 = vmatprep.subr.bf16.mxu0 0
        %5808 = vmatpush1.bf16.msra.mxu0 0
        %5809 = vmatprep.subr.bf16.mxu0 0
        %5810 = vmatpush1.bf16.msra.mxu0 0
        %5811 = vmatprep.subr.bf16.mxu0 0
        %5812 = vmatpush1.bf16.msra.mxu0 0
        %5813 = vmatprep.subr.bf16.mxu0 0
        %5814 = vmatpush1.bf16.msra.mxu0 0
        %5815 = vmatprep.subr.bf16.mxu0 0
        %5816 = vmatpush1.bf16.msra.mxu0 0
        %5817 = vmatprep.subr.bf16.mxu0 0
        %5818 = vmatpush1.bf16.msra.mxu0 0
        %5819 = vmatprep.mubr.bf16.mxu0 0
        %5820 = vmatmul.mubr.bf16.gmra.mrb[0].mxu0 %v5785
        %v5821 = vpop.f32.mrb[0].mxu0
        %v5822 = vadd.f32 %v5771, %v5821
        %v5823 = vpop.f32.mrb[0].mxu0
        %v5824 = vpop.f32.mrb[0].mxu0
        %v5825 = vadd.f32 %v5771, %v5824
        %v5826 = vpop.f32.mrb[0].mxu0
        %5827 = vdwg.mxu0
        %v5828 = vadd.f32 %v4673, %v5822
        %v5829 = vadd.f32 %v4674, %v5825
        %v5830 = vsel %vm810, %v5828, 0.0
        %5831 = vadd.xlane.f32.xlu0 %v5830
        %v5832 = vpop.xlane.xlu0 %5831
        %v5833 = vsel %vm810, %v5829, 0.0
        %5834 = vadd.xlane.f32.xlu0 %v5833
        %v5835 = vpop.xlane.xlu0 %5834
        %v5836 = vmul.f32 %v5832, %v2025
        %v5837 = vmul.f32 %v5835, %v2025
        %v5838 = vsub.f32 %v5828, %v5836
        %v5839 = vsub.f32 %v5829, %v5837
        %v5840 = vmul.f32 %v5838, %v5838
        %v5841 = vmul.f32 %v5839, %v5839
        %v5842 = vsel %vm810, %v5840, 0.0
        %5843 = vadd.xlane.f32.xlu0 %v5842
        %v5844 = vpop.xlane.xlu0 %5843
        %v5845 = vsel %vm810, %v5841, 0.0
        %5846 = vadd.xlane.f32.xlu0 %v5845
        %v5847 = vpop.xlane.xlu0 %5846
        %v5848 = vmul.f32 %v5844, %v2025
        %v5849 = vmul.f32 %v5847, %v2025
        %v5850 = vadd.f32 %v5848, 1e-05
        %v5851 = vadd.f32 %v5849, 1e-05
        %v5852 = vrsqrt.pop %v5850
        %v5853 = vrsqrt.pop %v5851
        %v5854 = vmul.f32 %v5838, %v5852
        %v5855 = vmul.f32 %v5839, %v5853
        %v5856 = vlaneseq
        %v5857 = vshrl.u32 %v5856, 7
        %v5858 = vsub.s32 7, %v5857
        %v5859 = vrot.slane %v3557, %v5858
        %v5860 = vmul.f32 %v5854, %v5859
        %v5861 = vmul.f32 %v5855, %v5859
        %v5862 = vlaneseq
        %v5863 = vshrl.u32 %v5862, 7
        %v5864 = vsub.s32 0, %v5863
        %v5865 = vrot.slane %v3558, %v5864
        %v5866 = vadd.f32 %v5860, %v5865
        %v5867 = vadd.f32 %v5861, %v5865
        %v5868 = vld [vmem:[%s16] sm:$0xf]
        %v5869 = vld [vmem:[%s16 + $0x4] sm:$0xf]
        %v5870 = vld [vmem:[%s16 + $0x8] sm:$0xf]
        %v5871 = vld [vmem:[%s16 + $0xc] sm:$0xf]
        %v5872 = vpack.c.bf16 %v5867, %v5866
        %v5873 = vlaneseq
        %v5874 = vshrl.u32 %v5873, 7
        %v5875 = vsub.s32 1, %v5874
        %v5876 = vrot.slane %v3558, %v5875
        %v5881 = vunpack.c.l.b16 %v5868
        %v5882 = vunpack.c.l.b16 %v5869
        %v5883 = vunpack.c.l.b16 %v5870
        %v5884 = vunpack.c.l.b16 %v5871
        %v5885 = vpack.c.b16 %v5882, %v5881
        %v5886 = vpack.c.b16 %v5884, %v5883
        %v5890 = vsel %vm810, %v5872, 0
        %5892 = vmatprep.subr.bf16.mxu0 0
        %5893 = vmatpush1.bf16.msra.mxu0 %v5885
        %5894 = vmatprep.subr.bf16.mxu0 0
        %5895 = vmatpush1.bf16.msra.mxu0 %v5886
        %5896 = vmatprep.subr.bf16.mxu0 0
        %5897 = vmatpush1.bf16.msra.mxu0 0
        %5898 = vmatprep.subr.bf16.mxu0 0
        %5899 = vmatpush1.bf16.msra.mxu0 0
        %5900 = vmatprep.subr.bf16.mxu0 0
        %5901 = vmatpush1.bf16.msra.mxu0 0
        %5902 = vmatprep.subr.bf16.mxu0 0
        %5903 = vmatpush1.bf16.msra.mxu0 0
        %5904 = vmatprep.subr.bf16.mxu0 0
        %5905 = vmatpush1.bf16.msra.mxu0 0
        %5906 = vmatprep.subr.bf16.mxu0 0
        %5907 = vmatpush1.bf16.msra.mxu0 0
        %5908 = vmatprep.subr.bf16.mxu0 0
        %5909 = vmatpush1.bf16.msra.mxu0 0
        %5910 = vmatprep.subr.bf16.mxu0 0
        %5911 = vmatpush1.bf16.msra.mxu0 0
        %5912 = vmatprep.subr.bf16.mxu0 0
        %5913 = vmatpush1.bf16.msra.mxu0 0
        %5914 = vmatprep.subr.bf16.mxu0 0
        %5915 = vmatpush1.bf16.msra.mxu0 0
        %5916 = vmatprep.subr.bf16.mxu0 0
        %5917 = vmatpush1.bf16.msra.mxu0 0
        %5918 = vmatprep.subr.bf16.mxu0 0
        %5919 = vmatpush1.bf16.msra.mxu0 0
        %5920 = vmatprep.subr.bf16.mxu0 0
        %5921 = vmatpush1.bf16.msra.mxu0 0
        %5922 = vmatprep.subr.bf16.mxu0 0
        %5923 = vmatpush1.bf16.msra.mxu0 0
        %5924 = vmatprep.mubr.bf16.mxu0 0
        %5925 = vmatmul.mubr.bf16.gmra.mrb[0].mxu0 %v5890
        %v5926 = vpop.f32.mrb[0].mxu0
        %v5927 = vadd.f32 %v5876, %v5926
        %v5928 = vpop.f32.mrb[0].mxu0
        %v5929 = vpop.f32.mrb[0].mxu0
        %v5930 = vadd.f32 %v5876, %v5929
        %v5931 = vpop.f32.mrb[0].mxu0
        %5932 = vdwg.mxu0
        %v5933 = vmax.f32 %v5927, 0.0
        %v5934 = vmax.f32 %v5930, 0.0
        %v5935 = vld [vmem:[%s17] sm:$0xf]
        %v5936 = vld [vmem:[%s17 + $0x4] sm:$0xf]
        %v5937 = vld [vmem:[%s17 + $0x8] sm:$0xf]
        %v5938 = vld [vmem:[%s17 + $0xc] sm:$0xf]
        %v5939 = vld [vmem:[%s17 + $0x10] sm:$0xf]
        %v5940 = vld [vmem:[%s17 + $0x14] sm:$0xf]
        %v5941 = vld [vmem:[%s17 + $0x18] sm:$0xf]
        %v5942 = vld [vmem:[%s17 + $0x1c] sm:$0xf]
        %v5943 = vpack.c.bf16 %v5934, %v5933
        %v5944 = vlaneseq
        %v5945 = vshrl.u32 %v5944, 7
        %v5946 = vsub.s32 2, %v5945
        %v5947 = vrot.slane %v3558, %v5946
        %v5956 = vunpack.c.l.b16 %v5935
        %v5957 = vunpack.c.l.b16 %v5936
        %v5958 = vunpack.c.l.b16 %v5937
        %v5959 = vunpack.c.l.b16 %v5938
        %v5960 = vunpack.c.l.b16 %v5939
        %v5961 = vunpack.c.l.b16 %v5940
        %v5962 = vunpack.c.l.b16 %v5941
        %v5963 = vunpack.c.l.b16 %v5942
        %v5964 = vpack.c.b16 %v5957, %v5956
        %v5965 = vpack.c.b16 %v5959, %v5958
        %v5966 = vpack.c.b16 %v5961, %v5960
        %v5967 = vpack.c.b16 %v5963, %v5962
        %v5973 = vsel %vm2162, %v5943, 0
        %5975 = vmatprep.subr.bf16.mxu0 0
        %5976 = vmatpush1.bf16.msra.mxu0 %v5964
        %5977 = vmatprep.subr.bf16.mxu0 0
        %5978 = vmatpush1.bf16.msra.mxu0 %v5965
        %5979 = vmatprep.subr.bf16.mxu0 0
        %5980 = vmatpush1.bf16.msra.mxu0 %v5966
        %5981 = vmatprep.subr.bf16.mxu0 0
        %5982 = vmatpush1.bf16.msra.mxu0 %v5967
        %5983 = vmatprep.subr.bf16.mxu0 0
        %5984 = vmatpush1.bf16.msra.mxu0 0
        %5985 = vmatprep.subr.bf16.mxu0 0
        %5986 = vmatpush1.bf16.msra.mxu0 0
        %5987 = vmatprep.subr.bf16.mxu0 0
        %5988 = vmatpush1.bf16.msra.mxu0 0
        %5989 = vmatprep.subr.bf16.mxu0 0
        %5990 = vmatpush1.bf16.msra.mxu0 0
        %5991 = vmatprep.subr.bf16.mxu0 0
        %5992 = vmatpush1.bf16.msra.mxu0 0
        %5993 = vmatprep.subr.bf16.mxu0 0
        %5994 = vmatpush1.bf16.msra.mxu0 0
        %5995 = vmatprep.subr.bf16.mxu0 0
        %5996 = vmatpush1.bf16.msra.mxu0 0
        %5997 = vmatprep.subr.bf16.mxu0 0
        %5998 = vmatpush1.bf16.msra.mxu0 0
        %5999 = vmatprep.subr.bf16.mxu0 0
        %6000 = vmatpush1.bf16.msra.mxu0 0
        %6001 = vmatprep.subr.bf16.mxu0 0
        %6002 = vmatpush1.bf16.msra.mxu0 0
        %6003 = vmatprep.subr.bf16.mxu0 0
        %6004 = vmatpush1.bf16.msra.mxu0 0
        %6005 = vmatprep.subr.bf16.mxu0 0
        %6006 = vmatpush1.bf16.msra.mxu0 0
        %6007 = vmatprep.mubr.bf16.mxu0 0
        %6008 = vmatmul.mubr.bf16.gmra.mrb[0].mxu0 %v5973
        %v6009 = vpop.f32.mrb[0].mxu0
        %v6010 = vadd.f32 %v5947, %v6009
        %v6011 = vpop.f32.mrb[0].mxu0
        %v6012 = vpop.f32.mrb[0].mxu0
        %v6013 = vadd.f32 %v5947, %v6012
        %v6014 = vpop.f32.mrb[0].mxu0
        %6015 = vdwg.mxu0
        %v6016 = vadd.f32 %v5866, %v6010
        %v6017 = vadd.f32 %v5867, %v6013
        %v6018 = vsel %vm810, %v6016, 0.0
        %6019 = vadd.xlane.f32.xlu0 %v6018
        %v6020 = vpop.xlane.xlu0 %6019
        %v6021 = vsel %vm810, %v6017, 0.0
        %6022 = vadd.xlane.f32.xlu0 %v6021
        %v6023 = vpop.xlane.xlu0 %6022
        %v6024 = vmul.f32 %v6020, %v2025
        %v6025 = vmul.f32 %v6023, %v2025
        %v6026 = vsub.f32 %v6016, %v6024
        %v6027 = vsub.f32 %v6017, %v6025
        %v6028 = vmul.f32 %v6026, %v6026
        %v6029 = vmul.f32 %v6027, %v6027
        %v6030 = vsel %vm810, %v6028, 0.0
        %6031 = vadd.xlane.f32.xlu0 %v6030
        %v6032 = vpop.xlane.xlu0 %6031
        %v6033 = vsel %vm810, %v6029, 0.0
        %6034 = vadd.xlane.f32.xlu0 %v6033
        %v6035 = vpop.xlane.xlu0 %6034
        %v6036 = vmul.f32 %v6032, %v2025
        %v6037 = vmul.f32 %v6035, %v2025
        %v6038 = vadd.f32 %v6036, 1e-05
        %v6039 = vadd.f32 %v6037, 1e-05
        %v6040 = vrsqrt.pop %v6038
        %v6041 = vrsqrt.pop %v6039
        %v6042 = vmul.f32 %v6026, %v6040
        %v6043 = vmul.f32 %v6027, %v6041
        %v6044 = vlaneseq
        %v6045 = vshrl.u32 %v6044, 7
        %v6046 = vsub.s32 3, %v6045
        %v6047 = vrot.slane %v3558, %v6046
        %v6048 = vmul.f32 %v6042, %v6047
        %v6049 = vmul.f32 %v6043, %v6047
        %v6050 = vlaneseq
        %v6051 = vshrl.u32 %v6050, 7
        %v6052 = vsub.s32 4, %v6051
        %v6053 = vrot.slane %v3558, %v6052
        %v6054 = vadd.f32 %v6048, %v6053
        %v6055 = vadd.f32 %v6049, %v6053
        %s6056 = scalar_lea.vmem %s18, 16
        %v6057 = vld [vmem:[%s6056] sm:$0xff]
        %v6058 = vld [vmem:[%s6056 + $0x8] sm:$0x1f]
        %s6059 = scalar_lea.vmem %s11, 16
        %v6060 = vld [vmem:[%s6059] sm:$0xf]
        %v6061 = vld [vmem:[%s6059 + $0x4] sm:$0xf]
        %v6062 = vld [vmem:[%s6059 + $0x8] sm:$0xf]
        %v6063 = vld [vmem:[%s6059 + $0xc] sm:$0xf]
        %v6064 = vpack.c.bf16 %v6055, %v6054
        %v6065 = vlaneseq
        %v6066 = vshrl.u32 %v6065, 7
        %v6067 = vsub.s32 0, %v6066
        %v6068 = vrot.slane %v6057, %v6067
        %v6073 = vunpack.c.l.b16 %v6060
        %v6074 = vunpack.c.l.b16 %v6061
        %v6075 = vunpack.c.l.b16 %v6062
        %v6076 = vunpack.c.l.b16 %v6063
        %v6077 = vpack.c.b16 %v6074, %v6073
        %v6078 = vpack.c.b16 %v6076, %v6075
        %v6082 = vsel %vm810, %v6064, 0
        %6084 = vmatprep.subr.bf16.mxu0 0
        %6085 = vmatpush1.bf16.msra.mxu0 %v6077
        %6086 = vmatprep.subr.bf16.mxu0 0
        %6087 = vmatpush1.bf16.msra.mxu0 %v6078
        %6088 = vmatprep.subr.bf16.mxu0 0
        %6089 = vmatpush1.bf16.msra.mxu0 0
        %6090 = vmatprep.subr.bf16.mxu0 0
        %6091 = vmatpush1.bf16.msra.mxu0 0
        %6092 = vmatprep.subr.bf16.mxu0 0
        %6093 = vmatpush1.bf16.msra.mxu0 0
        %6094 = vmatprep.subr.bf16.mxu0 0
        %6095 = vmatpush1.bf16.msra.mxu0 0
        %6096 = vmatprep.subr.bf16.mxu0 0
        %6097 = vmatpush1.bf16.msra.mxu0 0
        %6098 = vmatprep.subr.bf16.mxu0 0
        %6099 = vmatpush1.bf16.msra.mxu0 0
        %6100 = vmatprep.subr.bf16.mxu0 0
        %6101 = vmatpush1.bf16.msra.mxu0 0
        %6102 = vmatprep.subr.bf16.mxu0 0
        %6103 = vmatpush1.bf16.msra.mxu0 0
        %6104 = vmatprep.subr.bf16.mxu0 0
        %6105 = vmatpush1.bf16.msra.mxu0 0
        %6106 = vmatprep.subr.bf16.mxu0 0
        %6107 = vmatpush1.bf16.msra.mxu0 0
        %6108 = vmatprep.subr.bf16.mxu0 0
        %6109 = vmatpush1.bf16.msra.mxu0 0
        %6110 = vmatprep.subr.bf16.mxu0 0
        %6111 = vmatpush1.bf16.msra.mxu0 0
        %6112 = vmatprep.subr.bf16.mxu0 0
        %6113 = vmatpush1.bf16.msra.mxu0 0
        %6114 = vmatprep.subr.bf16.mxu0 0
        %6115 = vmatpush1.bf16.msra.mxu0 0
        %6116 = vmatprep.mubr.bf16.mxu0 0
        %6117 = vmatmul.mubr.bf16.gmra.mrb[0].mxu0 %v6082
        %v6118 = vpop.f32.mrb[0].mxu0
        %v6119 = vadd.f32 %v6068, %v6118
        %v6120 = vpop.f32.mrb[0].mxu0
        %v6121 = vpop.f32.mrb[0].mxu0
        %v6122 = vadd.f32 %v6068, %v6121
        %v6123 = vpop.f32.mrb[0].mxu0
        %6124 = vdwg.mxu0
        %6126 = vrot.lane.b32.xlu0 %v6119, 120
        %v6127 = vpop.permute.xlu0 %6126
        %6129 = vrot.lane.b32.xlu0 %v6119, 112
        %v6130 = vpop.permute.xlu0 %6129
        %6132 = vrot.lane.b32.xlu0 %v6119, 104
        %v6133 = vpop.permute.xlu0 %6132
        %v6135 = vpack.c.bf16 %v6119, %v6119
        %v6136 = vpack.c.bf16 %v6127, %v6127
        %v6137 = vpack.c.bf16 %v6130, %v6130
        %v6138 = vpack.c.bf16 %v6133, %v6133
        %6140 = vrot.lane.b32.xlu0 %v6135, 96
        %v6141 = vpop.permute.xlu0 %6140
        %v6143 = vsel %vm1011, %v6135, 0
        %v6146 = vsel %vm1011, %v6141, 0
        %6148 = vmatprep.subr.bf16.mxu0 0
        %6149 = vmatpush1.bf16.xpose.msra.mxu0 %v6146
        %6150 = vmatprep.subr.bf16.mxu0 0
        %6151 = vmatpush1.bf16.xpose.msra.mxu0 0
        %6152 = vmatprep.subr.bf16.mxu0 0
        %6153 = vmatpush1.bf16.xpose.msra.mxu0 0
        %6154 = vmatprep.subr.bf16.mxu0 0
        %6155 = vmatpush1.bf16.xpose.msra.mxu0 0
        %6156 = vmatprep.subr.bf16.mxu0 0
        %6157 = vmatpush1.bf16.xpose.msra.mxu0 0
        %6158 = vmatprep.subr.bf16.mxu0 0
        %6159 = vmatpush1.bf16.xpose.msra.mxu0 0
        %6160 = vmatprep.subr.bf16.mxu0 0
        %6161 = vmatpush1.bf16.xpose.msra.mxu0 0
        %6162 = vmatprep.subr.bf16.mxu0 0
        %6163 = vmatpush1.bf16.xpose.msra.mxu0 0
        %6164 = vmatprep.subr.bf16.mxu0 0
        %6165 = vmatpush1.bf16.xpose.msra.mxu0 0
        %6166 = vmatprep.subr.bf16.mxu0 0
        %6167 = vmatpush1.bf16.xpose.msra.mxu0 0
        %6168 = vmatprep.subr.bf16.mxu0 0
        %6169 = vmatpush1.bf16.xpose.msra.mxu0 0
        %6170 = vmatprep.subr.bf16.mxu0 0
        %6171 = vmatpush1.bf16.xpose.msra.mxu0 0
        %6172 = vmatprep.subr.bf16.mxu0 0
        %6173 = vmatpush1.bf16.xpose.msra.mxu0 0
        %6174 = vmatprep.subr.bf16.mxu0 0
        %6175 = vmatpush1.bf16.xpose.msra.mxu0 0
        %6176 = vmatprep.subr.bf16.mxu0 0
        %6177 = vmatpush1.bf16.xpose.msra.mxu0 0
        %6178 = vmatprep.subr.bf16.mxu0 0
        %6179 = vmatpush1.bf16.xpose.msra.mxu0 0
        %6180 = vmatprep.mubr.bf16.mxu0 0
        %6181 = vmatmul.mubr.bf16.gmra.mrb[0].mxu0 %v6143
        %v6182 = vpop.f32.mrb[0].mxu0
        %v6183 = vadd.f32 0.0, %v6182
        %v6184 = vpop.f32.mrb[0].mxu0
        %v6185 = vpop.f32.mrb[0].mxu0
        %v6186 = vpop.f32.mrb[0].mxu0
        %6187 = vdwg.mxu0
        %6189 = vrot.lane.b32.xlu0 %v6136, 96
        %v6190 = vpop.permute.xlu0 %6189
        %v6192 = vsel %vm1011, %v6136, 0
        %v6195 = vsel %vm1011, %v6190, 0
        %6197 = vmatprep.subr.bf16.mxu0 0
        %6198 = vmatpush1.bf16.xpose.msra.mxu0 %v6195
        %6199 = vmatprep.subr.bf16.mxu0 0
        %6200 = vmatpush1.bf16.xpose.msra.mxu0 0
        %6201 = vmatprep.subr.bf16.mxu0 0
        %6202 = vmatpush1.bf16.xpose.msra.mxu0 0
        %6203 = vmatprep.subr.bf16.mxu0 0
        %6204 = vmatpush1.bf16.xpose.msra.mxu0 0
        %6205 = vmatprep.subr.bf16.mxu0 0
        %6206 = vmatpush1.bf16.xpose.msra.mxu0 0
        %6207 = vmatprep.subr.bf16.mxu0 0
        %6208 = vmatpush1.bf16.xpose.msra.mxu0 0
        %6209 = vmatprep.subr.bf16.mxu0 0
        %6210 = vmatpush1.bf16.xpose.msra.mxu0 0
        %6211 = vmatprep.subr.bf16.mxu0 0
        %6212 = vmatpush1.bf16.xpose.msra.mxu0 0
        %6213 = vmatprep.subr.bf16.mxu0 0
        %6214 = vmatpush1.bf16.xpose.msra.mxu0 0
        %6215 = vmatprep.subr.bf16.mxu0 0
        %6216 = vmatpush1.bf16.xpose.msra.mxu0 0
        %6217 = vmatprep.subr.bf16.mxu0 0
        %6218 = vmatpush1.bf16.xpose.msra.mxu0 0
        %6219 = vmatprep.subr.bf16.mxu0 0
        %6220 = vmatpush1.bf16.xpose.msra.mxu0 0
        %6221 = vmatprep.subr.bf16.mxu0 0
        %6222 = vmatpush1.bf16.xpose.msra.mxu0 0
        %6223 = vmatprep.subr.bf16.mxu0 0
        %6224 = vmatpush1.bf16.xpose.msra.mxu0 0
        %6225 = vmatprep.subr.bf16.mxu0 0
        %6226 = vmatpush1.bf16.xpose.msra.mxu0 0
        %6227 = vmatprep.subr.bf16.mxu0 0
        %6228 = vmatpush1.bf16.xpose.msra.mxu0 0
        %6229 = vmatprep.mubr.bf16.mxu0 0
        %6230 = vmatmul.mubr.bf16.gmra.mrb[0].mxu0 %v6192
        %v6231 = vpop.f32.mrb[0].mxu0
        %v6232 = vadd.f32 0.0, %v6231
        %v6233 = vpop.f32.mrb[0].mxu0
        %v6234 = vpop.f32.mrb[0].mxu0
        %v6235 = vpop.f32.mrb[0].mxu0
        %6236 = vdwg.mxu0
        %6238 = vrot.lane.b32.xlu0 %v6137, 96
        %v6239 = vpop.permute.xlu0 %6238
        %v6241 = vsel %vm1011, %v6137, 0
        %v6244 = vsel %vm1011, %v6239, 0
        %6246 = vmatprep.subr.bf16.mxu0 0
        %6247 = vmatpush1.bf16.xpose.msra.mxu0 %v6244
        %6248 = vmatprep.subr.bf16.mxu0 0
        %6249 = vmatpush1.bf16.xpose.msra.mxu0 0
        %6250 = vmatprep.subr.bf16.mxu0 0
        %6251 = vmatpush1.bf16.xpose.msra.mxu0 0
        %6252 = vmatprep.subr.bf16.mxu0 0
        %6253 = vmatpush1.bf16.xpose.msra.mxu0 0
        %6254 = vmatprep.subr.bf16.mxu0 0
        %6255 = vmatpush1.bf16.xpose.msra.mxu0 0
        %6256 = vmatprep.subr.bf16.mxu0 0
        %6257 = vmatpush1.bf16.xpose.msra.mxu0 0
        %6258 = vmatprep.subr.bf16.mxu0 0
        %6259 = vmatpush1.bf16.xpose.msra.mxu0 0
        %6260 = vmatprep.subr.bf16.mxu0 0
        %6261 = vmatpush1.bf16.xpose.msra.mxu0 0
        %6262 = vmatprep.subr.bf16.mxu0 0
        %6263 = vmatpush1.bf16.xpose.msra.mxu0 0
        %6264 = vmatprep.subr.bf16.mxu0 0
        %6265 = vmatpush1.bf16.xpose.msra.mxu0 0
        %6266 = vmatprep.subr.bf16.mxu0 0
        %6267 = vmatpush1.bf16.xpose.msra.mxu0 0
        %6268 = vmatprep.subr.bf16.mxu0 0
        %6269 = vmatpush1.bf16.xpose.msra.mxu0 0
        %6270 = vmatprep.subr.bf16.mxu0 0
        %6271 = vmatpush1.bf16.xpose.msra.mxu0 0
        %6272 = vmatprep.subr.bf16.mxu0 0
        %6273 = vmatpush1.bf16.xpose.msra.mxu0 0
        %6274 = vmatprep.subr.bf16.mxu0 0
        %6275 = vmatpush1.bf16.xpose.msra.mxu0 0
        %6276 = vmatprep.subr.bf16.mxu0 0
        %6277 = vmatpush1.bf16.xpose.msra.mxu0 0
        %6278 = vmatprep.mubr.bf16.mxu0 0
        %6279 = vmatmul.mubr.bf16.gmra.mrb[0].mxu0 %v6241
        %v6280 = vpop.f32.mrb[0].mxu0
        %v6281 = vadd.f32 0.0, %v6280
        %v6282 = vpop.f32.mrb[0].mxu0
        %v6283 = vpop.f32.mrb[0].mxu0
        %v6284 = vpop.f32.mrb[0].mxu0
        %6285 = vdwg.mxu0
        %6287 = vrot.lane.b32.xlu0 %v6138, 96
        %v6288 = vpop.permute.xlu0 %6287
        %v6290 = vsel %vm1011, %v6138, 0
        %v6293 = vsel %vm1011, %v6288, 0
        %6295 = vmatprep.subr.bf16.mxu0 0
        %6296 = vmatpush1.bf16.xpose.msra.mxu0 %v6293
        %6297 = vmatprep.subr.bf16.mxu0 0
        %6298 = vmatpush1.bf16.xpose.msra.mxu0 0
        %6299 = vmatprep.subr.bf16.mxu0 0
        %6300 = vmatpush1.bf16.xpose.msra.mxu0 0
        %6301 = vmatprep.subr.bf16.mxu0 0
        %6302 = vmatpush1.bf16.xpose.msra.mxu0 0
        %6303 = vmatprep.subr.bf16.mxu0 0
        %6304 = vmatpush1.bf16.xpose.msra.mxu0 0
        %6305 = vmatprep.subr.bf16.mxu0 0
        %6306 = vmatpush1.bf16.xpose.msra.mxu0 0
        %6307 = vmatprep.subr.bf16.mxu0 0
        %6308 = vmatpush1.bf16.xpose.msra.mxu0 0
        %6309 = vmatprep.subr.bf16.mxu0 0
        %6310 = vmatpush1.bf16.xpose.msra.mxu0 0
        %6311 = vmatprep.subr.bf16.mxu0 0
        %6312 = vmatpush1.bf16.xpose.msra.mxu0 0
        %6313 = vmatprep.subr.bf16.mxu0 0
        %6314 = vmatpush1.bf16.xpose.msra.mxu0 0
        %6315 = vmatprep.subr.bf16.mxu0 0
        %6316 = vmatpush1.bf16.xpose.msra.mxu0 0
        %6317 = vmatprep.subr.bf16.mxu0 0
        %6318 = vmatpush1.bf16.xpose.msra.mxu0 0
        %6319 = vmatprep.subr.bf16.mxu0 0
        %6320 = vmatpush1.bf16.xpose.msra.mxu0 0
        %6321 = vmatprep.subr.bf16.mxu0 0
        %6322 = vmatpush1.bf16.xpose.msra.mxu0 0
        %6323 = vmatprep.subr.bf16.mxu0 0
        %6324 = vmatpush1.bf16.xpose.msra.mxu0 0
        %6325 = vmatprep.subr.bf16.mxu0 0
        %6326 = vmatpush1.bf16.xpose.msra.mxu0 0
        %6327 = vmatprep.mubr.bf16.mxu0 0
        %6328 = vmatmul.mubr.bf16.gmra.mrb[0].mxu0 %v6290
        %v6329 = vpop.f32.mrb[0].mxu0
        %v6330 = vadd.f32 0.0, %v6329
        %v6331 = vpop.f32.mrb[0].mxu0
        %v6332 = vpop.f32.mrb[0].mxu0
        %v6333 = vpop.f32.mrb[0].mxu0
        %6334 = vdwg.mxu0
        %v6335 = vmul.f32 %v6183, 0.35355338
        %v6336 = vmul.f32 %v6232, 0.35355338
        %v6337 = vmul.f32 %v6281, 0.35355338
        %v6338 = vmul.f32 %v6330, 0.35355338
        %v6339 = vadd.f32 %v6335, %v769
        %v6340 = vadd.f32 %v6336, %v769
        %v6341 = vadd.f32 %v6337, %v769
        %v6342 = vadd.f32 %v6338, %v769
        %v6343 = vsel %vm1011, %v6339, -inf
        %6344 = vmax.xlane.f32.xlu0 %v6343
        %v6345 = vpop.xlane.xlu0 %6344
        %v6346 = vsel %vm1011, %v6340, -inf
        %6347 = vmax.xlane.f32.xlu0 %v6346
        %v6348 = vpop.xlane.xlu0 %6347
        %v6349 = vsel %vm1011, %v6341, -inf
        %6350 = vmax.xlane.f32.xlu0 %v6349
        %v6351 = vpop.xlane.xlu0 %6350
        %v6352 = vsel %vm1011, %v6342, -inf
        %6353 = vmax.xlane.f32.xlu0 %v6352
        %v6354 = vpop.xlane.xlu0 %6353
        %v6355 = vsub.f32 %v6339, %v6345
        %v6356 = vsub.f32 %v6340, %v6348
        %v6357 = vsub.f32 %v6341, %v6351
        %v6358 = vsub.f32 %v6342, %v6354
        %v6359 = vmul.f32 %v6355, 1.442695
        %v6360 = vpow.pop %v6359
        %v6361 = vmul.f32 %v6356, 1.442695
        %v6362 = vpow.pop %v6361
        %v6363 = vmul.f32 %v6357, 1.442695
        %v6364 = vpow.pop %v6363
        %v6365 = vmul.f32 %v6358, 1.442695
        %v6366 = vpow.pop %v6365
        %v6367 = vsel %vm1011, %v6360, 0.0
        %6368 = vadd.xlane.f32.xlu0 %v6367
        %v6369 = vpop.xlane.xlu0 %6368
        %v6370 = vsel %vm1011, %v6362, 0.0
        %6371 = vadd.xlane.f32.xlu0 %v6370
        %v6372 = vpop.xlane.xlu0 %6371
        %v6373 = vsel %vm1011, %v6364, 0.0
        %6374 = vadd.xlane.f32.xlu0 %v6373
        %v6375 = vpop.xlane.xlu0 %6374
        %v6376 = vsel %vm1011, %v6366, 0.0
        %6377 = vadd.xlane.f32.xlu0 %v6376
        %v6378 = vpop.xlane.xlu0 %6377
        %v6379 = vrcp.pop %v6369
        %v6380 = vmul.f32 %v6360, %v6379
        %v6381 = vrcp.pop %v6372
        %v6382 = vmul.f32 %v6362, %v6381
        %v6383 = vrcp.pop %v6375
        %v6384 = vmul.f32 %v6364, %v6383
        %v6385 = vrcp.pop %v6378
        %v6386 = vmul.f32 %v6366, %v6385
        %v6387 = vpack.c.bf16 %v6380, %v6380
        %v6388 = vpack.c.bf16 %v6382, %v6382
        %v6389 = vpack.c.bf16 %v6384, %v6384
        %v6390 = vpack.c.bf16 %v6386, %v6386
        %6391 = vrot.lane.b32.xlu0 %v6135, 64
        %v6392 = vpop.permute.xlu0 %6391
        %v6394 = vsel %vm1011, %v6387, 0
        %v6397 = vsel %vm1270, %v6392, 0
        %6399 = vmatprep.subr.bf16.mxu0 0
        %6400 = vmatpush1.bf16.msra.mxu0 %v6397
        %6401 = vmatprep.subr.bf16.mxu0 0
        %6402 = vmatpush1.bf16.msra.mxu0 0
        %6403 = vmatprep.subr.bf16.mxu0 0
        %6404 = vmatpush1.bf16.msra.mxu0 0
        %6405 = vmatprep.subr.bf16.mxu0 0
        %6406 = vmatpush1.bf16.msra.mxu0 0
        %6407 = vmatprep.subr.bf16.mxu0 0
        %6408 = vmatpush1.bf16.msra.mxu0 0
        %6409 = vmatprep.subr.bf16.mxu0 0
        %6410 = vmatpush1.bf16.msra.mxu0 0
        %6411 = vmatprep.subr.bf16.mxu0 0
        %6412 = vmatpush1.bf16.msra.mxu0 0
        %6413 = vmatprep.subr.bf16.mxu0 0
        %6414 = vmatpush1.bf16.msra.mxu0 0
        %6415 = vmatprep.subr.bf16.mxu0 0
        %6416 = vmatpush1.bf16.msra.mxu0 0
        %6417 = vmatprep.subr.bf16.mxu0 0
        %6418 = vmatpush1.bf16.msra.mxu0 0
        %6419 = vmatprep.subr.bf16.mxu0 0
        %6420 = vmatpush1.bf16.msra.mxu0 0
        %6421 = vmatprep.subr.bf16.mxu0 0
        %6422 = vmatpush1.bf16.msra.mxu0 0
        %6423 = vmatprep.subr.bf16.mxu0 0
        %6424 = vmatpush1.bf16.msra.mxu0 0
        %6425 = vmatprep.subr.bf16.mxu0 0
        %6426 = vmatpush1.bf16.msra.mxu0 0
        %6427 = vmatprep.subr.bf16.mxu0 0
        %6428 = vmatpush1.bf16.msra.mxu0 0
        %6429 = vmatprep.subr.bf16.mxu0 0
        %6430 = vmatpush1.bf16.msra.mxu0 0
        %6431 = vmatprep.mubr.bf16.mxu0 0
        %6432 = vmatmul.mubr.bf16.gmra.mrb[0].mxu0 %v6394
        %v6433 = vpop.f32.mrb[0].mxu0
        %v6434 = vadd.f32 0.0, %v6433
        %v6435 = vpop.f32.mrb[0].mxu0
        %v6436 = vpop.f32.mrb[0].mxu0
        %v6437 = vpop.f32.mrb[0].mxu0
        %6438 = vdwg.mxu0
        %6439 = vrot.lane.b32.xlu0 %v6136, 64
        %v6440 = vpop.permute.xlu0 %6439
        %v6442 = vsel %vm1011, %v6388, 0
        %v6445 = vsel %vm1270, %v6440, 0
        %6447 = vmatprep.subr.bf16.mxu0 0
        %6448 = vmatpush1.bf16.msra.mxu0 %v6445
        %6449 = vmatprep.subr.bf16.mxu0 0
        %6450 = vmatpush1.bf16.msra.mxu0 0
        %6451 = vmatprep.subr.bf16.mxu0 0
        %6452 = vmatpush1.bf16.msra.mxu0 0
        %6453 = vmatprep.subr.bf16.mxu0 0
        %6454 = vmatpush1.bf16.msra.mxu0 0
        %6455 = vmatprep.subr.bf16.mxu0 0
        %6456 = vmatpush1.bf16.msra.mxu0 0
        %6457 = vmatprep.subr.bf16.mxu0 0
        %6458 = vmatpush1.bf16.msra.mxu0 0
        %6459 = vmatprep.subr.bf16.mxu0 0
        %6460 = vmatpush1.bf16.msra.mxu0 0
        %6461 = vmatprep.subr.bf16.mxu0 0
        %6462 = vmatpush1.bf16.msra.mxu0 0
        %6463 = vmatprep.subr.bf16.mxu0 0
        %6464 = vmatpush1.bf16.msra.mxu0 0
        %6465 = vmatprep.subr.bf16.mxu0 0
        %6466 = vmatpush1.bf16.msra.mxu0 0
        %6467 = vmatprep.subr.bf16.mxu0 0
        %6468 = vmatpush1.bf16.msra.mxu0 0
        %6469 = vmatprep.subr.bf16.mxu0 0
        %6470 = vmatpush1.bf16.msra.mxu0 0
        %6471 = vmatprep.subr.bf16.mxu0 0
        %6472 = vmatpush1.bf16.msra.mxu0 0
        %6473 = vmatprep.subr.bf16.mxu0 0
        %6474 = vmatpush1.bf16.msra.mxu0 0
        %6475 = vmatprep.subr.bf16.mxu0 0
        %6476 = vmatpush1.bf16.msra.mxu0 0
        %6477 = vmatprep.subr.bf16.mxu0 0
        %6478 = vmatpush1.bf16.msra.mxu0 0
        %6479 = vmatprep.mubr.bf16.mxu0 0
        %6480 = vmatmul.mubr.bf16.gmra.mrb[0].mxu0 %v6442
        %v6481 = vpop.f32.mrb[0].mxu0
        %v6482 = vadd.f32 0.0, %v6481
        %v6483 = vpop.f32.mrb[0].mxu0
        %v6484 = vpop.f32.mrb[0].mxu0
        %v6485 = vpop.f32.mrb[0].mxu0
        %6486 = vdwg.mxu0
        %6487 = vrot.lane.b32.xlu0 %v6137, 64
        %v6488 = vpop.permute.xlu0 %6487
        %v6490 = vsel %vm1011, %v6389, 0
        %v6493 = vsel %vm1270, %v6488, 0
        %6495 = vmatprep.subr.bf16.mxu0 0
        %6496 = vmatpush1.bf16.msra.mxu0 %v6493
        %6497 = vmatprep.subr.bf16.mxu0 0
        %6498 = vmatpush1.bf16.msra.mxu0 0
        %6499 = vmatprep.subr.bf16.mxu0 0
        %6500 = vmatpush1.bf16.msra.mxu0 0
        %6501 = vmatprep.subr.bf16.mxu0 0
        %6502 = vmatpush1.bf16.msra.mxu0 0
        %6503 = vmatprep.subr.bf16.mxu0 0
        %6504 = vmatpush1.bf16.msra.mxu0 0
        %6505 = vmatprep.subr.bf16.mxu0 0
        %6506 = vmatpush1.bf16.msra.mxu0 0
        %6507 = vmatprep.subr.bf16.mxu0 0
        %6508 = vmatpush1.bf16.msra.mxu0 0
        %6509 = vmatprep.subr.bf16.mxu0 0
        %6510 = vmatpush1.bf16.msra.mxu0 0
        %6511 = vmatprep.subr.bf16.mxu0 0
        %6512 = vmatpush1.bf16.msra.mxu0 0
        %6513 = vmatprep.subr.bf16.mxu0 0
        %6514 = vmatpush1.bf16.msra.mxu0 0
        %6515 = vmatprep.subr.bf16.mxu0 0
        %6516 = vmatpush1.bf16.msra.mxu0 0
        %6517 = vmatprep.subr.bf16.mxu0 0
        %6518 = vmatpush1.bf16.msra.mxu0 0
        %6519 = vmatprep.subr.bf16.mxu0 0
        %6520 = vmatpush1.bf16.msra.mxu0 0
        %6521 = vmatprep.subr.bf16.mxu0 0
        %6522 = vmatpush1.bf16.msra.mxu0 0
        %6523 = vmatprep.subr.bf16.mxu0 0
        %6524 = vmatpush1.bf16.msra.mxu0 0
        %6525 = vmatprep.subr.bf16.mxu0 0
        %6526 = vmatpush1.bf16.msra.mxu0 0
        %6527 = vmatprep.mubr.bf16.mxu0 0
        %6528 = vmatmul.mubr.bf16.gmra.mrb[0].mxu0 %v6490
        %v6529 = vpop.f32.mrb[0].mxu0
        %v6530 = vadd.f32 0.0, %v6529
        %v6531 = vpop.f32.mrb[0].mxu0
        %v6532 = vpop.f32.mrb[0].mxu0
        %v6533 = vpop.f32.mrb[0].mxu0
        %6534 = vdwg.mxu0
        %6535 = vrot.lane.b32.xlu0 %v6138, 64
        %v6536 = vpop.permute.xlu0 %6535
        %v6538 = vsel %vm1011, %v6390, 0
        %v6541 = vsel %vm1270, %v6536, 0
        %6543 = vmatprep.subr.bf16.mxu0 0
        %6544 = vmatpush1.bf16.msra.mxu0 %v6541
        %6545 = vmatprep.subr.bf16.mxu0 0
        %6546 = vmatpush1.bf16.msra.mxu0 0
        %6547 = vmatprep.subr.bf16.mxu0 0
        %6548 = vmatpush1.bf16.msra.mxu0 0
        %6549 = vmatprep.subr.bf16.mxu0 0
        %6550 = vmatpush1.bf16.msra.mxu0 0
        %6551 = vmatprep.subr.bf16.mxu0 0
        %6552 = vmatpush1.bf16.msra.mxu0 0
        %6553 = vmatprep.subr.bf16.mxu0 0
        %6554 = vmatpush1.bf16.msra.mxu0 0
        %6555 = vmatprep.subr.bf16.mxu0 0
        %6556 = vmatpush1.bf16.msra.mxu0 0
        %6557 = vmatprep.subr.bf16.mxu0 0
        %6558 = vmatpush1.bf16.msra.mxu0 0
        %6559 = vmatprep.subr.bf16.mxu0 0
        %6560 = vmatpush1.bf16.msra.mxu0 0
        %6561 = vmatprep.subr.bf16.mxu0 0
        %6562 = vmatpush1.bf16.msra.mxu0 0
        %6563 = vmatprep.subr.bf16.mxu0 0
        %6564 = vmatpush1.bf16.msra.mxu0 0
        %6565 = vmatprep.subr.bf16.mxu0 0
        %6566 = vmatpush1.bf16.msra.mxu0 0
        %6567 = vmatprep.subr.bf16.mxu0 0
        %6568 = vmatpush1.bf16.msra.mxu0 0
        %6569 = vmatprep.subr.bf16.mxu0 0
        %6570 = vmatpush1.bf16.msra.mxu0 0
        %6571 = vmatprep.subr.bf16.mxu0 0
        %6572 = vmatpush1.bf16.msra.mxu0 0
        %6573 = vmatprep.subr.bf16.mxu0 0
        %6574 = vmatpush1.bf16.msra.mxu0 0
        %6575 = vmatprep.mubr.bf16.mxu0 0
        %6576 = vmatmul.mubr.bf16.gmra.mrb[0].mxu0 %v6538
        %v6577 = vpop.f32.mrb[0].mxu0
        %v6578 = vadd.f32 0.0, %v6577
        %v6579 = vpop.f32.mrb[0].mxu0
        %v6580 = vpop.f32.mrb[0].mxu0
        %v6581 = vpop.f32.mrb[0].mxu0
        %6582 = vdwg.mxu0
        %6584 = vrot.lane.b32.xlu0 %v6482, 8
        %v6585 = vpop.permute.xlu0 %6584
        %6588 = vrot.lane.b32.xlu0 %v6530, 16
        %v6589 = vpop.permute.xlu0 %6588
        %6592 = vrot.lane.b32.xlu0 %v6578, 24
        %v6593 = vpop.permute.xlu0 %6592
        %v6595 = vsel %vm1011, %v6434, %v6585
        %v6596 = vsel %vm1471, %v6595, %v6589
        %v6597 = vsel %vm1473, %v6596, %v6593
        %6599 = vrot.lane.b32.xlu0 %v6122, 120
        %v6600 = vpop.permute.xlu0 %6599
        %6602 = vrot.lane.b32.xlu0 %v6122, 112
        %v6603 = vpop.permute.xlu0 %6602
        %6605 = vrot.lane.b32.xlu0 %v6122, 104
        %v6606 = vpop.permute.xlu0 %6605
        %v6608 = vpack.c.bf16 %v6122, %v6122
        %v6609 = vpack.c.bf16 %v6600, %v6600
        %v6610 = vpack.c.bf16 %v6603, %v6603
        %v6611 = vpack.c.bf16 %v6606, %v6606
        %6613 = vrot.lane.b32.xlu0 %v6608, 96
        %v6614 = vpop.permute.xlu0 %6613
        %v6616 = vsel %vm1011, %v6608, 0
        %v6619 = vsel %vm1011, %v6614, 0
        %6621 = vmatprep.subr.bf16.mxu0 0
        %6622 = vmatpush1.bf16.xpose.msra.mxu0 %v6619
        %6623 = vmatprep.subr.bf16.mxu0 0
        %6624 = vmatpush1.bf16.xpose.msra.mxu0 0
        %6625 = vmatprep.subr.bf16.mxu0 0
        %6626 = vmatpush1.bf16.xpose.msra.mxu0 0
        %6627 = vmatprep.subr.bf16.mxu0 0
        %6628 = vmatpush1.bf16.xpose.msra.mxu0 0
        %6629 = vmatprep.subr.bf16.mxu0 0
        %6630 = vmatpush1.bf16.xpose.msra.mxu0 0
        %6631 = vmatprep.subr.bf16.mxu0 0
        %6632 = vmatpush1.bf16.xpose.msra.mxu0 0
        %6633 = vmatprep.subr.bf16.mxu0 0
        %6634 = vmatpush1.bf16.xpose.msra.mxu0 0
        %6635 = vmatprep.subr.bf16.mxu0 0
        %6636 = vmatpush1.bf16.xpose.msra.mxu0 0
        %6637 = vmatprep.subr.bf16.mxu0 0
        %6638 = vmatpush1.bf16.xpose.msra.mxu0 0
        %6639 = vmatprep.subr.bf16.mxu0 0
        %6640 = vmatpush1.bf16.xpose.msra.mxu0 0
        %6641 = vmatprep.subr.bf16.mxu0 0
        %6642 = vmatpush1.bf16.xpose.msra.mxu0 0
        %6643 = vmatprep.subr.bf16.mxu0 0
        %6644 = vmatpush1.bf16.xpose.msra.mxu0 0
        %6645 = vmatprep.subr.bf16.mxu0 0
        %6646 = vmatpush1.bf16.xpose.msra.mxu0 0
        %6647 = vmatprep.subr.bf16.mxu0 0
        %6648 = vmatpush1.bf16.xpose.msra.mxu0 0
        %6649 = vmatprep.subr.bf16.mxu0 0
        %6650 = vmatpush1.bf16.xpose.msra.mxu0 0
        %6651 = vmatprep.subr.bf16.mxu0 0
        %6652 = vmatpush1.bf16.xpose.msra.mxu0 0
        %6653 = vmatprep.mubr.bf16.mxu0 0
        %6654 = vmatmul.mubr.bf16.gmra.mrb[0].mxu0 %v6616
        %v6655 = vpop.f32.mrb[0].mxu0
        %v6656 = vadd.f32 0.0, %v6655
        %v6657 = vpop.f32.mrb[0].mxu0
        %v6658 = vpop.f32.mrb[0].mxu0
        %v6659 = vpop.f32.mrb[0].mxu0
        %6660 = vdwg.mxu0
        %6662 = vrot.lane.b32.xlu0 %v6609, 96
        %v6663 = vpop.permute.xlu0 %6662
        %v6665 = vsel %vm1011, %v6609, 0
        %v6668 = vsel %vm1011, %v6663, 0
        %6670 = vmatprep.subr.bf16.mxu0 0
        %6671 = vmatpush1.bf16.xpose.msra.mxu0 %v6668
        %6672 = vmatprep.subr.bf16.mxu0 0
        %6673 = vmatpush1.bf16.xpose.msra.mxu0 0
        %6674 = vmatprep.subr.bf16.mxu0 0
        %6675 = vmatpush1.bf16.xpose.msra.mxu0 0
        %6676 = vmatprep.subr.bf16.mxu0 0
        %6677 = vmatpush1.bf16.xpose.msra.mxu0 0
        %6678 = vmatprep.subr.bf16.mxu0 0
        %6679 = vmatpush1.bf16.xpose.msra.mxu0 0
        %6680 = vmatprep.subr.bf16.mxu0 0
        %6681 = vmatpush1.bf16.xpose.msra.mxu0 0
        %6682 = vmatprep.subr.bf16.mxu0 0
        %6683 = vmatpush1.bf16.xpose.msra.mxu0 0
        %6684 = vmatprep.subr.bf16.mxu0 0
        %6685 = vmatpush1.bf16.xpose.msra.mxu0 0
        %6686 = vmatprep.subr.bf16.mxu0 0
        %6687 = vmatpush1.bf16.xpose.msra.mxu0 0
        %6688 = vmatprep.subr.bf16.mxu0 0
        %6689 = vmatpush1.bf16.xpose.msra.mxu0 0
        %6690 = vmatprep.subr.bf16.mxu0 0
        %6691 = vmatpush1.bf16.xpose.msra.mxu0 0
        %6692 = vmatprep.subr.bf16.mxu0 0
        %6693 = vmatpush1.bf16.xpose.msra.mxu0 0
        %6694 = vmatprep.subr.bf16.mxu0 0
        %6695 = vmatpush1.bf16.xpose.msra.mxu0 0
        %6696 = vmatprep.subr.bf16.mxu0 0
        %6697 = vmatpush1.bf16.xpose.msra.mxu0 0
        %6698 = vmatprep.subr.bf16.mxu0 0
        %6699 = vmatpush1.bf16.xpose.msra.mxu0 0
        %6700 = vmatprep.subr.bf16.mxu0 0
        %6701 = vmatpush1.bf16.xpose.msra.mxu0 0
        %6702 = vmatprep.mubr.bf16.mxu0 0
        %6703 = vmatmul.mubr.bf16.gmra.mrb[0].mxu0 %v6665
        %v6704 = vpop.f32.mrb[0].mxu0
        %v6705 = vadd.f32 0.0, %v6704
        %v6706 = vpop.f32.mrb[0].mxu0
        %v6707 = vpop.f32.mrb[0].mxu0
        %v6708 = vpop.f32.mrb[0].mxu0
        %6709 = vdwg.mxu0
        %6711 = vrot.lane.b32.xlu0 %v6610, 96
        %v6712 = vpop.permute.xlu0 %6711
        %v6714 = vsel %vm1011, %v6610, 0
        %v6717 = vsel %vm1011, %v6712, 0
        %6719 = vmatprep.subr.bf16.mxu0 0
        %6720 = vmatpush1.bf16.xpose.msra.mxu0 %v6717
        %6721 = vmatprep.subr.bf16.mxu0 0
        %6722 = vmatpush1.bf16.xpose.msra.mxu0 0
        %6723 = vmatprep.subr.bf16.mxu0 0
        %6724 = vmatpush1.bf16.xpose.msra.mxu0 0
        %6725 = vmatprep.subr.bf16.mxu0 0
        %6726 = vmatpush1.bf16.xpose.msra.mxu0 0
        %6727 = vmatprep.subr.bf16.mxu0 0
        %6728 = vmatpush1.bf16.xpose.msra.mxu0 0
        %6729 = vmatprep.subr.bf16.mxu0 0
        %6730 = vmatpush1.bf16.xpose.msra.mxu0 0
        %6731 = vmatprep.subr.bf16.mxu0 0
        %6732 = vmatpush1.bf16.xpose.msra.mxu0 0
        %6733 = vmatprep.subr.bf16.mxu0 0
        %6734 = vmatpush1.bf16.xpose.msra.mxu0 0
        %6735 = vmatprep.subr.bf16.mxu0 0
        %6736 = vmatpush1.bf16.xpose.msra.mxu0 0
        %6737 = vmatprep.subr.bf16.mxu0 0
        %6738 = vmatpush1.bf16.xpose.msra.mxu0 0
        %6739 = vmatprep.subr.bf16.mxu0 0
        %6740 = vmatpush1.bf16.xpose.msra.mxu0 0
        %6741 = vmatprep.subr.bf16.mxu0 0
        %6742 = vmatpush1.bf16.xpose.msra.mxu0 0
        %6743 = vmatprep.subr.bf16.mxu0 0
        %6744 = vmatpush1.bf16.xpose.msra.mxu0 0
        %6745 = vmatprep.subr.bf16.mxu0 0
        %6746 = vmatpush1.bf16.xpose.msra.mxu0 0
        %6747 = vmatprep.subr.bf16.mxu0 0
        %6748 = vmatpush1.bf16.xpose.msra.mxu0 0
        %6749 = vmatprep.subr.bf16.mxu0 0
        %6750 = vmatpush1.bf16.xpose.msra.mxu0 0
        %6751 = vmatprep.mubr.bf16.mxu0 0
        %6752 = vmatmul.mubr.bf16.gmra.mrb[0].mxu0 %v6714
        %v6753 = vpop.f32.mrb[0].mxu0
        %v6754 = vadd.f32 0.0, %v6753
        %v6755 = vpop.f32.mrb[0].mxu0
        %v6756 = vpop.f32.mrb[0].mxu0
        %v6757 = vpop.f32.mrb[0].mxu0
        %6758 = vdwg.mxu0
        %6760 = vrot.lane.b32.xlu0 %v6611, 96
        %v6761 = vpop.permute.xlu0 %6760
        %v6763 = vsel %vm1011, %v6611, 0
        %v6766 = vsel %vm1011, %v6761, 0
        %6768 = vmatprep.subr.bf16.mxu0 0
        %6769 = vmatpush1.bf16.xpose.msra.mxu0 %v6766
        %6770 = vmatprep.subr.bf16.mxu0 0
        %6771 = vmatpush1.bf16.xpose.msra.mxu0 0
        %6772 = vmatprep.subr.bf16.mxu0 0
        %6773 = vmatpush1.bf16.xpose.msra.mxu0 0
        %6774 = vmatprep.subr.bf16.mxu0 0
        %6775 = vmatpush1.bf16.xpose.msra.mxu0 0
        %6776 = vmatprep.subr.bf16.mxu0 0
        %6777 = vmatpush1.bf16.xpose.msra.mxu0 0
        %6778 = vmatprep.subr.bf16.mxu0 0
        %6779 = vmatpush1.bf16.xpose.msra.mxu0 0
        %6780 = vmatprep.subr.bf16.mxu0 0
        %6781 = vmatpush1.bf16.xpose.msra.mxu0 0
        %6782 = vmatprep.subr.bf16.mxu0 0
        %6783 = vmatpush1.bf16.xpose.msra.mxu0 0
        %6784 = vmatprep.subr.bf16.mxu0 0
        %6785 = vmatpush1.bf16.xpose.msra.mxu0 0
        %6786 = vmatprep.subr.bf16.mxu0 0
        %6787 = vmatpush1.bf16.xpose.msra.mxu0 0
        %6788 = vmatprep.subr.bf16.mxu0 0
        %6789 = vmatpush1.bf16.xpose.msra.mxu0 0
        %6790 = vmatprep.subr.bf16.mxu0 0
        %6791 = vmatpush1.bf16.xpose.msra.mxu0 0
        %6792 = vmatprep.subr.bf16.mxu0 0
        %6793 = vmatpush1.bf16.xpose.msra.mxu0 0
        %6794 = vmatprep.subr.bf16.mxu0 0
        %6795 = vmatpush1.bf16.xpose.msra.mxu0 0
        %6796 = vmatprep.subr.bf16.mxu0 0
        %6797 = vmatpush1.bf16.xpose.msra.mxu0 0
        %6798 = vmatprep.subr.bf16.mxu0 0
        %6799 = vmatpush1.bf16.xpose.msra.mxu0 0
        %6800 = vmatprep.mubr.bf16.mxu0 0
        %6801 = vmatmul.mubr.bf16.gmra.mrb[0].mxu0 %v6763
        %v6802 = vpop.f32.mrb[0].mxu0
        %v6803 = vadd.f32 0.0, %v6802
        %v6804 = vpop.f32.mrb[0].mxu0
        %v6805 = vpop.f32.mrb[0].mxu0
        %v6806 = vpop.f32.mrb[0].mxu0
        %6807 = vdwg.mxu0
        %v6808 = vmul.f32 %v6656, 0.35355338
        %v6809 = vmul.f32 %v6705, 0.35355338
        %v6810 = vmul.f32 %v6754, 0.35355338
        %v6811 = vmul.f32 %v6803, 0.35355338
        %v6812 = vadd.f32 %v6808, %v777
        %v6813 = vadd.f32 %v6809, %v777
        %v6814 = vadd.f32 %v6810, %v777
        %v6815 = vadd.f32 %v6811, %v777
        %v6816 = vsel %vm1011, %v6812, -inf
        %6817 = vmax.xlane.f32.xlu0 %v6816
        %v6818 = vpop.xlane.xlu0 %6817
        %v6819 = vsel %vm1011, %v6813, -inf
        %6820 = vmax.xlane.f32.xlu0 %v6819
        %v6821 = vpop.xlane.xlu0 %6820
        %v6822 = vsel %vm1011, %v6814, -inf
        %6823 = vmax.xlane.f32.xlu0 %v6822
        %v6824 = vpop.xlane.xlu0 %6823
        %v6825 = vsel %vm1011, %v6815, -inf
        %6826 = vmax.xlane.f32.xlu0 %v6825
        %v6827 = vpop.xlane.xlu0 %6826
        %v6828 = vsub.f32 %v6812, %v6818
        %v6829 = vsub.f32 %v6813, %v6821
        %v6830 = vsub.f32 %v6814, %v6824
        %v6831 = vsub.f32 %v6815, %v6827
        %v6832 = vmul.f32 %v6828, 1.442695
        %v6833 = vpow.pop %v6832
        %v6834 = vmul.f32 %v6829, 1.442695
        %v6835 = vpow.pop %v6834
        %v6836 = vmul.f32 %v6830, 1.442695
        %v6837 = vpow.pop %v6836
        %v6838 = vmul.f32 %v6831, 1.442695
        %v6839 = vpow.pop %v6838
        %v6840 = vsel %vm1011, %v6833, 0.0
        %6841 = vadd.xlane.f32.xlu0 %v6840
        %v6842 = vpop.xlane.xlu0 %6841
        %v6843 = vsel %vm1011, %v6835, 0.0
        %6844 = vadd.xlane.f32.xlu0 %v6843
        %v6845 = vpop.xlane.xlu0 %6844
        %v6846 = vsel %vm1011, %v6837, 0.0
        %6847 = vadd.xlane.f32.xlu0 %v6846
        %v6848 = vpop.xlane.xlu0 %6847
        %v6849 = vsel %vm1011, %v6839, 0.0
        %6850 = vadd.xlane.f32.xlu0 %v6849
        %v6851 = vpop.xlane.xlu0 %6850
        %v6852 = vrcp.pop %v6842
        %v6853 = vmul.f32 %v6833, %v6852
        %v6854 = vrcp.pop %v6845
        %v6855 = vmul.f32 %v6835, %v6854
        %v6856 = vrcp.pop %v6848
        %v6857 = vmul.f32 %v6837, %v6856
        %v6858 = vrcp.pop %v6851
        %v6859 = vmul.f32 %v6839, %v6858
        %v6860 = vpack.c.bf16 %v6853, %v6853
        %v6861 = vpack.c.bf16 %v6855, %v6855
        %v6862 = vpack.c.bf16 %v6857, %v6857
        %v6863 = vpack.c.bf16 %v6859, %v6859
        %6864 = vrot.lane.b32.xlu0 %v6608, 64
        %v6865 = vpop.permute.xlu0 %6864
        %v6867 = vsel %vm1011, %v6860, 0
        %v6870 = vsel %vm1270, %v6865, 0
        %6872 = vmatprep.subr.bf16.mxu0 0
        %6873 = vmatpush1.bf16.msra.mxu0 %v6870
        %6874 = vmatprep.subr.bf16.mxu0 0
        %6875 = vmatpush1.bf16.msra.mxu0 0
        %6876 = vmatprep.subr.bf16.mxu0 0
        %6877 = vmatpush1.bf16.msra.mxu0 0
        %6878 = vmatprep.subr.bf16.mxu0 0
        %6879 = vmatpush1.bf16.msra.mxu0 0
        %6880 = vmatprep.subr.bf16.mxu0 0
        %6881 = vmatpush1.bf16.msra.mxu0 0
        %6882 = vmatprep.subr.bf16.mxu0 0
        %6883 = vmatpush1.bf16.msra.mxu0 0
        %6884 = vmatprep.subr.bf16.mxu0 0
        %6885 = vmatpush1.bf16.msra.mxu0 0
        %6886 = vmatprep.subr.bf16.mxu0 0
        %6887 = vmatpush1.bf16.msra.mxu0 0
        %6888 = vmatprep.subr.bf16.mxu0 0
        %6889 = vmatpush1.bf16.msra.mxu0 0
        %6890 = vmatprep.subr.bf16.mxu0 0
        %6891 = vmatpush1.bf16.msra.mxu0 0
        %6892 = vmatprep.subr.bf16.mxu0 0
        %6893 = vmatpush1.bf16.msra.mxu0 0
        %6894 = vmatprep.subr.bf16.mxu0 0
        %6895 = vmatpush1.bf16.msra.mxu0 0
        %6896 = vmatprep.subr.bf16.mxu0 0
        %6897 = vmatpush1.bf16.msra.mxu0 0
        %6898 = vmatprep.subr.bf16.mxu0 0
        %6899 = vmatpush1.bf16.msra.mxu0 0
        %6900 = vmatprep.subr.bf16.mxu0 0
        %6901 = vmatpush1.bf16.msra.mxu0 0
        %6902 = vmatprep.subr.bf16.mxu0 0
        %6903 = vmatpush1.bf16.msra.mxu0 0
        %6904 = vmatprep.mubr.bf16.mxu0 0
        %6905 = vmatmul.mubr.bf16.gmra.mrb[0].mxu0 %v6867
        %v6906 = vpop.f32.mrb[0].mxu0
        %v6907 = vadd.f32 0.0, %v6906
        %v6908 = vpop.f32.mrb[0].mxu0
        %v6909 = vpop.f32.mrb[0].mxu0
        %v6910 = vpop.f32.mrb[0].mxu0
        %6911 = vdwg.mxu0
        %6912 = vrot.lane.b32.xlu0 %v6609, 64
        %v6913 = vpop.permute.xlu0 %6912
        %v6915 = vsel %vm1011, %v6861, 0
        %v6918 = vsel %vm1270, %v6913, 0
        %6920 = vmatprep.subr.bf16.mxu0 0
        %6921 = vmatpush1.bf16.msra.mxu0 %v6918
        %6922 = vmatprep.subr.bf16.mxu0 0
        %6923 = vmatpush1.bf16.msra.mxu0 0
        %6924 = vmatprep.subr.bf16.mxu0 0
        %6925 = vmatpush1.bf16.msra.mxu0 0
        %6926 = vmatprep.subr.bf16.mxu0 0
        %6927 = vmatpush1.bf16.msra.mxu0 0
        %6928 = vmatprep.subr.bf16.mxu0 0
        %6929 = vmatpush1.bf16.msra.mxu0 0
        %6930 = vmatprep.subr.bf16.mxu0 0
        %6931 = vmatpush1.bf16.msra.mxu0 0
        %6932 = vmatprep.subr.bf16.mxu0 0
        %6933 = vmatpush1.bf16.msra.mxu0 0
        %6934 = vmatprep.subr.bf16.mxu0 0
        %6935 = vmatpush1.bf16.msra.mxu0 0
        %6936 = vmatprep.subr.bf16.mxu0 0
        %6937 = vmatpush1.bf16.msra.mxu0 0
        %6938 = vmatprep.subr.bf16.mxu0 0
        %6939 = vmatpush1.bf16.msra.mxu0 0
        %6940 = vmatprep.subr.bf16.mxu0 0
        %6941 = vmatpush1.bf16.msra.mxu0 0
        %6942 = vmatprep.subr.bf16.mxu0 0
        %6943 = vmatpush1.bf16.msra.mxu0 0
        %6944 = vmatprep.subr.bf16.mxu0 0
        %6945 = vmatpush1.bf16.msra.mxu0 0
        %6946 = vmatprep.subr.bf16.mxu0 0
        %6947 = vmatpush1.bf16.msra.mxu0 0
        %6948 = vmatprep.subr.bf16.mxu0 0
        %6949 = vmatpush1.bf16.msra.mxu0 0
        %6950 = vmatprep.subr.bf16.mxu0 0
        %6951 = vmatpush1.bf16.msra.mxu0 0
        %6952 = vmatprep.mubr.bf16.mxu0 0
        %6953 = vmatmul.mubr.bf16.gmra.mrb[0].mxu0 %v6915
        %v6954 = vpop.f32.mrb[0].mxu0
        %v6955 = vadd.f32 0.0, %v6954
        %v6956 = vpop.f32.mrb[0].mxu0
        %v6957 = vpop.f32.mrb[0].mxu0
        %v6958 = vpop.f32.mrb[0].mxu0
        %6959 = vdwg.mxu0
        %6960 = vrot.lane.b32.xlu0 %v6610, 64
        %v6961 = vpop.permute.xlu0 %6960
        %v6963 = vsel %vm1011, %v6862, 0
        %v6966 = vsel %vm1270, %v6961, 0
        %6968 = vmatprep.subr.bf16.mxu0 0
        %6969 = vmatpush1.bf16.msra.mxu0 %v6966
        %6970 = vmatprep.subr.bf16.mxu0 0
        %6971 = vmatpush1.bf16.msra.mxu0 0
        %6972 = vmatprep.subr.bf16.mxu0 0
        %6973 = vmatpush1.bf16.msra.mxu0 0
        %6974 = vmatprep.subr.bf16.mxu0 0
        %6975 = vmatpush1.bf16.msra.mxu0 0
        %6976 = vmatprep.subr.bf16.mxu0 0
        %6977 = vmatpush1.bf16.msra.mxu0 0
        %6978 = vmatprep.subr.bf16.mxu0 0
        %6979 = vmatpush1.bf16.msra.mxu0 0
        %6980 = vmatprep.subr.bf16.mxu0 0
        %6981 = vmatpush1.bf16.msra.mxu0 0
        %6982 = vmatprep.subr.bf16.mxu0 0
        %6983 = vmatpush1.bf16.msra.mxu0 0
        %6984 = vmatprep.subr.bf16.mxu0 0
        %6985 = vmatpush1.bf16.msra.mxu0 0
        %6986 = vmatprep.subr.bf16.mxu0 0
        %6987 = vmatpush1.bf16.msra.mxu0 0
        %6988 = vmatprep.subr.bf16.mxu0 0
        %6989 = vmatpush1.bf16.msra.mxu0 0
        %6990 = vmatprep.subr.bf16.mxu0 0
        %6991 = vmatpush1.bf16.msra.mxu0 0
        %6992 = vmatprep.subr.bf16.mxu0 0
        %6993 = vmatpush1.bf16.msra.mxu0 0
        %6994 = vmatprep.subr.bf16.mxu0 0
        %6995 = vmatpush1.bf16.msra.mxu0 0
        %6996 = vmatprep.subr.bf16.mxu0 0
        %6997 = vmatpush1.bf16.msra.mxu0 0
        %6998 = vmatprep.subr.bf16.mxu0 0
        %6999 = vmatpush1.bf16.msra.mxu0 0
        %7000 = vmatprep.mubr.bf16.mxu0 0
        %7001 = vmatmul.mubr.bf16.gmra.mrb[0].mxu0 %v6963
        %v7002 = vpop.f32.mrb[0].mxu0
        %v7003 = vadd.f32 0.0, %v7002
        %v7004 = vpop.f32.mrb[0].mxu0
        %v7005 = vpop.f32.mrb[0].mxu0
        %v7006 = vpop.f32.mrb[0].mxu0
        %7007 = vdwg.mxu0
        %7008 = vrot.lane.b32.xlu0 %v6611, 64
        %v7009 = vpop.permute.xlu0 %7008
        %v7011 = vsel %vm1011, %v6863, 0
        %v7014 = vsel %vm1270, %v7009, 0
        %7016 = vmatprep.subr.bf16.mxu0 0
        %7017 = vmatpush1.bf16.msra.mxu0 %v7014
        %7018 = vmatprep.subr.bf16.mxu0 0
        %7019 = vmatpush1.bf16.msra.mxu0 0
        %7020 = vmatprep.subr.bf16.mxu0 0
        %7021 = vmatpush1.bf16.msra.mxu0 0
        %7022 = vmatprep.subr.bf16.mxu0 0
        %7023 = vmatpush1.bf16.msra.mxu0 0
        %7024 = vmatprep.subr.bf16.mxu0 0
        %7025 = vmatpush1.bf16.msra.mxu0 0
        %7026 = vmatprep.subr.bf16.mxu0 0
        %7027 = vmatpush1.bf16.msra.mxu0 0
        %7028 = vmatprep.subr.bf16.mxu0 0
        %7029 = vmatpush1.bf16.msra.mxu0 0
        %7030 = vmatprep.subr.bf16.mxu0 0
        %7031 = vmatpush1.bf16.msra.mxu0 0
        %7032 = vmatprep.subr.bf16.mxu0 0
        %7033 = vmatpush1.bf16.msra.mxu0 0
        %7034 = vmatprep.subr.bf16.mxu0 0
        %7035 = vmatpush1.bf16.msra.mxu0 0
        %7036 = vmatprep.subr.bf16.mxu0 0
        %7037 = vmatpush1.bf16.msra.mxu0 0
        %7038 = vmatprep.subr.bf16.mxu0 0
        %7039 = vmatpush1.bf16.msra.mxu0 0
        %7040 = vmatprep.subr.bf16.mxu0 0
        %7041 = vmatpush1.bf16.msra.mxu0 0
        %7042 = vmatprep.subr.bf16.mxu0 0
        %7043 = vmatpush1.bf16.msra.mxu0 0
        %7044 = vmatprep.subr.bf16.mxu0 0
        %7045 = vmatpush1.bf16.msra.mxu0 0
        %7046 = vmatprep.subr.bf16.mxu0 0
        %7047 = vmatpush1.bf16.msra.mxu0 0
        %7048 = vmatprep.mubr.bf16.mxu0 0
        %7049 = vmatmul.mubr.bf16.gmra.mrb[0].mxu0 %v7011
        %v7050 = vpop.f32.mrb[0].mxu0
        %v7051 = vadd.f32 0.0, %v7050
        %v7052 = vpop.f32.mrb[0].mxu0
        %v7053 = vpop.f32.mrb[0].mxu0
        %v7054 = vpop.f32.mrb[0].mxu0
        %7055 = vdwg.mxu0
        %7057 = vrot.lane.b32.xlu0 %v6955, 8
        %v7058 = vpop.permute.xlu0 %7057
        %7061 = vrot.lane.b32.xlu0 %v7003, 16
        %v7062 = vpop.permute.xlu0 %7061
        %7065 = vrot.lane.b32.xlu0 %v7051, 24
        %v7066 = vpop.permute.xlu0 %7065
        %v7068 = vsel %vm1011, %v6907, %v7058
        %v7069 = vsel %vm1471, %v7068, %v7062
        %v7070 = vsel %vm1473, %v7069, %v7066
        %s7071 = scalar_lea.vmem %s12, 16
        %v7072 = vld [vmem:[%s7071] sm:$0xf]
        %v7073 = vld [vmem:[%s7071 + $0x4] sm:$0xf]
        %v7074 = vld [vmem:[%s7071 + $0x8] sm:$0xf]
        %v7075 = vld [vmem:[%s7071 + $0xc] sm:$0xf]
        %v7076 = vpack.c.bf16 %v7070, %v6597
        %v7077 = vlaneseq
        %v7078 = vshrl.u32 %v7077, 7
        %v7079 = vsub.s32 1, %v7078
        %v7080 = vrot.slane %v6057, %v7079
        %v7085 = vunpack.c.l.b16 %v7072
        %v7086 = vunpack.c.l.b16 %v7073
        %v7087 = vunpack.c.l.b16 %v7074
        %v7088 = vunpack.c.l.b16 %v7075
        %v7089 = vpack.c.b16 %v7086, %v7085
        %v7090 = vpack.c.b16 %v7088, %v7087
        %v7094 = vsel %vm810, %v7076, 0
        %7096 = vmatprep.subr.bf16.mxu0 0
        %7097 = vmatpush1.bf16.msra.mxu0 %v7089
        %7098 = vmatprep.subr.bf16.mxu0 0
        %7099 = vmatpush1.bf16.msra.mxu0 %v7090
        %7100 = vmatprep.subr.bf16.mxu0 0
        %7101 = vmatpush1.bf16.msra.mxu0 0
        %7102 = vmatprep.subr.bf16.mxu0 0
        %7103 = vmatpush1.bf16.msra.mxu0 0
        %7104 = vmatprep.subr.bf16.mxu0 0
        %7105 = vmatpush1.bf16.msra.mxu0 0
        %7106 = vmatprep.subr.bf16.mxu0 0
        %7107 = vmatpush1.bf16.msra.mxu0 0
        %7108 = vmatprep.subr.bf16.mxu0 0
        %7109 = vmatpush1.bf16.msra.mxu0 0
        %7110 = vmatprep.subr.bf16.mxu0 0
        %7111 = vmatpush1.bf16.msra.mxu0 0
        %7112 = vmatprep.subr.bf16.mxu0 0
        %7113 = vmatpush1.bf16.msra.mxu0 0
        %7114 = vmatprep.subr.bf16.mxu0 0
        %7115 = vmatpush1.bf16.msra.mxu0 0
        %7116 = vmatprep.subr.bf16.mxu0 0
        %7117 = vmatpush1.bf16.msra.mxu0 0
        %7118 = vmatprep.subr.bf16.mxu0 0
        %7119 = vmatpush1.bf16.msra.mxu0 0
        %7120 = vmatprep.subr.bf16.mxu0 0
        %7121 = vmatpush1.bf16.msra.mxu0 0
        %7122 = vmatprep.subr.bf16.mxu0 0
        %7123 = vmatpush1.bf16.msra.mxu0 0
        %7124 = vmatprep.subr.bf16.mxu0 0
        %7125 = vmatpush1.bf16.msra.mxu0 0
        %7126 = vmatprep.subr.bf16.mxu0 0
        %7127 = vmatpush1.bf16.msra.mxu0 0
        %7128 = vmatprep.mubr.bf16.mxu0 0
        %7129 = vmatmul.mubr.bf16.gmra.mrb[0].mxu0 %v7094
        %v7130 = vpop.f32.mrb[0].mxu0
        %v7131 = vadd.f32 %v7080, %v7130
        %v7132 = vpop.f32.mrb[0].mxu0
        %v7133 = vpop.f32.mrb[0].mxu0
        %v7134 = vadd.f32 %v7080, %v7133
        %v7135 = vpop.f32.mrb[0].mxu0
        %7136 = vdwg.mxu0
        %v7137 = vadd.f32 %v6054, %v7131
        %v7138 = vadd.f32 %v6055, %v7134
        %v7139 = vsel %vm810, %v7137, 0.0
        %7140 = vadd.xlane.f32.xlu0 %v7139
        %v7141 = vpop.xlane.xlu0 %7140
        %v7142 = vsel %vm810, %v7138, 0.0
        %7143 = vadd.xlane.f32.xlu0 %v7142
        %v7144 = vpop.xlane.xlu0 %7143
        %v7145 = vmul.f32 %v7141, %v2025
        %v7146 = vmul.f32 %v7144, %v2025
        %v7147 = vsub.f32 %v7137, %v7145
        %v7148 = vsub.f32 %v7138, %v7146
        %v7149 = vmul.f32 %v7147, %v7147
        %v7150 = vmul.f32 %v7148, %v7148
        %v7151 = vsel %vm810, %v7149, 0.0
        %7152 = vadd.xlane.f32.xlu0 %v7151
        %v7153 = vpop.xlane.xlu0 %7152
        %v7154 = vsel %vm810, %v7150, 0.0
        %7155 = vadd.xlane.f32.xlu0 %v7154
        %v7156 = vpop.xlane.xlu0 %7155
        %v7157 = vmul.f32 %v7153, %v2025
        %v7158 = vmul.f32 %v7156, %v2025
        %v7159 = vadd.f32 %v7157, 1e-05
        %v7160 = vadd.f32 %v7158, 1e-05
        %v7161 = vrsqrt.pop %v7159
        %v7162 = vrsqrt.pop %v7160
        %v7163 = vmul.f32 %v7147, %v7161
        %v7164 = vmul.f32 %v7148, %v7162
        %v7165 = vlaneseq
        %v7166 = vshrl.u32 %v7165, 7
        %v7167 = vsub.s32 2, %v7166
        %v7168 = vrot.slane %v6057, %v7167
        %v7169 = vmul.f32 %v7163, %v7168
        %v7170 = vmul.f32 %v7164, %v7168
        %v7171 = vlaneseq
        %v7172 = vshrl.u32 %v7171, 7
        %v7173 = vsub.s32 3, %v7172
        %v7174 = vrot.slane %v6057, %v7173
        %v7175 = vadd.f32 %v7169, %v7174
        %v7176 = vadd.f32 %v7170, %v7174
        %s7177 = scalar_lea.vmem %s13, 16
        %v7178 = vld [vmem:[%s7177] sm:$0xf]
        %v7179 = vld [vmem:[%s7177 + $0x4] sm:$0xf]
        %v7180 = vld [vmem:[%s7177 + $0x8] sm:$0xf]
        %v7181 = vld [vmem:[%s7177 + $0xc] sm:$0xf]
        %v7182 = vpack.c.bf16 %v7176, %v7175
        %v7183 = vlaneseq
        %v7184 = vshrl.u32 %v7183, 7
        %v7185 = vsub.s32 4, %v7184
        %v7186 = vrot.slane %v6057, %v7185
        %v7191 = vunpack.c.l.b16 %v7178
        %v7192 = vunpack.c.l.b16 %v7179
        %v7193 = vunpack.c.l.b16 %v7180
        %v7194 = vunpack.c.l.b16 %v7181
        %v7195 = vpack.c.b16 %v7192, %v7191
        %v7196 = vpack.c.b16 %v7194, %v7193
        %v7200 = vsel %vm810, %v7182, 0
        %7202 = vmatprep.subr.bf16.mxu0 0
        %7203 = vmatpush1.bf16.msra.mxu0 %v7195
        %7204 = vmatprep.subr.bf16.mxu0 0
        %7205 = vmatpush1.bf16.msra.mxu0 %v7196
        %7206 = vmatprep.subr.bf16.mxu0 0
        %7207 = vmatpush1.bf16.msra.mxu0 0
        %7208 = vmatprep.subr.bf16.mxu0 0
        %7209 = vmatpush1.bf16.msra.mxu0 0
        %7210 = vmatprep.subr.bf16.mxu0 0
        %7211 = vmatpush1.bf16.msra.mxu0 0
        %7212 = vmatprep.subr.bf16.mxu0 0
        %7213 = vmatpush1.bf16.msra.mxu0 0
        %7214 = vmatprep.subr.bf16.mxu0 0
        %7215 = vmatpush1.bf16.msra.mxu0 0
        %7216 = vmatprep.subr.bf16.mxu0 0
        %7217 = vmatpush1.bf16.msra.mxu0 0
        %7218 = vmatprep.subr.bf16.mxu0 0
        %7219 = vmatpush1.bf16.msra.mxu0 0
        %7220 = vmatprep.subr.bf16.mxu0 0
        %7221 = vmatpush1.bf16.msra.mxu0 0
        %7222 = vmatprep.subr.bf16.mxu0 0
        %7223 = vmatpush1.bf16.msra.mxu0 0
        %7224 = vmatprep.subr.bf16.mxu0 0
        %7225 = vmatpush1.bf16.msra.mxu0 0
        %7226 = vmatprep.subr.bf16.mxu0 0
        %7227 = vmatpush1.bf16.msra.mxu0 0
        %7228 = vmatprep.subr.bf16.mxu0 0
        %7229 = vmatpush1.bf16.msra.mxu0 0
        %7230 = vmatprep.subr.bf16.mxu0 0
        %7231 = vmatpush1.bf16.msra.mxu0 0
        %7232 = vmatprep.subr.bf16.mxu0 0
        %7233 = vmatpush1.bf16.msra.mxu0 0
        %7234 = vmatprep.mubr.bf16.mxu0 0
        %7235 = vmatmul.mubr.bf16.gmra.mrb[0].mxu0 %v7200
        %v7236 = vpop.f32.mrb[0].mxu0
        %v7237 = vadd.f32 %v7186, %v7236
        %v7238 = vpop.f32.mrb[0].mxu0
        %v7239 = vpop.f32.mrb[0].mxu0
        %v7240 = vadd.f32 %v7186, %v7239
        %v7241 = vpop.f32.mrb[0].mxu0
        %7242 = vdwg.mxu0
        %s7243 = scalar_lea.vmem %s14, 16
        %v7244 = vld [vmem:[%s7243] sm:$0xf]
        %v7245 = vld [vmem:[%s7243 + $0x4] sm:$0xf]
        %v7246 = vld [vmem:[%s7243 + $0x8] sm:$0xf]
        %v7247 = vld [vmem:[%s7243 + $0xc] sm:$0xf]
        %v7248 = vlaneseq
        %v7249 = vshrl.u32 %v7248, 7
        %v7250 = vsub.s32 5, %v7249
        %v7251 = vrot.slane %v6057, %v7250
        %v7256 = vunpack.c.l.b16 %v7244
        %v7257 = vunpack.c.l.b16 %v7245
        %v7258 = vunpack.c.l.b16 %v7246
        %v7259 = vunpack.c.l.b16 %v7247
        %v7260 = vpack.c.b16 %v7257, %v7256
        %v7261 = vpack.c.b16 %v7259, %v7258
        %7264 = vmatprep.subr.bf16.mxu0 0
        %7265 = vmatpush1.bf16.msra.mxu0 %v7260
        %7266 = vmatprep.subr.bf16.mxu0 0
        %7267 = vmatpush1.bf16.msra.mxu0 %v7261
        %7268 = vmatprep.subr.bf16.mxu0 0
        %7269 = vmatpush1.bf16.msra.mxu0 0
        %7270 = vmatprep.subr.bf16.mxu0 0
        %7271 = vmatpush1.bf16.msra.mxu0 0
        %7272 = vmatprep.subr.bf16.mxu0 0
        %7273 = vmatpush1.bf16.msra.mxu0 0
        %7274 = vmatprep.subr.bf16.mxu0 0
        %7275 = vmatpush1.bf16.msra.mxu0 0
        %7276 = vmatprep.subr.bf16.mxu0 0
        %7277 = vmatpush1.bf16.msra.mxu0 0
        %7278 = vmatprep.subr.bf16.mxu0 0
        %7279 = vmatpush1.bf16.msra.mxu0 0
        %7280 = vmatprep.subr.bf16.mxu0 0
        %7281 = vmatpush1.bf16.msra.mxu0 0
        %7282 = vmatprep.subr.bf16.mxu0 0
        %7283 = vmatpush1.bf16.msra.mxu0 0
        %7284 = vmatprep.subr.bf16.mxu0 0
        %7285 = vmatpush1.bf16.msra.mxu0 0
        %7286 = vmatprep.subr.bf16.mxu0 0
        %7287 = vmatpush1.bf16.msra.mxu0 0
        %7288 = vmatprep.subr.bf16.mxu0 0
        %7289 = vmatpush1.bf16.msra.mxu0 0
        %7290 = vmatprep.subr.bf16.mxu0 0
        %7291 = vmatpush1.bf16.msra.mxu0 0
        %7292 = vmatprep.subr.bf16.mxu0 0
        %7293 = vmatpush1.bf16.msra.mxu0 0
        %7294 = vmatprep.subr.bf16.mxu0 0
        %7295 = vmatpush1.bf16.msra.mxu0 0
        %7296 = vmatprep.mubr.bf16.mxu0 0
        %7297 = vmatmul.mubr.bf16.gmra.mrb[0].mxu0 %v4762
        %v7298 = vpop.f32.mrb[0].mxu0
        %v7299 = vadd.f32 %v7251, %v7298
        %v7300 = vpop.f32.mrb[0].mxu0
        %v7301 = vpop.f32.mrb[0].mxu0
        %v7302 = vadd.f32 %v7251, %v7301
        %v7303 = vpop.f32.mrb[0].mxu0
        %7304 = vdwg.mxu0
        %7306 = vrot.lane.b32.xlu0 %v7237, 120
        %v7307 = vpop.permute.xlu0 %7306
        %7309 = vrot.lane.b32.xlu0 %v7237, 112
        %v7310 = vpop.permute.xlu0 %7309
        %7312 = vrot.lane.b32.xlu0 %v7237, 104
        %v7313 = vpop.permute.xlu0 %7312
        %v7315 = vpack.c.bf16 %v7237, %v7237
        %v7316 = vpack.c.bf16 %v7307, %v7307
        %v7317 = vpack.c.bf16 %v7310, %v7310
        %v7318 = vpack.c.bf16 %v7313, %v7313
        %7320 = vrot.lane.b32.xlu0 %v7299, 120
        %v7321 = vpop.permute.xlu0 %7320
        %7323 = vrot.lane.b32.xlu0 %v7299, 112
        %v7324 = vpop.permute.xlu0 %7323
        %7326 = vrot.lane.b32.xlu0 %v7299, 104
        %v7327 = vpop.permute.xlu0 %7326
        %v7329 = vpack.c.bf16 %v7299, %v7299
        %v7330 = vpack.c.bf16 %v7321, %v7321
        %v7331 = vpack.c.bf16 %v7324, %v7324
        %v7332 = vpack.c.bf16 %v7327, %v7327
        %v7334 = vsel %vm1011, %v7315, 0
        %v7337 = vsel %vm1011, %v7329, 0
        %7339 = vmatprep.subr.bf16.mxu0 0
        %7340 = vmatpush1.bf16.xpose.msra.mxu0 %v7337
        %7341 = vmatprep.subr.bf16.mxu0 0
        %7342 = vmatpush1.bf16.xpose.msra.mxu0 0
        %7343 = vmatprep.subr.bf16.mxu0 0
        %7344 = vmatpush1.bf16.xpose.msra.mxu0 0
        %7345 = vmatprep.subr.bf16.mxu0 0
        %7346 = vmatpush1.bf16.xpose.msra.mxu0 0
        %7347 = vmatprep.subr.bf16.mxu0 0
        %7348 = vmatpush1.bf16.xpose.msra.mxu0 0
        %7349 = vmatprep.subr.bf16.mxu0 0
        %7350 = vmatpush1.bf16.xpose.msra.mxu0 0
        %7351 = vmatprep.subr.bf16.mxu0 0
        %7352 = vmatpush1.bf16.xpose.msra.mxu0 0
        %7353 = vmatprep.subr.bf16.mxu0 0
        %7354 = vmatpush1.bf16.xpose.msra.mxu0 0
        %7355 = vmatprep.subr.bf16.mxu0 0
        %7356 = vmatpush1.bf16.xpose.msra.mxu0 0
        %7357 = vmatprep.subr.bf16.mxu0 0
        %7358 = vmatpush1.bf16.xpose.msra.mxu0 0
        %7359 = vmatprep.subr.bf16.mxu0 0
        %7360 = vmatpush1.bf16.xpose.msra.mxu0 0
        %7361 = vmatprep.subr.bf16.mxu0 0
        %7362 = vmatpush1.bf16.xpose.msra.mxu0 0
        %7363 = vmatprep.subr.bf16.mxu0 0
        %7364 = vmatpush1.bf16.xpose.msra.mxu0 0
        %7365 = vmatprep.subr.bf16.mxu0 0
        %7366 = vmatpush1.bf16.xpose.msra.mxu0 0
        %7367 = vmatprep.subr.bf16.mxu0 0
        %7368 = vmatpush1.bf16.xpose.msra.mxu0 0
        %7369 = vmatprep.subr.bf16.mxu0 0
        %7370 = vmatpush1.bf16.xpose.msra.mxu0 0
        %7371 = vmatprep.mubr.bf16.mxu0 0
        %7372 = vmatmul.mubr.bf16.gmra.mrb[0].mxu0 %v7334
        %v7373 = vpop.f32.mrb[0].mxu0
        %v7374 = vadd.f32 0.0, %v7373
        %v7375 = vpop.f32.mrb[0].mxu0
        %v7376 = vpop.f32.mrb[0].mxu0
        %v7377 = vpop.f32.mrb[0].mxu0
        %7378 = vdwg.mxu0
        %v7380 = vsel %vm1011, %v7316, 0
        %v7383 = vsel %vm1011, %v7330, 0
        %7385 = vmatprep.subr.bf16.mxu0 0
        %7386 = vmatpush1.bf16.xpose.msra.mxu0 %v7383
        %7387 = vmatprep.subr.bf16.mxu0 0
        %7388 = vmatpush1.bf16.xpose.msra.mxu0 0
        %7389 = vmatprep.subr.bf16.mxu0 0
        %7390 = vmatpush1.bf16.xpose.msra.mxu0 0
        %7391 = vmatprep.subr.bf16.mxu0 0
        %7392 = vmatpush1.bf16.xpose.msra.mxu0 0
        %7393 = vmatprep.subr.bf16.mxu0 0
        %7394 = vmatpush1.bf16.xpose.msra.mxu0 0
        %7395 = vmatprep.subr.bf16.mxu0 0
        %7396 = vmatpush1.bf16.xpose.msra.mxu0 0
        %7397 = vmatprep.subr.bf16.mxu0 0
        %7398 = vmatpush1.bf16.xpose.msra.mxu0 0
        %7399 = vmatprep.subr.bf16.mxu0 0
        %7400 = vmatpush1.bf16.xpose.msra.mxu0 0
        %7401 = vmatprep.subr.bf16.mxu0 0
        %7402 = vmatpush1.bf16.xpose.msra.mxu0 0
        %7403 = vmatprep.subr.bf16.mxu0 0
        %7404 = vmatpush1.bf16.xpose.msra.mxu0 0
        %7405 = vmatprep.subr.bf16.mxu0 0
        %7406 = vmatpush1.bf16.xpose.msra.mxu0 0
        %7407 = vmatprep.subr.bf16.mxu0 0
        %7408 = vmatpush1.bf16.xpose.msra.mxu0 0
        %7409 = vmatprep.subr.bf16.mxu0 0
        %7410 = vmatpush1.bf16.xpose.msra.mxu0 0
        %7411 = vmatprep.subr.bf16.mxu0 0
        %7412 = vmatpush1.bf16.xpose.msra.mxu0 0
        %7413 = vmatprep.subr.bf16.mxu0 0
        %7414 = vmatpush1.bf16.xpose.msra.mxu0 0
        %7415 = vmatprep.subr.bf16.mxu0 0
        %7416 = vmatpush1.bf16.xpose.msra.mxu0 0
        %7417 = vmatprep.mubr.bf16.mxu0 0
        %7418 = vmatmul.mubr.bf16.gmra.mrb[0].mxu0 %v7380
        %v7419 = vpop.f32.mrb[0].mxu0
        %v7420 = vadd.f32 0.0, %v7419
        %v7421 = vpop.f32.mrb[0].mxu0
        %v7422 = vpop.f32.mrb[0].mxu0
        %v7423 = vpop.f32.mrb[0].mxu0
        %7424 = vdwg.mxu0
        %v7426 = vsel %vm1011, %v7317, 0
        %v7429 = vsel %vm1011, %v7331, 0
        %7431 = vmatprep.subr.bf16.mxu0 0
        %7432 = vmatpush1.bf16.xpose.msra.mxu0 %v7429
        %7433 = vmatprep.subr.bf16.mxu0 0
        %7434 = vmatpush1.bf16.xpose.msra.mxu0 0
        %7435 = vmatprep.subr.bf16.mxu0 0
        %7436 = vmatpush1.bf16.xpose.msra.mxu0 0
        %7437 = vmatprep.subr.bf16.mxu0 0
        %7438 = vmatpush1.bf16.xpose.msra.mxu0 0
        %7439 = vmatprep.subr.bf16.mxu0 0
        %7440 = vmatpush1.bf16.xpose.msra.mxu0 0
        %7441 = vmatprep.subr.bf16.mxu0 0
        %7442 = vmatpush1.bf16.xpose.msra.mxu0 0
        %7443 = vmatprep.subr.bf16.mxu0 0
        %7444 = vmatpush1.bf16.xpose.msra.mxu0 0
        %7445 = vmatprep.subr.bf16.mxu0 0
        %7446 = vmatpush1.bf16.xpose.msra.mxu0 0
        %7447 = vmatprep.subr.bf16.mxu0 0
        %7448 = vmatpush1.bf16.xpose.msra.mxu0 0
        %7449 = vmatprep.subr.bf16.mxu0 0
        %7450 = vmatpush1.bf16.xpose.msra.mxu0 0
        %7451 = vmatprep.subr.bf16.mxu0 0
        %7452 = vmatpush1.bf16.xpose.msra.mxu0 0
        %7453 = vmatprep.subr.bf16.mxu0 0
        %7454 = vmatpush1.bf16.xpose.msra.mxu0 0
        %7455 = vmatprep.subr.bf16.mxu0 0
        %7456 = vmatpush1.bf16.xpose.msra.mxu0 0
        %7457 = vmatprep.subr.bf16.mxu0 0
        %7458 = vmatpush1.bf16.xpose.msra.mxu0 0
        %7459 = vmatprep.subr.bf16.mxu0 0
        %7460 = vmatpush1.bf16.xpose.msra.mxu0 0
        %7461 = vmatprep.subr.bf16.mxu0 0
        %7462 = vmatpush1.bf16.xpose.msra.mxu0 0
        %7463 = vmatprep.mubr.bf16.mxu0 0
        %7464 = vmatmul.mubr.bf16.gmra.mrb[0].mxu0 %v7426
        %v7465 = vpop.f32.mrb[0].mxu0
        %v7466 = vadd.f32 0.0, %v7465
        %v7467 = vpop.f32.mrb[0].mxu0
        %v7468 = vpop.f32.mrb[0].mxu0
        %v7469 = vpop.f32.mrb[0].mxu0
        %7470 = vdwg.mxu0
        %v7472 = vsel %vm1011, %v7318, 0
        %v7475 = vsel %vm1011, %v7332, 0
        %7477 = vmatprep.subr.bf16.mxu0 0
        %7478 = vmatpush1.bf16.xpose.msra.mxu0 %v7475
        %7479 = vmatprep.subr.bf16.mxu0 0
        %7480 = vmatpush1.bf16.xpose.msra.mxu0 0
        %7481 = vmatprep.subr.bf16.mxu0 0
        %7482 = vmatpush1.bf16.xpose.msra.mxu0 0
        %7483 = vmatprep.subr.bf16.mxu0 0
        %7484 = vmatpush1.bf16.xpose.msra.mxu0 0
        %7485 = vmatprep.subr.bf16.mxu0 0
        %7486 = vmatpush1.bf16.xpose.msra.mxu0 0
        %7487 = vmatprep.subr.bf16.mxu0 0
        %7488 = vmatpush1.bf16.xpose.msra.mxu0 0
        %7489 = vmatprep.subr.bf16.mxu0 0
        %7490 = vmatpush1.bf16.xpose.msra.mxu0 0
        %7491 = vmatprep.subr.bf16.mxu0 0
        %7492 = vmatpush1.bf16.xpose.msra.mxu0 0
        %7493 = vmatprep.subr.bf16.mxu0 0
        %7494 = vmatpush1.bf16.xpose.msra.mxu0 0
        %7495 = vmatprep.subr.bf16.mxu0 0
        %7496 = vmatpush1.bf16.xpose.msra.mxu0 0
        %7497 = vmatprep.subr.bf16.mxu0 0
        %7498 = vmatpush1.bf16.xpose.msra.mxu0 0
        %7499 = vmatprep.subr.bf16.mxu0 0
        %7500 = vmatpush1.bf16.xpose.msra.mxu0 0
        %7501 = vmatprep.subr.bf16.mxu0 0
        %7502 = vmatpush1.bf16.xpose.msra.mxu0 0
        %7503 = vmatprep.subr.bf16.mxu0 0
        %7504 = vmatpush1.bf16.xpose.msra.mxu0 0
        %7505 = vmatprep.subr.bf16.mxu0 0
        %7506 = vmatpush1.bf16.xpose.msra.mxu0 0
        %7507 = vmatprep.subr.bf16.mxu0 0
        %7508 = vmatpush1.bf16.xpose.msra.mxu0 0
        %7509 = vmatprep.mubr.bf16.mxu0 0
        %7510 = vmatmul.mubr.bf16.gmra.mrb[0].mxu0 %v7472
        %v7511 = vpop.f32.mrb[0].mxu0
        %v7512 = vadd.f32 0.0, %v7511
        %v7513 = vpop.f32.mrb[0].mxu0
        %v7514 = vpop.f32.mrb[0].mxu0
        %v7515 = vpop.f32.mrb[0].mxu0
        %7516 = vdwg.mxu0
        %v7517 = vmul.f32 %v7374, 0.35355338
        %v7518 = vmul.f32 %v7420, 0.35355338
        %v7519 = vmul.f32 %v7466, 0.35355338
        %v7520 = vmul.f32 %v7512, 0.35355338
        %v7521 = vadd.f32 %v7517, %v1212
        %v7522 = vadd.f32 %v7518, %v1212
        %v7523 = vadd.f32 %v7519, %v1212
        %v7524 = vadd.f32 %v7520, %v1212
        %v7525 = vsel %vm1011, %v7521, -inf
        %7526 = vmax.xlane.f32.xlu0 %v7525
        %v7527 = vpop.xlane.xlu0 %7526
        %v7528 = vsel %vm1011, %v7522, -inf
        %7529 = vmax.xlane.f32.xlu0 %v7528
        %v7530 = vpop.xlane.xlu0 %7529
        %v7531 = vsel %vm1011, %v7523, -inf
        %7532 = vmax.xlane.f32.xlu0 %v7531
        %v7533 = vpop.xlane.xlu0 %7532
        %v7534 = vsel %vm1011, %v7524, -inf
        %7535 = vmax.xlane.f32.xlu0 %v7534
        %v7536 = vpop.xlane.xlu0 %7535
        %v7537 = vsub.f32 %v7521, %v7527
        %v7538 = vsub.f32 %v7522, %v7530
        %v7539 = vsub.f32 %v7523, %v7533
        %v7540 = vsub.f32 %v7524, %v7536
        %v7541 = vmul.f32 %v7537, 1.442695
        %v7542 = vpow.pop %v7541
        %v7543 = vmul.f32 %v7538, 1.442695
        %v7544 = vpow.pop %v7543
        %v7545 = vmul.f32 %v7539, 1.442695
        %v7546 = vpow.pop %v7545
        %v7547 = vmul.f32 %v7540, 1.442695
        %v7548 = vpow.pop %v7547
        %v7549 = vsel %vm1011, %v7542, 0.0
        %7550 = vadd.xlane.f32.xlu0 %v7549
        %v7551 = vpop.xlane.xlu0 %7550
        %v7552 = vsel %vm1011, %v7544, 0.0
        %7553 = vadd.xlane.f32.xlu0 %v7552
        %v7554 = vpop.xlane.xlu0 %7553
        %v7555 = vsel %vm1011, %v7546, 0.0
        %7556 = vadd.xlane.f32.xlu0 %v7555
        %v7557 = vpop.xlane.xlu0 %7556
        %v7558 = vsel %vm1011, %v7548, 0.0
        %7559 = vadd.xlane.f32.xlu0 %v7558
        %v7560 = vpop.xlane.xlu0 %7559
        %v7561 = vrcp.pop %v7551
        %v7562 = vmul.f32 %v7542, %v7561
        %v7563 = vrcp.pop %v7554
        %v7564 = vmul.f32 %v7544, %v7563
        %v7565 = vrcp.pop %v7557
        %v7566 = vmul.f32 %v7546, %v7565
        %v7567 = vrcp.pop %v7560
        %v7568 = vmul.f32 %v7548, %v7567
        %v7569 = vpack.c.bf16 %v7562, %v7562
        %v7570 = vpack.c.bf16 %v7564, %v7564
        %v7571 = vpack.c.bf16 %v7566, %v7566
        %v7572 = vpack.c.bf16 %v7568, %v7568
        %7574 = vrot.lane.b32.xlu0 %v7329, 96
        %v7575 = vpop.permute.xlu0 %7574
        %v7577 = vsel %vm1011, %v7569, 0
        %v7580 = vsel %vm1270, %v7575, 0
        %7582 = vmatprep.subr.bf16.mxu0 0
        %7583 = vmatpush1.bf16.msra.mxu0 %v7580
        %7584 = vmatprep.subr.bf16.mxu0 0
        %7585 = vmatpush1.bf16.msra.mxu0 0
        %7586 = vmatprep.subr.bf16.mxu0 0
        %7587 = vmatpush1.bf16.msra.mxu0 0
        %7588 = vmatprep.subr.bf16.mxu0 0
        %7589 = vmatpush1.bf16.msra.mxu0 0
        %7590 = vmatprep.subr.bf16.mxu0 0
        %7591 = vmatpush1.bf16.msra.mxu0 0
        %7592 = vmatprep.subr.bf16.mxu0 0
        %7593 = vmatpush1.bf16.msra.mxu0 0
        %7594 = vmatprep.subr.bf16.mxu0 0
        %7595 = vmatpush1.bf16.msra.mxu0 0
        %7596 = vmatprep.subr.bf16.mxu0 0
        %7597 = vmatpush1.bf16.msra.mxu0 0
        %7598 = vmatprep.subr.bf16.mxu0 0
        %7599 = vmatpush1.bf16.msra.mxu0 0
        %7600 = vmatprep.subr.bf16.mxu0 0
        %7601 = vmatpush1.bf16.msra.mxu0 0
        %7602 = vmatprep.subr.bf16.mxu0 0
        %7603 = vmatpush1.bf16.msra.mxu0 0
        %7604 = vmatprep.subr.bf16.mxu0 0
        %7605 = vmatpush1.bf16.msra.mxu0 0
        %7606 = vmatprep.subr.bf16.mxu0 0
        %7607 = vmatpush1.bf16.msra.mxu0 0
        %7608 = vmatprep.subr.bf16.mxu0 0
        %7609 = vmatpush1.bf16.msra.mxu0 0
        %7610 = vmatprep.subr.bf16.mxu0 0
        %7611 = vmatpush1.bf16.msra.mxu0 0
        %7612 = vmatprep.subr.bf16.mxu0 0
        %7613 = vmatpush1.bf16.msra.mxu0 0
        %7614 = vmatprep.mubr.bf16.mxu0 0
        %7615 = vmatmul.mubr.bf16.gmra.mrb[0].mxu0 %v7577
        %v7616 = vpop.f32.mrb[0].mxu0
        %v7617 = vadd.f32 0.0, %v7616
        %v7618 = vpop.f32.mrb[0].mxu0
        %v7619 = vpop.f32.mrb[0].mxu0
        %v7620 = vpop.f32.mrb[0].mxu0
        %7621 = vdwg.mxu0
        %7623 = vrot.lane.b32.xlu0 %v7330, 96
        %v7624 = vpop.permute.xlu0 %7623
        %v7626 = vsel %vm1011, %v7570, 0
        %v7629 = vsel %vm1270, %v7624, 0
        %7631 = vmatprep.subr.bf16.mxu0 0
        %7632 = vmatpush1.bf16.msra.mxu0 %v7629
        %7633 = vmatprep.subr.bf16.mxu0 0
        %7634 = vmatpush1.bf16.msra.mxu0 0
        %7635 = vmatprep.subr.bf16.mxu0 0
        %7636 = vmatpush1.bf16.msra.mxu0 0
        %7637 = vmatprep.subr.bf16.mxu0 0
        %7638 = vmatpush1.bf16.msra.mxu0 0
        %7639 = vmatprep.subr.bf16.mxu0 0
        %7640 = vmatpush1.bf16.msra.mxu0 0
        %7641 = vmatprep.subr.bf16.mxu0 0
        %7642 = vmatpush1.bf16.msra.mxu0 0
        %7643 = vmatprep.subr.bf16.mxu0 0
        %7644 = vmatpush1.bf16.msra.mxu0 0
        %7645 = vmatprep.subr.bf16.mxu0 0
        %7646 = vmatpush1.bf16.msra.mxu0 0
        %7647 = vmatprep.subr.bf16.mxu0 0
        %7648 = vmatpush1.bf16.msra.mxu0 0
        %7649 = vmatprep.subr.bf16.mxu0 0
        %7650 = vmatpush1.bf16.msra.mxu0 0
        %7651 = vmatprep.subr.bf16.mxu0 0
        %7652 = vmatpush1.bf16.msra.mxu0 0
        %7653 = vmatprep.subr.bf16.mxu0 0
        %7654 = vmatpush1.bf16.msra.mxu0 0
        %7655 = vmatprep.subr.bf16.mxu0 0
        %7656 = vmatpush1.bf16.msra.mxu0 0
        %7657 = vmatprep.subr.bf16.mxu0 0
        %7658 = vmatpush1.bf16.msra.mxu0 0
        %7659 = vmatprep.subr.bf16.mxu0 0
        %7660 = vmatpush1.bf16.msra.mxu0 0
        %7661 = vmatprep.subr.bf16.mxu0 0
        %7662 = vmatpush1.bf16.msra.mxu0 0
        %7663 = vmatprep.mubr.bf16.mxu0 0
        %7664 = vmatmul.mubr.bf16.gmra.mrb[0].mxu0 %v7626
        %v7665 = vpop.f32.mrb[0].mxu0
        %v7666 = vadd.f32 0.0, %v7665
        %v7667 = vpop.f32.mrb[0].mxu0
        %v7668 = vpop.f32.mrb[0].mxu0
        %v7669 = vpop.f32.mrb[0].mxu0
        %7670 = vdwg.mxu0
        %7672 = vrot.lane.b32.xlu0 %v7331, 96
        %v7673 = vpop.permute.xlu0 %7672
        %v7675 = vsel %vm1011, %v7571, 0
        %v7678 = vsel %vm1270, %v7673, 0
        %7680 = vmatprep.subr.bf16.mxu0 0
        %7681 = vmatpush1.bf16.msra.mxu0 %v7678
        %7682 = vmatprep.subr.bf16.mxu0 0
        %7683 = vmatpush1.bf16.msra.mxu0 0
        %7684 = vmatprep.subr.bf16.mxu0 0
        %7685 = vmatpush1.bf16.msra.mxu0 0
        %7686 = vmatprep.subr.bf16.mxu0 0
        %7687 = vmatpush1.bf16.msra.mxu0 0
        %7688 = vmatprep.subr.bf16.mxu0 0
        %7689 = vmatpush1.bf16.msra.mxu0 0
        %7690 = vmatprep.subr.bf16.mxu0 0
        %7691 = vmatpush1.bf16.msra.mxu0 0
        %7692 = vmatprep.subr.bf16.mxu0 0
        %7693 = vmatpush1.bf16.msra.mxu0 0
        %7694 = vmatprep.subr.bf16.mxu0 0
        %7695 = vmatpush1.bf16.msra.mxu0 0
        %7696 = vmatprep.subr.bf16.mxu0 0
        %7697 = vmatpush1.bf16.msra.mxu0 0
        %7698 = vmatprep.subr.bf16.mxu0 0
        %7699 = vmatpush1.bf16.msra.mxu0 0
        %7700 = vmatprep.subr.bf16.mxu0 0
        %7701 = vmatpush1.bf16.msra.mxu0 0
        %7702 = vmatprep.subr.bf16.mxu0 0
        %7703 = vmatpush1.bf16.msra.mxu0 0
        %7704 = vmatprep.subr.bf16.mxu0 0
        %7705 = vmatpush1.bf16.msra.mxu0 0
        %7706 = vmatprep.subr.bf16.mxu0 0
        %7707 = vmatpush1.bf16.msra.mxu0 0
        %7708 = vmatprep.subr.bf16.mxu0 0
        %7709 = vmatpush1.bf16.msra.mxu0 0
        %7710 = vmatprep.subr.bf16.mxu0 0
        %7711 = vmatpush1.bf16.msra.mxu0 0
        %7712 = vmatprep.mubr.bf16.mxu0 0
        %7713 = vmatmul.mubr.bf16.gmra.mrb[0].mxu0 %v7675
        %v7714 = vpop.f32.mrb[0].mxu0
        %v7715 = vadd.f32 0.0, %v7714
        %v7716 = vpop.f32.mrb[0].mxu0
        %v7717 = vpop.f32.mrb[0].mxu0
        %v7718 = vpop.f32.mrb[0].mxu0
        %7719 = vdwg.mxu0
        %7721 = vrot.lane.b32.xlu0 %v7332, 96
        %v7722 = vpop.permute.xlu0 %7721
        %v7724 = vsel %vm1011, %v7572, 0
        %v7727 = vsel %vm1270, %v7722, 0
        %7729 = vmatprep.subr.bf16.mxu0 0
        %7730 = vmatpush1.bf16.msra.mxu0 %v7727
        %7731 = vmatprep.subr.bf16.mxu0 0
        %7732 = vmatpush1.bf16.msra.mxu0 0
        %7733 = vmatprep.subr.bf16.mxu0 0
        %7734 = vmatpush1.bf16.msra.mxu0 0
        %7735 = vmatprep.subr.bf16.mxu0 0
        %7736 = vmatpush1.bf16.msra.mxu0 0
        %7737 = vmatprep.subr.bf16.mxu0 0
        %7738 = vmatpush1.bf16.msra.mxu0 0
        %7739 = vmatprep.subr.bf16.mxu0 0
        %7740 = vmatpush1.bf16.msra.mxu0 0
        %7741 = vmatprep.subr.bf16.mxu0 0
        %7742 = vmatpush1.bf16.msra.mxu0 0
        %7743 = vmatprep.subr.bf16.mxu0 0
        %7744 = vmatpush1.bf16.msra.mxu0 0
        %7745 = vmatprep.subr.bf16.mxu0 0
        %7746 = vmatpush1.bf16.msra.mxu0 0
        %7747 = vmatprep.subr.bf16.mxu0 0
        %7748 = vmatpush1.bf16.msra.mxu0 0
        %7749 = vmatprep.subr.bf16.mxu0 0
        %7750 = vmatpush1.bf16.msra.mxu0 0
        %7751 = vmatprep.subr.bf16.mxu0 0
        %7752 = vmatpush1.bf16.msra.mxu0 0
        %7753 = vmatprep.subr.bf16.mxu0 0
        %7754 = vmatpush1.bf16.msra.mxu0 0
        %7755 = vmatprep.subr.bf16.mxu0 0
        %7756 = vmatpush1.bf16.msra.mxu0 0
        %7757 = vmatprep.subr.bf16.mxu0 0
        %7758 = vmatpush1.bf16.msra.mxu0 0
        %7759 = vmatprep.subr.bf16.mxu0 0
        %7760 = vmatpush1.bf16.msra.mxu0 0
        %7761 = vmatprep.mubr.bf16.mxu0 0
        %7762 = vmatmul.mubr.bf16.gmra.mrb[0].mxu0 %v7724
        %v7763 = vpop.f32.mrb[0].mxu0
        %v7764 = vadd.f32 0.0, %v7763
        %v7765 = vpop.f32.mrb[0].mxu0
        %v7766 = vpop.f32.mrb[0].mxu0
        %v7767 = vpop.f32.mrb[0].mxu0
        %7768 = vdwg.mxu0
        %7770 = vrot.lane.b32.xlu0 %v7666, 8
        %v7771 = vpop.permute.xlu0 %7770
        %7774 = vrot.lane.b32.xlu0 %v7715, 16
        %v7775 = vpop.permute.xlu0 %7774
        %7778 = vrot.lane.b32.xlu0 %v7764, 24
        %v7779 = vpop.permute.xlu0 %7778
        %v7781 = vsel %vm1011, %v7617, %v7771
        %v7782 = vsel %vm1471, %v7781, %v7775
        %v7783 = vsel %vm1473, %v7782, %v7779
        %7785 = vrot.lane.b32.xlu0 %v7240, 120
        %v7786 = vpop.permute.xlu0 %7785
        %7788 = vrot.lane.b32.xlu0 %v7240, 112
        %v7789 = vpop.permute.xlu0 %7788
        %7791 = vrot.lane.b32.xlu0 %v7240, 104
        %v7792 = vpop.permute.xlu0 %7791
        %v7794 = vpack.c.bf16 %v7240, %v7240
        %v7795 = vpack.c.bf16 %v7786, %v7786
        %v7796 = vpack.c.bf16 %v7789, %v7789
        %v7797 = vpack.c.bf16 %v7792, %v7792
        %7799 = vrot.lane.b32.xlu0 %v7302, 120
        %v7800 = vpop.permute.xlu0 %7799
        %7802 = vrot.lane.b32.xlu0 %v7302, 112
        %v7803 = vpop.permute.xlu0 %7802
        %7805 = vrot.lane.b32.xlu0 %v7302, 104
        %v7806 = vpop.permute.xlu0 %7805
        %v7808 = vpack.c.bf16 %v7302, %v7302
        %v7809 = vpack.c.bf16 %v7800, %v7800
        %v7810 = vpack.c.bf16 %v7803, %v7803
        %v7811 = vpack.c.bf16 %v7806, %v7806
        %v7813 = vsel %vm1011, %v7794, 0
        %v7816 = vsel %vm1011, %v7808, 0
        %7818 = vmatprep.subr.bf16.mxu0 0
        %7819 = vmatpush1.bf16.xpose.msra.mxu0 %v7816
        %7820 = vmatprep.subr.bf16.mxu0 0
        %7821 = vmatpush1.bf16.xpose.msra.mxu0 0
        %7822 = vmatprep.subr.bf16.mxu0 0
        %7823 = vmatpush1.bf16.xpose.msra.mxu0 0
        %7824 = vmatprep.subr.bf16.mxu0 0
        %7825 = vmatpush1.bf16.xpose.msra.mxu0 0
        %7826 = vmatprep.subr.bf16.mxu0 0
        %7827 = vmatpush1.bf16.xpose.msra.mxu0 0
        %7828 = vmatprep.subr.bf16.mxu0 0
        %7829 = vmatpush1.bf16.xpose.msra.mxu0 0
        %7830 = vmatprep.subr.bf16.mxu0 0
        %7831 = vmatpush1.bf16.xpose.msra.mxu0 0
        %7832 = vmatprep.subr.bf16.mxu0 0
        %7833 = vmatpush1.bf16.xpose.msra.mxu0 0
        %7834 = vmatprep.subr.bf16.mxu0 0
        %7835 = vmatpush1.bf16.xpose.msra.mxu0 0
        %7836 = vmatprep.subr.bf16.mxu0 0
        %7837 = vmatpush1.bf16.xpose.msra.mxu0 0
        %7838 = vmatprep.subr.bf16.mxu0 0
        %7839 = vmatpush1.bf16.xpose.msra.mxu0 0
        %7840 = vmatprep.subr.bf16.mxu0 0
        %7841 = vmatpush1.bf16.xpose.msra.mxu0 0
        %7842 = vmatprep.subr.bf16.mxu0 0
        %7843 = vmatpush1.bf16.xpose.msra.mxu0 0
        %7844 = vmatprep.subr.bf16.mxu0 0
        %7845 = vmatpush1.bf16.xpose.msra.mxu0 0
        %7846 = vmatprep.subr.bf16.mxu0 0
        %7847 = vmatpush1.bf16.xpose.msra.mxu0 0
        %7848 = vmatprep.subr.bf16.mxu0 0
        %7849 = vmatpush1.bf16.xpose.msra.mxu0 0
        %7850 = vmatprep.mubr.bf16.mxu0 0
        %7851 = vmatmul.mubr.bf16.gmra.mrb[0].mxu0 %v7813
        %v7852 = vpop.f32.mrb[0].mxu0
        %v7853 = vadd.f32 0.0, %v7852
        %v7854 = vpop.f32.mrb[0].mxu0
        %v7855 = vpop.f32.mrb[0].mxu0
        %v7856 = vpop.f32.mrb[0].mxu0
        %7857 = vdwg.mxu0
        %v7859 = vsel %vm1011, %v7795, 0
        %v7862 = vsel %vm1011, %v7809, 0
        %7864 = vmatprep.subr.bf16.mxu0 0
        %7865 = vmatpush1.bf16.xpose.msra.mxu0 %v7862
        %7866 = vmatprep.subr.bf16.mxu0 0
        %7867 = vmatpush1.bf16.xpose.msra.mxu0 0
        %7868 = vmatprep.subr.bf16.mxu0 0
        %7869 = vmatpush1.bf16.xpose.msra.mxu0 0
        %7870 = vmatprep.subr.bf16.mxu0 0
        %7871 = vmatpush1.bf16.xpose.msra.mxu0 0
        %7872 = vmatprep.subr.bf16.mxu0 0
        %7873 = vmatpush1.bf16.xpose.msra.mxu0 0
        %7874 = vmatprep.subr.bf16.mxu0 0
        %7875 = vmatpush1.bf16.xpose.msra.mxu0 0
        %7876 = vmatprep.subr.bf16.mxu0 0
        %7877 = vmatpush1.bf16.xpose.msra.mxu0 0
        %7878 = vmatprep.subr.bf16.mxu0 0
        %7879 = vmatpush1.bf16.xpose.msra.mxu0 0
        %7880 = vmatprep.subr.bf16.mxu0 0
        %7881 = vmatpush1.bf16.xpose.msra.mxu0 0
        %7882 = vmatprep.subr.bf16.mxu0 0
        %7883 = vmatpush1.bf16.xpose.msra.mxu0 0
        %7884 = vmatprep.subr.bf16.mxu0 0
        %7885 = vmatpush1.bf16.xpose.msra.mxu0 0
        %7886 = vmatprep.subr.bf16.mxu0 0
        %7887 = vmatpush1.bf16.xpose.msra.mxu0 0
        %7888 = vmatprep.subr.bf16.mxu0 0
        %7889 = vmatpush1.bf16.xpose.msra.mxu0 0
        %7890 = vmatprep.subr.bf16.mxu0 0
        %7891 = vmatpush1.bf16.xpose.msra.mxu0 0
        %7892 = vmatprep.subr.bf16.mxu0 0
        %7893 = vmatpush1.bf16.xpose.msra.mxu0 0
        %7894 = vmatprep.subr.bf16.mxu0 0
        %7895 = vmatpush1.bf16.xpose.msra.mxu0 0
        %7896 = vmatprep.mubr.bf16.mxu0 0
        %7897 = vmatmul.mubr.bf16.gmra.mrb[0].mxu0 %v7859
        %v7898 = vpop.f32.mrb[0].mxu0
        %v7899 = vadd.f32 0.0, %v7898
        %v7900 = vpop.f32.mrb[0].mxu0
        %v7901 = vpop.f32.mrb[0].mxu0
        %v7902 = vpop.f32.mrb[0].mxu0
        %7903 = vdwg.mxu0
        %v7905 = vsel %vm1011, %v7796, 0
        %v7908 = vsel %vm1011, %v7810, 0
        %7910 = vmatprep.subr.bf16.mxu0 0
        %7911 = vmatpush1.bf16.xpose.msra.mxu0 %v7908
        %7912 = vmatprep.subr.bf16.mxu0 0
        %7913 = vmatpush1.bf16.xpose.msra.mxu0 0
        %7914 = vmatprep.subr.bf16.mxu0 0
        %7915 = vmatpush1.bf16.xpose.msra.mxu0 0
        %7916 = vmatprep.subr.bf16.mxu0 0
        %7917 = vmatpush1.bf16.xpose.msra.mxu0 0
        %7918 = vmatprep.subr.bf16.mxu0 0
        %7919 = vmatpush1.bf16.xpose.msra.mxu0 0
        %7920 = vmatprep.subr.bf16.mxu0 0
        %7921 = vmatpush1.bf16.xpose.msra.mxu0 0
        %7922 = vmatprep.subr.bf16.mxu0 0
        %7923 = vmatpush1.bf16.xpose.msra.mxu0 0
        %7924 = vmatprep.subr.bf16.mxu0 0
        %7925 = vmatpush1.bf16.xpose.msra.mxu0 0
        %7926 = vmatprep.subr.bf16.mxu0 0
        %7927 = vmatpush1.bf16.xpose.msra.mxu0 0
        %7928 = vmatprep.subr.bf16.mxu0 0
        %7929 = vmatpush1.bf16.xpose.msra.mxu0 0
        %7930 = vmatprep.subr.bf16.mxu0 0
        %7931 = vmatpush1.bf16.xpose.msra.mxu0 0
        %7932 = vmatprep.subr.bf16.mxu0 0
        %7933 = vmatpush1.bf16.xpose.msra.mxu0 0
        %7934 = vmatprep.subr.bf16.mxu0 0
        %7935 = vmatpush1.bf16.xpose.msra.mxu0 0
        %7936 = vmatprep.subr.bf16.mxu0 0
        %7937 = vmatpush1.bf16.xpose.msra.mxu0 0
        %7938 = vmatprep.subr.bf16.mxu0 0
        %7939 = vmatpush1.bf16.xpose.msra.mxu0 0
        %7940 = vmatprep.subr.bf16.mxu0 0
        %7941 = vmatpush1.bf16.xpose.msra.mxu0 0
        %7942 = vmatprep.mubr.bf16.mxu0 0
        %7943 = vmatmul.mubr.bf16.gmra.mrb[0].mxu0 %v7905
        %v7944 = vpop.f32.mrb[0].mxu0
        %v7945 = vadd.f32 0.0, %v7944
        %v7946 = vpop.f32.mrb[0].mxu0
        %v7947 = vpop.f32.mrb[0].mxu0
        %v7948 = vpop.f32.mrb[0].mxu0
        %7949 = vdwg.mxu0
        %v7951 = vsel %vm1011, %v7797, 0
        %v7954 = vsel %vm1011, %v7811, 0
        %7956 = vmatprep.subr.bf16.mxu0 0
        %7957 = vmatpush1.bf16.xpose.msra.mxu0 %v7954
        %7958 = vmatprep.subr.bf16.mxu0 0
        %7959 = vmatpush1.bf16.xpose.msra.mxu0 0
        %7960 = vmatprep.subr.bf16.mxu0 0
        %7961 = vmatpush1.bf16.xpose.msra.mxu0 0
        %7962 = vmatprep.subr.bf16.mxu0 0
        %7963 = vmatpush1.bf16.xpose.msra.mxu0 0
        %7964 = vmatprep.subr.bf16.mxu0 0
        %7965 = vmatpush1.bf16.xpose.msra.mxu0 0
        %7966 = vmatprep.subr.bf16.mxu0 0
        %7967 = vmatpush1.bf16.xpose.msra.mxu0 0
        %7968 = vmatprep.subr.bf16.mxu0 0
        %7969 = vmatpush1.bf16.xpose.msra.mxu0 0
        %7970 = vmatprep.subr.bf16.mxu0 0
        %7971 = vmatpush1.bf16.xpose.msra.mxu0 0
        %7972 = vmatprep.subr.bf16.mxu0 0
        %7973 = vmatpush1.bf16.xpose.msra.mxu0 0
        %7974 = vmatprep.subr.bf16.mxu0 0
        %7975 = vmatpush1.bf16.xpose.msra.mxu0 0
        %7976 = vmatprep.subr.bf16.mxu0 0
        %7977 = vmatpush1.bf16.xpose.msra.mxu0 0
        %7978 = vmatprep.subr.bf16.mxu0 0
        %7979 = vmatpush1.bf16.xpose.msra.mxu0 0
        %7980 = vmatprep.subr.bf16.mxu0 0
        %7981 = vmatpush1.bf16.xpose.msra.mxu0 0
        %7982 = vmatprep.subr.bf16.mxu0 0
        %7983 = vmatpush1.bf16.xpose.msra.mxu0 0
        %7984 = vmatprep.subr.bf16.mxu0 0
        %7985 = vmatpush1.bf16.xpose.msra.mxu0 0
        %7986 = vmatprep.subr.bf16.mxu0 0
        %7987 = vmatpush1.bf16.xpose.msra.mxu0 0
        %7988 = vmatprep.mubr.bf16.mxu0 0
        %7989 = vmatmul.mubr.bf16.gmra.mrb[0].mxu0 %v7951
        %v7990 = vpop.f32.mrb[0].mxu0
        %v7991 = vadd.f32 0.0, %v7990
        %v7992 = vpop.f32.mrb[0].mxu0
        %v7993 = vpop.f32.mrb[0].mxu0
        %v7994 = vpop.f32.mrb[0].mxu0
        %7995 = vdwg.mxu0
        %v7996 = vmul.f32 %v7853, 0.35355338
        %v7997 = vmul.f32 %v7899, 0.35355338
        %v7998 = vmul.f32 %v7945, 0.35355338
        %v7999 = vmul.f32 %v7991, 0.35355338
        %v8000 = vadd.f32 %v7996, %v1692
        %v8001 = vadd.f32 %v7997, %v1692
        %v8002 = vadd.f32 %v7998, %v1692
        %v8003 = vadd.f32 %v7999, %v1692
        %v8004 = vsel %vm1011, %v8000, -inf
        %8005 = vmax.xlane.f32.xlu0 %v8004
        %v8006 = vpop.xlane.xlu0 %8005
        %v8007 = vsel %vm1011, %v8001, -inf
        %8008 = vmax.xlane.f32.xlu0 %v8007
        %v8009 = vpop.xlane.xlu0 %8008
        %v8010 = vsel %vm1011, %v8002, -inf
        %8011 = vmax.xlane.f32.xlu0 %v8010
        %v8012 = vpop.xlane.xlu0 %8011
        %v8013 = vsel %vm1011, %v8003, -inf
        %8014 = vmax.xlane.f32.xlu0 %v8013
        %v8015 = vpop.xlane.xlu0 %8014
        %v8016 = vsub.f32 %v8000, %v8006
        %v8017 = vsub.f32 %v8001, %v8009
        %v8018 = vsub.f32 %v8002, %v8012
        %v8019 = vsub.f32 %v8003, %v8015
        %v8020 = vmul.f32 %v8016, 1.442695
        %v8021 = vpow.pop %v8020
        %v8022 = vmul.f32 %v8017, 1.442695
        %v8023 = vpow.pop %v8022
        %v8024 = vmul.f32 %v8018, 1.442695
        %v8025 = vpow.pop %v8024
        %v8026 = vmul.f32 %v8019, 1.442695
        %v8027 = vpow.pop %v8026
        %v8028 = vsel %vm1011, %v8021, 0.0
        %8029 = vadd.xlane.f32.xlu0 %v8028
        %v8030 = vpop.xlane.xlu0 %8029
        %v8031 = vsel %vm1011, %v8023, 0.0
        %8032 = vadd.xlane.f32.xlu0 %v8031
        %v8033 = vpop.xlane.xlu0 %8032
        %v8034 = vsel %vm1011, %v8025, 0.0
        %8035 = vadd.xlane.f32.xlu0 %v8034
        %v8036 = vpop.xlane.xlu0 %8035
        %v8037 = vsel %vm1011, %v8027, 0.0
        %8038 = vadd.xlane.f32.xlu0 %v8037
        %v8039 = vpop.xlane.xlu0 %8038
        %v8040 = vrcp.pop %v8030
        %v8041 = vmul.f32 %v8021, %v8040
        %v8042 = vrcp.pop %v8033
        %v8043 = vmul.f32 %v8023, %v8042
        %v8044 = vrcp.pop %v8036
        %v8045 = vmul.f32 %v8025, %v8044
        %v8046 = vrcp.pop %v8039
        %v8047 = vmul.f32 %v8027, %v8046
        %v8048 = vpack.c.bf16 %v8041, %v8041
        %v8049 = vpack.c.bf16 %v8043, %v8043
        %v8050 = vpack.c.bf16 %v8045, %v8045
        %v8051 = vpack.c.bf16 %v8047, %v8047
        %8053 = vrot.lane.b32.xlu0 %v7808, 96
        %v8054 = vpop.permute.xlu0 %8053
        %v8056 = vsel %vm1011, %v8048, 0
        %v8059 = vsel %vm1270, %v8054, 0
        %8061 = vmatprep.subr.bf16.mxu0 0
        %8062 = vmatpush1.bf16.msra.mxu0 %v8059
        %8063 = vmatprep.subr.bf16.mxu0 0
        %8064 = vmatpush1.bf16.msra.mxu0 0
        %8065 = vmatprep.subr.bf16.mxu0 0
        %8066 = vmatpush1.bf16.msra.mxu0 0
        %8067 = vmatprep.subr.bf16.mxu0 0
        %8068 = vmatpush1.bf16.msra.mxu0 0
        %8069 = vmatprep.subr.bf16.mxu0 0
        %8070 = vmatpush1.bf16.msra.mxu0 0
        %8071 = vmatprep.subr.bf16.mxu0 0
        %8072 = vmatpush1.bf16.msra.mxu0 0
        %8073 = vmatprep.subr.bf16.mxu0 0
        %8074 = vmatpush1.bf16.msra.mxu0 0
        %8075 = vmatprep.subr.bf16.mxu0 0
        %8076 = vmatpush1.bf16.msra.mxu0 0
        %8077 = vmatprep.subr.bf16.mxu0 0
        %8078 = vmatpush1.bf16.msra.mxu0 0
        %8079 = vmatprep.subr.bf16.mxu0 0
        %8080 = vmatpush1.bf16.msra.mxu0 0
        %8081 = vmatprep.subr.bf16.mxu0 0
        %8082 = vmatpush1.bf16.msra.mxu0 0
        %8083 = vmatprep.subr.bf16.mxu0 0
        %8084 = vmatpush1.bf16.msra.mxu0 0
        %8085 = vmatprep.subr.bf16.mxu0 0
        %8086 = vmatpush1.bf16.msra.mxu0 0
        %8087 = vmatprep.subr.bf16.mxu0 0
        %8088 = vmatpush1.bf16.msra.mxu0 0
        %8089 = vmatprep.subr.bf16.mxu0 0
        %8090 = vmatpush1.bf16.msra.mxu0 0
        %8091 = vmatprep.subr.bf16.mxu0 0
        %8092 = vmatpush1.bf16.msra.mxu0 0
        %8093 = vmatprep.mubr.bf16.mxu0 0
        %8094 = vmatmul.mubr.bf16.gmra.mrb[0].mxu0 %v8056
        %v8095 = vpop.f32.mrb[0].mxu0
        %v8096 = vadd.f32 0.0, %v8095
        %v8097 = vpop.f32.mrb[0].mxu0
        %v8098 = vpop.f32.mrb[0].mxu0
        %v8099 = vpop.f32.mrb[0].mxu0
        %8100 = vdwg.mxu0
        %8102 = vrot.lane.b32.xlu0 %v7809, 96
        %v8103 = vpop.permute.xlu0 %8102
        %v8105 = vsel %vm1011, %v8049, 0
        %v8108 = vsel %vm1270, %v8103, 0
        %8110 = vmatprep.subr.bf16.mxu0 0
        %8111 = vmatpush1.bf16.msra.mxu0 %v8108
        %8112 = vmatprep.subr.bf16.mxu0 0
        %8113 = vmatpush1.bf16.msra.mxu0 0
        %8114 = vmatprep.subr.bf16.mxu0 0
        %8115 = vmatpush1.bf16.msra.mxu0 0
        %8116 = vmatprep.subr.bf16.mxu0 0
        %8117 = vmatpush1.bf16.msra.mxu0 0
        %8118 = vmatprep.subr.bf16.mxu0 0
        %8119 = vmatpush1.bf16.msra.mxu0 0
        %8120 = vmatprep.subr.bf16.mxu0 0
        %8121 = vmatpush1.bf16.msra.mxu0 0
        %8122 = vmatprep.subr.bf16.mxu0 0
        %8123 = vmatpush1.bf16.msra.mxu0 0
        %8124 = vmatprep.subr.bf16.mxu0 0
        %8125 = vmatpush1.bf16.msra.mxu0 0
        %8126 = vmatprep.subr.bf16.mxu0 0
        %8127 = vmatpush1.bf16.msra.mxu0 0
        %8128 = vmatprep.subr.bf16.mxu0 0
        %8129 = vmatpush1.bf16.msra.mxu0 0
        %8130 = vmatprep.subr.bf16.mxu0 0
        %8131 = vmatpush1.bf16.msra.mxu0 0
        %8132 = vmatprep.subr.bf16.mxu0 0
        %8133 = vmatpush1.bf16.msra.mxu0 0
        %8134 = vmatprep.subr.bf16.mxu0 0
        %8135 = vmatpush1.bf16.msra.mxu0 0
        %8136 = vmatprep.subr.bf16.mxu0 0
        %8137 = vmatpush1.bf16.msra.mxu0 0
        %8138 = vmatprep.subr.bf16.mxu0 0
        %8139 = vmatpush1.bf16.msra.mxu0 0
        %8140 = vmatprep.subr.bf16.mxu0 0
        %8141 = vmatpush1.bf16.msra.mxu0 0
        %8142 = vmatprep.mubr.bf16.mxu0 0
        %8143 = vmatmul.mubr.bf16.gmra.mrb[0].mxu0 %v8105
        %v8144 = vpop.f32.mrb[0].mxu0
        %v8145 = vadd.f32 0.0, %v8144
        %v8146 = vpop.f32.mrb[0].mxu0
        %v8147 = vpop.f32.mrb[0].mxu0
        %v8148 = vpop.f32.mrb[0].mxu0
        %8149 = vdwg.mxu0
        %8151 = vrot.lane.b32.xlu0 %v7810, 96
        %v8152 = vpop.permute.xlu0 %8151
        %v8154 = vsel %vm1011, %v8050, 0
        %v8157 = vsel %vm1270, %v8152, 0
        %8159 = vmatprep.subr.bf16.mxu0 0
        %8160 = vmatpush1.bf16.msra.mxu0 %v8157
        %8161 = vmatprep.subr.bf16.mxu0 0
        %8162 = vmatpush1.bf16.msra.mxu0 0
        %8163 = vmatprep.subr.bf16.mxu0 0
        %8164 = vmatpush1.bf16.msra.mxu0 0
        %8165 = vmatprep.subr.bf16.mxu0 0
        %8166 = vmatpush1.bf16.msra.mxu0 0
        %8167 = vmatprep.subr.bf16.mxu0 0
        %8168 = vmatpush1.bf16.msra.mxu0 0
        %8169 = vmatprep.subr.bf16.mxu0 0
        %8170 = vmatpush1.bf16.msra.mxu0 0
        %8171 = vmatprep.subr.bf16.mxu0 0
        %8172 = vmatpush1.bf16.msra.mxu0 0
        %8173 = vmatprep.subr.bf16.mxu0 0
        %8174 = vmatpush1.bf16.msra.mxu0 0
        %8175 = vmatprep.subr.bf16.mxu0 0
        %8176 = vmatpush1.bf16.msra.mxu0 0
        %8177 = vmatprep.subr.bf16.mxu0 0
        %8178 = vmatpush1.bf16.msra.mxu0 0
        %8179 = vmatprep.subr.bf16.mxu0 0
        %8180 = vmatpush1.bf16.msra.mxu0 0
        %8181 = vmatprep.subr.bf16.mxu0 0
        %8182 = vmatpush1.bf16.msra.mxu0 0
        %8183 = vmatprep.subr.bf16.mxu0 0
        %8184 = vmatpush1.bf16.msra.mxu0 0
        %8185 = vmatprep.subr.bf16.mxu0 0
        %8186 = vmatpush1.bf16.msra.mxu0 0
        %8187 = vmatprep.subr.bf16.mxu0 0
        %8188 = vmatpush1.bf16.msra.mxu0 0
        %8189 = vmatprep.subr.bf16.mxu0 0
        %8190 = vmatpush1.bf16.msra.mxu0 0
        %8191 = vmatprep.mubr.bf16.mxu0 0
        %8192 = vmatmul.mubr.bf16.gmra.mrb[0].mxu0 %v8154
        %v8193 = vpop.f32.mrb[0].mxu0
        %v8194 = vadd.f32 0.0, %v8193
        %v8195 = vpop.f32.mrb[0].mxu0
        %v8196 = vpop.f32.mrb[0].mxu0
        %v8197 = vpop.f32.mrb[0].mxu0
        %8198 = vdwg.mxu0
        %8200 = vrot.lane.b32.xlu0 %v7811, 96
        %v8201 = vpop.permute.xlu0 %8200
        %v8203 = vsel %vm1011, %v8051, 0
        %v8206 = vsel %vm1270, %v8201, 0
        %8208 = vmatprep.subr.bf16.mxu0 0
        %8209 = vmatpush1.bf16.msra.mxu0 %v8206
        %8210 = vmatprep.subr.bf16.mxu0 0
        %8211 = vmatpush1.bf16.msra.mxu0 0
        %8212 = vmatprep.subr.bf16.mxu0 0
        %8213 = vmatpush1.bf16.msra.mxu0 0
        %8214 = vmatprep.subr.bf16.mxu0 0
        %8215 = vmatpush1.bf16.msra.mxu0 0
        %8216 = vmatprep.subr.bf16.mxu0 0
        %8217 = vmatpush1.bf16.msra.mxu0 0
        %8218 = vmatprep.subr.bf16.mxu0 0
        %8219 = vmatpush1.bf16.msra.mxu0 0
        %8220 = vmatprep.subr.bf16.mxu0 0
        %8221 = vmatpush1.bf16.msra.mxu0 0
        %8222 = vmatprep.subr.bf16.mxu0 0
        %8223 = vmatpush1.bf16.msra.mxu0 0
        %8224 = vmatprep.subr.bf16.mxu0 0
        %8225 = vmatpush1.bf16.msra.mxu0 0
        %8226 = vmatprep.subr.bf16.mxu0 0
        %8227 = vmatpush1.bf16.msra.mxu0 0
        %8228 = vmatprep.subr.bf16.mxu0 0
        %8229 = vmatpush1.bf16.msra.mxu0 0
        %8230 = vmatprep.subr.bf16.mxu0 0
        %8231 = vmatpush1.bf16.msra.mxu0 0
        %8232 = vmatprep.subr.bf16.mxu0 0
        %8233 = vmatpush1.bf16.msra.mxu0 0
        %8234 = vmatprep.subr.bf16.mxu0 0
        %8235 = vmatpush1.bf16.msra.mxu0 0
        %8236 = vmatprep.subr.bf16.mxu0 0
        %8237 = vmatpush1.bf16.msra.mxu0 0
        %8238 = vmatprep.subr.bf16.mxu0 0
        %8239 = vmatpush1.bf16.msra.mxu0 0
        %8240 = vmatprep.mubr.bf16.mxu0 0
        %8241 = vmatmul.mubr.bf16.gmra.mrb[0].mxu0 %v8203
        %v8242 = vpop.f32.mrb[0].mxu0
        %v8243 = vadd.f32 0.0, %v8242
        %v8244 = vpop.f32.mrb[0].mxu0
        %v8245 = vpop.f32.mrb[0].mxu0
        %v8246 = vpop.f32.mrb[0].mxu0
        %8247 = vdwg.mxu0
        %8249 = vrot.lane.b32.xlu0 %v8145, 8
        %v8250 = vpop.permute.xlu0 %8249
        %8253 = vrot.lane.b32.xlu0 %v8194, 16
        %v8254 = vpop.permute.xlu0 %8253
        %8257 = vrot.lane.b32.xlu0 %v8243, 24
        %v8258 = vpop.permute.xlu0 %8257
        %v8260 = vsel %vm1011, %v8096, %v8250
        %v8261 = vsel %vm1471, %v8260, %v8254
        %v8262 = vsel %vm1473, %v8261, %v8258
        %s8263 = scalar_lea.vmem %s15, 16
        %v8264 = vld [vmem:[%s8263] sm:$0xf]
        %v8265 = vld [vmem:[%s8263 + $0x4] sm:$0xf]
        %v8266 = vld [vmem:[%s8263 + $0x8] sm:$0xf]
        %v8267 = vld [vmem:[%s8263 + $0xc] sm:$0xf]
        %v8268 = vpack.c.bf16 %v8262, %v7783
        %v8269 = vlaneseq
        %v8270 = vshrl.u32 %v8269, 7
        %v8271 = vsub.s32 6, %v8270
        %v8272 = vrot.slane %v6057, %v8271
        %v8277 = vunpack.c.l.b16 %v8264
        %v8278 = vunpack.c.l.b16 %v8265
        %v8279 = vunpack.c.l.b16 %v8266
        %v8280 = vunpack.c.l.b16 %v8267
        %v8281 = vpack.c.b16 %v8278, %v8277
        %v8282 = vpack.c.b16 %v8280, %v8279
        %v8286 = vsel %vm810, %v8268, 0
        %8288 = vmatprep.subr.bf16.mxu0 0
        %8289 = vmatpush1.bf16.msra.mxu0 %v8281
        %8290 = vmatprep.subr.bf16.mxu0 0
        %8291 = vmatpush1.bf16.msra.mxu0 %v8282
        %8292 = vmatprep.subr.bf16.mxu0 0
        %8293 = vmatpush1.bf16.msra.mxu0 0
        %8294 = vmatprep.subr.bf16.mxu0 0
        %8295 = vmatpush1.bf16.msra.mxu0 0
        %8296 = vmatprep.subr.bf16.mxu0 0
        %8297 = vmatpush1.bf16.msra.mxu0 0
        %8298 = vmatprep.subr.bf16.mxu0 0
        %8299 = vmatpush1.bf16.msra.mxu0 0
        %8300 = vmatprep.subr.bf16.mxu0 0
        %8301 = vmatpush1.bf16.msra.mxu0 0
        %8302 = vmatprep.subr.bf16.mxu0 0
        %8303 = vmatpush1.bf16.msra.mxu0 0
        %8304 = vmatprep.subr.bf16.mxu0 0
        %8305 = vmatpush1.bf16.msra.mxu0 0
        %8306 = vmatprep.subr.bf16.mxu0 0
        %8307 = vmatpush1.bf16.msra.mxu0 0
        %8308 = vmatprep.subr.bf16.mxu0 0
        %8309 = vmatpush1.bf16.msra.mxu0 0
        %8310 = vmatprep.subr.bf16.mxu0 0
        %8311 = vmatpush1.bf16.msra.mxu0 0
        %8312 = vmatprep.subr.bf16.mxu0 0
        %8313 = vmatpush1.bf16.msra.mxu0 0
        %8314 = vmatprep.subr.bf16.mxu0 0
        %8315 = vmatpush1.bf16.msra.mxu0 0
        %8316 = vmatprep.subr.bf16.mxu0 0
        %8317 = vmatpush1.bf16.msra.mxu0 0
        %8318 = vmatprep.subr.bf16.mxu0 0
        %8319 = vmatpush1.bf16.msra.mxu0 0
        %8320 = vmatprep.mubr.bf16.mxu0 0
        %8321 = vmatmul.mubr.bf16.gmra.mrb[0].mxu0 %v8286
        %v8322 = vpop.f32.mrb[0].mxu0
        %v8323 = vadd.f32 %v8272, %v8322
        %v8324 = vpop.f32.mrb[0].mxu0
        %v8325 = vpop.f32.mrb[0].mxu0
        %v8326 = vadd.f32 %v8272, %v8325
        %v8327 = vpop.f32.mrb[0].mxu0
        %8328 = vdwg.mxu0
        %v8329 = vadd.f32 %v7175, %v8323
        %v8330 = vadd.f32 %v7176, %v8326
        %v8331 = vsel %vm810, %v8329, 0.0
        %8332 = vadd.xlane.f32.xlu0 %v8331
        %v8333 = vpop.xlane.xlu0 %8332
        %v8334 = vsel %vm810, %v8330, 0.0
        %8335 = vadd.xlane.f32.xlu0 %v8334
        %v8336 = vpop.xlane.xlu0 %8335
        %v8337 = vmul.f32 %v8333, %v2025
        %v8338 = vmul.f32 %v8336, %v2025
        %v8339 = vsub.f32 %v8329, %v8337
        %v8340 = vsub.f32 %v8330, %v8338
        %v8341 = vmul.f32 %v8339, %v8339
        %v8342 = vmul.f32 %v8340, %v8340
        %v8343 = vsel %vm810, %v8341, 0.0
        %8344 = vadd.xlane.f32.xlu0 %v8343
        %v8345 = vpop.xlane.xlu0 %8344
        %v8346 = vsel %vm810, %v8342, 0.0
        %8347 = vadd.xlane.f32.xlu0 %v8346
        %v8348 = vpop.xlane.xlu0 %8347
        %v8349 = vmul.f32 %v8345, %v2025
        %v8350 = vmul.f32 %v8348, %v2025
        %v8351 = vadd.f32 %v8349, 1e-05
        %v8352 = vadd.f32 %v8350, 1e-05
        %v8353 = vrsqrt.pop %v8351
        %v8354 = vrsqrt.pop %v8352
        %v8355 = vmul.f32 %v8339, %v8353
        %v8356 = vmul.f32 %v8340, %v8354
        %v8357 = vlaneseq
        %v8358 = vshrl.u32 %v8357, 7
        %v8359 = vsub.s32 7, %v8358
        %v8360 = vrot.slane %v6057, %v8359
        %v8361 = vmul.f32 %v8355, %v8360
        %v8362 = vmul.f32 %v8356, %v8360
        %v8363 = vlaneseq
        %v8364 = vshrl.u32 %v8363, 7
        %v8365 = vsub.s32 0, %v8364
        %v8366 = vrot.slane %v6058, %v8365
        %v8367 = vadd.f32 %v8361, %v8366
        %v8368 = vadd.f32 %v8362, %v8366
        %s8369 = scalar_lea.vmem %s16, 16
        %v8370 = vld [vmem:[%s8369] sm:$0xf]
        %v8371 = vld [vmem:[%s8369 + $0x4] sm:$0xf]
        %v8372 = vld [vmem:[%s8369 + $0x8] sm:$0xf]
        %v8373 = vld [vmem:[%s8369 + $0xc] sm:$0xf]
        %v8374 = vpack.c.bf16 %v8368, %v8367
        %v8375 = vlaneseq
        %v8376 = vshrl.u32 %v8375, 7
        %v8377 = vsub.s32 1, %v8376
        %v8378 = vrot.slane %v6058, %v8377
        %v8383 = vunpack.c.l.b16 %v8370
        %v8384 = vunpack.c.l.b16 %v8371
        %v8385 = vunpack.c.l.b16 %v8372
        %v8386 = vunpack.c.l.b16 %v8373
        %v8387 = vpack.c.b16 %v8384, %v8383
        %v8388 = vpack.c.b16 %v8386, %v8385
        %v8392 = vsel %vm810, %v8374, 0
        %8394 = vmatprep.subr.bf16.mxu0 0
        %8395 = vmatpush1.bf16.msra.mxu0 %v8387
        %8396 = vmatprep.subr.bf16.mxu0 0
        %8397 = vmatpush1.bf16.msra.mxu0 %v8388
        %8398 = vmatprep.subr.bf16.mxu0 0
        %8399 = vmatpush1.bf16.msra.mxu0 0
        %8400 = vmatprep.subr.bf16.mxu0 0
        %8401 = vmatpush1.bf16.msra.mxu0 0
        %8402 = vmatprep.subr.bf16.mxu0 0
        %8403 = vmatpush1.bf16.msra.mxu0 0
        %8404 = vmatprep.subr.bf16.mxu0 0
        %8405 = vmatpush1.bf16.msra.mxu0 0
        %8406 = vmatprep.subr.bf16.mxu0 0
        %8407 = vmatpush1.bf16.msra.mxu0 0
        %8408 = vmatprep.subr.bf16.mxu0 0
        %8409 = vmatpush1.bf16.msra.mxu0 0
        %8410 = vmatprep.subr.bf16.mxu0 0
        %8411 = vmatpush1.bf16.msra.mxu0 0
        %8412 = vmatprep.subr.bf16.mxu0 0
        %8413 = vmatpush1.bf16.msra.mxu0 0
        %8414 = vmatprep.subr.bf16.mxu0 0
        %8415 = vmatpush1.bf16.msra.mxu0 0
        %8416 = vmatprep.subr.bf16.mxu0 0
        %8417 = vmatpush1.bf16.msra.mxu0 0
        %8418 = vmatprep.subr.bf16.mxu0 0
        %8419 = vmatpush1.bf16.msra.mxu0 0
        %8420 = vmatprep.subr.bf16.mxu0 0
        %8421 = vmatpush1.bf16.msra.mxu0 0
        %8422 = vmatprep.subr.bf16.mxu0 0
        %8423 = vmatpush1.bf16.msra.mxu0 0
        %8424 = vmatprep.subr.bf16.mxu0 0
        %8425 = vmatpush1.bf16.msra.mxu0 0
        %8426 = vmatprep.mubr.bf16.mxu0 0
        %8427 = vmatmul.mubr.bf16.gmra.mrb[0].mxu0 %v8392
        %v8428 = vpop.f32.mrb[0].mxu0
        %v8429 = vadd.f32 %v8378, %v8428
        %v8430 = vpop.f32.mrb[0].mxu0
        %v8431 = vpop.f32.mrb[0].mxu0
        %v8432 = vadd.f32 %v8378, %v8431
        %v8433 = vpop.f32.mrb[0].mxu0
        %8434 = vdwg.mxu0
        %v8435 = vmax.f32 %v8429, 0.0
        %v8436 = vmax.f32 %v8432, 0.0
        %s8437 = scalar_lea.vmem %s17, 32
        %v8438 = vld [vmem:[%s8437] sm:$0xf]
        %v8439 = vld [vmem:[%s8437 + $0x4] sm:$0xf]
        %v8440 = vld [vmem:[%s8437 + $0x8] sm:$0xf]
        %v8441 = vld [vmem:[%s8437 + $0xc] sm:$0xf]
        %v8442 = vld [vmem:[%s8437 + $0x10] sm:$0xf]
        %v8443 = vld [vmem:[%s8437 + $0x14] sm:$0xf]
        %v8444 = vld [vmem:[%s8437 + $0x18] sm:$0xf]
        %v8445 = vld [vmem:[%s8437 + $0x1c] sm:$0xf]
        %v8446 = vpack.c.bf16 %v8436, %v8435
        %v8447 = vlaneseq
        %v8448 = vshrl.u32 %v8447, 7
        %v8449 = vsub.s32 2, %v8448
        %v8450 = vrot.slane %v6058, %v8449
        %v8459 = vunpack.c.l.b16 %v8438
        %v8460 = vunpack.c.l.b16 %v8439
        %v8461 = vunpack.c.l.b16 %v8440
        %v8462 = vunpack.c.l.b16 %v8441
        %v8463 = vunpack.c.l.b16 %v8442
        %v8464 = vunpack.c.l.b16 %v8443
        %v8465 = vunpack.c.l.b16 %v8444
        %v8466 = vunpack.c.l.b16 %v8445
        %v8467 = vpack.c.b16 %v8460, %v8459
        %v8468 = vpack.c.b16 %v8462, %v8461
        %v8469 = vpack.c.b16 %v8464, %v8463
        %v8470 = vpack.c.b16 %v8466, %v8465
        %v8476 = vsel %vm2162, %v8446, 0
        %8478 = vmatprep.subr.bf16.mxu0 0
        %8479 = vmatpush1.bf16.msra.mxu0 %v8467
        %8480 = vmatprep.subr.bf16.mxu0 0
        %8481 = vmatpush1.bf16.msra.mxu0 %v8468
        %8482 = vmatprep.subr.bf16.mxu0 0
        %8483 = vmatpush1.bf16.msra.mxu0 %v8469
        %8484 = vmatprep.subr.bf16.mxu0 0
        %8485 = vmatpush1.bf16.msra.mxu0 %v8470
        %8486 = vmatprep.subr.bf16.mxu0 0
        %8487 = vmatpush1.bf16.msra.mxu0 0
        %8488 = vmatprep.subr.bf16.mxu0 0
        %8489 = vmatpush1.bf16.msra.mxu0 0
        %8490 = vmatprep.subr.bf16.mxu0 0
        %8491 = vmatpush1.bf16.msra.mxu0 0
        %8492 = vmatprep.subr.bf16.mxu0 0
        %8493 = vmatpush1.bf16.msra.mxu0 0
        %8494 = vmatprep.subr.bf16.mxu0 0
        %8495 = vmatpush1.bf16.msra.mxu0 0
        %8496 = vmatprep.subr.bf16.mxu0 0
        %8497 = vmatpush1.bf16.msra.mxu0 0
        %8498 = vmatprep.subr.bf16.mxu0 0
        %8499 = vmatpush1.bf16.msra.mxu0 0
        %8500 = vmatprep.subr.bf16.mxu0 0
        %8501 = vmatpush1.bf16.msra.mxu0 0
        %8502 = vmatprep.subr.bf16.mxu0 0
        %8503 = vmatpush1.bf16.msra.mxu0 0
        %8504 = vmatprep.subr.bf16.mxu0 0
        %8505 = vmatpush1.bf16.msra.mxu0 0
        %8506 = vmatprep.subr.bf16.mxu0 0
        %8507 = vmatpush1.bf16.msra.mxu0 0
        %8508 = vmatprep.subr.bf16.mxu0 0
        %8509 = vmatpush1.bf16.msra.mxu0 0
        %8510 = vmatprep.mubr.bf16.mxu0 0
        %8511 = vmatmul.mubr.bf16.gmra.mrb[0].mxu0 %v8476
        %v8512 = vpop.f32.mrb[0].mxu0
        %v8513 = vadd.f32 %v8450, %v8512
        %v8514 = vpop.f32.mrb[0].mxu0
        %v8515 = vpop.f32.mrb[0].mxu0
        %v8516 = vadd.f32 %v8450, %v8515
        %v8517 = vpop.f32.mrb[0].mxu0
        %8518 = vdwg.mxu0
        %v8519 = vadd.f32 %v8367, %v8513
        %v8520 = vadd.f32 %v8368, %v8516
        %v8521 = vsel %vm810, %v8519, 0.0
        %8522 = vadd.xlane.f32.xlu0 %v8521
        %v8523 = vpop.xlane.xlu0 %8522
        %v8524 = vsel %vm810, %v8520, 0.0
        %8525 = vadd.xlane.f32.xlu0 %v8524
        %v8526 = vpop.xlane.xlu0 %8525
        %v8527 = vmul.f32 %v8523, %v2025
        %v8528 = vmul.f32 %v8526, %v2025
        %v8529 = vsub.f32 %v8519, %v8527
        %v8530 = vsub.f32 %v8520, %v8528
        %v8531 = vmul.f32 %v8529, %v8529
        %v8532 = vmul.f32 %v8530, %v8530
        %v8533 = vsel %vm810, %v8531, 0.0
        %8534 = vadd.xlane.f32.xlu0 %v8533
        %v8535 = vpop.xlane.xlu0 %8534
        %v8536 = vsel %vm810, %v8532, 0.0
        %8537 = vadd.xlane.f32.xlu0 %v8536
        %v8538 = vpop.xlane.xlu0 %8537
        %v8539 = vmul.f32 %v8535, %v2025
        %v8540 = vmul.f32 %v8538, %v2025
        %v8541 = vadd.f32 %v8539, 1e-05
        %v8542 = vadd.f32 %v8540, 1e-05
        %v8543 = vrsqrt.pop %v8541
        %v8544 = vrsqrt.pop %v8542
        %v8545 = vmul.f32 %v8529, %v8543
        %v8546 = vmul.f32 %v8530, %v8544
        %v8547 = vlaneseq
        %v8548 = vshrl.u32 %v8547, 7
        %v8549 = vsub.s32 3, %v8548
        %v8550 = vrot.slane %v6058, %v8549
        %v8551 = vmul.f32 %v8545, %v8550
        %v8552 = vmul.f32 %v8546, %v8550
        %v8553 = vlaneseq
        %v8554 = vshrl.u32 %v8553, 7
        %v8555 = vsub.s32 4, %v8554
        %v8556 = vrot.slane %v6058, %v8555
        %v8557 = vadd.f32 %v8551, %v8556
        %v8558 = vadd.f32 %v8552, %v8556
        %v8559 = vld [vmem:[%s19] sm:$0xf]
        %v8560 = vld [vmem:[%s19 + $0x4] sm:$0xf]
        %v8561 = vld [vmem:[%s19 + $0x8] sm:$0xf]
        %v8562 = vld [vmem:[%s19 + $0xc] sm:$0xf]
        %v8563 = vpack.c.bf16 %v8558, %v8557
        %v8564 = vld [vmem:[#allocation8] sm:$0x1]
        %v8566 = vlaneseq
        %v8567 = vshrl.u32 %v8566, 7
        %v8568 = vsub.s32 0, %v8567
        %v8569 = vrot.slane %v8564, %v8568
        %v8575 = vunpack.c.l.b16 %v8559
        %v8576 = vunpack.c.l.b16 %v8560
        %v8577 = vunpack.c.l.b16 %v8561
        %v8578 = vunpack.c.l.b16 %v8562
        %v8579 = vpack.c.b16 %v8576, %v8575
        %v8580 = vpack.c.b16 %v8578, %v8577
        %v8584 = vsel %vm810, %v8563, 0
        %8586 = vmatprep.subr.bf16.mxu0 0
        %8587 = vmatpush1.bf16.msra.mxu0 %v8579
        %8588 = vmatprep.subr.bf16.mxu0 0
        %8589 = vmatpush1.bf16.msra.mxu0 %v8580
        %8590 = vmatprep.subr.bf16.mxu0 0
        %8591 = vmatpush1.bf16.msra.mxu0 0
        %8592 = vmatprep.subr.bf16.mxu0 0
        %8593 = vmatpush1.bf16.msra.mxu0 0
        %8594 = vmatprep.subr.bf16.mxu0 0
        %8595 = vmatpush1.bf16.msra.mxu0 0
        %8596 = vmatprep.subr.bf16.mxu0 0
        %8597 = vmatpush1.bf16.msra.mxu0 0
        %8598 = vmatprep.subr.bf16.mxu0 0
        %8599 = vmatpush1.bf16.msra.mxu0 0
        %8600 = vmatprep.subr.bf16.mxu0 0
        %8601 = vmatpush1.bf16.msra.mxu0 0
        %8602 = vmatprep.subr.bf16.mxu0 0
        %8603 = vmatpush1.bf16.msra.mxu0 0
        %8604 = vmatprep.subr.bf16.mxu0 0
        %8605 = vmatpush1.bf16.msra.mxu0 0
        %8606 = vmatprep.subr.bf16.mxu0 0
        %8607 = vmatpush1.bf16.msra.mxu0 0
        %8608 = vmatprep.subr.bf16.mxu0 0
        %8609 = vmatpush1.bf16.msra.mxu0 0
        %8610 = vmatprep.subr.bf16.mxu0 0
        %8611 = vmatpush1.bf16.msra.mxu0 0
        %8612 = vmatprep.subr.bf16.mxu0 0
        %8613 = vmatpush1.bf16.msra.mxu0 0
        %8614 = vmatprep.subr.bf16.mxu0 0
        %8615 = vmatpush1.bf16.msra.mxu0 0
        %8616 = vmatprep.subr.bf16.mxu0 0
        %8617 = vmatpush1.bf16.msra.mxu0 0
        %8618 = vmatprep.mubr.bf16.mxu0 0
        %8619 = vmatmul.mubr.bf16.gmra.mrb[0].mxu0 %v8584
        %v8620 = vpop.f32.mrb[0].mxu0
        %v8621 = vadd.f32 %v8569, %v8620
        %v8622 = vpop.f32.mrb[0].mxu0
        %v8623 = vpop.f32.mrb[0].mxu0
        %v8624 = vadd.f32 %v8569, %v8623
        %v8625 = vpop.f32.mrb[0].mxu0
        %8626 = vdwg.mxu0
        %8627 = vst [vmem:[%s734] sm:$0xff] %v8621
        %8628 = vst [vmem:[%s734 + $0x8] sm:$0xff] %v8624
        %s8629 = sand.u32 %s502, 1
        %s8630 = scalar_lea.sflag [#allocation4], %s8629
        %s8631 = sand.u32 %s502, 1
        %s8632 = smul.addr %s8631, 16
        %s8633 = scalar_lea.vmem [#allocation10], %s8632
        // Predicated region
        $region121: #{transformer_forward.1} parent=103 // pred_check
          %p8634 = pneg %p512
        $region122: #{transformer_forward.1} parent=103 // pred_check_branch
          %8636 = sbr.rel (%p8634) target = $region124
        $region123: #{transformer_forward.1} parent=103 // pred_region
          %s8637 = smul.u32 2, %s38
          %s8639 = ssub.s32 256, 256
          %8640 = vsyncadd %s8630, %s8639
          %s8641 = smul.addr %s8637, 128
          %s8642 = scalar_lea.hbm %s21, %s8641
          %s8643 = sshll.u32 %s8633, 4
          %s8644 = int_to_ptr.vmem [resolvable:$true] %s8643
          %8649 = dma.vmem_to_hbm [thread:$0]  %s8644, 256, %s8642, %s8630, 128, 128, 8
        $region124: #{transformer_forward.1} parent=103 // pred_fallthru
          _
      $region104: #{transformer_forward.1} parent=5 // pred_fallthru
        _
      %p8650 = scmp.le.s32.totalorder 2, %s33
      // Predicated region
      $region125: #{transformer_forward.1} parent=5 // pred_check
        %p8651 = pneg %p8650
      $region126: #{transformer_forward.1} parent=5 // pred_check_branch
        %8653 = sbr.rel (%p8651) target = $region128
      $region127: #{transformer_forward.1} parent=5 // pred_region
        %s8654 = ssub.s32 %s33, 2
        // Predicated region
        $region129: #{transformer_forward.1} parent=127 // pred_check
          %p8655 = pneg %p518
        $region130: #{transformer_forward.1} parent=127 // pred_check_branch
          %8657 = sbr.rel (%p8655) target = $region132
        $region131: #{transformer_forward.1} parent=127 // pred_region
          %s8658 = sand.u32 %s503, 1
          %s8659 = scalar_lea.sflag [#allocation4], %s8658
          %s8660 = sand.u32 %s503, 1
          %s8661 = smul.addr %s8660, 16
          %s8662 = scalar_lea.vmem [#allocation10], %s8661
          %8663 = dma.done %s8659, 256
        $region132: #{transformer_forward.1} parent=127 // pred_fallthru
          _
      $region128: #{transformer_forward.1} parent=5 // pred_fallthru
        _
    $region6: #{transformer_forward.1} parent=1 // loop_footer
      %s37 = sadd.s32 1, %s33
    $region7: #{transformer_forward.1} parent=1 // loop_footer_branch
      %32 = sbr.rel target = $region3
    $region8: #{transformer_forward.1} parent=1 // loop_exit
      _
    %8664 = vsyncpa [#allocation3], 1
    %s8665 = scalar_lea.sflag [#allocation3], 1
    %8666 = vsyncpa %s8665, 1
    %8667 = vsyncpa [#allocation6], 1
    %8668 = vsyncpa [#allocation9], 1
    %8669 = vsyncpa [#allocation4], 1
    %s8670 = scalar_lea.sflag [#allocation4], 1
    %8671 = vsyncpa %s8670, 1

</llo_original>
